<compile_context>
chip_gen: v5e
topology: v5e:2x2
jax: 0.10.0
libtpu: 0.0.40
codegen_flags: <defaults>
</compile_context>

<pallas_src>
import jax
import jax.numpy as jnp
from jax.experimental import pallas as pl
from jax.experimental.pallas import tpu as pltpu

SIZE = 30        # self.size (fixed sequence length)
HIDDEN = 100     # hidden size of FC1 / LSTMCells
PREDICT = 7      # number of autoregressive prediction steps / FC2 outputs
HP = 128         # hidden size padded to one lane tile
G4 = 4 * HP      # four lane-aligned gate blocks (i, f, g, o)


def _sigmoid(x):
    # sigmoid(x) == 0.5 * tanh(0.5 * x) + 0.5  — one EUP push instead of two.
    return 0.5 * jnp.tanh(0.5 * x) + 0.5


def _lstm_step(g_in, h, c, whh_ref):
    # PyTorch LSTMCell with the input projection (+ both biases) pre-folded
    # into g_in: gates = g_in + h @ W_hh^T ; gate order (i, f, g, o).
    # bf16 operands, f32 accumulation; state / activations stay f32.
    gates = g_in + jnp.dot(h.astype(jnp.bfloat16), whh_ref[...],
                           preferred_element_type=jnp.float32)
    i_g = _sigmoid(gates[:, 0 * HP:1 * HP])
    f_g = _sigmoid(gates[:, 1 * HP:2 * HP])
    g_g = jnp.tanh(gates[:, 2 * HP:3 * HP])
    o_g = _sigmoid(gates[:, 3 * HP:4 * HP])
    c_new = f_g * c + i_g * g_g
    h_new = o_g * jnp.tanh(c_new)
    return h_new, c_new


def ournet_kernel(x_ref, p1_ref, q1_ref, whh1_ref,
                  wih2_ref, whh2_ref, bg2_ref,
                  w2_ref, b2_ref,
                  o_ref, hbuf_ref):
    # x_ref   : (SIZE, B, 1) f32
    # p1_ref  : (1, G4) f32 = pad(fc1_w @ Wih1^T)
    # q1_ref  : (1, G4) f32 = pad(fc1_b @ Wih1^T + b_ih1 + b_hh1)
    # whh1_ref: (HP, G4) bf16    wih2_ref/whh2_ref: (HP, G4) bf16
    # bg2_ref : (1, G4) f32
    # w2_ref  : (PREDICT*HP, PREDICT) bf16    b2_ref: (1, PREDICT) f32
    # o_ref   : (B, PREDICT) f32
    # hbuf_ref: VMEM scratch (B, PREDICT*HP) f32
    B = o_ref.shape[0]

    # Tiny (4-vreg) rows: safe to hoist.
    p1 = p1_ref[...]
    q1 = q1_ref[...]

    h = jnp.zeros((B, HP), jnp.float32)
    c = jnp.zeros((B, HP), jnp.float32)

    # ---- first recurrence (self.cell), 30 steps, fully unrolled ----
    # Per-step input contribution is a broadcast FMA (FC1 folded); it lands in
    # VPU/XLU slots that are idle under the MXU/EUP latency of the step.
    for t in range(SIZE):
        g_in = x_ref[t] * p1 + q1            # (B,1)*(1,G4)+(1,G4) -> (B,G4)
        h, c = _lstm_step(g_in, h, c, whh1_ref)

    # ---- second recurrence (self.cell2) ----
    # Input is constant (output[-1] == final h of loop 1): hoist its projection.
    gin2 = (jnp.dot(h.astype(jnp.bfloat16), wih2_ref[...],
                    preferred_element_type=jnp.float32) + bg2_ref[...])
    for t in range(PREDICT):
        h, c = _lstm_step(gin2, h, c, whh2_ref)
        hbuf_ref[:, t * HP:(t + 1) * HP] = h   # lane-aligned static slice

    # ---- FC2 as a single matmul over the concatenated hidden states ----
    logits = (jnp.dot(hbuf_ref[...].astype(jnp.bfloat16), w2_ref[...],
                      preferred_element_type=jnp.float32) + b2_ref[...])
    o_ref[...] = _sigmoid(logits)


def _pad_gate_cols(w):
    """(H, 4H) weight (gate blocks of width H) -> (HP, G4) bf16, zero-padded."""
    out = jnp.zeros((HP, G4), jnp.float32)
    for g in range(4):
        out = out.at[:HIDDEN, g * HP:g * HP + HIDDEN].set(
            w[:, g * HIDDEN:(g + 1) * HIDDEN])
    return out.astype(jnp.bfloat16)


def _pad_gate_row(v):
    """(1, 4H) row (gate blocks of width H) -> (1, G4) f32, zero-padded."""
    out = jnp.zeros((1, G4), jnp.float32)
    for g in range(4):
        out = out.at[:, g * HP:g * HP + HIDDEN].set(
            v[:, g * HIDDEN:(g + 1) * HIDDEN])
    return out


def ournet_forward(x, p):
    """x: (SIZE, B) float32 -> (B, PREDICT) float32."""
    assert x.shape[0] == SIZE
    B = x.shape[1]
    H = HIDDEN

    x3 = x.reshape(SIZE, B, 1).astype(jnp.float32)

    wih1_t = p["c1_wih"].T                                      # (H, 4H)
    # FC1 (input dim 1) folded into cell-1's input projection (kept f32).
    p1 = _pad_gate_row(p["fc1_w"].T @ wih1_t)                   # (1, G4)
    q1 = _pad_gate_row(p["fc1_b"].reshape(1, H) @ wih1_t
                       + (p["c1_bih"] + p["c1_bhh"]).reshape(1, 4 * H))
    whh1 = _pad_gate_cols(p["c1_whh"].T)                        # (HP, G4) bf16

    wih2 = _pad_gate_cols(p["c2_wih"].T)                        # bf16
    whh2 = _pad_gate_cols(p["c2_whh"].T)                        # bf16
    bg2 = _pad_gate_row((p["c2_bih"] + p["c2_bhh"]).reshape(1, 4 * H))

    # FC2: (PREDICT, PREDICT*H) -> (PREDICT*HP, PREDICT) bf16; rows for padded
    # hidden lanes (100..127 of each step block) are zero.
    w2_blocks = p["fc2_w"].T.reshape(PREDICT, H, PREDICT)
    w2 = (jnp.zeros((PREDICT, HP, PREDICT), jnp.float32)
          .at[:, :H, :].set(w2_blocks)
          .reshape(PREDICT * HP, PREDICT)
          .astype(jnp.bfloat16))
    b2 = p["fc2_b"].reshape(1, PREDICT)

    vmem = pl.BlockSpec(memory_space=pltpu.MemorySpace.VMEM)
    return pl.pallas_call(
        ournet_kernel,
        out_shape=jax.ShapeDtypeStruct((B, PREDICT), jnp.float32),
        in_specs=[vmem] * 9,
        out_specs=vmem,
        scratch_shapes=[pltpu.VMEM((B, PREDICT * HP), jnp.float32)],
    )(x3, p1, q1, whh1, wih2, whh2, bg2, w2, b2)


def init_params(key):
    H = HIDDEN
    ks = jax.random.split(key, 12)

    def u(k, shape, fan_in):
        bound = 1.0 / float(fan_in) ** 0.5
        return jax.random.uniform(k, shape, jnp.float32, -bound, bound)

    return {
        "fc1_w": u(ks[0], (H, 1), 1),
        "fc1_b": u(ks[1], (H,), 1),
        "c1_wih": u(ks[2], (4 * H, H), H),
        "c1_whh": u(ks[3], (4 * H, H), H),
        "c1_bih": u(ks[4], (4 * H,), H),
        "c1_bhh": u(ks[5], (4 * H,), H),
        "c2_wih": u(ks[6], (4 * H, H), H),
        "c2_whh": u(ks[7], (4 * H, H), H),
        "c2_bih": u(ks[8], (4 * H,), H),
        "c2_bhh": u(ks[9], (4 * H,), H),
        "fc2_w": u(ks[10], (PREDICT, PREDICT * H), PREDICT * H),
        "fc2_b": u(ks[11], (PREDICT,), PREDICT * H),
    }


def reference_forward(x, p):
    """Pure-JAX (f32) replica of the PyTorch forward (for verification)."""
    B = x.shape[1]
    H = HIDDEN
    xf = x.reshape(SIZE * B, 1) @ p["fc1_w"].T + p["fc1_b"]
    xf = xf.reshape(SIZE, B, H)

    def cell(xi, h, c, wih, whh, bih, bhh):
        g = xi @ wih.T + bih + h @ whh.T + bhh
        i = jax.nn.sigmoid(g[:, :H])
        f = jax.nn.sigmoid(g[:, H:2 * H])
        gg = jnp.tanh(g[:, 2 * H:3 * H])
        o = jax.nn.sigmoid(g[:, 3 * H:])
        c = f * c + i * gg
        return o * jnp.tanh(c), c

    h = jnp.zeros((B, H), jnp.float32)
    c = jnp.zeros((B, H), jnp.float32)
    outs = []
    for t in range(SIZE):
        h, c = cell(xf[t], h, c, p["c1_wih"], p["c1_whh"], p["c1_bih"], p["c1_bhh"])
        outs.append(h)
    inp = outs[-1]
    res = []
    for _ in range(PREDICT):
        h, c = cell(inp, h, c, p["c2_wih"], p["c2_whh"], p["c2_bih"], p["c2_bhh"])
        res.append(h)
    r = jnp.stack(res, 0).transpose(1, 0, 2).reshape(B, PREDICT * H)
    return jax.nn.sigmoid(r @ p["fc2_w"].T + p["fc2_b"])


if __name__ == "__main__":
    key = jax.random.PRNGKey(0)
    k_param, k_x = jax.random.split(key)

    batch = 8   # sublane-aligned small batch
    params = init_params(k_param)
    x = jax.random.normal(k_x, (SIZE, batch), jnp.float32)   # (30, 8)

    out = jax.jit(ournet_forward)(x, params)
    out = jax.block_until_ready(out)
    assert out.shape == (batch, PREDICT)

    ref = reference_forward(x, params)
    # bf16 matmul operands (f32 accumulation) over 37 recurrent steps keep the
    # post-sigmoid output within a few 1e-3 of the f32 reference.
    max_diff = float(jnp.max(jnp.abs(out - ref)))
    assert max_diff < 1e-2, f"mismatch vs reference: {max_diff}"

    print("KERNEL_OK")
</pallas_src>

<mosaic_0001>
module attributes {stable_mosaic.version = 11 : i64} {
  func.func @ournet_kernel(%arg0: memref<30x8x1xf32, #tpu.memory_space<vmem>>, %arg1: memref<1x512xf32, #tpu.memory_space<vmem>>, %arg2: memref<1x512xf32, #tpu.memory_space<vmem>>, %arg3: memref<128x512xbf16, #tpu.memory_space<vmem>>, %arg4: memref<128x512xbf16, #tpu.memory_space<vmem>>, %arg5: memref<128x512xbf16, #tpu.memory_space<vmem>>, %arg6: memref<1x512xf32, #tpu.memory_space<vmem>>, %arg7: memref<896x7xbf16, #tpu.memory_space<vmem>>, %arg8: memref<1x7xf32, #tpu.memory_space<vmem>>, %arg9: memref<8x7xf32, #tpu.memory_space<vmem>>, %arg10: memref<8x896xf32, #tpu.memory_space<vmem>>) attributes {dimension_semantics = [], scalar_prefetch = 0 : i64, scratch_operands = 1 : i64, tpu.core_type = #tpu.core_type<tc>} {
    %c0 = arith.constant 0 : index
    %c0_0 = arith.constant 0 : index
    %0 = vector.load %arg1[%c0, %c0_0] : memref<1x512xf32, #tpu.memory_space<vmem>>, vector<1x512xf32>
    %c0_1 = arith.constant 0 : index
    %c0_2 = arith.constant 0 : index
    %1 = vector.load %arg2[%c0_1, %c0_2] : memref<1x512xf32, #tpu.memory_space<vmem>>, vector<1x512xf32>
    %cst = arith.constant 0.000000e+00 : f32
    %2 = vector.broadcast %cst : f32 to vector<8x128xf32>
    %cst_3 = arith.constant 0.000000e+00 : f32
    %3 = vector.broadcast %cst_3 : f32 to vector<8x128xf32>
    %c0_4 = arith.constant 0 : index
    %c0_5 = arith.constant 0 : index
    %c0_6 = arith.constant 0 : index
    %4 = vector.load %arg0[%c0_4, %c0_5, %c0_6] : memref<30x8x1xf32, #tpu.memory_space<vmem>>, vector<1x8x1xf32>
    %5 = vector.shape_cast %4 : vector<1x8x1xf32> to vector<8x1xf32>
    %6 = vector.broadcast %5 : vector<8x1xf32> to vector<8x512xf32>
    %7 = vector.broadcast %0 : vector<1x512xf32> to vector<8x512xf32>
    %8 = arith.mulf %6, %7 : vector<8x512xf32>
    %9 = vector.broadcast %1 : vector<1x512xf32> to vector<8x512xf32>
    %10 = arith.addf %8, %9 : vector<8x512xf32>
    %11 = arith.truncf %2 : vector<8x128xf32> to vector<8x128xbf16>
    %c0_7 = arith.constant 0 : index
    %c0_8 = arith.constant 0 : index
    %12 = vector.load %arg3[%c0_7, %c0_8] : memref<128x512xbf16, #tpu.memory_space<vmem>>, vector<128x512xbf16>
    %cst_9 = arith.constant dense<0.000000e+00> : vector<8x512xf32>
    %13 = tpu.matmul %11, %12, %cst_9 {dimension_numbers = #tpu.dot_dimension_numbers<[1], [0], [0], [1], [0, 0, 1, 1], [], []>} : vector<8x128xbf16>, vector<128x512xbf16>, vector<8x512xf32> -> vector<8x512xf32>
    %14 = arith.addf %10, %13 : vector<8x512xf32>
    %15 = vector.extract_strided_slice %14 {offsets = [0, 0], sizes = [8, 128], strides = [1, 1]} : vector<8x512xf32> to vector<8x128xf32>
    %cst_10 = arith.constant 5.000000e-01 : f32
    %16 = vector.broadcast %cst_10 : f32 to vector<8x128xf32>
    %17 = arith.mulf %16, %15 : vector<8x128xf32>
    %18 = math.tanh %17 : vector<8x128xf32>
    %cst_11 = arith.constant 5.000000e-01 : f32
    %19 = vector.broadcast %cst_11 : f32 to vector<8x128xf32>
    %20 = arith.mulf %19, %18 : vector<8x128xf32>
    %cst_12 = arith.constant 5.000000e-01 : f32
    %21 = vector.broadcast %cst_12 : f32 to vector<8x128xf32>
    %22 = arith.addf %20, %21 : vector<8x128xf32>
    %23 = vector.extract_strided_slice %14 {offsets = [0, 128], sizes = [8, 128], strides = [1, 1]} : vector<8x512xf32> to vector<8x128xf32>
    %cst_13 = arith.constant 5.000000e-01 : f32
    %24 = vector.broadcast %cst_13 : f32 to vector<8x128xf32>
    %25 = arith.mulf %24, %23 : vector<8x128xf32>
    %26 = math.tanh %25 : vector<8x128xf32>
    %cst_14 = arith.constant 5.000000e-01 : f32
    %27 = vector.broadcast %cst_14 : f32 to vector<8x128xf32>
    %28 = arith.mulf %27, %26 : vector<8x128xf32>
    %cst_15 = arith.constant 5.000000e-01 : f32
    %29 = vector.broadcast %cst_15 : f32 to vector<8x128xf32>
    %30 = arith.addf %28, %29 : vector<8x128xf32>
    %31 = vector.extract_strided_slice %14 {offsets = [0, 256], sizes = [8, 128], strides = [1, 1]} : vector<8x512xf32> to vector<8x128xf32>
    %32 = math.tanh %31 : vector<8x128xf32>
    %33 = vector.extract_strided_slice %14 {offsets = [0, 384], sizes = [8, 128], strides = [1, 1]} : vector<8x512xf32> to vector<8x128xf32>
    %cst_16 = arith.constant 5.000000e-01 : f32
    %34 = vector.broadcast %cst_16 : f32 to vector<8x128xf32>
    %35 = arith.mulf %34, %33 : vector<8x128xf32>
    %36 = math.tanh %35 : vector<8x128xf32>
    %cst_17 = arith.constant 5.000000e-01 : f32
    %37 = vector.broadcast %cst_17 : f32 to vector<8x128xf32>
    %38 = arith.mulf %37, %36 : vector<8x128xf32>
    %cst_18 = arith.constant 5.000000e-01 : f32
    %39 = vector.broadcast %cst_18 : f32 to vector<8x128xf32>
    %40 = arith.addf %38, %39 : vector<8x128xf32>
    %41 = arith.mulf %30, %3 : vector<8x128xf32>
    %42 = arith.mulf %22, %32 : vector<8x128xf32>
    %43 = arith.addf %41, %42 : vector<8x128xf32>
    %44 = math.tanh %43 : vector<8x128xf32>
    %45 = arith.mulf %40, %44 : vector<8x128xf32>
    %c1 = arith.constant 1 : index
    %c0_19 = arith.constant 0 : index
    %c0_20 = arith.constant 0 : index
    %46 = vector.load %arg0[%c1, %c0_19, %c0_20] : memref<30x8x1xf32, #tpu.memory_space<vmem>>, vector<1x8x1xf32>
    %47 = vector.shape_cast %46 : vector<1x8x1xf32> to vector<8x1xf32>
    %48 = vector.broadcast %47 : vector<8x1xf32> to vector<8x512xf32>
    %49 = vector.broadcast %0 : vector<1x512xf32> to vector<8x512xf32>
    %50 = arith.mulf %48, %49 : vector<8x512xf32>
    %51 = vector.broadcast %1 : vector<1x512xf32> to vector<8x512xf32>
    %52 = arith.addf %50, %51 : vector<8x512xf32>
    %53 = arith.truncf %45 : vector<8x128xf32> to vector<8x128xbf16>
    %c0_21 = arith.constant 0 : index
    %c0_22 = arith.constant 0 : index
    %54 = vector.load %arg3[%c0_21, %c0_22] : memref<128x512xbf16, #tpu.memory_space<vmem>>, vector<128x512xbf16>
    %cst_23 = arith.constant dense<0.000000e+00> : vector<8x512xf32>
    %55 = tpu.matmul %53, %54, %cst_23 {dimension_numbers = #tpu.dot_dimension_numbers<[1], [0], [0], [1], [0, 0, 1, 1], [], []>} : vector<8x128xbf16>, vector<128x512xbf16>, vector<8x512xf32> -> vector<8x512xf32>
    %56 = arith.addf %52, %55 : vector<8x512xf32>
    %57 = vector.extract_strided_slice %56 {offsets = [0, 0], sizes = [8, 128], strides = [1, 1]} : vector<8x512xf32> to vector<8x128xf32>
    %cst_24 = arith.constant 5.000000e-01 : f32
    %58 = vector.broadcast %cst_24 : f32 to vector<8x128xf32>
    %59 = arith.mulf %58, %57 : vector<8x128xf32>
    %60 = math.tanh %59 : vector<8x128xf32>
    %cst_25 = arith.constant 5.000000e-01 : f32
    %61 = vector.broadcast %cst_25 : f32 to vector<8x128xf32>
    %62 = arith.mulf %61, %60 : vector<8x128xf32>
    %cst_26 = arith.constant 5.000000e-01 : f32
    %63 = vector.broadcast %cst_26 : f32 to vector<8x128xf32>
    %64 = arith.addf %62, %63 : vector<8x128xf32>
    %65 = vector.extract_strided_slice %56 {offsets = [0, 128], sizes = [8, 128], strides = [1, 1]} : vector<8x512xf32> to vector<8x128xf32>
    %cst_27 = arith.constant 5.000000e-01 : f32
    %66 = vector.broadcast %cst_27 : f32 to vector<8x128xf32>
    %67 = arith.mulf %66, %65 : vector<8x128xf32>
    %68 = math.tanh %67 : vector<8x128xf32>
    %cst_28 = arith.constant 5.000000e-01 : f32
    %69 = vector.broadcast %cst_28 : f32 to vector<8x128xf32>
    %70 = arith.mulf %69, %68 : vector<8x128xf32>
    %cst_29 = arith.constant 5.000000e-01 : f32
    %71 = vector.broadcast %cst_29 : f32 to vector<8x128xf32>
    %72 = arith.addf %70, %71 : vector<8x128xf32>
    %73 = vector.extract_strided_slice %56 {offsets = [0, 256], sizes = [8, 128], strides = [1, 1]} : vector<8x512xf32> to vector<8x128xf32>
    %74 = math.tanh %73 : vector<8x128xf32>
    %75 = vector.extract_strided_slice %56 {offsets = [0, 384], sizes = [8, 128], strides = [1, 1]} : vector<8x512xf32> to vector<8x128xf32>
    %cst_30 = arith.constant 5.000000e-01 : f32
    %76 = vector.broadcast %cst_30 : f32 to vector<8x128xf32>
    %77 = arith.mulf %76, %75 : vector<8x128xf32>
    %78 = math.tanh %77 : vector<8x128xf32>
    %cst_31 = arith.constant 5.000000e-01 : f32
    %79 = vector.broadcast %cst_31 : f32 to vector<8x128xf32>
    %80 = arith.mulf %79, %78 : vector<8x128xf32>
    %cst_32 = arith.constant 5.000000e-01 : f32
    %81 = vector.broadcast %cst_32 : f32 to vector<8x128xf32>
    %82 = arith.addf %80, %81 : vector<8x128xf32>
    %83 = arith.mulf %72, %43 : vector<8x128xf32>
    %84 = arith.mulf %64, %74 : vector<8x128xf32>
    %85 = arith.addf %83, %84 : vector<8x128xf32>
    %86 = math.tanh %85 : vector<8x128xf32>
    %87 = arith.mulf %82, %86 : vector<8x128xf32>
    %c2 = arith.constant 2 : index
    %c0_33 = arith.constant 0 : index
    %c0_34 = arith.constant 0 : index
    %88 = vector.load %arg0[%c2, %c0_33, %c0_34] : memref<30x8x1xf32, #tpu.memory_space<vmem>>, vector<1x8x1xf32>
    %89 = vector.shape_cast %88 : vector<1x8x1xf32> to vector<8x1xf32>
    %90 = vector.broadcast %89 : vector<8x1xf32> to vector<8x512xf32>
    %91 = vector.broadcast %0 : vector<1x512xf32> to vector<8x512xf32>
    %92 = arith.mulf %90, %91 : vector<8x512xf32>
    %93 = vector.broadcast %1 : vector<1x512xf32> to vector<8x512xf32>
    %94 = arith.addf %92, %93 : vector<8x512xf32>
    %95 = arith.truncf %87 : vector<8x128xf32> to vector<8x128xbf16>
    %c0_35 = arith.constant 0 : index
    %c0_36 = arith.constant 0 : index
    %96 = vector.load %arg3[%c0_35, %c0_36] : memref<128x512xbf16, #tpu.memory_space<vmem>>, vector<128x512xbf16>
    %cst_37 = arith.constant dense<0.000000e+00> : vector<8x512xf32>
    %97 = tpu.matmul %95, %96, %cst_37 {dimension_numbers = #tpu.dot_dimension_numbers<[1], [0], [0], [1], [0, 0, 1, 1], [], []>} : vector<8x128xbf16>, vector<128x512xbf16>, vector<8x512xf32> -> vector<8x512xf32>
    %98 = arith.addf %94, %97 : vector<8x512xf32>
    %99 = vector.extract_strided_slice %98 {offsets = [0, 0], sizes = [8, 128], strides = [1, 1]} : vector<8x512xf32> to vector<8x128xf32>
    %cst_38 = arith.constant 5.000000e-01 : f32
    %100 = vector.broadcast %cst_38 : f32 to vector<8x128xf32>
    %101 = arith.mulf %100, %99 : vector<8x128xf32>
    %102 = math.tanh %101 : vector<8x128xf32>
    %cst_39 = arith.constant 5.000000e-01 : f32
    %103 = vector.broadcast %cst_39 : f32 to vector<8x128xf32>
    %104 = arith.mulf %103, %102 : vector<8x128xf32>
    %cst_40 = arith.constant 5.000000e-01 : f32
    %105 = vector.broadcast %cst_40 : f32 to vector<8x128xf32>
    %106 = arith.addf %104, %105 : vector<8x128xf32>
    %107 = vector.extract_strided_slice %98 {offsets = [0, 128], sizes = [8, 128], strides = [1, 1]} : vector<8x512xf32> to vector<8x128xf32>
    %cst_41 = arith.constant 5.000000e-01 : f32
    %108 = vector.broadcast %cst_41 : f32 to vector<8x128xf32>
    %109 = arith.mulf %108, %107 : vector<8x128xf32>
    %110 = math.tanh %109 : vector<8x128xf32>
    %cst_42 = arith.constant 5.000000e-01 : f32
    %111 = vector.broadcast %cst_42 : f32 to vector<8x128xf32>
    %112 = arith.mulf %111, %110 : vector<8x128xf32>
    %cst_43 = arith.constant 5.000000e-01 : f32
    %113 = vector.broadcast %cst_43 : f32 to vector<8x128xf32>
    %114 = arith.addf %112, %113 : vector<8x128xf32>
    %115 = vector.extract_strided_slice %98 {offsets = [0, 256], sizes = [8, 128], strides = [1, 1]} : vector<8x512xf32> to vector<8x128xf32>
    %116 = math.tanh %115 : vector<8x128xf32>
    %117 = vector.extract_strided_slice %98 {offsets = [0, 384], sizes = [8, 128], strides = [1, 1]} : vector<8x512xf32> to vector<8x128xf32>
    %cst_44 = arith.constant 5.000000e-01 : f32
    %118 = vector.broadcast %cst_44 : f32 to vector<8x128xf32>
    %119 = arith.mulf %118, %117 : vector<8x128xf32>
    %120 = math.tanh %119 : vector<8x128xf32>
    %cst_45 = arith.constant 5.000000e-01 : f32
    %121 = vector.broadcast %cst_45 : f32 to vector<8x128xf32>
    %122 = arith.mulf %121, %120 : vector<8x128xf32>
    %cst_46 = arith.constant 5.000000e-01 : f32
    %123 = vector.broadcast %cst_46 : f32 to vector<8x128xf32>
    %124 = arith.addf %122, %123 : vector<8x128xf32>
    %125 = arith.mulf %114, %85 : vector<8x128xf32>
    %126 = arith.mulf %106, %116 : vector<8x128xf32>
    %127 = arith.addf %125, %126 : vector<8x128xf32>
    %128 = math.tanh %127 : vector<8x128xf32>
    %129 = arith.mulf %124, %128 : vector<8x128xf32>
    %c3 = arith.constant 3 : index
    %c0_47 = arith.constant 0 : index
    %c0_48 = arith.constant 0 : index
    %130 = vector.load %arg0[%c3, %c0_47, %c0_48] : memref<30x8x1xf32, #tpu.memory_space<vmem>>, vector<1x8x1xf32>
    %131 = vector.shape_cast %130 : vector<1x8x1xf32> to vector<8x1xf32>
    %132 = vector.broadcast %131 : vector<8x1xf32> to vector<8x512xf32>
    %133 = vector.broadcast %0 : vector<1x512xf32> to vector<8x512xf32>
    %134 = arith.mulf %132, %133 : vector<8x512xf32>
    %135 = vector.broadcast %1 : vector<1x512xf32> to vector<8x512xf32>
    %136 = arith.addf %134, %135 : vector<8x512xf32>
    %137 = arith.truncf %129 : vector<8x128xf32> to vector<8x128xbf16>
    %c0_49 = arith.constant 0 : index
    %c0_50 = arith.constant 0 : index
    %138 = vector.load %arg3[%c0_49, %c0_50] : memref<128x512xbf16, #tpu.memory_space<vmem>>, vector<128x512xbf16>
    %cst_51 = arith.constant dense<0.000000e+00> : vector<8x512xf32>
    %139 = tpu.matmul %137, %138, %cst_51 {dimension_numbers = #tpu.dot_dimension_numbers<[1], [0], [0], [1], [0, 0, 1, 1], [], []>} : vector<8x128xbf16>, vector<128x512xbf16>, vector<8x512xf32> -> vector<8x512xf32>
    %140 = arith.addf %136, %139 : vector<8x512xf32>
    %141 = vector.extract_strided_slice %140 {offsets = [0, 0], sizes = [8, 128], strides = [1, 1]} : vector<8x512xf32> to vector<8x128xf32>
    %cst_52 = arith.constant 5.000000e-01 : f32
    %142 = vector.broadcast %cst_52 : f32 to vector<8x128xf32>
    %143 = arith.mulf %142, %141 : vector<8x128xf32>
    %144 = math.tanh %143 : vector<8x128xf32>
    %cst_53 = arith.constant 5.000000e-01 : f32
    %145 = vector.broadcast %cst_53 : f32 to vector<8x128xf32>
    %146 = arith.mulf %145, %144 : vector<8x128xf32>
    %cst_54 = arith.constant 5.000000e-01 : f32
    %147 = vector.broadcast %cst_54 : f32 to vector<8x128xf32>
    %148 = arith.addf %146, %147 : vector<8x128xf32>
    %149 = vector.extract_strided_slice %140 {offsets = [0, 128], sizes = [8, 128], strides = [1, 1]} : vector<8x512xf32> to vector<8x128xf32>
    %cst_55 = arith.constant 5.000000e-01 : f32
    %150 = vector.broadcast %cst_55 : f32 to vector<8x128xf32>
    %151 = arith.mulf %150, %149 : vector<8x128xf32>
    %152 = math.tanh %151 : vector<8x128xf32>
    %cst_56 = arith.constant 5.000000e-01 : f32
    %153 = vector.broadcast %cst_56 : f32 to vector<8x128xf32>
    %154 = arith.mulf %153, %152 : vector<8x128xf32>
    %cst_57 = arith.constant 5.000000e-01 : f32
    %155 = vector.broadcast %cst_57 : f32 to vector<8x128xf32>
    %156 = arith.addf %154, %155 : vector<8x128xf32>
    %157 = vector.extract_strided_slice %140 {offsets = [0, 256], sizes = [8, 128], strides = [1, 1]} : vector<8x512xf32> to vector<8x128xf32>
    %158 = math.tanh %157 : vector<8x128xf32>
    %159 = vector.extract_strided_slice %140 {offsets = [0, 384], sizes = [8, 128], strides = [1, 1]} : vector<8x512xf32> to vector<8x128xf32>
    %cst_58 = arith.constant 5.000000e-01 : f32
    %160 = vector.broadcast %cst_58 : f32 to vector<8x128xf32>
    %161 = arith.mulf %160, %159 : vector<8x128xf32>
    %162 = math.tanh %161 : vector<8x128xf32>
    %cst_59 = arith.constant 5.000000e-01 : f32
    %163 = vector.broadcast %cst_59 : f32 to vector<8x128xf32>
    %164 = arith.mulf %163, %162 : vector<8x128xf32>
    %cst_60 = arith.constant 5.000000e-01 : f32
    %165 = vector.broadcast %cst_60 : f32 to vector<8x128xf32>
    %166 = arith.addf %164, %165 : vector<8x128xf32>
    %167 = arith.mulf %156, %127 : vector<8x128xf32>
    %168 = arith.mulf %148, %158 : vector<8x128xf32>
    %169 = arith.addf %167, %168 : vector<8x128xf32>
    %170 = math.tanh %169 : vector<8x128xf32>
    %171 = arith.mulf %166, %170 : vector<8x128xf32>
    %c4 = arith.constant 4 : index
    %c0_61 = arith.constant 0 : index
    %c0_62 = arith.constant 0 : index
    %172 = vector.load %arg0[%c4, %c0_61, %c0_62] : memref<30x8x1xf32, #tpu.memory_space<vmem>>, vector<1x8x1xf32>
    %173 = vector.shape_cast %172 : vector<1x8x1xf32> to vector<8x1xf32>
    %174 = vector.broadcast %173 : vector<8x1xf32> to vector<8x512xf32>
    %175 = vector.broadcast %0 : vector<1x512xf32> to vector<8x512xf32>
    %176 = arith.mulf %174, %175 : vector<8x512xf32>
    %177 = vector.broadcast %1 : vector<1x512xf32> to vector<8x512xf32>
    %178 = arith.addf %176, %177 : vector<8x512xf32>
    %179 = arith.truncf %171 : vector<8x128xf32> to vector<8x128xbf16>
    %c0_63 = arith.constant 0 : index
    %c0_64 = arith.constant 0 : index
    %180 = vector.load %arg3[%c0_63, %c0_64] : memref<128x512xbf16, #tpu.memory_space<vmem>>, vector<128x512xbf16>
    %cst_65 = arith.constant dense<0.000000e+00> : vector<8x512xf32>
    %181 = tpu.matmul %179, %180, %cst_65 {dimension_numbers = #tpu.dot_dimension_numbers<[1], [0], [0], [1], [0, 0, 1, 1], [], []>} : vector<8x128xbf16>, vector<128x512xbf16>, vector<8x512xf32> -> vector<8x512xf32>
    %182 = arith.addf %178, %181 : vector<8x512xf32>
    %183 = vector.extract_strided_slice %182 {offsets = [0, 0], sizes = [8, 128], strides = [1, 1]} : vector<8x512xf32> to vector<8x128xf32>
    %cst_66 = arith.constant 5.000000e-01 : f32
    %184 = vector.broadcast %cst_66 : f32 to vector<8x128xf32>
    %185 = arith.mulf %184, %183 : vector<8x128xf32>
    %186 = math.tanh %185 : vector<8x128xf32>
    %cst_67 = arith.constant 5.000000e-01 : f32
    %187 = vector.broadcast %cst_67 : f32 to vector<8x128xf32>
    %188 = arith.mulf %187, %186 : vector<8x128xf32>
    %cst_68 = arith.constant 5.000000e-01 : f32
    %189 = vector.broadcast %cst_68 : f32 to vector<8x128xf32>
    %190 = arith.addf %188, %189 : vector<8x128xf32>
    %191 = vector.extract_strided_slice %182 {offsets = [0, 128], sizes = [8, 128], strides = [1, 1]} : vector<8x512xf32> to vector<8x128xf32>
    %cst_69 = arith.constant 5.000000e-01 : f32
    %192 = vector.broadcast %cst_69 : f32 to vector<8x128xf32>
    %193 = arith.mulf %192, %191 : vector<8x128xf32>
    %194 = math.tanh %193 : vector<8x128xf32>
    %cst_70 = arith.constant 5.000000e-01 : f32
    %195 = vector.broadcast %cst_70 : f32 to vector<8x128xf32>
    %196 = arith.mulf %195, %194 : vector<8x128xf32>
    %cst_71 = arith.constant 5.000000e-01 : f32
    %197 = vector.broadcast %cst_71 : f32 to vector<8x128xf32>
    %198 = arith.addf %196, %197 : vector<8x128xf32>
    %199 = vector.extract_strided_slice %182 {offsets = [0, 256], sizes = [8, 128], strides = [1, 1]} : vector<8x512xf32> to vector<8x128xf32>
    %200 = math.tanh %199 : vector<8x128xf32>
    %201 = vector.extract_strided_slice %182 {offsets = [0, 384], sizes = [8, 128], strides = [1, 1]} : vector<8x512xf32> to vector<8x128xf32>
    %cst_72 = arith.constant 5.000000e-01 : f32
    %202 = vector.broadcast %cst_72 : f32 to vector<8x128xf32>
    %203 = arith.mulf %202, %201 : vector<8x128xf32>
    %204 = math.tanh %203 : vector<8x128xf32>
    %cst_73 = arith.constant 5.000000e-01 : f32
    %205 = vector.broadcast %cst_73 : f32 to vector<8x128xf32>
    %206 = arith.mulf %205, %204 : vector<8x128xf32>
    %cst_74 = arith.constant 5.000000e-01 : f32
    %207 = vector.broadcast %cst_74 : f32 to vector<8x128xf32>
    %208 = arith.addf %206, %207 : vector<8x128xf32>
    %209 = arith.mulf %198, %169 : vector<8x128xf32>
    %210 = arith.mulf %190, %200 : vector<8x128xf32>
    %211 = arith.addf %209, %210 : vector<8x128xf32>
    %212 = math.tanh %211 : vector<8x128xf32>
    %213 = arith.mulf %208, %212 : vector<8x128xf32>
    %c5 = arith.constant 5 : index
    %c0_75 = arith.constant 0 : index
    %c0_76 = arith.constant 0 : index
    %214 = vector.load %arg0[%c5, %c0_75, %c0_76] : memref<30x8x1xf32, #tpu.memory_space<vmem>>, vector<1x8x1xf32>
    %215 = vector.shape_cast %214 : vector<1x8x1xf32> to vector<8x1xf32>
    %216 = vector.broadcast %215 : vector<8x1xf32> to vector<8x512xf32>
    %217 = vector.broadcast %0 : vector<1x512xf32> to vector<8x512xf32>
    %218 = arith.mulf %216, %217 : vector<8x512xf32>
    %219 = vector.broadcast %1 : vector<1x512xf32> to vector<8x512xf32>
    %220 = arith.addf %218, %219 : vector<8x512xf32>
    %221 = arith.truncf %213 : vector<8x128xf32> to vector<8x128xbf16>
    %c0_77 = arith.constant 0 : index
    %c0_78 = arith.constant 0 : index
    %222 = vector.load %arg3[%c0_77, %c0_78] : memref<128x512xbf16, #tpu.memory_space<vmem>>, vector<128x512xbf16>
    %cst_79 = arith.constant dense<0.000000e+00> : vector<8x512xf32>
    %223 = tpu.matmul %221, %222, %cst_79 {dimension_numbers = #tpu.dot_dimension_numbers<[1], [0], [0], [1], [0, 0, 1, 1], [], []>} : vector<8x128xbf16>, vector<128x512xbf16>, vector<8x512xf32> -> vector<8x512xf32>
    %224 = arith.addf %220, %223 : vector<8x512xf32>
    %225 = vector.extract_strided_slice %224 {offsets = [0, 0], sizes = [8, 128], strides = [1, 1]} : vector<8x512xf32> to vector<8x128xf32>
    %cst_80 = arith.constant 5.000000e-01 : f32
    %226 = vector.broadcast %cst_80 : f32 to vector<8x128xf32>
    %227 = arith.mulf %226, %225 : vector<8x128xf32>
    %228 = math.tanh %227 : vector<8x128xf32>
    %cst_81 = arith.constant 5.000000e-01 : f32
    %229 = vector.broadcast %cst_81 : f32 to vector<8x128xf32>
    %230 = arith.mulf %229, %228 : vector<8x128xf32>
    %cst_82 = arith.constant 5.000000e-01 : f32
    %231 = vector.broadcast %cst_82 : f32 to vector<8x128xf32>
    %232 = arith.addf %230, %231 : vector<8x128xf32>
    %233 = vector.extract_strided_slice %224 {offsets = [0, 128], sizes = [8, 128], strides = [1, 1]} : vector<8x512xf32> to vector<8x128xf32>
    %cst_83 = arith.constant 5.000000e-01 : f32
    %234 = vector.broadcast %cst_83 : f32 to vector<8x128xf32>
    %235 = arith.mulf %234, %233 : vector<8x128xf32>
    %236 = math.tanh %235 : vector<8x128xf32>
    %cst_84 = arith.constant 5.000000e-01 : f32
    %237 = vector.broadcast %cst_84 : f32 to vector<8x128xf32>
    %238 = arith.mulf %237, %236 : vector<8x128xf32>
    %cst_85 = arith.constant 5.000000e-01 : f32
    %239 = vector.broadcast %cst_85 : f32 to vector<8x128xf32>
    %240 = arith.addf %238, %239 : vector<8x128xf32>
    %241 = vector.extract_strided_slice %224 {offsets = [0, 256], sizes = [8, 128], strides = [1, 1]} : vector<8x512xf32> to vector<8x128xf32>
    %242 = math.tanh %241 : vector<8x128xf32>
    %243 = vector.extract_strided_slice %224 {offsets = [0, 384], sizes = [8, 128], strides = [1, 1]} : vector<8x512xf32> to vector<8x128xf32>
    %cst_86 = arith.constant 5.000000e-01 : f32
    %244 = vector.broadcast %cst_86 : f32 to vector<8x128xf32>
    %245 = arith.mulf %244, %243 : vector<8x128xf32>
    %246 = math.tanh %245 : vector<8x128xf32>
    %cst_87 = arith.constant 5.000000e-01 : f32
    %247 = vector.broadcast %cst_87 : f32 to vector<8x128xf32>
    %248 = arith.mulf %247, %246 : vector<8x128xf32>
    %cst_88 = arith.constant 5.000000e-01 : f32
    %249 = vector.broadcast %cst_88 : f32 to vector<8x128xf32>
    %250 = arith.addf %248, %249 : vector<8x128xf32>
    %251 = arith.mulf %240, %211 : vector<8x128xf32>
    %252 = arith.mulf %232, %242 : vector<8x128xf32>
    %253 = arith.addf %251, %252 : vector<8x128xf32>
    %254 = math.tanh %253 : vector<8x128xf32>
    %255 = arith.mulf %250, %254 : vector<8x128xf32>
    %c6 = arith.constant 6 : index
    %c0_89 = arith.constant 0 : index
    %c0_90 = arith.constant 0 : index
    %256 = vector.load %arg0[%c6, %c0_89, %c0_90] : memref<30x8x1xf32, #tpu.memory_space<vmem>>, vector<1x8x1xf32>
    %257 = vector.shape_cast %256 : vector<1x8x1xf32> to vector<8x1xf32>
    %258 = vector.broadcast %257 : vector<8x1xf32> to vector<8x512xf32>
    %259 = vector.broadcast %0 : vector<1x512xf32> to vector<8x512xf32>
    %260 = arith.mulf %258, %259 : vector<8x512xf32>
    %261 = vector.broadcast %1 : vector<1x512xf32> to vector<8x512xf32>
    %262 = arith.addf %260, %261 : vector<8x512xf32>
    %263 = arith.truncf %255 : vector<8x128xf32> to vector<8x128xbf16>
    %c0_91 = arith.constant 0 : index
    %c0_92 = arith.constant 0 : index
    %264 = vector.load %arg3[%c0_91, %c0_92] : memref<128x512xbf16, #tpu.memory_space<vmem>>, vector<128x512xbf16>
    %cst_93 = arith.constant dense<0.000000e+00> : vector<8x512xf32>
    %265 = tpu.matmul %263, %264, %cst_93 {dimension_numbers = #tpu.dot_dimension_numbers<[1], [0], [0], [1], [0, 0, 1, 1], [], []>} : vector<8x128xbf16>, vector<128x512xbf16>, vector<8x512xf32> -> vector<8x512xf32>
    %266 = arith.addf %262, %265 : vector<8x512xf32>
    %267 = vector.extract_strided_slice %266 {offsets = [0, 0], sizes = [8, 128], strides = [1, 1]} : vector<8x512xf32> to vector<8x128xf32>
    %cst_94 = arith.constant 5.000000e-01 : f32
    %268 = vector.broadcast %cst_94 : f32 to vector<8x128xf32>
    %269 = arith.mulf %268, %267 : vector<8x128xf32>
    %270 = math.tanh %269 : vector<8x128xf32>
    %cst_95 = arith.constant 5.000000e-01 : f32
    %271 = vector.broadcast %cst_95 : f32 to vector<8x128xf32>
    %272 = arith.mulf %271, %270 : vector<8x128xf32>
    %cst_96 = arith.constant 5.000000e-01 : f32
    %273 = vector.broadcast %cst_96 : f32 to vector<8x128xf32>
    %274 = arith.addf %272, %273 : vector<8x128xf32>
    %275 = vector.extract_strided_slice %266 {offsets = [0, 128], sizes = [8, 128], strides = [1, 1]} : vector<8x512xf32> to vector<8x128xf32>
    %cst_97 = arith.constant 5.000000e-01 : f32
    %276 = vector.broadcast %cst_97 : f32 to vector<8x128xf32>
    %277 = arith.mulf %276, %275 : vector<8x128xf32>
    %278 = math.tanh %277 : vector<8x128xf32>
    %cst_98 = arith.constant 5.000000e-01 : f32
    %279 = vector.broadcast %cst_98 : f32 to vector<8x128xf32>
    %280 = arith.mulf %279, %278 : vector<8x128xf32>
    %cst_99 = arith.constant 5.000000e-01 : f32
    %281 = vector.broadcast %cst_99 : f32 to vector<8x128xf32>
    %282 = arith.addf %280, %281 : vector<8x128xf32>
    %283 = vector.extract_strided_slice %266 {offsets = [0, 256], sizes = [8, 128], strides = [1, 1]} : vector<8x512xf32> to vector<8x128xf32>
    %284 = math.tanh %283 : vector<8x128xf32>
    %285 = vector.extract_strided_slice %266 {offsets = [0, 384], sizes = [8, 128], strides = [1, 1]} : vector<8x512xf32> to vector<8x128xf32>
    %cst_100 = arith.constant 5.000000e-01 : f32
    %286 = vector.broadcast %cst_100 : f32 to vector<8x128xf32>
    %287 = arith.mulf %286, %285 : vector<8x128xf32>
    %288 = math.tanh %287 : vector<8x128xf32>
    %cst_101 = arith.constant 5.000000e-01 : f32
    %289 = vector.broadcast %cst_101 : f32 to vector<8x128xf32>
    %290 = arith.mulf %289, %288 : vector<8x128xf32>
    %cst_102 = arith.constant 5.000000e-01 : f32
    %291 = vector.broadcast %cst_102 : f32 to vector<8x128xf32>
    %292 = arith.addf %290, %291 : vector<8x128xf32>
    %293 = arith.mulf %282, %253 : vector<8x128xf32>
    %294 = arith.mulf %274, %284 : vector<8x128xf32>
    %295 = arith.addf %293, %294 : vector<8x128xf32>
    %296 = math.tanh %295 : vector<8x128xf32>
    %297 = arith.mulf %292, %296 : vector<8x128xf32>
    %c7 = arith.constant 7 : index
    %c0_103 = arith.constant 0 : index
    %c0_104 = arith.constant 0 : index
    %298 = vector.load %arg0[%c7, %c0_103, %c0_104] : memref<30x8x1xf32, #tpu.memory_space<vmem>>, vector<1x8x1xf32>
    %299 = vector.shape_cast %298 : vector<1x8x1xf32> to vector<8x1xf32>
    %300 = vector.broadcast %299 : vector<8x1xf32> to vector<8x512xf32>
    %301 = vector.broadcast %0 : vector<1x512xf32> to vector<8x512xf32>
    %302 = arith.mulf %300, %301 : vector<8x512xf32>
    %303 = vector.broadcast %1 : vector<1x512xf32> to vector<8x512xf32>
    %304 = arith.addf %302, %303 : vector<8x512xf32>
    %305 = arith.truncf %297 : vector<8x128xf32> to vector<8x128xbf16>
    %c0_105 = arith.constant 0 : index
    %c0_106 = arith.constant 0 : index
    %306 = vector.load %arg3[%c0_105, %c0_106] : memref<128x512xbf16, #tpu.memory_space<vmem>>, vector<128x512xbf16>
    %cst_107 = arith.constant dense<0.000000e+00> : vector<8x512xf32>
    %307 = tpu.matmul %305, %306, %cst_107 {dimension_numbers = #tpu.dot_dimension_numbers<[1], [0], [0], [1], [0, 0, 1, 1], [], []>} : vector<8x128xbf16>, vector<128x512xbf16>, vector<8x512xf32> -> vector<8x512xf32>
    %308 = arith.addf %304, %307 : vector<8x512xf32>
    %309 = vector.extract_strided_slice %308 {offsets = [0, 0], sizes = [8, 128], strides = [1, 1]} : vector<8x512xf32> to vector<8x128xf32>
    %cst_108 = arith.constant 5.000000e-01 : f32
    %310 = vector.broadcast %cst_108 : f32 to vector<8x128xf32>
    %311 = arith.mulf %310, %309 : vector<8x128xf32>
    %312 = math.tanh %311 : vector<8x128xf32>
    %cst_109 = arith.constant 5.000000e-01 : f32
    %313 = vector.broadcast %cst_109 : f32 to vector<8x128xf32>
    %314 = arith.mulf %313, %312 : vector<8x128xf32>
    %cst_110 = arith.constant 5.000000e-01 : f32
    %315 = vector.broadcast %cst_110 : f32 to vector<8x128xf32>
    %316 = arith.addf %314, %315 : vector<8x128xf32>
    %317 = vector.extract_strided_slice %308 {offsets = [0, 128], sizes = [8, 128], strides = [1, 1]} : vector<8x512xf32> to vector<8x128xf32>
    %cst_111 = arith.constant 5.000000e-01 : f32
    %318 = vector.broadcast %cst_111 : f32 to vector<8x128xf32>
    %319 = arith.mulf %318, %317 : vector<8x128xf32>
    %320 = math.tanh %319 : vector<8x128xf32>
    %cst_112 = arith.constant 5.000000e-01 : f32
    %321 = vector.broadcast %cst_112 : f32 to vector<8x128xf32>
    %322 = arith.mulf %321, %320 : vector<8x128xf32>
    %cst_113 = arith.constant 5.000000e-01 : f32
    %323 = vector.broadcast %cst_113 : f32 to vector<8x128xf32>
    %324 = arith.addf %322, %323 : vector<8x128xf32>
    %325 = vector.extract_strided_slice %308 {offsets = [0, 256], sizes = [8, 128], strides = [1, 1]} : vector<8x512xf32> to vector<8x128xf32>
    %326 = math.tanh %325 : vector<8x128xf32>
    %327 = vector.extract_strided_slice %308 {offsets = [0, 384], sizes = [8, 128], strides = [1, 1]} : vector<8x512xf32> to vector<8x128xf32>
    %cst_114 = arith.constant 5.000000e-01 : f32
    %328 = vector.broadcast %cst_114 : f32 to vector<8x128xf32>
    %329 = arith.mulf %328, %327 : vector<8x128xf32>
    %330 = math.tanh %329 : vector<8x128xf32>
    %cst_115 = arith.constant 5.000000e-01 : f32
    %331 = vector.broadcast %cst_115 : f32 to vector<8x128xf32>
    %332 = arith.mulf %331, %330 : vector<8x128xf32>
    %cst_116 = arith.constant 5.000000e-01 : f32
    %333 = vector.broadcast %cst_116 : f32 to vector<8x128xf32>
    %334 = arith.addf %332, %333 : vector<8x128xf32>
    %335 = arith.mulf %324, %295 : vector<8x128xf32>
    %336 = arith.mulf %316, %326 : vector<8x128xf32>
    %337 = arith.addf %335, %336 : vector<8x128xf32>
    %338 = math.tanh %337 : vector<8x128xf32>
    %339 = arith.mulf %334, %338 : vector<8x128xf32>
    %c8 = arith.constant 8 : index
    %c0_117 = arith.constant 0 : index
    %c0_118 = arith.constant 0 : index
    %340 = vector.load %arg0[%c8, %c0_117, %c0_118] : memref<30x8x1xf32, #tpu.memory_space<vmem>>, vector<1x8x1xf32>
    %341 = vector.shape_cast %340 : vector<1x8x1xf32> to vector<8x1xf32>
    %342 = vector.broadcast %341 : vector<8x1xf32> to vector<8x512xf32>
    %343 = vector.broadcast %0 : vector<1x512xf32> to vector<8x512xf32>
    %344 = arith.mulf %342, %343 : vector<8x512xf32>
    %345 = vector.broadcast %1 : vector<1x512xf32> to vector<8x512xf32>
    %346 = arith.addf %344, %345 : vector<8x512xf32>
    %347 = arith.truncf %339 : vector<8x128xf32> to vector<8x128xbf16>
    %c0_119 = arith.constant 0 : index
    %c0_120 = arith.constant 0 : index
    %348 = vector.load %arg3[%c0_119, %c0_120] : memref<128x512xbf16, #tpu.memory_space<vmem>>, vector<128x512xbf16>
    %cst_121 = arith.constant dense<0.000000e+00> : vector<8x512xf32>
    %349 = tpu.matmul %347, %348, %cst_121 {dimension_numbers = #tpu.dot_dimension_numbers<[1], [0], [0], [1], [0, 0, 1, 1], [], []>} : vector<8x128xbf16>, vector<128x512xbf16>, vector<8x512xf32> -> vector<8x512xf32>
    %350 = arith.addf %346, %349 : vector<8x512xf32>
    %351 = vector.extract_strided_slice %350 {offsets = [0, 0], sizes = [8, 128], strides = [1, 1]} : vector<8x512xf32> to vector<8x128xf32>
    %cst_122 = arith.constant 5.000000e-01 : f32
    %352 = vector.broadcast %cst_122 : f32 to vector<8x128xf32>
    %353 = arith.mulf %352, %351 : vector<8x128xf32>
    %354 = math.tanh %353 : vector<8x128xf32>
    %cst_123 = arith.constant 5.000000e-01 : f32
    %355 = vector.broadcast %cst_123 : f32 to vector<8x128xf32>
    %356 = arith.mulf %355, %354 : vector<8x128xf32>
    %cst_124 = arith.constant 5.000000e-01 : f32
    %357 = vector.broadcast %cst_124 : f32 to vector<8x128xf32>
    %358 = arith.addf %356, %357 : vector<8x128xf32>
    %359 = vector.extract_strided_slice %350 {offsets = [0, 128], sizes = [8, 128], strides = [1, 1]} : vector<8x512xf32> to vector<8x128xf32>
    %cst_125 = arith.constant 5.000000e-01 : f32
    %360 = vector.broadcast %cst_125 : f32 to vector<8x128xf32>
    %361 = arith.mulf %360, %359 : vector<8x128xf32>
    %362 = math.tanh %361 : vector<8x128xf32>
    %cst_126 = arith.constant 5.000000e-01 : f32
    %363 = vector.broadcast %cst_126 : f32 to vector<8x128xf32>
    %364 = arith.mulf %363, %362 : vector<8x128xf32>
    %cst_127 = arith.constant 5.000000e-01 : f32
    %365 = vector.broadcast %cst_127 : f32 to vector<8x128xf32>
    %366 = arith.addf %364, %365 : vector<8x128xf32>
    %367 = vector.extract_strided_slice %350 {offsets = [0, 256], sizes = [8, 128], strides = [1, 1]} : vector<8x512xf32> to vector<8x128xf32>
    %368 = math.tanh %367 : vector<8x128xf32>
    %369 = vector.extract_strided_slice %350 {offsets = [0, 384], sizes = [8, 128], strides = [1, 1]} : vector<8x512xf32> to vector<8x128xf32>
    %cst_128 = arith.constant 5.000000e-01 : f32
    %370 = vector.broadcast %cst_128 : f32 to vector<8x128xf32>
    %371 = arith.mulf %370, %369 : vector<8x128xf32>
    %372 = math.tanh %371 : vector<8x128xf32>
    %cst_129 = arith.constant 5.000000e-01 : f32
    %373 = vector.broadcast %cst_129 : f32 to vector<8x128xf32>
    %374 = arith.mulf %373, %372 : vector<8x128xf32>
    %cst_130 = arith.constant 5.000000e-01 : f32
    %375 = vector.broadcast %cst_130 : f32 to vector<8x128xf32>
    %376 = arith.addf %374, %375 : vector<8x128xf32>
    %377 = arith.mulf %366, %337 : vector<8x128xf32>
    %378 = arith.mulf %358, %368 : vector<8x128xf32>
    %379 = arith.addf %377, %378 : vector<8x128xf32>
    %380 = math.tanh %379 : vector<8x128xf32>
    %381 = arith.mulf %376, %380 : vector<8x128xf32>
    %c9 = arith.constant 9 : index
    %c0_131 = arith.constant 0 : index
    %c0_132 = arith.constant 0 : index
    %382 = vector.load %arg0[%c9, %c0_131, %c0_132] : memref<30x8x1xf32, #tpu.memory_space<vmem>>, vector<1x8x1xf32>
    %383 = vector.shape_cast %382 : vector<1x8x1xf32> to vector<8x1xf32>
    %384 = vector.broadcast %383 : vector<8x1xf32> to vector<8x512xf32>
    %385 = vector.broadcast %0 : vector<1x512xf32> to vector<8x512xf32>
    %386 = arith.mulf %384, %385 : vector<8x512xf32>
    %387 = vector.broadcast %1 : vector<1x512xf32> to vector<8x512xf32>
    %388 = arith.addf %386, %387 : vector<8x512xf32>
    %389 = arith.truncf %381 : vector<8x128xf32> to vector<8x128xbf16>
    %c0_133 = arith.constant 0 : index
    %c0_134 = arith.constant 0 : index
    %390 = vector.load %arg3[%c0_133, %c0_134] : memref<128x512xbf16, #tpu.memory_space<vmem>>, vector<128x512xbf16>
    %cst_135 = arith.constant dense<0.000000e+00> : vector<8x512xf32>
    %391 = tpu.matmul %389, %390, %cst_135 {dimension_numbers = #tpu.dot_dimension_numbers<[1], [0], [0], [1], [0, 0, 1, 1], [], []>} : vector<8x128xbf16>, vector<128x512xbf16>, vector<8x512xf32> -> vector<8x512xf32>
    %392 = arith.addf %388, %391 : vector<8x512xf32>
    %393 = vector.extract_strided_slice %392 {offsets = [0, 0], sizes = [8, 128], strides = [1, 1]} : vector<8x512xf32> to vector<8x128xf32>
    %cst_136 = arith.constant 5.000000e-01 : f32
    %394 = vector.broadcast %cst_136 : f32 to vector<8x128xf32>
    %395 = arith.mulf %394, %393 : vector<8x128xf32>
    %396 = math.tanh %395 : vector<8x128xf32>
    %cst_137 = arith.constant 5.000000e-01 : f32
    %397 = vector.broadcast %cst_137 : f32 to vector<8x128xf32>
    %398 = arith.mulf %397, %396 : vector<8x128xf32>
    %cst_138 = arith.constant 5.000000e-01 : f32
    %399 = vector.broadcast %cst_138 : f32 to vector<8x128xf32>
    %400 = arith.addf %398, %399 : vector<8x128xf32>
    %401 = vector.extract_strided_slice %392 {offsets = [0, 128], sizes = [8, 128], strides = [1, 1]} : vector<8x512xf32> to vector<8x128xf32>
    %cst_139 = arith.constant 5.000000e-01 : f32
    %402 = vector.broadcast %cst_139 : f32 to vector<8x128xf32>
    %403 = arith.mulf %402, %401 : vector<8x128xf32>
    %404 = math.tanh %403 : vector<8x128xf32>
    %cst_140 = arith.constant 5.000000e-01 : f32
    %405 = vector.broadcast %cst_140 : f32 to vector<8x128xf32>
    %406 = arith.mulf %405, %404 : vector<8x128xf32>
    %cst_141 = arith.constant 5.000000e-01 : f32
    %407 = vector.broadcast %cst_141 : f32 to vector<8x128xf32>
    %408 = arith.addf %406, %407 : vector<8x128xf32>
    %409 = vector.extract_strided_slice %392 {offsets = [0, 256], sizes = [8, 128], strides = [1, 1]} : vector<8x512xf32> to vector<8x128xf32>
    %410 = math.tanh %409 : vector<8x128xf32>
    %411 = vector.extract_strided_slice %392 {offsets = [0, 384], sizes = [8, 128], strides = [1, 1]} : vector<8x512xf32> to vector<8x128xf32>
    %cst_142 = arith.constant 5.000000e-01 : f32
    %412 = vector.broadcast %cst_142 : f32 to vector<8x128xf32>
    %413 = arith.mulf %412, %411 : vector<8x128xf32>
    %414 = math.tanh %413 : vector<8x128xf32>
    %cst_143 = arith.constant 5.000000e-01 : f32
    %415 = vector.broadcast %cst_143 : f32 to vector<8x128xf32>
    %416 = arith.mulf %415, %414 : vector<8x128xf32>
    %cst_144 = arith.constant 5.000000e-01 : f32
    %417 = vector.broadcast %cst_144 : f32 to vector<8x128xf32>
    %418 = arith.addf %416, %417 : vector<8x128xf32>
    %419 = arith.mulf %408, %379 : vector<8x128xf32>
    %420 = arith.mulf %400, %410 : vector<8x128xf32>
    %421 = arith.addf %419, %420 : vector<8x128xf32>
    %422 = math.tanh %421 : vector<8x128xf32>
    %423 = arith.mulf %418, %422 : vector<8x128xf32>
    %c10 = arith.constant 10 : index
    %c0_145 = arith.constant 0 : index
    %c0_146 = arith.constant 0 : index
    %424 = vector.load %arg0[%c10, %c0_145, %c0_146] : memref<30x8x1xf32, #tpu.memory_space<vmem>>, vector<1x8x1xf32>
    %425 = vector.shape_cast %424 : vector<1x8x1xf32> to vector<8x1xf32>
    %426 = vector.broadcast %425 : vector<8x1xf32> to vector<8x512xf32>
    %427 = vector.broadcast %0 : vector<1x512xf32> to vector<8x512xf32>
    %428 = arith.mulf %426, %427 : vector<8x512xf32>
    %429 = vector.broadcast %1 : vector<1x512xf32> to vector<8x512xf32>
    %430 = arith.addf %428, %429 : vector<8x512xf32>
    %431 = arith.truncf %423 : vector<8x128xf32> to vector<8x128xbf16>
    %c0_147 = arith.constant 0 : index
    %c0_148 = arith.constant 0 : index
    %432 = vector.load %arg3[%c0_147, %c0_148] : memref<128x512xbf16, #tpu.memory_space<vmem>>, vector<128x512xbf16>
    %cst_149 = arith.constant dense<0.000000e+00> : vector<8x512xf32>
    %433 = tpu.matmul %431, %432, %cst_149 {dimension_numbers = #tpu.dot_dimension_numbers<[1], [0], [0], [1], [0, 0, 1, 1], [], []>} : vector<8x128xbf16>, vector<128x512xbf16>, vector<8x512xf32> -> vector<8x512xf32>
    %434 = arith.addf %430, %433 : vector<8x512xf32>
    %435 = vector.extract_strided_slice %434 {offsets = [0, 0], sizes = [8, 128], strides = [1, 1]} : vector<8x512xf32> to vector<8x128xf32>
    %cst_150 = arith.constant 5.000000e-01 : f32
    %436 = vector.broadcast %cst_150 : f32 to vector<8x128xf32>
    %437 = arith.mulf %436, %435 : vector<8x128xf32>
    %438 = math.tanh %437 : vector<8x128xf32>
    %cst_151 = arith.constant 5.000000e-01 : f32
    %439 = vector.broadcast %cst_151 : f32 to vector<8x128xf32>
    %440 = arith.mulf %439, %438 : vector<8x128xf32>
    %cst_152 = arith.constant 5.000000e-01 : f32
    %441 = vector.broadcast %cst_152 : f32 to vector<8x128xf32>
    %442 = arith.addf %440, %441 : vector<8x128xf32>
    %443 = vector.extract_strided_slice %434 {offsets = [0, 128], sizes = [8, 128], strides = [1, 1]} : vector<8x512xf32> to vector<8x128xf32>
    %cst_153 = arith.constant 5.000000e-01 : f32
    %444 = vector.broadcast %cst_153 : f32 to vector<8x128xf32>
    %445 = arith.mulf %444, %443 : vector<8x128xf32>
    %446 = math.tanh %445 : vector<8x128xf32>
    %cst_154 = arith.constant 5.000000e-01 : f32
    %447 = vector.broadcast %cst_154 : f32 to vector<8x128xf32>
    %448 = arith.mulf %447, %446 : vector<8x128xf32>
    %cst_155 = arith.constant 5.000000e-01 : f32
    %449 = vector.broadcast %cst_155 : f32 to vector<8x128xf32>
    %450 = arith.addf %448, %449 : vector<8x128xf32>
    %451 = vector.extract_strided_slice %434 {offsets = [0, 256], sizes = [8, 128], strides = [1, 1]} : vector<8x512xf32> to vector<8x128xf32>
    %452 = math.tanh %451 : vector<8x128xf32>
    %453 = vector.extract_strided_slice %434 {offsets = [0, 384], sizes = [8, 128], strides = [1, 1]} : vector<8x512xf32> to vector<8x128xf32>
    %cst_156 = arith.constant 5.000000e-01 : f32
    %454 = vector.broadcast %cst_156 : f32 to vector<8x128xf32>
    %455 = arith.mulf %454, %453 : vector<8x128xf32>
    %456 = math.tanh %455 : vector<8x128xf32>
    %cst_157 = arith.constant 5.000000e-01 : f32
    %457 = vector.broadcast %cst_157 : f32 to vector<8x128xf32>
    %458 = arith.mulf %457, %456 : vector<8x128xf32>
    %cst_158 = arith.constant 5.000000e-01 : f32
    %459 = vector.broadcast %cst_158 : f32 to vector<8x128xf32>
    %460 = arith.addf %458, %459 : vector<8x128xf32>
    %461 = arith.mulf %450, %421 : vector<8x128xf32>
    %462 = arith.mulf %442, %452 : vector<8x128xf32>
    %463 = arith.addf %461, %462 : vector<8x128xf32>
    %464 = math.tanh %463 : vector<8x128xf32>
    %465 = arith.mulf %460, %464 : vector<8x128xf32>
    %c11 = arith.constant 11 : index
    %c0_159 = arith.constant 0 : index
    %c0_160 = arith.constant 0 : index
    %466 = vector.load %arg0[%c11, %c0_159, %c0_160] : memref<30x8x1xf32, #tpu.memory_space<vmem>>, vector<1x8x1xf32>
    %467 = vector.shape_cast %466 : vector<1x8x1xf32> to vector<8x1xf32>
    %468 = vector.broadcast %467 : vector<8x1xf32> to vector<8x512xf32>
    %469 = vector.broadcast %0 : vector<1x512xf32> to vector<8x512xf32>
    %470 = arith.mulf %468, %469 : vector<8x512xf32>
    %471 = vector.broadcast %1 : vector<1x512xf32> to vector<8x512xf32>
    %472 = arith.addf %470, %471 : vector<8x512xf32>
    %473 = arith.truncf %465 : vector<8x128xf32> to vector<8x128xbf16>
    %c0_161 = arith.constant 0 : index
    %c0_162 = arith.constant 0 : index
    %474 = vector.load %arg3[%c0_161, %c0_162] : memref<128x512xbf16, #tpu.memory_space<vmem>>, vector<128x512xbf16>
    %cst_163 = arith.constant dense<0.000000e+00> : vector<8x512xf32>
    %475 = tpu.matmul %473, %474, %cst_163 {dimension_numbers = #tpu.dot_dimension_numbers<[1], [0], [0], [1], [0, 0, 1, 1], [], []>} : vector<8x128xbf16>, vector<128x512xbf16>, vector<8x512xf32> -> vector<8x512xf32>
    %476 = arith.addf %472, %475 : vector<8x512xf32>
    %477 = vector.extract_strided_slice %476 {offsets = [0, 0], sizes = [8, 128], strides = [1, 1]} : vector<8x512xf32> to vector<8x128xf32>
    %cst_164 = arith.constant 5.000000e-01 : f32
    %478 = vector.broadcast %cst_164 : f32 to vector<8x128xf32>
    %479 = arith.mulf %478, %477 : vector<8x128xf32>
    %480 = math.tanh %479 : vector<8x128xf32>
    %cst_165 = arith.constant 5.000000e-01 : f32
    %481 = vector.broadcast %cst_165 : f32 to vector<8x128xf32>
    %482 = arith.mulf %481, %480 : vector<8x128xf32>
    %cst_166 = arith.constant 5.000000e-01 : f32
    %483 = vector.broadcast %cst_166 : f32 to vector<8x128xf32>
    %484 = arith.addf %482, %483 : vector<8x128xf32>
    %485 = vector.extract_strided_slice %476 {offsets = [0, 128], sizes = [8, 128], strides = [1, 1]} : vector<8x512xf32> to vector<8x128xf32>
    %cst_167 = arith.constant 5.000000e-01 : f32
    %486 = vector.broadcast %cst_167 : f32 to vector<8x128xf32>
    %487 = arith.mulf %486, %485 : vector<8x128xf32>
    %488 = math.tanh %487 : vector<8x128xf32>
    %cst_168 = arith.constant 5.000000e-01 : f32
    %489 = vector.broadcast %cst_168 : f32 to vector<8x128xf32>
    %490 = arith.mulf %489, %488 : vector<8x128xf32>
    %cst_169 = arith.constant 5.000000e-01 : f32
    %491 = vector.broadcast %cst_169 : f32 to vector<8x128xf32>
    %492 = arith.addf %490, %491 : vector<8x128xf32>
    %493 = vector.extract_strided_slice %476 {offsets = [0, 256], sizes = [8, 128], strides = [1, 1]} : vector<8x512xf32> to vector<8x128xf32>
    %494 = math.tanh %493 : vector<8x128xf32>
    %495 = vector.extract_strided_slice %476 {offsets = [0, 384], sizes = [8, 128], strides = [1, 1]} : vector<8x512xf32> to vector<8x128xf32>
    %cst_170 = arith.constant 5.000000e-01 : f32
    %496 = vector.broadcast %cst_170 : f32 to vector<8x128xf32>
    %497 = arith.mulf %496, %495 : vector<8x128xf32>
    %498 = math.tanh %497 : vector<8x128xf32>
    %cst_171 = arith.constant 5.000000e-01 : f32
    %499 = vector.broadcast %cst_171 : f32 to vector<8x128xf32>
    %500 = arith.mulf %499, %498 : vector<8x128xf32>
    %cst_172 = arith.constant 5.000000e-01 : f32
    %501 = vector.broadcast %cst_172 : f32 to vector<8x128xf32>
    %502 = arith.addf %500, %501 : vector<8x128xf32>
    %503 = arith.mulf %492, %463 : vector<8x128xf32>
    %504 = arith.mulf %484, %494 : vector<8x128xf32>
    %505 = arith.addf %503, %504 : vector<8x128xf32>
    %506 = math.tanh %505 : vector<8x128xf32>
    %507 = arith.mulf %502, %506 : vector<8x128xf32>
    %c12 = arith.constant 12 : index
    %c0_173 = arith.constant 0 : index
    %c0_174 = arith.constant 0 : index
    %508 = vector.load %arg0[%c12, %c0_173, %c0_174] : memref<30x8x1xf32, #tpu.memory_space<vmem>>, vector<1x8x1xf32>
    %509 = vector.shape_cast %508 : vector<1x8x1xf32> to vector<8x1xf32>
    %510 = vector.broadcast %509 : vector<8x1xf32> to vector<8x512xf32>
    %511 = vector.broadcast %0 : vector<1x512xf32> to vector<8x512xf32>
    %512 = arith.mulf %510, %511 : vector<8x512xf32>
    %513 = vector.broadcast %1 : vector<1x512xf32> to vector<8x512xf32>
    %514 = arith.addf %512, %513 : vector<8x512xf32>
    %515 = arith.truncf %507 : vector<8x128xf32> to vector<8x128xbf16>
    %c0_175 = arith.constant 0 : index
    %c0_176 = arith.constant 0 : index
    %516 = vector.load %arg3[%c0_175, %c0_176] : memref<128x512xbf16, #tpu.memory_space<vmem>>, vector<128x512xbf16>
    %cst_177 = arith.constant dense<0.000000e+00> : vector<8x512xf32>
    %517 = tpu.matmul %515, %516, %cst_177 {dimension_numbers = #tpu.dot_dimension_numbers<[1], [0], [0], [1], [0, 0, 1, 1], [], []>} : vector<8x128xbf16>, vector<128x512xbf16>, vector<8x512xf32> -> vector<8x512xf32>
    %518 = arith.addf %514, %517 : vector<8x512xf32>
    %519 = vector.extract_strided_slice %518 {offsets = [0, 0], sizes = [8, 128], strides = [1, 1]} : vector<8x512xf32> to vector<8x128xf32>
    %cst_178 = arith.constant 5.000000e-01 : f32
    %520 = vector.broadcast %cst_178 : f32 to vector<8x128xf32>
    %521 = arith.mulf %520, %519 : vector<8x128xf32>
    %522 = math.tanh %521 : vector<8x128xf32>
    %cst_179 = arith.constant 5.000000e-01 : f32
    %523 = vector.broadcast %cst_179 : f32 to vector<8x128xf32>
    %524 = arith.mulf %523, %522 : vector<8x128xf32>
    %cst_180 = arith.constant 5.000000e-01 : f32
    %525 = vector.broadcast %cst_180 : f32 to vector<8x128xf32>
    %526 = arith.addf %524, %525 : vector<8x128xf32>
    %527 = vector.extract_strided_slice %518 {offsets = [0, 128], sizes = [8, 128], strides = [1, 1]} : vector<8x512xf32> to vector<8x128xf32>
    %cst_181 = arith.constant 5.000000e-01 : f32
    %528 = vector.broadcast %cst_181 : f32 to vector<8x128xf32>
    %529 = arith.mulf %528, %527 : vector<8x128xf32>
    %530 = math.tanh %529 : vector<8x128xf32>
    %cst_182 = arith.constant 5.000000e-01 : f32
    %531 = vector.broadcast %cst_182 : f32 to vector<8x128xf32>
    %532 = arith.mulf %531, %530 : vector<8x128xf32>
    %cst_183 = arith.constant 5.000000e-01 : f32
    %533 = vector.broadcast %cst_183 : f32 to vector<8x128xf32>
    %534 = arith.addf %532, %533 : vector<8x128xf32>
    %535 = vector.extract_strided_slice %518 {offsets = [0, 256], sizes = [8, 128], strides = [1, 1]} : vector<8x512xf32> to vector<8x128xf32>
    %536 = math.tanh %535 : vector<8x128xf32>
    %537 = vector.extract_strided_slice %518 {offsets = [0, 384], sizes = [8, 128], strides = [1, 1]} : vector<8x512xf32> to vector<8x128xf32>
    %cst_184 = arith.constant 5.000000e-01 : f32
    %538 = vector.broadcast %cst_184 : f32 to vector<8x128xf32>
    %539 = arith.mulf %538, %537 : vector<8x128xf32>
    %540 = math.tanh %539 : vector<8x128xf32>
    %cst_185 = arith.constant 5.000000e-01 : f32
    %541 = vector.broadcast %cst_185 : f32 to vector<8x128xf32>
    %542 = arith.mulf %541, %540 : vector<8x128xf32>
    %cst_186 = arith.constant 5.000000e-01 : f32
    %543 = vector.broadcast %cst_186 : f32 to vector<8x128xf32>
    %544 = arith.addf %542, %543 : vector<8x128xf32>
    %545 = arith.mulf %534, %505 : vector<8x128xf32>
    %546 = arith.mulf %526, %536 : vector<8x128xf32>
    %547 = arith.addf %545, %546 : vector<8x128xf32>
    %548 = math.tanh %547 : vector<8x128xf32>
    %549 = arith.mulf %544, %548 : vector<8x128xf32>
    %c13 = arith.constant 13 : index
    %c0_187 = arith.constant 0 : index
    %c0_188 = arith.constant 0 : index
    %550 = vector.load %arg0[%c13, %c0_187, %c0_188] : memref<30x8x1xf32, #tpu.memory_space<vmem>>, vector<1x8x1xf32>
    %551 = vector.shape_cast %550 : vector<1x8x1xf32> to vector<8x1xf32>
    %552 = vector.broadcast %551 : vector<8x1xf32> to vector<8x512xf32>
    %553 = vector.broadcast %0 : vector<1x512xf32> to vector<8x512xf32>
    %554 = arith.mulf %552, %553 : vector<8x512xf32>
    %555 = vector.broadcast %1 : vector<1x512xf32> to vector<8x512xf32>
    %556 = arith.addf %554, %555 : vector<8x512xf32>
    %557 = arith.truncf %549 : vector<8x128xf32> to vector<8x128xbf16>
    %c0_189 = arith.constant 0 : index
    %c0_190 = arith.constant 0 : index
    %558 = vector.load %arg3[%c0_189, %c0_190] : memref<128x512xbf16, #tpu.memory_space<vmem>>, vector<128x512xbf16>
    %cst_191 = arith.constant dense<0.000000e+00> : vector<8x512xf32>
    %559 = tpu.matmul %557, %558, %cst_191 {dimension_numbers = #tpu.dot_dimension_numbers<[1], [0], [0], [1], [0, 0, 1, 1], [], []>} : vector<8x128xbf16>, vector<128x512xbf16>, vector<8x512xf32> -> vector<8x512xf32>
    %560 = arith.addf %556, %559 : vector<8x512xf32>
    %561 = vector.extract_strided_slice %560 {offsets = [0, 0], sizes = [8, 128], strides = [1, 1]} : vector<8x512xf32> to vector<8x128xf32>
    %cst_192 = arith.constant 5.000000e-01 : f32
    %562 = vector.broadcast %cst_192 : f32 to vector<8x128xf32>
    %563 = arith.mulf %562, %561 : vector<8x128xf32>
    %564 = math.tanh %563 : vector<8x128xf32>
    %cst_193 = arith.constant 5.000000e-01 : f32
    %565 = vector.broadcast %cst_193 : f32 to vector<8x128xf32>
    %566 = arith.mulf %565, %564 : vector<8x128xf32>
    %cst_194 = arith.constant 5.000000e-01 : f32
    %567 = vector.broadcast %cst_194 : f32 to vector<8x128xf32>
    %568 = arith.addf %566, %567 : vector<8x128xf32>
    %569 = vector.extract_strided_slice %560 {offsets = [0, 128], sizes = [8, 128], strides = [1, 1]} : vector<8x512xf32> to vector<8x128xf32>
    %cst_195 = arith.constant 5.000000e-01 : f32
    %570 = vector.broadcast %cst_195 : f32 to vector<8x128xf32>
    %571 = arith.mulf %570, %569 : vector<8x128xf32>
    %572 = math.tanh %571 : vector<8x128xf32>
    %cst_196 = arith.constant 5.000000e-01 : f32
    %573 = vector.broadcast %cst_196 : f32 to vector<8x128xf32>
    %574 = arith.mulf %573, %572 : vector<8x128xf32>
    %cst_197 = arith.constant 5.000000e-01 : f32
    %575 = vector.broadcast %cst_197 : f32 to vector<8x128xf32>
    %576 = arith.addf %574, %575 : vector<8x128xf32>
    %577 = vector.extract_strided_slice %560 {offsets = [0, 256], sizes = [8, 128], strides = [1, 1]} : vector<8x512xf32> to vector<8x128xf32>
    %578 = math.tanh %577 : vector<8x128xf32>
    %579 = vector.extract_strided_slice %560 {offsets = [0, 384], sizes = [8, 128], strides = [1, 1]} : vector<8x512xf32> to vector<8x128xf32>
    %cst_198 = arith.constant 5.000000e-01 : f32
    %580 = vector.broadcast %cst_198 : f32 to vector<8x128xf32>
    %581 = arith.mulf %580, %579 : vector<8x128xf32>
    %582 = math.tanh %581 : vector<8x128xf32>
    %cst_199 = arith.constant 5.000000e-01 : f32
    %583 = vector.broadcast %cst_199 : f32 to vector<8x128xf32>
    %584 = arith.mulf %583, %582 : vector<8x128xf32>
    %cst_200 = arith.constant 5.000000e-01 : f32
    %585 = vector.broadcast %cst_200 : f32 to vector<8x128xf32>
    %586 = arith.addf %584, %585 : vector<8x128xf32>
    %587 = arith.mulf %576, %547 : vector<8x128xf32>
    %588 = arith.mulf %568, %578 : vector<8x128xf32>
    %589 = arith.addf %587, %588 : vector<8x128xf32>
    %590 = math.tanh %589 : vector<8x128xf32>
    %591 = arith.mulf %586, %590 : vector<8x128xf32>
    %c14 = arith.constant 14 : index
    %c0_201 = arith.constant 0 : index
    %c0_202 = arith.constant 0 : index
    %592 = vector.load %arg0[%c14, %c0_201, %c0_202] : memref<30x8x1xf32, #tpu.memory_space<vmem>>, vector<1x8x1xf32>
    %593 = vector.shape_cast %592 : vector<1x8x1xf32> to vector<8x1xf32>
    %594 = vector.broadcast %593 : vector<8x1xf32> to vector<8x512xf32>
    %595 = vector.broadcast %0 : vector<1x512xf32> to vector<8x512xf32>
    %596 = arith.mulf %594, %595 : vector<8x512xf32>
    %597 = vector.broadcast %1 : vector<1x512xf32> to vector<8x512xf32>
    %598 = arith.addf %596, %597 : vector<8x512xf32>
    %599 = arith.truncf %591 : vector<8x128xf32> to vector<8x128xbf16>
    %c0_203 = arith.constant 0 : index
    %c0_204 = arith.constant 0 : index
    %600 = vector.load %arg3[%c0_203, %c0_204] : memref<128x512xbf16, #tpu.memory_space<vmem>>, vector<128x512xbf16>
    %cst_205 = arith.constant dense<0.000000e+00> : vector<8x512xf32>
    %601 = tpu.matmul %599, %600, %cst_205 {dimension_numbers = #tpu.dot_dimension_numbers<[1], [0], [0], [1], [0, 0, 1, 1], [], []>} : vector<8x128xbf16>, vector<128x512xbf16>, vector<8x512xf32> -> vector<8x512xf32>
    %602 = arith.addf %598, %601 : vector<8x512xf32>
    %603 = vector.extract_strided_slice %602 {offsets = [0, 0], sizes = [8, 128], strides = [1, 1]} : vector<8x512xf32> to vector<8x128xf32>
    %cst_206 = arith.constant 5.000000e-01 : f32
    %604 = vector.broadcast %cst_206 : f32 to vector<8x128xf32>
    %605 = arith.mulf %604, %603 : vector<8x128xf32>
    %606 = math.tanh %605 : vector<8x128xf32>
    %cst_207 = arith.constant 5.000000e-01 : f32
    %607 = vector.broadcast %cst_207 : f32 to vector<8x128xf32>
    %608 = arith.mulf %607, %606 : vector<8x128xf32>
    %cst_208 = arith.constant 5.000000e-01 : f32
    %609 = vector.broadcast %cst_208 : f32 to vector<8x128xf32>
    %610 = arith.addf %608, %609 : vector<8x128xf32>
    %611 = vector.extract_strided_slice %602 {offsets = [0, 128], sizes = [8, 128], strides = [1, 1]} : vector<8x512xf32> to vector<8x128xf32>
    %cst_209 = arith.constant 5.000000e-01 : f32
    %612 = vector.broadcast %cst_209 : f32 to vector<8x128xf32>
    %613 = arith.mulf %612, %611 : vector<8x128xf32>
    %614 = math.tanh %613 : vector<8x128xf32>
    %cst_210 = arith.constant 5.000000e-01 : f32
    %615 = vector.broadcast %cst_210 : f32 to vector<8x128xf32>
    %616 = arith.mulf %615, %614 : vector<8x128xf32>
    %cst_211 = arith.constant 5.000000e-01 : f32
    %617 = vector.broadcast %cst_211 : f32 to vector<8x128xf32>
    %618 = arith.addf %616, %617 : vector<8x128xf32>
    %619 = vector.extract_strided_slice %602 {offsets = [0, 256], sizes = [8, 128], strides = [1, 1]} : vector<8x512xf32> to vector<8x128xf32>
    %620 = math.tanh %619 : vector<8x128xf32>
    %621 = vector.extract_strided_slice %602 {offsets = [0, 384], sizes = [8, 128], strides = [1, 1]} : vector<8x512xf32> to vector<8x128xf32>
    %cst_212 = arith.constant 5.000000e-01 : f32
    %622 = vector.broadcast %cst_212 : f32 to vector<8x128xf32>
    %623 = arith.mulf %622, %621 : vector<8x128xf32>
    %624 = math.tanh %623 : vector<8x128xf32>
    %cst_213 = arith.constant 5.000000e-01 : f32
    %625 = vector.broadcast %cst_213 : f32 to vector<8x128xf32>
    %626 = arith.mulf %625, %624 : vector<8x128xf32>
    %cst_214 = arith.constant 5.000000e-01 : f32
    %627 = vector.broadcast %cst_214 : f32 to vector<8x128xf32>
    %628 = arith.addf %626, %627 : vector<8x128xf32>
    %629 = arith.mulf %618, %589 : vector<8x128xf32>
    %630 = arith.mulf %610, %620 : vector<8x128xf32>
    %631 = arith.addf %629, %630 : vector<8x128xf32>
    %632 = math.tanh %631 : vector<8x128xf32>
    %633 = arith.mulf %628, %632 : vector<8x128xf32>
    %c15 = arith.constant 15 : index
    %c0_215 = arith.constant 0 : index
    %c0_216 = arith.constant 0 : index
    %634 = vector.load %arg0[%c15, %c0_215, %c0_216] : memref<30x8x1xf32, #tpu.memory_space<vmem>>, vector<1x8x1xf32>
    %635 = vector.shape_cast %634 : vector<1x8x1xf32> to vector<8x1xf32>
    %636 = vector.broadcast %635 : vector<8x1xf32> to vector<8x512xf32>
    %637 = vector.broadcast %0 : vector<1x512xf32> to vector<8x512xf32>
    %638 = arith.mulf %636, %637 : vector<8x512xf32>
    %639 = vector.broadcast %1 : vector<1x512xf32> to vector<8x512xf32>
    %640 = arith.addf %638, %639 : vector<8x512xf32>
    %641 = arith.truncf %633 : vector<8x128xf32> to vector<8x128xbf16>
    %c0_217 = arith.constant 0 : index
    %c0_218 = arith.constant 0 : index
    %642 = vector.load %arg3[%c0_217, %c0_218] : memref<128x512xbf16, #tpu.memory_space<vmem>>, vector<128x512xbf16>
    %cst_219 = arith.constant dense<0.000000e+00> : vector<8x512xf32>
    %643 = tpu.matmul %641, %642, %cst_219 {dimension_numbers = #tpu.dot_dimension_numbers<[1], [0], [0], [1], [0, 0, 1, 1], [], []>} : vector<8x128xbf16>, vector<128x512xbf16>, vector<8x512xf32> -> vector<8x512xf32>
    %644 = arith.addf %640, %643 : vector<8x512xf32>
    %645 = vector.extract_strided_slice %644 {offsets = [0, 0], sizes = [8, 128], strides = [1, 1]} : vector<8x512xf32> to vector<8x128xf32>
    %cst_220 = arith.constant 5.000000e-01 : f32
    %646 = vector.broadcast %cst_220 : f32 to vector<8x128xf32>
    %647 = arith.mulf %646, %645 : vector<8x128xf32>
    %648 = math.tanh %647 : vector<8x128xf32>
    %cst_221 = arith.constant 5.000000e-01 : f32
    %649 = vector.broadcast %cst_221 : f32 to vector<8x128xf32>
    %650 = arith.mulf %649, %648 : vector<8x128xf32>
    %cst_222 = arith.constant 5.000000e-01 : f32
    %651 = vector.broadcast %cst_222 : f32 to vector<8x128xf32>
    %652 = arith.addf %650, %651 : vector<8x128xf32>
    %653 = vector.extract_strided_slice %644 {offsets = [0, 128], sizes = [8, 128], strides = [1, 1]} : vector<8x512xf32> to vector<8x128xf32>
    %cst_223 = arith.constant 5.000000e-01 : f32
    %654 = vector.broadcast %cst_223 : f32 to vector<8x128xf32>
    %655 = arith.mulf %654, %653 : vector<8x128xf32>
    %656 = math.tanh %655 : vector<8x128xf32>
    %cst_224 = arith.constant 5.000000e-01 : f32
    %657 = vector.broadcast %cst_224 : f32 to vector<8x128xf32>
    %658 = arith.mulf %657, %656 : vector<8x128xf32>
    %cst_225 = arith.constant 5.000000e-01 : f32
    %659 = vector.broadcast %cst_225 : f32 to vector<8x128xf32>
    %660 = arith.addf %658, %659 : vector<8x128xf32>
    %661 = vector.extract_strided_slice %644 {offsets = [0, 256], sizes = [8, 128], strides = [1, 1]} : vector<8x512xf32> to vector<8x128xf32>
    %662 = math.tanh %661 : vector<8x128xf32>
    %663 = vector.extract_strided_slice %644 {offsets = [0, 384], sizes = [8, 128], strides = [1, 1]} : vector<8x512xf32> to vector<8x128xf32>
    %cst_226 = arith.constant 5.000000e-01 : f32
    %664 = vector.broadcast %cst_226 : f32 to vector<8x128xf32>
    %665 = arith.mulf %664, %663 : vector<8x128xf32>
    %666 = math.tanh %665 : vector<8x128xf32>
    %cst_227 = arith.constant 5.000000e-01 : f32
    %667 = vector.broadcast %cst_227 : f32 to vector<8x128xf32>
    %668 = arith.mulf %667, %666 : vector<8x128xf32>
    %cst_228 = arith.constant 5.000000e-01 : f32
    %669 = vector.broadcast %cst_228 : f32 to vector<8x128xf32>
    %670 = arith.addf %668, %669 : vector<8x128xf32>
    %671 = arith.mulf %660, %631 : vector<8x128xf32>
    %672 = arith.mulf %652, %662 : vector<8x128xf32>
    %673 = arith.addf %671, %672 : vector<8x128xf32>
    %674 = math.tanh %673 : vector<8x128xf32>
    %675 = arith.mulf %670, %674 : vector<8x128xf32>
    %c16 = arith.constant 16 : index
    %c0_229 = arith.constant 0 : index
    %c0_230 = arith.constant 0 : index
    %676 = vector.load %arg0[%c16, %c0_229, %c0_230] : memref<30x8x1xf32, #tpu.memory_space<vmem>>, vector<1x8x1xf32>
    %677 = vector.shape_cast %676 : vector<1x8x1xf32> to vector<8x1xf32>
    %678 = vector.broadcast %677 : vector<8x1xf32> to vector<8x512xf32>
    %679 = vector.broadcast %0 : vector<1x512xf32> to vector<8x512xf32>
    %680 = arith.mulf %678, %679 : vector<8x512xf32>
    %681 = vector.broadcast %1 : vector<1x512xf32> to vector<8x512xf32>
    %682 = arith.addf %680, %681 : vector<8x512xf32>
    %683 = arith.truncf %675 : vector<8x128xf32> to vector<8x128xbf16>
    %c0_231 = arith.constant 0 : index
    %c0_232 = arith.constant 0 : index
    %684 = vector.load %arg3[%c0_231, %c0_232] : memref<128x512xbf16, #tpu.memory_space<vmem>>, vector<128x512xbf16>
    %cst_233 = arith.constant dense<0.000000e+00> : vector<8x512xf32>
    %685 = tpu.matmul %683, %684, %cst_233 {dimension_numbers = #tpu.dot_dimension_numbers<[1], [0], [0], [1], [0, 0, 1, 1], [], []>} : vector<8x128xbf16>, vector<128x512xbf16>, vector<8x512xf32> -> vector<8x512xf32>
    %686 = arith.addf %682, %685 : vector<8x512xf32>
    %687 = vector.extract_strided_slice %686 {offsets = [0, 0], sizes = [8, 128], strides = [1, 1]} : vector<8x512xf32> to vector<8x128xf32>
    %cst_234 = arith.constant 5.000000e-01 : f32
    %688 = vector.broadcast %cst_234 : f32 to vector<8x128xf32>
    %689 = arith.mulf %688, %687 : vector<8x128xf32>
    %690 = math.tanh %689 : vector<8x128xf32>
    %cst_235 = arith.constant 5.000000e-01 : f32
    %691 = vector.broadcast %cst_235 : f32 to vector<8x128xf32>
    %692 = arith.mulf %691, %690 : vector<8x128xf32>
    %cst_236 = arith.constant 5.000000e-01 : f32
    %693 = vector.broadcast %cst_236 : f32 to vector<8x128xf32>
    %694 = arith.addf %692, %693 : vector<8x128xf32>
    %695 = vector.extract_strided_slice %686 {offsets = [0, 128], sizes = [8, 128], strides = [1, 1]} : vector<8x512xf32> to vector<8x128xf32>
    %cst_237 = arith.constant 5.000000e-01 : f32
    %696 = vector.broadcast %cst_237 : f32 to vector<8x128xf32>
    %697 = arith.mulf %696, %695 : vector<8x128xf32>
    %698 = math.tanh %697 : vector<8x128xf32>
    %cst_238 = arith.constant 5.000000e-01 : f32
    %699 = vector.broadcast %cst_238 : f32 to vector<8x128xf32>
    %700 = arith.mulf %699, %698 : vector<8x128xf32>
    %cst_239 = arith.constant 5.000000e-01 : f32
    %701 = vector.broadcast %cst_239 : f32 to vector<8x128xf32>
    %702 = arith.addf %700, %701 : vector<8x128xf32>
    %703 = vector.extract_strided_slice %686 {offsets = [0, 256], sizes = [8, 128], strides = [1, 1]} : vector<8x512xf32> to vector<8x128xf32>
    %704 = math.tanh %703 : vector<8x128xf32>
    %705 = vector.extract_strided_slice %686 {offsets = [0, 384], sizes = [8, 128], strides = [1, 1]} : vector<8x512xf32> to vector<8x128xf32>
    %cst_240 = arith.constant 5.000000e-01 : f32
    %706 = vector.broadcast %cst_240 : f32 to vector<8x128xf32>
    %707 = arith.mulf %706, %705 : vector<8x128xf32>
    %708 = math.tanh %707 : vector<8x128xf32>
    %cst_241 = arith.constant 5.000000e-01 : f32
    %709 = vector.broadcast %cst_241 : f32 to vector<8x128xf32>
    %710 = arith.mulf %709, %708 : vector<8x128xf32>
    %cst_242 = arith.constant 5.000000e-01 : f32
    %711 = vector.broadcast %cst_242 : f32 to vector<8x128xf32>
    %712 = arith.addf %710, %711 : vector<8x128xf32>
    %713 = arith.mulf %702, %673 : vector<8x128xf32>
    %714 = arith.mulf %694, %704 : vector<8x128xf32>
    %715 = arith.addf %713, %714 : vector<8x128xf32>
    %716 = math.tanh %715 : vector<8x128xf32>
    %717 = arith.mulf %712, %716 : vector<8x128xf32>
    %c17 = arith.constant 17 : index
    %c0_243 = arith.constant 0 : index
    %c0_244 = arith.constant 0 : index
    %718 = vector.load %arg0[%c17, %c0_243, %c0_244] : memref<30x8x1xf32, #tpu.memory_space<vmem>>, vector<1x8x1xf32>
    %719 = vector.shape_cast %718 : vector<1x8x1xf32> to vector<8x1xf32>
    %720 = vector.broadcast %719 : vector<8x1xf32> to vector<8x512xf32>
    %721 = vector.broadcast %0 : vector<1x512xf32> to vector<8x512xf32>
    %722 = arith.mulf %720, %721 : vector<8x512xf32>
    %723 = vector.broadcast %1 : vector<1x512xf32> to vector<8x512xf32>
    %724 = arith.addf %722, %723 : vector<8x512xf32>
    %725 = arith.truncf %717 : vector<8x128xf32> to vector<8x128xbf16>
    %c0_245 = arith.constant 0 : index
    %c0_246 = arith.constant 0 : index
    %726 = vector.load %arg3[%c0_245, %c0_246] : memref<128x512xbf16, #tpu.memory_space<vmem>>, vector<128x512xbf16>
    %cst_247 = arith.constant dense<0.000000e+00> : vector<8x512xf32>
    %727 = tpu.matmul %725, %726, %cst_247 {dimension_numbers = #tpu.dot_dimension_numbers<[1], [0], [0], [1], [0, 0, 1, 1], [], []>} : vector<8x128xbf16>, vector<128x512xbf16>, vector<8x512xf32> -> vector<8x512xf32>
    %728 = arith.addf %724, %727 : vector<8x512xf32>
    %729 = vector.extract_strided_slice %728 {offsets = [0, 0], sizes = [8, 128], strides = [1, 1]} : vector<8x512xf32> to vector<8x128xf32>
    %cst_248 = arith.constant 5.000000e-01 : f32
    %730 = vector.broadcast %cst_248 : f32 to vector<8x128xf32>
    %731 = arith.mulf %730, %729 : vector<8x128xf32>
    %732 = math.tanh %731 : vector<8x128xf32>
    %cst_249 = arith.constant 5.000000e-01 : f32
    %733 = vector.broadcast %cst_249 : f32 to vector<8x128xf32>
    %734 = arith.mulf %733, %732 : vector<8x128xf32>
    %cst_250 = arith.constant 5.000000e-01 : f32
    %735 = vector.broadcast %cst_250 : f32 to vector<8x128xf32>
    %736 = arith.addf %734, %735 : vector<8x128xf32>
    %737 = vector.extract_strided_slice %728 {offsets = [0, 128], sizes = [8, 128], strides = [1, 1]} : vector<8x512xf32> to vector<8x128xf32>
    %cst_251 = arith.constant 5.000000e-01 : f32
    %738 = vector.broadcast %cst_251 : f32 to vector<8x128xf32>
    %739 = arith.mulf %738, %737 : vector<8x128xf32>
    %740 = math.tanh %739 : vector<8x128xf32>
    %cst_252 = arith.constant 5.000000e-01 : f32
    %741 = vector.broadcast %cst_252 : f32 to vector<8x128xf32>
    %742 = arith.mulf %741, %740 : vector<8x128xf32>
    %cst_253 = arith.constant 5.000000e-01 : f32
    %743 = vector.broadcast %cst_253 : f32 to vector<8x128xf32>
    %744 = arith.addf %742, %743 : vector<8x128xf32>
    %745 = vector.extract_strided_slice %728 {offsets = [0, 256], sizes = [8, 128], strides = [1, 1]} : vector<8x512xf32> to vector<8x128xf32>
    %746 = math.tanh %745 : vector<8x128xf32>
    %747 = vector.extract_strided_slice %728 {offsets = [0, 384], sizes = [8, 128], strides = [1, 1]} : vector<8x512xf32> to vector<8x128xf32>
    %cst_254 = arith.constant 5.000000e-01 : f32
    %748 = vector.broadcast %cst_254 : f32 to vector<8x128xf32>
    %749 = arith.mulf %748, %747 : vector<8x128xf32>
    %750 = math.tanh %749 : vector<8x128xf32>
    %cst_255 = arith.constant 5.000000e-01 : f32
    %751 = vector.broadcast %cst_255 : f32 to vector<8x128xf32>
    %752 = arith.mulf %751, %750 : vector<8x128xf32>
    %cst_256 = arith.constant 5.000000e-01 : f32
    %753 = vector.broadcast %cst_256 : f32 to vector<8x128xf32>
    %754 = arith.addf %752, %753 : vector<8x128xf32>
    %755 = arith.mulf %744, %715 : vector<8x128xf32>
    %756 = arith.mulf %736, %746 : vector<8x128xf32>
    %757 = arith.addf %755, %756 : vector<8x128xf32>
    %758 = math.tanh %757 : vector<8x128xf32>
    %759 = arith.mulf %754, %758 : vector<8x128xf32>
    %c18 = arith.constant 18 : index
    %c0_257 = arith.constant 0 : index
    %c0_258 = arith.constant 0 : index
    %760 = vector.load %arg0[%c18, %c0_257, %c0_258] : memref<30x8x1xf32, #tpu.memory_space<vmem>>, vector<1x8x1xf32>
    %761 = vector.shape_cast %760 : vector<1x8x1xf32> to vector<8x1xf32>
    %762 = vector.broadcast %761 : vector<8x1xf32> to vector<8x512xf32>
    %763 = vector.broadcast %0 : vector<1x512xf32> to vector<8x512xf32>
    %764 = arith.mulf %762, %763 : vector<8x512xf32>
    %765 = vector.broadcast %1 : vector<1x512xf32> to vector<8x512xf32>
    %766 = arith.addf %764, %765 : vector<8x512xf32>
    %767 = arith.truncf %759 : vector<8x128xf32> to vector<8x128xbf16>
    %c0_259 = arith.constant 0 : index
    %c0_260 = arith.constant 0 : index
    %768 = vector.load %arg3[%c0_259, %c0_260] : memref<128x512xbf16, #tpu.memory_space<vmem>>, vector<128x512xbf16>
    %cst_261 = arith.constant dense<0.000000e+00> : vector<8x512xf32>
    %769 = tpu.matmul %767, %768, %cst_261 {dimension_numbers = #tpu.dot_dimension_numbers<[1], [0], [0], [1], [0, 0, 1, 1], [], []>} : vector<8x128xbf16>, vector<128x512xbf16>, vector<8x512xf32> -> vector<8x512xf32>
    %770 = arith.addf %766, %769 : vector<8x512xf32>
    %771 = vector.extract_strided_slice %770 {offsets = [0, 0], sizes = [8, 128], strides = [1, 1]} : vector<8x512xf32> to vector<8x128xf32>
    %cst_262 = arith.constant 5.000000e-01 : f32
    %772 = vector.broadcast %cst_262 : f32 to vector<8x128xf32>
    %773 = arith.mulf %772, %771 : vector<8x128xf32>
    %774 = math.tanh %773 : vector<8x128xf32>
    %cst_263 = arith.constant 5.000000e-01 : f32
    %775 = vector.broadcast %cst_263 : f32 to vector<8x128xf32>
    %776 = arith.mulf %775, %774 : vector<8x128xf32>
    %cst_264 = arith.constant 5.000000e-01 : f32
    %777 = vector.broadcast %cst_264 : f32 to vector<8x128xf32>
    %778 = arith.addf %776, %777 : vector<8x128xf32>
    %779 = vector.extract_strided_slice %770 {offsets = [0, 128], sizes = [8, 128], strides = [1, 1]} : vector<8x512xf32> to vector<8x128xf32>
    %cst_265 = arith.constant 5.000000e-01 : f32
    %780 = vector.broadcast %cst_265 : f32 to vector<8x128xf32>
    %781 = arith.mulf %780, %779 : vector<8x128xf32>
    %782 = math.tanh %781 : vector<8x128xf32>
    %cst_266 = arith.constant 5.000000e-01 : f32
    %783 = vector.broadcast %cst_266 : f32 to vector<8x128xf32>
    %784 = arith.mulf %783, %782 : vector<8x128xf32>
    %cst_267 = arith.constant 5.000000e-01 : f32
    %785 = vector.broadcast %cst_267 : f32 to vector<8x128xf32>
    %786 = arith.addf %784, %785 : vector<8x128xf32>
    %787 = vector.extract_strided_slice %770 {offsets = [0, 256], sizes = [8, 128], strides = [1, 1]} : vector<8x512xf32> to vector<8x128xf32>
    %788 = math.tanh %787 : vector<8x128xf32>
    %789 = vector.extract_strided_slice %770 {offsets = [0, 384], sizes = [8, 128], strides = [1, 1]} : vector<8x512xf32> to vector<8x128xf32>
    %cst_268 = arith.constant 5.000000e-01 : f32
    %790 = vector.broadcast %cst_268 : f32 to vector<8x128xf32>
    %791 = arith.mulf %790, %789 : vector<8x128xf32>
    %792 = math.tanh %791 : vector<8x128xf32>
    %cst_269 = arith.constant 5.000000e-01 : f32
    %793 = vector.broadcast %cst_269 : f32 to vector<8x128xf32>
    %794 = arith.mulf %793, %792 : vector<8x128xf32>
    %cst_270 = arith.constant 5.000000e-01 : f32
    %795 = vector.broadcast %cst_270 : f32 to vector<8x128xf32>
    %796 = arith.addf %794, %795 : vector<8x128xf32>
    %797 = arith.mulf %786, %757 : vector<8x128xf32>
    %798 = arith.mulf %778, %788 : vector<8x128xf32>
    %799 = arith.addf %797, %798 : vector<8x128xf32>
    %800 = math.tanh %799 : vector<8x128xf32>
    %801 = arith.mulf %796, %800 : vector<8x128xf32>
    %c19 = arith.constant 19 : index
    %c0_271 = arith.constant 0 : index
    %c0_272 = arith.constant 0 : index
    %802 = vector.load %arg0[%c19, %c0_271, %c0_272] : memref<30x8x1xf32, #tpu.memory_space<vmem>>, vector<1x8x1xf32>
    %803 = vector.shape_cast %802 : vector<1x8x1xf32> to vector<8x1xf32>
    %804 = vector.broadcast %803 : vector<8x1xf32> to vector<8x512xf32>
    %805 = vector.broadcast %0 : vector<1x512xf32> to vector<8x512xf32>
    %806 = arith.mulf %804, %805 : vector<8x512xf32>
    %807 = vector.broadcast %1 : vector<1x512xf32> to vector<8x512xf32>
    %808 = arith.addf %806, %807 : vector<8x512xf32>
    %809 = arith.truncf %801 : vector<8x128xf32> to vector<8x128xbf16>
    %c0_273 = arith.constant 0 : index
    %c0_274 = arith.constant 0 : index
    %810 = vector.load %arg3[%c0_273, %c0_274] : memref<128x512xbf16, #tpu.memory_space<vmem>>, vector<128x512xbf16>
    %cst_275 = arith.constant dense<0.000000e+00> : vector<8x512xf32>
    %811 = tpu.matmul %809, %810, %cst_275 {dimension_numbers = #tpu.dot_dimension_numbers<[1], [0], [0], [1], [0, 0, 1, 1], [], []>} : vector<8x128xbf16>, vector<128x512xbf16>, vector<8x512xf32> -> vector<8x512xf32>
    %812 = arith.addf %808, %811 : vector<8x512xf32>
    %813 = vector.extract_strided_slice %812 {offsets = [0, 0], sizes = [8, 128], strides = [1, 1]} : vector<8x512xf32> to vector<8x128xf32>
    %cst_276 = arith.constant 5.000000e-01 : f32
    %814 = vector.broadcast %cst_276 : f32 to vector<8x128xf32>
    %815 = arith.mulf %814, %813 : vector<8x128xf32>
    %816 = math.tanh %815 : vector<8x128xf32>
    %cst_277 = arith.constant 5.000000e-01 : f32
    %817 = vector.broadcast %cst_277 : f32 to vector<8x128xf32>
    %818 = arith.mulf %817, %816 : vector<8x128xf32>
    %cst_278 = arith.constant 5.000000e-01 : f32
    %819 = vector.broadcast %cst_278 : f32 to vector<8x128xf32>
    %820 = arith.addf %818, %819 : vector<8x128xf32>
    %821 = vector.extract_strided_slice %812 {offsets = [0, 128], sizes = [8, 128], strides = [1, 1]} : vector<8x512xf32> to vector<8x128xf32>
    %cst_279 = arith.constant 5.000000e-01 : f32
    %822 = vector.broadcast %cst_279 : f32 to vector<8x128xf32>
    %823 = arith.mulf %822, %821 : vector<8x128xf32>
    %824 = math.tanh %823 : vector<8x128xf32>
    %cst_280 = arith.constant 5.000000e-01 : f32
    %825 = vector.broadcast %cst_280 : f32 to vector<8x128xf32>
    %826 = arith.mulf %825, %824 : vector<8x128xf32>
    %cst_281 = arith.constant 5.000000e-01 : f32
    %827 = vector.broadcast %cst_281 : f32 to vector<8x128xf32>
    %828 = arith.addf %826, %827 : vector<8x128xf32>
    %829 = vector.extract_strided_slice %812 {offsets = [0, 256], sizes = [8, 128], strides = [1, 1]} : vector<8x512xf32> to vector<8x128xf32>
    %830 = math.tanh %829 : vector<8x128xf32>
    %831 = vector.extract_strided_slice %812 {offsets = [0, 384], sizes = [8, 128], strides = [1, 1]} : vector<8x512xf32> to vector<8x128xf32>
    %cst_282 = arith.constant 5.000000e-01 : f32
    %832 = vector.broadcast %cst_282 : f32 to vector<8x128xf32>
    %833 = arith.mulf %832, %831 : vector<8x128xf32>
    %834 = math.tanh %833 : vector<8x128xf32>
    %cst_283 = arith.constant 5.000000e-01 : f32
    %835 = vector.broadcast %cst_283 : f32 to vector<8x128xf32>
    %836 = arith.mulf %835, %834 : vector<8x128xf32>
    %cst_284 = arith.constant 5.000000e-01 : f32
    %837 = vector.broadcast %cst_284 : f32 to vector<8x128xf32>
    %838 = arith.addf %836, %837 : vector<8x128xf32>
    %839 = arith.mulf %828, %799 : vector<8x128xf32>
    %840 = arith.mulf %820, %830 : vector<8x128xf32>
    %841 = arith.addf %839, %840 : vector<8x128xf32>
    %842 = math.tanh %841 : vector<8x128xf32>
    %843 = arith.mulf %838, %842 : vector<8x128xf32>
    %c20 = arith.constant 20 : index
    %c0_285 = arith.constant 0 : index
    %c0_286 = arith.constant 0 : index
    %844 = vector.load %arg0[%c20, %c0_285, %c0_286] : memref<30x8x1xf32, #tpu.memory_space<vmem>>, vector<1x8x1xf32>
    %845 = vector.shape_cast %844 : vector<1x8x1xf32> to vector<8x1xf32>
    %846 = vector.broadcast %845 : vector<8x1xf32> to vector<8x512xf32>
    %847 = vector.broadcast %0 : vector<1x512xf32> to vector<8x512xf32>
    %848 = arith.mulf %846, %847 : vector<8x512xf32>
    %849 = vector.broadcast %1 : vector<1x512xf32> to vector<8x512xf32>
    %850 = arith.addf %848, %849 : vector<8x512xf32>
    %851 = arith.truncf %843 : vector<8x128xf32> to vector<8x128xbf16>
    %c0_287 = arith.constant 0 : index
    %c0_288 = arith.constant 0 : index
    %852 = vector.load %arg3[%c0_287, %c0_288] : memref<128x512xbf16, #tpu.memory_space<vmem>>, vector<128x512xbf16>
    %cst_289 = arith.constant dense<0.000000e+00> : vector<8x512xf32>
    %853 = tpu.matmul %851, %852, %cst_289 {dimension_numbers = #tpu.dot_dimension_numbers<[1], [0], [0], [1], [0, 0, 1, 1], [], []>} : vector<8x128xbf16>, vector<128x512xbf16>, vector<8x512xf32> -> vector<8x512xf32>
    %854 = arith.addf %850, %853 : vector<8x512xf32>
    %855 = vector.extract_strided_slice %854 {offsets = [0, 0], sizes = [8, 128], strides = [1, 1]} : vector<8x512xf32> to vector<8x128xf32>
    %cst_290 = arith.constant 5.000000e-01 : f32
    %856 = vector.broadcast %cst_290 : f32 to vector<8x128xf32>
    %857 = arith.mulf %856, %855 : vector<8x128xf32>
    %858 = math.tanh %857 : vector<8x128xf32>
    %cst_291 = arith.constant 5.000000e-01 : f32
    %859 = vector.broadcast %cst_291 : f32 to vector<8x128xf32>
    %860 = arith.mulf %859, %858 : vector<8x128xf32>
    %cst_292 = arith.constant 5.000000e-01 : f32
    %861 = vector.broadcast %cst_292 : f32 to vector<8x128xf32>
    %862 = arith.addf %860, %861 : vector<8x128xf32>
    %863 = vector.extract_strided_slice %854 {offsets = [0, 128], sizes = [8, 128], strides = [1, 1]} : vector<8x512xf32> to vector<8x128xf32>
    %cst_293 = arith.constant 5.000000e-01 : f32
    %864 = vector.broadcast %cst_293 : f32 to vector<8x128xf32>
    %865 = arith.mulf %864, %863 : vector<8x128xf32>
    %866 = math.tanh %865 : vector<8x128xf32>
    %cst_294 = arith.constant 5.000000e-01 : f32
    %867 = vector.broadcast %cst_294 : f32 to vector<8x128xf32>
    %868 = arith.mulf %867, %866 : vector<8x128xf32>
    %cst_295 = arith.constant 5.000000e-01 : f32
    %869 = vector.broadcast %cst_295 : f32 to vector<8x128xf32>
    %870 = arith.addf %868, %869 : vector<8x128xf32>
    %871 = vector.extract_strided_slice %854 {offsets = [0, 256], sizes = [8, 128], strides = [1, 1]} : vector<8x512xf32> to vector<8x128xf32>
    %872 = math.tanh %871 : vector<8x128xf32>
    %873 = vector.extract_strided_slice %854 {offsets = [0, 384], sizes = [8, 128], strides = [1, 1]} : vector<8x512xf32> to vector<8x128xf32>
    %cst_296 = arith.constant 5.000000e-01 : f32
    %874 = vector.broadcast %cst_296 : f32 to vector<8x128xf32>
    %875 = arith.mulf %874, %873 : vector<8x128xf32>
    %876 = math.tanh %875 : vector<8x128xf32>
    %cst_297 = arith.constant 5.000000e-01 : f32
    %877 = vector.broadcast %cst_297 : f32 to vector<8x128xf32>
    %878 = arith.mulf %877, %876 : vector<8x128xf32>
    %cst_298 = arith.constant 5.000000e-01 : f32
    %879 = vector.broadcast %cst_298 : f32 to vector<8x128xf32>
    %880 = arith.addf %878, %879 : vector<8x128xf32>
    %881 = arith.mulf %870, %841 : vector<8x128xf32>
    %882 = arith.mulf %862, %872 : vector<8x128xf32>
    %883 = arith.addf %881, %882 : vector<8x128xf32>
    %884 = math.tanh %883 : vector<8x128xf32>
    %885 = arith.mulf %880, %884 : vector<8x128xf32>
    %c21 = arith.constant 21 : index
    %c0_299 = arith.constant 0 : index
    %c0_300 = arith.constant 0 : index
    %886 = vector.load %arg0[%c21, %c0_299, %c0_300] : memref<30x8x1xf32, #tpu.memory_space<vmem>>, vector<1x8x1xf32>
    %887 = vector.shape_cast %886 : vector<1x8x1xf32> to vector<8x1xf32>
    %888 = vector.broadcast %887 : vector<8x1xf32> to vector<8x512xf32>
    %889 = vector.broadcast %0 : vector<1x512xf32> to vector<8x512xf32>
    %890 = arith.mulf %888, %889 : vector<8x512xf32>
    %891 = vector.broadcast %1 : vector<1x512xf32> to vector<8x512xf32>
    %892 = arith.addf %890, %891 : vector<8x512xf32>
    %893 = arith.truncf %885 : vector<8x128xf32> to vector<8x128xbf16>
    %c0_301 = arith.constant 0 : index
    %c0_302 = arith.constant 0 : index
    %894 = vector.load %arg3[%c0_301, %c0_302] : memref<128x512xbf16, #tpu.memory_space<vmem>>, vector<128x512xbf16>
    %cst_303 = arith.constant dense<0.000000e+00> : vector<8x512xf32>
    %895 = tpu.matmul %893, %894, %cst_303 {dimension_numbers = #tpu.dot_dimension_numbers<[1], [0], [0], [1], [0, 0, 1, 1], [], []>} : vector<8x128xbf16>, vector<128x512xbf16>, vector<8x512xf32> -> vector<8x512xf32>
    %896 = arith.addf %892, %895 : vector<8x512xf32>
    %897 = vector.extract_strided_slice %896 {offsets = [0, 0], sizes = [8, 128], strides = [1, 1]} : vector<8x512xf32> to vector<8x128xf32>
    %cst_304 = arith.constant 5.000000e-01 : f32
    %898 = vector.broadcast %cst_304 : f32 to vector<8x128xf32>
    %899 = arith.mulf %898, %897 : vector<8x128xf32>
    %900 = math.tanh %899 : vector<8x128xf32>
    %cst_305 = arith.constant 5.000000e-01 : f32
    %901 = vector.broadcast %cst_305 : f32 to vector<8x128xf32>
    %902 = arith.mulf %901, %900 : vector<8x128xf32>
    %cst_306 = arith.constant 5.000000e-01 : f32
    %903 = vector.broadcast %cst_306 : f32 to vector<8x128xf32>
    %904 = arith.addf %902, %903 : vector<8x128xf32>
    %905 = vector.extract_strided_slice %896 {offsets = [0, 128], sizes = [8, 128], strides = [1, 1]} : vector<8x512xf32> to vector<8x128xf32>
    %cst_307 = arith.constant 5.000000e-01 : f32
    %906 = vector.broadcast %cst_307 : f32 to vector<8x128xf32>
    %907 = arith.mulf %906, %905 : vector<8x128xf32>
    %908 = math.tanh %907 : vector<8x128xf32>
    %cst_308 = arith.constant 5.000000e-01 : f32
    %909 = vector.broadcast %cst_308 : f32 to vector<8x128xf32>
    %910 = arith.mulf %909, %908 : vector<8x128xf32>
    %cst_309 = arith.constant 5.000000e-01 : f32
    %911 = vector.broadcast %cst_309 : f32 to vector<8x128xf32>
    %912 = arith.addf %910, %911 : vector<8x128xf32>
    %913 = vector.extract_strided_slice %896 {offsets = [0, 256], sizes = [8, 128], strides = [1, 1]} : vector<8x512xf32> to vector<8x128xf32>
    %914 = math.tanh %913 : vector<8x128xf32>
    %915 = vector.extract_strided_slice %896 {offsets = [0, 384], sizes = [8, 128], strides = [1, 1]} : vector<8x512xf32> to vector<8x128xf32>
    %cst_310 = arith.constant 5.000000e-01 : f32
    %916 = vector.broadcast %cst_310 : f32 to vector<8x128xf32>
    %917 = arith.mulf %916, %915 : vector<8x128xf32>
    %918 = math.tanh %917 : vector<8x128xf32>
    %cst_311 = arith.constant 5.000000e-01 : f32
    %919 = vector.broadcast %cst_311 : f32 to vector<8x128xf32>
    %920 = arith.mulf %919, %918 : vector<8x128xf32>
    %cst_312 = arith.constant 5.000000e-01 : f32
    %921 = vector.broadcast %cst_312 : f32 to vector<8x128xf32>
    %922 = arith.addf %920, %921 : vector<8x128xf32>
    %923 = arith.mulf %912, %883 : vector<8x128xf32>
    %924 = arith.mulf %904, %914 : vector<8x128xf32>
    %925 = arith.addf %923, %924 : vector<8x128xf32>
    %926 = math.tanh %925 : vector<8x128xf32>
    %927 = arith.mulf %922, %926 : vector<8x128xf32>
    %c22 = arith.constant 22 : index
    %c0_313 = arith.constant 0 : index
    %c0_314 = arith.constant 0 : index
    %928 = vector.load %arg0[%c22, %c0_313, %c0_314] : memref<30x8x1xf32, #tpu.memory_space<vmem>>, vector<1x8x1xf32>
    %929 = vector.shape_cast %928 : vector<1x8x1xf32> to vector<8x1xf32>
    %930 = vector.broadcast %929 : vector<8x1xf32> to vector<8x512xf32>
    %931 = vector.broadcast %0 : vector<1x512xf32> to vector<8x512xf32>
    %932 = arith.mulf %930, %931 : vector<8x512xf32>
    %933 = vector.broadcast %1 : vector<1x512xf32> to vector<8x512xf32>
    %934 = arith.addf %932, %933 : vector<8x512xf32>
    %935 = arith.truncf %927 : vector<8x128xf32> to vector<8x128xbf16>
    %c0_315 = arith.constant 0 : index
    %c0_316 = arith.constant 0 : index
    %936 = vector.load %arg3[%c0_315, %c0_316] : memref<128x512xbf16, #tpu.memory_space<vmem>>, vector<128x512xbf16>
    %cst_317 = arith.constant dense<0.000000e+00> : vector<8x512xf32>
    %937 = tpu.matmul %935, %936, %cst_317 {dimension_numbers = #tpu.dot_dimension_numbers<[1], [0], [0], [1], [0, 0, 1, 1], [], []>} : vector<8x128xbf16>, vector<128x512xbf16>, vector<8x512xf32> -> vector<8x512xf32>
    %938 = arith.addf %934, %937 : vector<8x512xf32>
    %939 = vector.extract_strided_slice %938 {offsets = [0, 0], sizes = [8, 128], strides = [1, 1]} : vector<8x512xf32> to vector<8x128xf32>
    %cst_318 = arith.constant 5.000000e-01 : f32
    %940 = vector.broadcast %cst_318 : f32 to vector<8x128xf32>
    %941 = arith.mulf %940, %939 : vector<8x128xf32>
    %942 = math.tanh %941 : vector<8x128xf32>
    %cst_319 = arith.constant 5.000000e-01 : f32
    %943 = vector.broadcast %cst_319 : f32 to vector<8x128xf32>
    %944 = arith.mulf %943, %942 : vector<8x128xf32>
    %cst_320 = arith.constant 5.000000e-01 : f32
    %945 = vector.broadcast %cst_320 : f32 to vector<8x128xf32>
    %946 = arith.addf %944, %945 : vector<8x128xf32>
    %947 = vector.extract_strided_slice %938 {offsets = [0, 128], sizes = [8, 128], strides = [1, 1]} : vector<8x512xf32> to vector<8x128xf32>
    %cst_321 = arith.constant 5.000000e-01 : f32
    %948 = vector.broadcast %cst_321 : f32 to vector<8x128xf32>
    %949 = arith.mulf %948, %947 : vector<8x128xf32>
    %950 = math.tanh %949 : vector<8x128xf32>
    %cst_322 = arith.constant 5.000000e-01 : f32
    %951 = vector.broadcast %cst_322 : f32 to vector<8x128xf32>
    %952 = arith.mulf %951, %950 : vector<8x128xf32>
    %cst_323 = arith.constant 5.000000e-01 : f32
    %953 = vector.broadcast %cst_323 : f32 to vector<8x128xf32>
    %954 = arith.addf %952, %953 : vector<8x128xf32>
    %955 = vector.extract_strided_slice %938 {offsets = [0, 256], sizes = [8, 128], strides = [1, 1]} : vector<8x512xf32> to vector<8x128xf32>
    %956 = math.tanh %955 : vector<8x128xf32>
    %957 = vector.extract_strided_slice %938 {offsets = [0, 384], sizes = [8, 128], strides = [1, 1]} : vector<8x512xf32> to vector<8x128xf32>
    %cst_324 = arith.constant 5.000000e-01 : f32
    %958 = vector.broadcast %cst_324 : f32 to vector<8x128xf32>
    %959 = arith.mulf %958, %957 : vector<8x128xf32>
    %960 = math.tanh %959 : vector<8x128xf32>
    %cst_325 = arith.constant 5.000000e-01 : f32
    %961 = vector.broadcast %cst_325 : f32 to vector<8x128xf32>
    %962 = arith.mulf %961, %960 : vector<8x128xf32>
    %cst_326 = arith.constant 5.000000e-01 : f32
    %963 = vector.broadcast %cst_326 : f32 to vector<8x128xf32>
    %964 = arith.addf %962, %963 : vector<8x128xf32>
    %965 = arith.mulf %954, %925 : vector<8x128xf32>
    %966 = arith.mulf %946, %956 : vector<8x128xf32>
    %967 = arith.addf %965, %966 : vector<8x128xf32>
    %968 = math.tanh %967 : vector<8x128xf32>
    %969 = arith.mulf %964, %968 : vector<8x128xf32>
    %c23 = arith.constant 23 : index
    %c0_327 = arith.constant 0 : index
    %c0_328 = arith.constant 0 : index
    %970 = vector.load %arg0[%c23, %c0_327, %c0_328] : memref<30x8x1xf32, #tpu.memory_space<vmem>>, vector<1x8x1xf32>
    %971 = vector.shape_cast %970 : vector<1x8x1xf32> to vector<8x1xf32>
    %972 = vector.broadcast %971 : vector<8x1xf32> to vector<8x512xf32>
    %973 = vector.broadcast %0 : vector<1x512xf32> to vector<8x512xf32>
    %974 = arith.mulf %972, %973 : vector<8x512xf32>
    %975 = vector.broadcast %1 : vector<1x512xf32> to vector<8x512xf32>
    %976 = arith.addf %974, %975 : vector<8x512xf32>
    %977 = arith.truncf %969 : vector<8x128xf32> to vector<8x128xbf16>
    %c0_329 = arith.constant 0 : index
    %c0_330 = arith.constant 0 : index
    %978 = vector.load %arg3[%c0_329, %c0_330] : memref<128x512xbf16, #tpu.memory_space<vmem>>, vector<128x512xbf16>
    %cst_331 = arith.constant dense<0.000000e+00> : vector<8x512xf32>
    %979 = tpu.matmul %977, %978, %cst_331 {dimension_numbers = #tpu.dot_dimension_numbers<[1], [0], [0], [1], [0, 0, 1, 1], [], []>} : vector<8x128xbf16>, vector<128x512xbf16>, vector<8x512xf32> -> vector<8x512xf32>
    %980 = arith.addf %976, %979 : vector<8x512xf32>
    %981 = vector.extract_strided_slice %980 {offsets = [0, 0], sizes = [8, 128], strides = [1, 1]} : vector<8x512xf32> to vector<8x128xf32>
    %cst_332 = arith.constant 5.000000e-01 : f32
    %982 = vector.broadcast %cst_332 : f32 to vector<8x128xf32>
    %983 = arith.mulf %982, %981 : vector<8x128xf32>
    %984 = math.tanh %983 : vector<8x128xf32>
    %cst_333 = arith.constant 5.000000e-01 : f32
    %985 = vector.broadcast %cst_333 : f32 to vector<8x128xf32>
    %986 = arith.mulf %985, %984 : vector<8x128xf32>
    %cst_334 = arith.constant 5.000000e-01 : f32
    %987 = vector.broadcast %cst_334 : f32 to vector<8x128xf32>
    %988 = arith.addf %986, %987 : vector<8x128xf32>
    %989 = vector.extract_strided_slice %980 {offsets = [0, 128], sizes = [8, 128], strides = [1, 1]} : vector<8x512xf32> to vector<8x128xf32>
    %cst_335 = arith.constant 5.000000e-01 : f32
    %990 = vector.broadcast %cst_335 : f32 to vector<8x128xf32>
    %991 = arith.mulf %990, %989 : vector<8x128xf32>
    %992 = math.tanh %991 : vector<8x128xf32>
    %cst_336 = arith.constant 5.000000e-01 : f32
    %993 = vector.broadcast %cst_336 : f32 to vector<8x128xf32>
    %994 = arith.mulf %993, %992 : vector<8x128xf32>
    %cst_337 = arith.constant 5.000000e-01 : f32
    %995 = vector.broadcast %cst_337 : f32 to vector<8x128xf32>
    %996 = arith.addf %994, %995 : vector<8x128xf32>
    %997 = vector.extract_strided_slice %980 {offsets = [0, 256], sizes = [8, 128], strides = [1, 1]} : vector<8x512xf32> to vector<8x128xf32>
    %998 = math.tanh %997 : vector<8x128xf32>
    %999 = vector.extract_strided_slice %980 {offsets = [0, 384], sizes = [8, 128], strides = [1, 1]} : vector<8x512xf32> to vector<8x128xf32>
    %cst_338 = arith.constant 5.000000e-01 : f32
    %1000 = vector.broadcast %cst_338 : f32 to vector<8x128xf32>
    %1001 = arith.mulf %1000, %999 : vector<8x128xf32>
    %1002 = math.tanh %1001 : vector<8x128xf32>
    %cst_339 = arith.constant 5.000000e-01 : f32
    %1003 = vector.broadcast %cst_339 : f32 to vector<8x128xf32>
    %1004 = arith.mulf %1003, %1002 : vector<8x128xf32>
    %cst_340 = arith.constant 5.000000e-01 : f32
    %1005 = vector.broadcast %cst_340 : f32 to vector<8x128xf32>
    %1006 = arith.addf %1004, %1005 : vector<8x128xf32>
    %1007 = arith.mulf %996, %967 : vector<8x128xf32>
    %1008 = arith.mulf %988, %998 : vector<8x128xf32>
    %1009 = arith.addf %1007, %1008 : vector<8x128xf32>
    %1010 = math.tanh %1009 : vector<8x128xf32>
    %1011 = arith.mulf %1006, %1010 : vector<8x128xf32>
    %c24 = arith.constant 24 : index
    %c0_341 = arith.constant 0 : index
    %c0_342 = arith.constant 0 : index
    %1012 = vector.load %arg0[%c24, %c0_341, %c0_342] : memref<30x8x1xf32, #tpu.memory_space<vmem>>, vector<1x8x1xf32>
    %1013 = vector.shape_cast %1012 : vector<1x8x1xf32> to vector<8x1xf32>
    %1014 = vector.broadcast %1013 : vector<8x1xf32> to vector<8x512xf32>
    %1015 = vector.broadcast %0 : vector<1x512xf32> to vector<8x512xf32>
    %1016 = arith.mulf %1014, %1015 : vector<8x512xf32>
    %1017 = vector.broadcast %1 : vector<1x512xf32> to vector<8x512xf32>
    %1018 = arith.addf %1016, %1017 : vector<8x512xf32>
    %1019 = arith.truncf %1011 : vector<8x128xf32> to vector<8x128xbf16>
    %c0_343 = arith.constant 0 : index
    %c0_344 = arith.constant 0 : index
    %1020 = vector.load %arg3[%c0_343, %c0_344] : memref<128x512xbf16, #tpu.memory_space<vmem>>, vector<128x512xbf16>
    %cst_345 = arith.constant dense<0.000000e+00> : vector<8x512xf32>
    %1021 = tpu.matmul %1019, %1020, %cst_345 {dimension_numbers = #tpu.dot_dimension_numbers<[1], [0], [0], [1], [0, 0, 1, 1], [], []>} : vector<8x128xbf16>, vector<128x512xbf16>, vector<8x512xf32> -> vector<8x512xf32>
    %1022 = arith.addf %1018, %1021 : vector<8x512xf32>
    %1023 = vector.extract_strided_slice %1022 {offsets = [0, 0], sizes = [8, 128], strides = [1, 1]} : vector<8x512xf32> to vector<8x128xf32>
    %cst_346 = arith.constant 5.000000e-01 : f32
    %1024 = vector.broadcast %cst_346 : f32 to vector<8x128xf32>
    %1025 = arith.mulf %1024, %1023 : vector<8x128xf32>
    %1026 = math.tanh %1025 : vector<8x128xf32>
    %cst_347 = arith.constant 5.000000e-01 : f32
    %1027 = vector.broadcast %cst_347 : f32 to vector<8x128xf32>
    %1028 = arith.mulf %1027, %1026 : vector<8x128xf32>
    %cst_348 = arith.constant 5.000000e-01 : f32
    %1029 = vector.broadcast %cst_348 : f32 to vector<8x128xf32>
    %1030 = arith.addf %1028, %1029 : vector<8x128xf32>
    %1031 = vector.extract_strided_slice %1022 {offsets = [0, 128], sizes = [8, 128], strides = [1, 1]} : vector<8x512xf32> to vector<8x128xf32>
    %cst_349 = arith.constant 5.000000e-01 : f32
    %1032 = vector.broadcast %cst_349 : f32 to vector<8x128xf32>
    %1033 = arith.mulf %1032, %1031 : vector<8x128xf32>
    %1034 = math.tanh %1033 : vector<8x128xf32>
    %cst_350 = arith.constant 5.000000e-01 : f32
    %1035 = vector.broadcast %cst_350 : f32 to vector<8x128xf32>
    %1036 = arith.mulf %1035, %1034 : vector<8x128xf32>
    %cst_351 = arith.constant 5.000000e-01 : f32
    %1037 = vector.broadcast %cst_351 : f32 to vector<8x128xf32>
    %1038 = arith.addf %1036, %1037 : vector<8x128xf32>
    %1039 = vector.extract_strided_slice %1022 {offsets = [0, 256], sizes = [8, 128], strides = [1, 1]} : vector<8x512xf32> to vector<8x128xf32>
    %1040 = math.tanh %1039 : vector<8x128xf32>
    %1041 = vector.extract_strided_slice %1022 {offsets = [0, 384], sizes = [8, 128], strides = [1, 1]} : vector<8x512xf32> to vector<8x128xf32>
    %cst_352 = arith.constant 5.000000e-01 : f32
    %1042 = vector.broadcast %cst_352 : f32 to vector<8x128xf32>
    %1043 = arith.mulf %1042, %1041 : vector<8x128xf32>
    %1044 = math.tanh %1043 : vector<8x128xf32>
    %cst_353 = arith.constant 5.000000e-01 : f32
    %1045 = vector.broadcast %cst_353 : f32 to vector<8x128xf32>
    %1046 = arith.mulf %1045, %1044 : vector<8x128xf32>
    %cst_354 = arith.constant 5.000000e-01 : f32
    %1047 = vector.broadcast %cst_354 : f32 to vector<8x128xf32>
    %1048 = arith.addf %1046, %1047 : vector<8x128xf32>
    %1049 = arith.mulf %1038, %1009 : vector<8x128xf32>
    %1050 = arith.mulf %1030, %1040 : vector<8x128xf32>
    %1051 = arith.addf %1049, %1050 : vector<8x128xf32>
    %1052 = math.tanh %1051 : vector<8x128xf32>
    %1053 = arith.mulf %1048, %1052 : vector<8x128xf32>
    %c25 = arith.constant 25 : index
    %c0_355 = arith.constant 0 : index
    %c0_356 = arith.constant 0 : index
    %1054 = vector.load %arg0[%c25, %c0_355, %c0_356] : memref<30x8x1xf32, #tpu.memory_space<vmem>>, vector<1x8x1xf32>
    %1055 = vector.shape_cast %1054 : vector<1x8x1xf32> to vector<8x1xf32>
    %1056 = vector.broadcast %1055 : vector<8x1xf32> to vector<8x512xf32>
    %1057 = vector.broadcast %0 : vector<1x512xf32> to vector<8x512xf32>
    %1058 = arith.mulf %1056, %1057 : vector<8x512xf32>
    %1059 = vector.broadcast %1 : vector<1x512xf32> to vector<8x512xf32>
    %1060 = arith.addf %1058, %1059 : vector<8x512xf32>
    %1061 = arith.truncf %1053 : vector<8x128xf32> to vector<8x128xbf16>
    %c0_357 = arith.constant 0 : index
    %c0_358 = arith.constant 0 : index
    %1062 = vector.load %arg3[%c0_357, %c0_358] : memref<128x512xbf16, #tpu.memory_space<vmem>>, vector<128x512xbf16>
    %cst_359 = arith.constant dense<0.000000e+00> : vector<8x512xf32>
    %1063 = tpu.matmul %1061, %1062, %cst_359 {dimension_numbers = #tpu.dot_dimension_numbers<[1], [0], [0], [1], [0, 0, 1, 1], [], []>} : vector<8x128xbf16>, vector<128x512xbf16>, vector<8x512xf32> -> vector<8x512xf32>
    %1064 = arith.addf %1060, %1063 : vector<8x512xf32>
    %1065 = vector.extract_strided_slice %1064 {offsets = [0, 0], sizes = [8, 128], strides = [1, 1]} : vector<8x512xf32> to vector<8x128xf32>
    %cst_360 = arith.constant 5.000000e-01 : f32
    %1066 = vector.broadcast %cst_360 : f32 to vector<8x128xf32>
    %1067 = arith.mulf %1066, %1065 : vector<8x128xf32>
    %1068 = math.tanh %1067 : vector<8x128xf32>
    %cst_361 = arith.constant 5.000000e-01 : f32
    %1069 = vector.broadcast %cst_361 : f32 to vector<8x128xf32>
    %1070 = arith.mulf %1069, %1068 : vector<8x128xf32>
    %cst_362 = arith.constant 5.000000e-01 : f32
    %1071 = vector.broadcast %cst_362 : f32 to vector<8x128xf32>
    %1072 = arith.addf %1070, %1071 : vector<8x128xf32>
    %1073 = vector.extract_strided_slice %1064 {offsets = [0, 128], sizes = [8, 128], strides = [1, 1]} : vector<8x512xf32> to vector<8x128xf32>
    %cst_363 = arith.constant 5.000000e-01 : f32
    %1074 = vector.broadcast %cst_363 : f32 to vector<8x128xf32>
    %1075 = arith.mulf %1074, %1073 : vector<8x128xf32>
    %1076 = math.tanh %1075 : vector<8x128xf32>
    %cst_364 = arith.constant 5.000000e-01 : f32
    %1077 = vector.broadcast %cst_364 : f32 to vector<8x128xf32>
    %1078 = arith.mulf %1077, %1076 : vector<8x128xf32>
    %cst_365 = arith.constant 5.000000e-01 : f32
    %1079 = vector.broadcast %cst_365 : f32 to vector<8x128xf32>
    %1080 = arith.addf %1078, %1079 : vector<8x128xf32>
    %1081 = vector.extract_strided_slice %1064 {offsets = [0, 256], sizes = [8, 128], strides = [1, 1]} : vector<8x512xf32> to vector<8x128xf32>
    %1082 = math.tanh %1081 : vector<8x128xf32>
    %1083 = vector.extract_strided_slice %1064 {offsets = [0, 384], sizes = [8, 128], strides = [1, 1]} : vector<8x512xf32> to vector<8x128xf32>
    %cst_366 = arith.constant 5.000000e-01 : f32
    %1084 = vector.broadcast %cst_366 : f32 to vector<8x128xf32>
    %1085 = arith.mulf %1084, %1083 : vector<8x128xf32>
    %1086 = math.tanh %1085 : vector<8x128xf32>
    %cst_367 = arith.constant 5.000000e-01 : f32
    %1087 = vector.broadcast %cst_367 : f32 to vector<8x128xf32>
    %1088 = arith.mulf %1087, %1086 : vector<8x128xf32>
    %cst_368 = arith.constant 5.000000e-01 : f32
    %1089 = vector.broadcast %cst_368 : f32 to vector<8x128xf32>
    %1090 = arith.addf %1088, %1089 : vector<8x128xf32>
    %1091 = arith.mulf %1080, %1051 : vector<8x128xf32>
    %1092 = arith.mulf %1072, %1082 : vector<8x128xf32>
    %1093 = arith.addf %1091, %1092 : vector<8x128xf32>
    %1094 = math.tanh %1093 : vector<8x128xf32>
    %1095 = arith.mulf %1090, %1094 : vector<8x128xf32>
    %c26 = arith.constant 26 : index
    %c0_369 = arith.constant 0 : index
    %c0_370 = arith.constant 0 : index
    %1096 = vector.load %arg0[%c26, %c0_369, %c0_370] : memref<30x8x1xf32, #tpu.memory_space<vmem>>, vector<1x8x1xf32>
    %1097 = vector.shape_cast %1096 : vector<1x8x1xf32> to vector<8x1xf32>
    %1098 = vector.broadcast %1097 : vector<8x1xf32> to vector<8x512xf32>
    %1099 = vector.broadcast %0 : vector<1x512xf32> to vector<8x512xf32>
    %1100 = arith.mulf %1098, %1099 : vector<8x512xf32>
    %1101 = vector.broadcast %1 : vector<1x512xf32> to vector<8x512xf32>
    %1102 = arith.addf %1100, %1101 : vector<8x512xf32>
    %1103 = arith.truncf %1095 : vector<8x128xf32> to vector<8x128xbf16>
    %c0_371 = arith.constant 0 : index
    %c0_372 = arith.constant 0 : index
    %1104 = vector.load %arg3[%c0_371, %c0_372] : memref<128x512xbf16, #tpu.memory_space<vmem>>, vector<128x512xbf16>
    %cst_373 = arith.constant dense<0.000000e+00> : vector<8x512xf32>
    %1105 = tpu.matmul %1103, %1104, %cst_373 {dimension_numbers = #tpu.dot_dimension_numbers<[1], [0], [0], [1], [0, 0, 1, 1], [], []>} : vector<8x128xbf16>, vector<128x512xbf16>, vector<8x512xf32> -> vector<8x512xf32>
    %1106 = arith.addf %1102, %1105 : vector<8x512xf32>
    %1107 = vector.extract_strided_slice %1106 {offsets = [0, 0], sizes = [8, 128], strides = [1, 1]} : vector<8x512xf32> to vector<8x128xf32>
    %cst_374 = arith.constant 5.000000e-01 : f32
    %1108 = vector.broadcast %cst_374 : f32 to vector<8x128xf32>
    %1109 = arith.mulf %1108, %1107 : vector<8x128xf32>
    %1110 = math.tanh %1109 : vector<8x128xf32>
    %cst_375 = arith.constant 5.000000e-01 : f32
    %1111 = vector.broadcast %cst_375 : f32 to vector<8x128xf32>
    %1112 = arith.mulf %1111, %1110 : vector<8x128xf32>
    %cst_376 = arith.constant 5.000000e-01 : f32
    %1113 = vector.broadcast %cst_376 : f32 to vector<8x128xf32>
    %1114 = arith.addf %1112, %1113 : vector<8x128xf32>
    %1115 = vector.extract_strided_slice %1106 {offsets = [0, 128], sizes = [8, 128], strides = [1, 1]} : vector<8x512xf32> to vector<8x128xf32>
    %cst_377 = arith.constant 5.000000e-01 : f32
    %1116 = vector.broadcast %cst_377 : f32 to vector<8x128xf32>
    %1117 = arith.mulf %1116, %1115 : vector<8x128xf32>
    %1118 = math.tanh %1117 : vector<8x128xf32>
    %cst_378 = arith.constant 5.000000e-01 : f32
    %1119 = vector.broadcast %cst_378 : f32 to vector<8x128xf32>
    %1120 = arith.mulf %1119, %1118 : vector<8x128xf32>
    %cst_379 = arith.constant 5.000000e-01 : f32
    %1121 = vector.broadcast %cst_379 : f32 to vector<8x128xf32>
    %1122 = arith.addf %1120, %1121 : vector<8x128xf32>
    %1123 = vector.extract_strided_slice %1106 {offsets = [0, 256], sizes = [8, 128], strides = [1, 1]} : vector<8x512xf32> to vector<8x128xf32>
    %1124 = math.tanh %1123 : vector<8x128xf32>
    %1125 = vector.extract_strided_slice %1106 {offsets = [0, 384], sizes = [8, 128], strides = [1, 1]} : vector<8x512xf32> to vector<8x128xf32>
    %cst_380 = arith.constant 5.000000e-01 : f32
    %1126 = vector.broadcast %cst_380 : f32 to vector<8x128xf32>
    %1127 = arith.mulf %1126, %1125 : vector<8x128xf32>
    %1128 = math.tanh %1127 : vector<8x128xf32>
    %cst_381 = arith.constant 5.000000e-01 : f32
    %1129 = vector.broadcast %cst_381 : f32 to vector<8x128xf32>
    %1130 = arith.mulf %1129, %1128 : vector<8x128xf32>
    %cst_382 = arith.constant 5.000000e-01 : f32
    %1131 = vector.broadcast %cst_382 : f32 to vector<8x128xf32>
    %1132 = arith.addf %1130, %1131 : vector<8x128xf32>
    %1133 = arith.mulf %1122, %1093 : vector<8x128xf32>
    %1134 = arith.mulf %1114, %1124 : vector<8x128xf32>
    %1135 = arith.addf %1133, %1134 : vector<8x128xf32>
    %1136 = math.tanh %1135 : vector<8x128xf32>
    %1137 = arith.mulf %1132, %1136 : vector<8x128xf32>
    %c27 = arith.constant 27 : index
    %c0_383 = arith.constant 0 : index
    %c0_384 = arith.constant 0 : index
    %1138 = vector.load %arg0[%c27, %c0_383, %c0_384] : memref<30x8x1xf32, #tpu.memory_space<vmem>>, vector<1x8x1xf32>
    %1139 = vector.shape_cast %1138 : vector<1x8x1xf32> to vector<8x1xf32>
    %1140 = vector.broadcast %1139 : vector<8x1xf32> to vector<8x512xf32>
    %1141 = vector.broadcast %0 : vector<1x512xf32> to vector<8x512xf32>
    %1142 = arith.mulf %1140, %1141 : vector<8x512xf32>
    %1143 = vector.broadcast %1 : vector<1x512xf32> to vector<8x512xf32>
    %1144 = arith.addf %1142, %1143 : vector<8x512xf32>
    %1145 = arith.truncf %1137 : vector<8x128xf32> to vector<8x128xbf16>
    %c0_385 = arith.constant 0 : index
    %c0_386 = arith.constant 0 : index
    %1146 = vector.load %arg3[%c0_385, %c0_386] : memref<128x512xbf16, #tpu.memory_space<vmem>>, vector<128x512xbf16>
    %cst_387 = arith.constant dense<0.000000e+00> : vector<8x512xf32>
    %1147 = tpu.matmul %1145, %1146, %cst_387 {dimension_numbers = #tpu.dot_dimension_numbers<[1], [0], [0], [1], [0, 0, 1, 1], [], []>} : vector<8x128xbf16>, vector<128x512xbf16>, vector<8x512xf32> -> vector<8x512xf32>
    %1148 = arith.addf %1144, %1147 : vector<8x512xf32>
    %1149 = vector.extract_strided_slice %1148 {offsets = [0, 0], sizes = [8, 128], strides = [1, 1]} : vector<8x512xf32> to vector<8x128xf32>
    %cst_388 = arith.constant 5.000000e-01 : f32
    %1150 = vector.broadcast %cst_388 : f32 to vector<8x128xf32>
    %1151 = arith.mulf %1150, %1149 : vector<8x128xf32>
    %1152 = math.tanh %1151 : vector<8x128xf32>
    %cst_389 = arith.constant 5.000000e-01 : f32
    %1153 = vector.broadcast %cst_389 : f32 to vector<8x128xf32>
    %1154 = arith.mulf %1153, %1152 : vector<8x128xf32>
    %cst_390 = arith.constant 5.000000e-01 : f32
    %1155 = vector.broadcast %cst_390 : f32 to vector<8x128xf32>
    %1156 = arith.addf %1154, %1155 : vector<8x128xf32>
    %1157 = vector.extract_strided_slice %1148 {offsets = [0, 128], sizes = [8, 128], strides = [1, 1]} : vector<8x512xf32> to vector<8x128xf32>
    %cst_391 = arith.constant 5.000000e-01 : f32
    %1158 = vector.broadcast %cst_391 : f32 to vector<8x128xf32>
    %1159 = arith.mulf %1158, %1157 : vector<8x128xf32>
    %1160 = math.tanh %1159 : vector<8x128xf32>
    %cst_392 = arith.constant 5.000000e-01 : f32
    %1161 = vector.broadcast %cst_392 : f32 to vector<8x128xf32>
    %1162 = arith.mulf %1161, %1160 : vector<8x128xf32>
    %cst_393 = arith.constant 5.000000e-01 : f32
    %1163 = vector.broadcast %cst_393 : f32 to vector<8x128xf32>
    %1164 = arith.addf %1162, %1163 : vector<8x128xf32>
    %1165 = vector.extract_strided_slice %1148 {offsets = [0, 256], sizes = [8, 128], strides = [1, 1]} : vector<8x512xf32> to vector<8x128xf32>
    %1166 = math.tanh %1165 : vector<8x128xf32>
    %1167 = vector.extract_strided_slice %1148 {offsets = [0, 384], sizes = [8, 128], strides = [1, 1]} : vector<8x512xf32> to vector<8x128xf32>
    %cst_394 = arith.constant 5.000000e-01 : f32
    %1168 = vector.broadcast %cst_394 : f32 to vector<8x128xf32>
    %1169 = arith.mulf %1168, %1167 : vector<8x128xf32>
    %1170 = math.tanh %1169 : vector<8x128xf32>
    %cst_395 = arith.constant 5.000000e-01 : f32
    %1171 = vector.broadcast %cst_395 : f32 to vector<8x128xf32>
    %1172 = arith.mulf %1171, %1170 : vector<8x128xf32>
    %cst_396 = arith.constant 5.000000e-01 : f32
    %1173 = vector.broadcast %cst_396 : f32 to vector<8x128xf32>
    %1174 = arith.addf %1172, %1173 : vector<8x128xf32>
    %1175 = arith.mulf %1164, %1135 : vector<8x128xf32>
    %1176 = arith.mulf %1156, %1166 : vector<8x128xf32>
    %1177 = arith.addf %1175, %1176 : vector<8x128xf32>
    %1178 = math.tanh %1177 : vector<8x128xf32>
    %1179 = arith.mulf %1174, %1178 : vector<8x128xf32>
    %c28 = arith.constant 28 : index
    %c0_397 = arith.constant 0 : index
    %c0_398 = arith.constant 0 : index
    %1180 = vector.load %arg0[%c28, %c0_397, %c0_398] : memref<30x8x1xf32, #tpu.memory_space<vmem>>, vector<1x8x1xf32>
    %1181 = vector.shape_cast %1180 : vector<1x8x1xf32> to vector<8x1xf32>
    %1182 = vector.broadcast %1181 : vector<8x1xf32> to vector<8x512xf32>
    %1183 = vector.broadcast %0 : vector<1x512xf32> to vector<8x512xf32>
    %1184 = arith.mulf %1182, %1183 : vector<8x512xf32>
    %1185 = vector.broadcast %1 : vector<1x512xf32> to vector<8x512xf32>
    %1186 = arith.addf %1184, %1185 : vector<8x512xf32>
    %1187 = arith.truncf %1179 : vector<8x128xf32> to vector<8x128xbf16>
    %c0_399 = arith.constant 0 : index
    %c0_400 = arith.constant 0 : index
    %1188 = vector.load %arg3[%c0_399, %c0_400] : memref<128x512xbf16, #tpu.memory_space<vmem>>, vector<128x512xbf16>
    %cst_401 = arith.constant dense<0.000000e+00> : vector<8x512xf32>
    %1189 = tpu.matmul %1187, %1188, %cst_401 {dimension_numbers = #tpu.dot_dimension_numbers<[1], [0], [0], [1], [0, 0, 1, 1], [], []>} : vector<8x128xbf16>, vector<128x512xbf16>, vector<8x512xf32> -> vector<8x512xf32>
    %1190 = arith.addf %1186, %1189 : vector<8x512xf32>
    %1191 = vector.extract_strided_slice %1190 {offsets = [0, 0], sizes = [8, 128], strides = [1, 1]} : vector<8x512xf32> to vector<8x128xf32>
    %cst_402 = arith.constant 5.000000e-01 : f32
    %1192 = vector.broadcast %cst_402 : f32 to vector<8x128xf32>
    %1193 = arith.mulf %1192, %1191 : vector<8x128xf32>
    %1194 = math.tanh %1193 : vector<8x128xf32>
    %cst_403 = arith.constant 5.000000e-01 : f32
    %1195 = vector.broadcast %cst_403 : f32 to vector<8x128xf32>
    %1196 = arith.mulf %1195, %1194 : vector<8x128xf32>
    %cst_404 = arith.constant 5.000000e-01 : f32
    %1197 = vector.broadcast %cst_404 : f32 to vector<8x128xf32>
    %1198 = arith.addf %1196, %1197 : vector<8x128xf32>
    %1199 = vector.extract_strided_slice %1190 {offsets = [0, 128], sizes = [8, 128], strides = [1, 1]} : vector<8x512xf32> to vector<8x128xf32>
    %cst_405 = arith.constant 5.000000e-01 : f32
    %1200 = vector.broadcast %cst_405 : f32 to vector<8x128xf32>
    %1201 = arith.mulf %1200, %1199 : vector<8x128xf32>
    %1202 = math.tanh %1201 : vector<8x128xf32>
    %cst_406 = arith.constant 5.000000e-01 : f32
    %1203 = vector.broadcast %cst_406 : f32 to vector<8x128xf32>
    %1204 = arith.mulf %1203, %1202 : vector<8x128xf32>
    %cst_407 = arith.constant 5.000000e-01 : f32
    %1205 = vector.broadcast %cst_407 : f32 to vector<8x128xf32>
    %1206 = arith.addf %1204, %1205 : vector<8x128xf32>
    %1207 = vector.extract_strided_slice %1190 {offsets = [0, 256], sizes = [8, 128], strides = [1, 1]} : vector<8x512xf32> to vector<8x128xf32>
    %1208 = math.tanh %1207 : vector<8x128xf32>
    %1209 = vector.extract_strided_slice %1190 {offsets = [0, 384], sizes = [8, 128], strides = [1, 1]} : vector<8x512xf32> to vector<8x128xf32>
    %cst_408 = arith.constant 5.000000e-01 : f32
    %1210 = vector.broadcast %cst_408 : f32 to vector<8x128xf32>
    %1211 = arith.mulf %1210, %1209 : vector<8x128xf32>
    %1212 = math.tanh %1211 : vector<8x128xf32>
    %cst_409 = arith.constant 5.000000e-01 : f32
    %1213 = vector.broadcast %cst_409 : f32 to vector<8x128xf32>
    %1214 = arith.mulf %1213, %1212 : vector<8x128xf32>
    %cst_410 = arith.constant 5.000000e-01 : f32
    %1215 = vector.broadcast %cst_410 : f32 to vector<8x128xf32>
    %1216 = arith.addf %1214, %1215 : vector<8x128xf32>
    %1217 = arith.mulf %1206, %1177 : vector<8x128xf32>
    %1218 = arith.mulf %1198, %1208 : vector<8x128xf32>
    %1219 = arith.addf %1217, %1218 : vector<8x128xf32>
    %1220 = math.tanh %1219 : vector<8x128xf32>
    %1221 = arith.mulf %1216, %1220 : vector<8x128xf32>
    %c29 = arith.constant 29 : index
    %c0_411 = arith.constant 0 : index
    %c0_412 = arith.constant 0 : index
    %1222 = vector.load %arg0[%c29, %c0_411, %c0_412] : memref<30x8x1xf32, #tpu.memory_space<vmem>>, vector<1x8x1xf32>
    %1223 = vector.shape_cast %1222 : vector<1x8x1xf32> to vector<8x1xf32>
    %1224 = vector.broadcast %1223 : vector<8x1xf32> to vector<8x512xf32>
    %1225 = vector.broadcast %0 : vector<1x512xf32> to vector<8x512xf32>
    %1226 = arith.mulf %1224, %1225 : vector<8x512xf32>
    %1227 = vector.broadcast %1 : vector<1x512xf32> to vector<8x512xf32>
    %1228 = arith.addf %1226, %1227 : vector<8x512xf32>
    %1229 = arith.truncf %1221 : vector<8x128xf32> to vector<8x128xbf16>
    %c0_413 = arith.constant 0 : index
    %c0_414 = arith.constant 0 : index
    %1230 = vector.load %arg3[%c0_413, %c0_414] : memref<128x512xbf16, #tpu.memory_space<vmem>>, vector<128x512xbf16>
    %cst_415 = arith.constant dense<0.000000e+00> : vector<8x512xf32>
    %1231 = tpu.matmul %1229, %1230, %cst_415 {dimension_numbers = #tpu.dot_dimension_numbers<[1], [0], [0], [1], [0, 0, 1, 1], [], []>} : vector<8x128xbf16>, vector<128x512xbf16>, vector<8x512xf32> -> vector<8x512xf32>
    %1232 = arith.addf %1228, %1231 : vector<8x512xf32>
    %1233 = vector.extract_strided_slice %1232 {offsets = [0, 0], sizes = [8, 128], strides = [1, 1]} : vector<8x512xf32> to vector<8x128xf32>
    %cst_416 = arith.constant 5.000000e-01 : f32
    %1234 = vector.broadcast %cst_416 : f32 to vector<8x128xf32>
    %1235 = arith.mulf %1234, %1233 : vector<8x128xf32>
    %1236 = math.tanh %1235 : vector<8x128xf32>
    %cst_417 = arith.constant 5.000000e-01 : f32
    %1237 = vector.broadcast %cst_417 : f32 to vector<8x128xf32>
    %1238 = arith.mulf %1237, %1236 : vector<8x128xf32>
    %cst_418 = arith.constant 5.000000e-01 : f32
    %1239 = vector.broadcast %cst_418 : f32 to vector<8x128xf32>
    %1240 = arith.addf %1238, %1239 : vector<8x128xf32>
    %1241 = vector.extract_strided_slice %1232 {offsets = [0, 128], sizes = [8, 128], strides = [1, 1]} : vector<8x512xf32> to vector<8x128xf32>
    %cst_419 = arith.constant 5.000000e-01 : f32
    %1242 = vector.broadcast %cst_419 : f32 to vector<8x128xf32>
    %1243 = arith.mulf %1242, %1241 : vector<8x128xf32>
    %1244 = math.tanh %1243 : vector<8x128xf32>
    %cst_420 = arith.constant 5.000000e-01 : f32
    %1245 = vector.broadcast %cst_420 : f32 to vector<8x128xf32>
    %1246 = arith.mulf %1245, %1244 : vector<8x128xf32>
    %cst_421 = arith.constant 5.000000e-01 : f32
    %1247 = vector.broadcast %cst_421 : f32 to vector<8x128xf32>
    %1248 = arith.addf %1246, %1247 : vector<8x128xf32>
    %1249 = vector.extract_strided_slice %1232 {offsets = [0, 256], sizes = [8, 128], strides = [1, 1]} : vector<8x512xf32> to vector<8x128xf32>
    %1250 = math.tanh %1249 : vector<8x128xf32>
    %1251 = vector.extract_strided_slice %1232 {offsets = [0, 384], sizes = [8, 128], strides = [1, 1]} : vector<8x512xf32> to vector<8x128xf32>
    %cst_422 = arith.constant 5.000000e-01 : f32
    %1252 = vector.broadcast %cst_422 : f32 to vector<8x128xf32>
    %1253 = arith.mulf %1252, %1251 : vector<8x128xf32>
    %1254 = math.tanh %1253 : vector<8x128xf32>
    %cst_423 = arith.constant 5.000000e-01 : f32
    %1255 = vector.broadcast %cst_423 : f32 to vector<8x128xf32>
    %1256 = arith.mulf %1255, %1254 : vector<8x128xf32>
    %cst_424 = arith.constant 5.000000e-01 : f32
    %1257 = vector.broadcast %cst_424 : f32 to vector<8x128xf32>
    %1258 = arith.addf %1256, %1257 : vector<8x128xf32>
    %1259 = arith.mulf %1248, %1219 : vector<8x128xf32>
    %1260 = arith.mulf %1240, %1250 : vector<8x128xf32>
    %1261 = arith.addf %1259, %1260 : vector<8x128xf32>
    %1262 = math.tanh %1261 : vector<8x128xf32>
    %1263 = arith.mulf %1258, %1262 : vector<8x128xf32>
    %1264 = arith.truncf %1263 : vector<8x128xf32> to vector<8x128xbf16>
    %c0_425 = arith.constant 0 : index
    %c0_426 = arith.constant 0 : index
    %1265 = vector.load %arg4[%c0_425, %c0_426] : memref<128x512xbf16, #tpu.memory_space<vmem>>, vector<128x512xbf16>
    %cst_427 = arith.constant dense<0.000000e+00> : vector<8x512xf32>
    %1266 = tpu.matmul %1264, %1265, %cst_427 {dimension_numbers = #tpu.dot_dimension_numbers<[1], [0], [0], [1], [0, 0, 1, 1], [], []>} : vector<8x128xbf16>, vector<128x512xbf16>, vector<8x512xf32> -> vector<8x512xf32>
    %c0_428 = arith.constant 0 : index
    %c0_429 = arith.constant 0 : index
    %1267 = vector.load %arg6[%c0_428, %c0_429] : memref<1x512xf32, #tpu.memory_space<vmem>>, vector<1x512xf32>
    %1268 = vector.broadcast %1267 : vector<1x512xf32> to vector<8x512xf32>
    %1269 = arith.addf %1266, %1268 : vector<8x512xf32>
    %1270 = arith.truncf %1263 : vector<8x128xf32> to vector<8x128xbf16>
    %c0_430 = arith.constant 0 : index
    %c0_431 = arith.constant 0 : index
    %1271 = vector.load %arg5[%c0_430, %c0_431] : memref<128x512xbf16, #tpu.memory_space<vmem>>, vector<128x512xbf16>
    %cst_432 = arith.constant dense<0.000000e+00> : vector<8x512xf32>
    %1272 = tpu.matmul %1270, %1271, %cst_432 {dimension_numbers = #tpu.dot_dimension_numbers<[1], [0], [0], [1], [0, 0, 1, 1], [], []>} : vector<8x128xbf16>, vector<128x512xbf16>, vector<8x512xf32> -> vector<8x512xf32>
    %1273 = arith.addf %1269, %1272 : vector<8x512xf32>
    %1274 = vector.extract_strided_slice %1273 {offsets = [0, 0], sizes = [8, 128], strides = [1, 1]} : vector<8x512xf32> to vector<8x128xf32>
    %cst_433 = arith.constant 5.000000e-01 : f32
    %1275 = vector.broadcast %cst_433 : f32 to vector<8x128xf32>
    %1276 = arith.mulf %1275, %1274 : vector<8x128xf32>
    %1277 = math.tanh %1276 : vector<8x128xf32>
    %cst_434 = arith.constant 5.000000e-01 : f32
    %1278 = vector.broadcast %cst_434 : f32 to vector<8x128xf32>
    %1279 = arith.mulf %1278, %1277 : vector<8x128xf32>
    %cst_435 = arith.constant 5.000000e-01 : f32
    %1280 = vector.broadcast %cst_435 : f32 to vector<8x128xf32>
    %1281 = arith.addf %1279, %1280 : vector<8x128xf32>
    %1282 = vector.extract_strided_slice %1273 {offsets = [0, 128], sizes = [8, 128], strides = [1, 1]} : vector<8x512xf32> to vector<8x128xf32>
    %cst_436 = arith.constant 5.000000e-01 : f32
    %1283 = vector.broadcast %cst_436 : f32 to vector<8x128xf32>
    %1284 = arith.mulf %1283, %1282 : vector<8x128xf32>
    %1285 = math.tanh %1284 : vector<8x128xf32>
    %cst_437 = arith.constant 5.000000e-01 : f32
    %1286 = vector.broadcast %cst_437 : f32 to vector<8x128xf32>
    %1287 = arith.mulf %1286, %1285 : vector<8x128xf32>
    %cst_438 = arith.constant 5.000000e-01 : f32
    %1288 = vector.broadcast %cst_438 : f32 to vector<8x128xf32>
    %1289 = arith.addf %1287, %1288 : vector<8x128xf32>
    %1290 = vector.extract_strided_slice %1273 {offsets = [0, 256], sizes = [8, 128], strides = [1, 1]} : vector<8x512xf32> to vector<8x128xf32>
    %1291 = math.tanh %1290 : vector<8x128xf32>
    %1292 = vector.extract_strided_slice %1273 {offsets = [0, 384], sizes = [8, 128], strides = [1, 1]} : vector<8x512xf32> to vector<8x128xf32>
    %cst_439 = arith.constant 5.000000e-01 : f32
    %1293 = vector.broadcast %cst_439 : f32 to vector<8x128xf32>
    %1294 = arith.mulf %1293, %1292 : vector<8x128xf32>
    %1295 = math.tanh %1294 : vector<8x128xf32>
    %cst_440 = arith.constant 5.000000e-01 : f32
    %1296 = vector.broadcast %cst_440 : f32 to vector<8x128xf32>
    %1297 = arith.mulf %1296, %1295 : vector<8x128xf32>
    %cst_441 = arith.constant 5.000000e-01 : f32
    %1298 = vector.broadcast %cst_441 : f32 to vector<8x128xf32>
    %1299 = arith.addf %1297, %1298 : vector<8x128xf32>
    %1300 = arith.mulf %1289, %1261 : vector<8x128xf32>
    %1301 = arith.mulf %1281, %1291 : vector<8x128xf32>
    %1302 = arith.addf %1300, %1301 : vector<8x128xf32>
    %1303 = math.tanh %1302 : vector<8x128xf32>
    %1304 = arith.mulf %1299, %1303 : vector<8x128xf32>
    %c0_442 = arith.constant 0 : index
    %c0_443 = arith.constant 0 : index
    %1305 = vector.load %arg10[%c0_442, %c0_443] : memref<8x896xf32, #tpu.memory_space<vmem>>, vector<8x128xf32>
    tpu.vector_store %arg10[%c0_442, %c0_443], %1304 {strides = array<i32>} : memref<8x896xf32, #tpu.memory_space<vmem>>, vector<8x128xf32>,
    %1306 = arith.truncf %1304 : vector<8x128xf32> to vector<8x128xbf16>
    %c0_444 = arith.constant 0 : index
    %c0_445 = arith.constant 0 : index
    %1307 = vector.load %arg5[%c0_444, %c0_445] : memref<128x512xbf16, #tpu.memory_space<vmem>>, vector<128x512xbf16>
    %cst_446 = arith.constant dense<0.000000e+00> : vector<8x512xf32>
    %1308 = tpu.matmul %1306, %1307, %cst_446 {dimension_numbers = #tpu.dot_dimension_numbers<[1], [0], [0], [1], [0, 0, 1, 1], [], []>} : vector<8x128xbf16>, vector<128x512xbf16>, vector<8x512xf32> -> vector<8x512xf32>
    %1309 = arith.addf %1269, %1308 : vector<8x512xf32>
    %1310 = vector.extract_strided_slice %1309 {offsets = [0, 0], sizes = [8, 128], strides = [1, 1]} : vector<8x512xf32> to vector<8x128xf32>
    %cst_447 = arith.constant 5.000000e-01 : f32
    %1311 = vector.broadcast %cst_447 : f32 to vector<8x128xf32>
    %1312 = arith.mulf %1311, %1310 : vector<8x128xf32>
    %1313 = math.tanh %1312 : vector<8x128xf32>
    %cst_448 = arith.constant 5.000000e-01 : f32
    %1314 = vector.broadcast %cst_448 : f32 to vector<8x128xf32>
    %1315 = arith.mulf %1314, %1313 : vector<8x128xf32>
    %cst_449 = arith.constant 5.000000e-01 : f32
    %1316 = vector.broadcast %cst_449 : f32 to vector<8x128xf32>
    %1317 = arith.addf %1315, %1316 : vector<8x128xf32>
    %1318 = vector.extract_strided_slice %1309 {offsets = [0, 128], sizes = [8, 128], strides = [1, 1]} : vector<8x512xf32> to vector<8x128xf32>
    %cst_450 = arith.constant 5.000000e-01 : f32
    %1319 = vector.broadcast %cst_450 : f32 to vector<8x128xf32>
    %1320 = arith.mulf %1319, %1318 : vector<8x128xf32>
    %1321 = math.tanh %1320 : vector<8x128xf32>
    %cst_451 = arith.constant 5.000000e-01 : f32
    %1322 = vector.broadcast %cst_451 : f32 to vector<8x128xf32>
    %1323 = arith.mulf %1322, %1321 : vector<8x128xf32>
    %cst_452 = arith.constant 5.000000e-01 : f32
    %1324 = vector.broadcast %cst_452 : f32 to vector<8x128xf32>
    %1325 = arith.addf %1323, %1324 : vector<8x128xf32>
    %1326 = vector.extract_strided_slice %1309 {offsets = [0, 256], sizes = [8, 128], strides = [1, 1]} : vector<8x512xf32> to vector<8x128xf32>
    %1327 = math.tanh %1326 : vector<8x128xf32>
    %1328 = vector.extract_strided_slice %1309 {offsets = [0, 384], sizes = [8, 128], strides = [1, 1]} : vector<8x512xf32> to vector<8x128xf32>
    %cst_453 = arith.constant 5.000000e-01 : f32
    %1329 = vector.broadcast %cst_453 : f32 to vector<8x128xf32>
    %1330 = arith.mulf %1329, %1328 : vector<8x128xf32>
    %1331 = math.tanh %1330 : vector<8x128xf32>
    %cst_454 = arith.constant 5.000000e-01 : f32
    %1332 = vector.broadcast %cst_454 : f32 to vector<8x128xf32>
    %1333 = arith.mulf %1332, %1331 : vector<8x128xf32>
    %cst_455 = arith.constant 5.000000e-01 : f32
    %1334 = vector.broadcast %cst_455 : f32 to vector<8x128xf32>
    %1335 = arith.addf %1333, %1334 : vector<8x128xf32>
    %1336 = arith.mulf %1325, %1302 : vector<8x128xf32>
    %1337 = arith.mulf %1317, %1327 : vector<8x128xf32>
    %1338 = arith.addf %1336, %1337 : vector<8x128xf32>
    %1339 = math.tanh %1338 : vector<8x128xf32>
    %1340 = arith.mulf %1335, %1339 : vector<8x128xf32>
    %c0_456 = arith.constant 0 : index
    %c128 = arith.constant 128 : index
    %1341 = vector.load %arg10[%c0_456, %c128] : memref<8x896xf32, #tpu.memory_space<vmem>>, vector<8x128xf32>
    tpu.vector_store %arg10[%c0_456, %c128], %1340 {strides = array<i32>} : memref<8x896xf32, #tpu.memory_space<vmem>>, vector<8x128xf32>,
    %1342 = arith.truncf %1340 : vector<8x128xf32> to vector<8x128xbf16>
    %c0_457 = arith.constant 0 : index
    %c0_458 = arith.constant 0 : index
    %1343 = vector.load %arg5[%c0_457, %c0_458] : memref<128x512xbf16, #tpu.memory_space<vmem>>, vector<128x512xbf16>
    %cst_459 = arith.constant dense<0.000000e+00> : vector<8x512xf32>
    %1344 = tpu.matmul %1342, %1343, %cst_459 {dimension_numbers = #tpu.dot_dimension_numbers<[1], [0], [0], [1], [0, 0, 1, 1], [], []>} : vector<8x128xbf16>, vector<128x512xbf16>, vector<8x512xf32> -> vector<8x512xf32>
    %1345 = arith.addf %1269, %1344 : vector<8x512xf32>
    %1346 = vector.extract_strided_slice %1345 {offsets = [0, 0], sizes = [8, 128], strides = [1, 1]} : vector<8x512xf32> to vector<8x128xf32>
    %cst_460 = arith.constant 5.000000e-01 : f32
    %1347 = vector.broadcast %cst_460 : f32 to vector<8x128xf32>
    %1348 = arith.mulf %1347, %1346 : vector<8x128xf32>
    %1349 = math.tanh %1348 : vector<8x128xf32>
    %cst_461 = arith.constant 5.000000e-01 : f32
    %1350 = vector.broadcast %cst_461 : f32 to vector<8x128xf32>
    %1351 = arith.mulf %1350, %1349 : vector<8x128xf32>
    %cst_462 = arith.constant 5.000000e-01 : f32
    %1352 = vector.broadcast %cst_462 : f32 to vector<8x128xf32>
    %1353 = arith.addf %1351, %1352 : vector<8x128xf32>
    %1354 = vector.extract_strided_slice %1345 {offsets = [0, 128], sizes = [8, 128], strides = [1, 1]} : vector<8x512xf32> to vector<8x128xf32>
    %cst_463 = arith.constant 5.000000e-01 : f32
    %1355 = vector.broadcast %cst_463 : f32 to vector<8x128xf32>
    %1356 = arith.mulf %1355, %1354 : vector<8x128xf32>
    %1357 = math.tanh %1356 : vector<8x128xf32>
    %cst_464 = arith.constant 5.000000e-01 : f32
    %1358 = vector.broadcast %cst_464 : f32 to vector<8x128xf32>
    %1359 = arith.mulf %1358, %1357 : vector<8x128xf32>
    %cst_465 = arith.constant 5.000000e-01 : f32
    %1360 = vector.broadcast %cst_465 : f32 to vector<8x128xf32>
    %1361 = arith.addf %1359, %1360 : vector<8x128xf32>
    %1362 = vector.extract_strided_slice %1345 {offsets = [0, 256], sizes = [8, 128], strides = [1, 1]} : vector<8x512xf32> to vector<8x128xf32>
    %1363 = math.tanh %1362 : vector<8x128xf32>
    %1364 = vector.extract_strided_slice %1345 {offsets = [0, 384], sizes = [8, 128], strides = [1, 1]} : vector<8x512xf32> to vector<8x128xf32>
    %cst_466 = arith.constant 5.000000e-01 : f32
    %1365 = vector.broadcast %cst_466 : f32 to vector<8x128xf32>
    %1366 = arith.mulf %1365, %1364 : vector<8x128xf32>
    %1367 = math.tanh %1366 : vector<8x128xf32>
    %cst_467 = arith.constant 5.000000e-01 : f32
    %1368 = vector.broadcast %cst_467 : f32 to vector<8x128xf32>
    %1369 = arith.mulf %1368, %1367 : vector<8x128xf32>
    %cst_468 = arith.constant 5.000000e-01 : f32
    %1370 = vector.broadcast %cst_468 : f32 to vector<8x128xf32>
    %1371 = arith.addf %1369, %1370 : vector<8x128xf32>
    %1372 = arith.mulf %1361, %1338 : vector<8x128xf32>
    %1373 = arith.mulf %1353, %1363 : vector<8x128xf32>
    %1374 = arith.addf %1372, %1373 : vector<8x128xf32>
    %1375 = math.tanh %1374 : vector<8x128xf32>
    %1376 = arith.mulf %1371, %1375 : vector<8x128xf32>
    %c0_469 = arith.constant 0 : index
    %c256 = arith.constant 256 : index
    %1377 = vector.load %arg10[%c0_469, %c256] : memref<8x896xf32, #tpu.memory_space<vmem>>, vector<8x128xf32>
    tpu.vector_store %arg10[%c0_469, %c256], %1376 {strides = array<i32>} : memref<8x896xf32, #tpu.memory_space<vmem>>, vector<8x128xf32>,
    %1378 = arith.truncf %1376 : vector<8x128xf32> to vector<8x128xbf16>
    %c0_470 = arith.constant 0 : index
    %c0_471 = arith.constant 0 : index
    %1379 = vector.load %arg5[%c0_470, %c0_471] : memref<128x512xbf16, #tpu.memory_space<vmem>>, vector<128x512xbf16>
    %cst_472 = arith.constant dense<0.000000e+00> : vector<8x512xf32>
    %1380 = tpu.matmul %1378, %1379, %cst_472 {dimension_numbers = #tpu.dot_dimension_numbers<[1], [0], [0], [1], [0, 0, 1, 1], [], []>} : vector<8x128xbf16>, vector<128x512xbf16>, vector<8x512xf32> -> vector<8x512xf32>
    %1381 = arith.addf %1269, %1380 : vector<8x512xf32>
    %1382 = vector.extract_strided_slice %1381 {offsets = [0, 0], sizes = [8, 128], strides = [1, 1]} : vector<8x512xf32> to vector<8x128xf32>
    %cst_473 = arith.constant 5.000000e-01 : f32
    %1383 = vector.broadcast %cst_473 : f32 to vector<8x128xf32>
    %1384 = arith.mulf %1383, %1382 : vector<8x128xf32>
    %1385 = math.tanh %1384 : vector<8x128xf32>
    %cst_474 = arith.constant 5.000000e-01 : f32
    %1386 = vector.broadcast %cst_474 : f32 to vector<8x128xf32>
    %1387 = arith.mulf %1386, %1385 : vector<8x128xf32>
    %cst_475 = arith.constant 5.000000e-01 : f32
    %1388 = vector.broadcast %cst_475 : f32 to vector<8x128xf32>
    %1389 = arith.addf %1387, %1388 : vector<8x128xf32>
    %1390 = vector.extract_strided_slice %1381 {offsets = [0, 128], sizes = [8, 128], strides = [1, 1]} : vector<8x512xf32> to vector<8x128xf32>
    %cst_476 = arith.constant 5.000000e-01 : f32
    %1391 = vector.broadcast %cst_476 : f32 to vector<8x128xf32>
    %1392 = arith.mulf %1391, %1390 : vector<8x128xf32>
    %1393 = math.tanh %1392 : vector<8x128xf32>
    %cst_477 = arith.constant 5.000000e-01 : f32
    %1394 = vector.broadcast %cst_477 : f32 to vector<8x128xf32>
    %1395 = arith.mulf %1394, %1393 : vector<8x128xf32>
    %cst_478 = arith.constant 5.000000e-01 : f32
    %1396 = vector.broadcast %cst_478 : f32 to vector<8x128xf32>
    %1397 = arith.addf %1395, %1396 : vector<8x128xf32>
    %1398 = vector.extract_strided_slice %1381 {offsets = [0, 256], sizes = [8, 128], strides = [1, 1]} : vector<8x512xf32> to vector<8x128xf32>
    %1399 = math.tanh %1398 : vector<8x128xf32>
    %1400 = vector.extract_strided_slice %1381 {offsets = [0, 384], sizes = [8, 128], strides = [1, 1]} : vector<8x512xf32> to vector<8x128xf32>
    %cst_479 = arith.constant 5.000000e-01 : f32
    %1401 = vector.broadcast %cst_479 : f32 to vector<8x128xf32>
    %1402 = arith.mulf %1401, %1400 : vector<8x128xf32>
    %1403 = math.tanh %1402 : vector<8x128xf32>
    %cst_480 = arith.constant 5.000000e-01 : f32
    %1404 = vector.broadcast %cst_480 : f32 to vector<8x128xf32>
    %1405 = arith.mulf %1404, %1403 : vector<8x128xf32>
    %cst_481 = arith.constant 5.000000e-01 : f32
    %1406 = vector.broadcast %cst_481 : f32 to vector<8x128xf32>
    %1407 = arith.addf %1405, %1406 : vector<8x128xf32>
    %1408 = arith.mulf %1397, %1374 : vector<8x128xf32>
    %1409 = arith.mulf %1389, %1399 : vector<8x128xf32>
    %1410 = arith.addf %1408, %1409 : vector<8x128xf32>
    %1411 = math.tanh %1410 : vector<8x128xf32>
    %1412 = arith.mulf %1407, %1411 : vector<8x128xf32>
    %c0_482 = arith.constant 0 : index
    %c384 = arith.constant 384 : index
    %1413 = vector.load %arg10[%c0_482, %c384] : memref<8x896xf32, #tpu.memory_space<vmem>>, vector<8x128xf32>
    tpu.vector_store %arg10[%c0_482, %c384], %1412 {strides = array<i32>} : memref<8x896xf32, #tpu.memory_space<vmem>>, vector<8x128xf32>,
    %1414 = arith.truncf %1412 : vector<8x128xf32> to vector<8x128xbf16>
    %c0_483 = arith.constant 0 : index
    %c0_484 = arith.constant 0 : index
    %1415 = vector.load %arg5[%c0_483, %c0_484] : memref<128x512xbf16, #tpu.memory_space<vmem>>, vector<128x512xbf16>
    %cst_485 = arith.constant dense<0.000000e+00> : vector<8x512xf32>
    %1416 = tpu.matmul %1414, %1415, %cst_485 {dimension_numbers = #tpu.dot_dimension_numbers<[1], [0], [0], [1], [0, 0, 1, 1], [], []>} : vector<8x128xbf16>, vector<128x512xbf16>, vector<8x512xf32> -> vector<8x512xf32>
    %1417 = arith.addf %1269, %1416 : vector<8x512xf32>
    %1418 = vector.extract_strided_slice %1417 {offsets = [0, 0], sizes = [8, 128], strides = [1, 1]} : vector<8x512xf32> to vector<8x128xf32>
    %cst_486 = arith.constant 5.000000e-01 : f32
    %1419 = vector.broadcast %cst_486 : f32 to vector<8x128xf32>
    %1420 = arith.mulf %1419, %1418 : vector<8x128xf32>
    %1421 = math.tanh %1420 : vector<8x128xf32>
    %cst_487 = arith.constant 5.000000e-01 : f32
    %1422 = vector.broadcast %cst_487 : f32 to vector<8x128xf32>
    %1423 = arith.mulf %1422, %1421 : vector<8x128xf32>
    %cst_488 = arith.constant 5.000000e-01 : f32
    %1424 = vector.broadcast %cst_488 : f32 to vector<8x128xf32>
    %1425 = arith.addf %1423, %1424 : vector<8x128xf32>
    %1426 = vector.extract_strided_slice %1417 {offsets = [0, 128], sizes = [8, 128], strides = [1, 1]} : vector<8x512xf32> to vector<8x128xf32>
    %cst_489 = arith.constant 5.000000e-01 : f32
    %1427 = vector.broadcast %cst_489 : f32 to vector<8x128xf32>
    %1428 = arith.mulf %1427, %1426 : vector<8x128xf32>
    %1429 = math.tanh %1428 : vector<8x128xf32>
    %cst_490 = arith.constant 5.000000e-01 : f32
    %1430 = vector.broadcast %cst_490 : f32 to vector<8x128xf32>
    %1431 = arith.mulf %1430, %1429 : vector<8x128xf32>
    %cst_491 = arith.constant 5.000000e-01 : f32
    %1432 = vector.broadcast %cst_491 : f32 to vector<8x128xf32>
    %1433 = arith.addf %1431, %1432 : vector<8x128xf32>
    %1434 = vector.extract_strided_slice %1417 {offsets = [0, 256], sizes = [8, 128], strides = [1, 1]} : vector<8x512xf32> to vector<8x128xf32>
    %1435 = math.tanh %1434 : vector<8x128xf32>
    %1436 = vector.extract_strided_slice %1417 {offsets = [0, 384], sizes = [8, 128], strides = [1, 1]} : vector<8x512xf32> to vector<8x128xf32>
    %cst_492 = arith.constant 5.000000e-01 : f32
    %1437 = vector.broadcast %cst_492 : f32 to vector<8x128xf32>
    %1438 = arith.mulf %1437, %1436 : vector<8x128xf32>
    %1439 = math.tanh %1438 : vector<8x128xf32>
    %cst_493 = arith.constant 5.000000e-01 : f32
    %1440 = vector.broadcast %cst_493 : f32 to vector<8x128xf32>
    %1441 = arith.mulf %1440, %1439 : vector<8x128xf32>
    %cst_494 = arith.constant 5.000000e-01 : f32
    %1442 = vector.broadcast %cst_494 : f32 to vector<8x128xf32>
    %1443 = arith.addf %1441, %1442 : vector<8x128xf32>
    %1444 = arith.mulf %1433, %1410 : vector<8x128xf32>
    %1445 = arith.mulf %1425, %1435 : vector<8x128xf32>
    %1446 = arith.addf %1444, %1445 : vector<8x128xf32>
    %1447 = math.tanh %1446 : vector<8x128xf32>
    %1448 = arith.mulf %1443, %1447 : vector<8x128xf32>
    %c0_495 = arith.constant 0 : index
    %c512 = arith.constant 512 : index
    %1449 = vector.load %arg10[%c0_495, %c512] : memref<8x896xf32, #tpu.memory_space<vmem>>, vector<8x128xf32>
    tpu.vector_store %arg10[%c0_495, %c512], %1448 {strides = array<i32>} : memref<8x896xf32, #tpu.memory_space<vmem>>, vector<8x128xf32>,
    %1450 = arith.truncf %1448 : vector<8x128xf32> to vector<8x128xbf16>
    %c0_496 = arith.constant 0 : index
    %c0_497 = arith.constant 0 : index
    %1451 = vector.load %arg5[%c0_496, %c0_497] : memref<128x512xbf16, #tpu.memory_space<vmem>>, vector<128x512xbf16>
    %cst_498 = arith.constant dense<0.000000e+00> : vector<8x512xf32>
    %1452 = tpu.matmul %1450, %1451, %cst_498 {dimension_numbers = #tpu.dot_dimension_numbers<[1], [0], [0], [1], [0, 0, 1, 1], [], []>} : vector<8x128xbf16>, vector<128x512xbf16>, vector<8x512xf32> -> vector<8x512xf32>
    %1453 = arith.addf %1269, %1452 : vector<8x512xf32>
    %1454 = vector.extract_strided_slice %1453 {offsets = [0, 0], sizes = [8, 128], strides = [1, 1]} : vector<8x512xf32> to vector<8x128xf32>
    %cst_499 = arith.constant 5.000000e-01 : f32
    %1455 = vector.broadcast %cst_499 : f32 to vector<8x128xf32>
    %1456 = arith.mulf %1455, %1454 : vector<8x128xf32>
    %1457 = math.tanh %1456 : vector<8x128xf32>
    %cst_500 = arith.constant 5.000000e-01 : f32
    %1458 = vector.broadcast %cst_500 : f32 to vector<8x128xf32>
    %1459 = arith.mulf %1458, %1457 : vector<8x128xf32>
    %cst_501 = arith.constant 5.000000e-01 : f32
    %1460 = vector.broadcast %cst_501 : f32 to vector<8x128xf32>
    %1461 = arith.addf %1459, %1460 : vector<8x128xf32>
    %1462 = vector.extract_strided_slice %1453 {offsets = [0, 128], sizes = [8, 128], strides = [1, 1]} : vector<8x512xf32> to vector<8x128xf32>
    %cst_502 = arith.constant 5.000000e-01 : f32
    %1463 = vector.broadcast %cst_502 : f32 to vector<8x128xf32>
    %1464 = arith.mulf %1463, %1462 : vector<8x128xf32>
    %1465 = math.tanh %1464 : vector<8x128xf32>
    %cst_503 = arith.constant 5.000000e-01 : f32
    %1466 = vector.broadcast %cst_503 : f32 to vector<8x128xf32>
    %1467 = arith.mulf %1466, %1465 : vector<8x128xf32>
    %cst_504 = arith.constant 5.000000e-01 : f32
    %1468 = vector.broadcast %cst_504 : f32 to vector<8x128xf32>
    %1469 = arith.addf %1467, %1468 : vector<8x128xf32>
    %1470 = vector.extract_strided_slice %1453 {offsets = [0, 256], sizes = [8, 128], strides = [1, 1]} : vector<8x512xf32> to vector<8x128xf32>
    %1471 = math.tanh %1470 : vector<8x128xf32>
    %1472 = vector.extract_strided_slice %1453 {offsets = [0, 384], sizes = [8, 128], strides = [1, 1]} : vector<8x512xf32> to vector<8x128xf32>
    %cst_505 = arith.constant 5.000000e-01 : f32
    %1473 = vector.broadcast %cst_505 : f32 to vector<8x128xf32>
    %1474 = arith.mulf %1473, %1472 : vector<8x128xf32>
    %1475 = math.tanh %1474 : vector<8x128xf32>
    %cst_506 = arith.constant 5.000000e-01 : f32
    %1476 = vector.broadcast %cst_506 : f32 to vector<8x128xf32>
    %1477 = arith.mulf %1476, %1475 : vector<8x128xf32>
    %cst_507 = arith.constant 5.000000e-01 : f32
    %1478 = vector.broadcast %cst_507 : f32 to vector<8x128xf32>
    %1479 = arith.addf %1477, %1478 : vector<8x128xf32>
    %1480 = arith.mulf %1469, %1446 : vector<8x128xf32>
    %1481 = arith.mulf %1461, %1471 : vector<8x128xf32>
    %1482 = arith.addf %1480, %1481 : vector<8x128xf32>
    %1483 = math.tanh %1482 : vector<8x128xf32>
    %1484 = arith.mulf %1479, %1483 : vector<8x128xf32>
    %c0_508 = arith.constant 0 : index
    %c640 = arith.constant 640 : index
    %1485 = vector.load %arg10[%c0_508, %c640] : memref<8x896xf32, #tpu.memory_space<vmem>>, vector<8x128xf32>
    tpu.vector_store %arg10[%c0_508, %c640], %1484 {strides = array<i32>} : memref<8x896xf32, #tpu.memory_space<vmem>>, vector<8x128xf32>,
    %1486 = arith.truncf %1484 : vector<8x128xf32> to vector<8x128xbf16>
    %c0_509 = arith.constant 0 : index
    %c0_510 = arith.constant 0 : index
    %1487 = vector.load %arg5[%c0_509, %c0_510] : memref<128x512xbf16, #tpu.memory_space<vmem>>, vector<128x512xbf16>
    %cst_511 = arith.constant dense<0.000000e+00> : vector<8x512xf32>
    %1488 = tpu.matmul %1486, %1487, %cst_511 {dimension_numbers = #tpu.dot_dimension_numbers<[1], [0], [0], [1], [0, 0, 1, 1], [], []>} : vector<8x128xbf16>, vector<128x512xbf16>, vector<8x512xf32> -> vector<8x512xf32>
    %1489 = arith.addf %1269, %1488 : vector<8x512xf32>
    %1490 = vector.extract_strided_slice %1489 {offsets = [0, 0], sizes = [8, 128], strides = [1, 1]} : vector<8x512xf32> to vector<8x128xf32>
    %cst_512 = arith.constant 5.000000e-01 : f32
    %1491 = vector.broadcast %cst_512 : f32 to vector<8x128xf32>
    %1492 = arith.mulf %1491, %1490 : vector<8x128xf32>
    %1493 = math.tanh %1492 : vector<8x128xf32>
    %cst_513 = arith.constant 5.000000e-01 : f32
    %1494 = vector.broadcast %cst_513 : f32 to vector<8x128xf32>
    %1495 = arith.mulf %1494, %1493 : vector<8x128xf32>
    %cst_514 = arith.constant 5.000000e-01 : f32
    %1496 = vector.broadcast %cst_514 : f32 to vector<8x128xf32>
    %1497 = arith.addf %1495, %1496 : vector<8x128xf32>
    %1498 = vector.extract_strided_slice %1489 {offsets = [0, 128], sizes = [8, 128], strides = [1, 1]} : vector<8x512xf32> to vector<8x128xf32>
    %cst_515 = arith.constant 5.000000e-01 : f32
    %1499 = vector.broadcast %cst_515 : f32 to vector<8x128xf32>
    %1500 = arith.mulf %1499, %1498 : vector<8x128xf32>
    %1501 = math.tanh %1500 : vector<8x128xf32>
    %cst_516 = arith.constant 5.000000e-01 : f32
    %1502 = vector.broadcast %cst_516 : f32 to vector<8x128xf32>
    %1503 = arith.mulf %1502, %1501 : vector<8x128xf32>
    %cst_517 = arith.constant 5.000000e-01 : f32
    %1504 = vector.broadcast %cst_517 : f32 to vector<8x128xf32>
    %1505 = arith.addf %1503, %1504 : vector<8x128xf32>
    %1506 = vector.extract_strided_slice %1489 {offsets = [0, 256], sizes = [8, 128], strides = [1, 1]} : vector<8x512xf32> to vector<8x128xf32>
    %1507 = math.tanh %1506 : vector<8x128xf32>
    %1508 = vector.extract_strided_slice %1489 {offsets = [0, 384], sizes = [8, 128], strides = [1, 1]} : vector<8x512xf32> to vector<8x128xf32>
    %cst_518 = arith.constant 5.000000e-01 : f32
    %1509 = vector.broadcast %cst_518 : f32 to vector<8x128xf32>
    %1510 = arith.mulf %1509, %1508 : vector<8x128xf32>
    %1511 = math.tanh %1510 : vector<8x128xf32>
    %cst_519 = arith.constant 5.000000e-01 : f32
    %1512 = vector.broadcast %cst_519 : f32 to vector<8x128xf32>
    %1513 = arith.mulf %1512, %1511 : vector<8x128xf32>
    %cst_520 = arith.constant 5.000000e-01 : f32
    %1514 = vector.broadcast %cst_520 : f32 to vector<8x128xf32>
    %1515 = arith.addf %1513, %1514 : vector<8x128xf32>
    %1516 = arith.mulf %1505, %1482 : vector<8x128xf32>
    %1517 = arith.mulf %1497, %1507 : vector<8x128xf32>
    %1518 = arith.addf %1516, %1517 : vector<8x128xf32>
    %1519 = math.tanh %1518 : vector<8x128xf32>
    %1520 = arith.mulf %1515, %1519 : vector<8x128xf32>
    %c0_521 = arith.constant 0 : index
    %c768 = arith.constant 768 : index
    %1521 = vector.load %arg10[%c0_521, %c768] : memref<8x896xf32, #tpu.memory_space<vmem>>, vector<8x128xf32>
    tpu.vector_store %arg10[%c0_521, %c768], %1520 {strides = array<i32>} : memref<8x896xf32, #tpu.memory_space<vmem>>, vector<8x128xf32>,
    %c0_522 = arith.constant 0 : index
    %c0_523 = arith.constant 0 : index
    %1522 = vector.load %arg10[%c0_522, %c0_523] : memref<8x896xf32, #tpu.memory_space<vmem>>, vector<8x896xf32>
    %1523 = arith.truncf %1522 : vector<8x896xf32> to vector<8x896xbf16>
    %c0_524 = arith.constant 0 : index
    %c0_525 = arith.constant 0 : index
    %1524 = vector.load %arg7[%c0_524, %c0_525] : memref<896x7xbf16, #tpu.memory_space<vmem>>, vector<896x7xbf16>
    %cst_526 = arith.constant dense<0.000000e+00> : vector<8x7xf32>
    %1525 = tpu.matmul %1523, %1524, %cst_526 {dimension_numbers = #tpu.dot_dimension_numbers<[1], [0], [0], [1], [0, 0, 1, 1], [], []>} : vector<8x896xbf16>, vector<896x7xbf16>, vector<8x7xf32> -> vector<8x7xf32>
    %c0_527 = arith.constant 0 : index
    %c0_528 = arith.constant 0 : index
    %1526 = vector.load %arg8[%c0_527, %c0_528] : memref<1x7xf32, #tpu.memory_space<vmem>>, vector<1x7xf32>
    %1527 = vector.broadcast %1526 : vector<1x7xf32> to vector<8x7xf32>
    %1528 = arith.addf %1525, %1527 : vector<8x7xf32>
    %cst_529 = arith.constant 5.000000e-01 : f32
    %1529 = vector.broadcast %cst_529 : f32 to vector<8x7xf32>
    %1530 = arith.mulf %1529, %1528 : vector<8x7xf32>
    %1531 = math.tanh %1530 : vector<8x7xf32>
    %cst_530 = arith.constant 5.000000e-01 : f32
    %1532 = vector.broadcast %cst_530 : f32 to vector<8x7xf32>
    %1533 = arith.mulf %1532, %1531 : vector<8x7xf32>
    %cst_531 = arith.constant 5.000000e-01 : f32
    %1534 = vector.broadcast %cst_531 : f32 to vector<8x7xf32>
    %1535 = arith.addf %1533, %1534 : vector<8x7xf32>
    %c0_532 = arith.constant 0 : index
    %c0_533 = arith.constant 0 : index
    %1536 = vector.load %arg9[%c0_532, %c0_533] : memref<8x7xf32, #tpu.memory_space<vmem>>, vector<8x7xf32>
    tpu.vector_store %arg9[%c0_532, %c0_533], %1535 {strides = array<i32>} : memref<8x7xf32, #tpu.memory_space<vmem>>, vector<8x7xf32>,
    return
  }
}

</mosaic_0001>

<llo_original>
// kernel: ournet_forward.1
$region0: #{ournet_forward.1}
  #allocation0 [shape = 'u32[]', space=smem, size = 0x4, offset = 0x4, fixed_abs, tag = 'smem constant byte address 0x4 - core index']
  #allocation1 [shape = 'u32[72,128]{1,0:T(1,128)}', space=vmem, size = 0x9000, scoped, tag = 'internal scratch']
  #allocation2 [shape = 'f32[8,896]{1,0:T(8,128)}', space=vmem, size = 0x7000, scoped, tag = 'scratch operand']
  %s0 = inlined_call_operand.vmem [shape: f32[30,8,1], index: 0, kind: input, shape index: {}]
  %s1 = inlined_call_operand.vmem [shape: f32[1,512], index: 1, kind: input, shape index: {}]
  %s2 = inlined_call_operand.vmem [shape: f32[1,512], index: 2, kind: input, shape index: {}]
  %s3 = inlined_call_operand.vmem [shape: bf16[128,512], index: 3, kind: input, shape index: {}]
  %s4 = inlined_call_operand.vmem [shape: bf16[128,512], index: 4, kind: input, shape index: {}]
  %s5 = inlined_call_operand.vmem [shape: bf16[128,512], index: 5, kind: input, shape index: {}]
  %s6 = inlined_call_operand.vmem [shape: f32[1,512], index: 6, kind: input, shape index: {}]
  %s7 = inlined_call_operand.vmem [shape: bf16[896,7], index: 7, kind: input, shape index: {}]
  %s8 = inlined_call_operand.vmem [shape: f32[1,7], index: 8, kind: input, shape index: {}]
  %s9 = inlined_call_operand.hbm [shape: f32[8,7], index: 9, kind: output, shape index: {}]
  %s10 = sld [smem:[#allocation0]]
  $region46: #{ournet_forward.1} parent=0
    _
  %s12 = ssub.s32 1, %s10
  %s13 = scalar_select 0, %s12, %s10
  $region1: #{ournet_forward.1} parent=0
    #allocation3 [shape = 'u8[4096]{0}', space=vmem, size = 0x1000, scoped, tag = 'output window, operand 0, single buffered']
    #allocation4 [shape = 's32[1]{0}', space=sflag, size = 0x4, scoped, tag = 'scoped memory for ournet_forward.1']
    %14 = vsyncpa [#allocation4], 0
    // Predicated region
    $region2: #{ournet_forward.1} parent=1 // pred_check
      _
    $region3: #{ournet_forward.1} parent=1 // pred_check_branch
      %16 = sbr.rel (0) target = $region5
    $region4: #{ournet_forward.1} parent=1 // pred_region
      _
    $region5: #{ournet_forward.1} parent=1 // pred_fallthru
      _
    // Predicated region
    $region6: #{ournet_forward.1} parent=1 // pred_check
      _
    $region7: #{ournet_forward.1} parent=1 // pred_check_branch
      %18 = sbr.rel (0) target = $region9
    $region8: #{ournet_forward.1} parent=1 // pred_region
      _
    $region9: #{ournet_forward.1} parent=1 // pred_fallthru
      _
    // Predicated region
    $region10: #{ournet_forward.1} parent=1 // pred_check
      _
    $region11: #{ournet_forward.1} parent=1 // pred_check_branch
      %20 = sbr.rel (0) target = $region13
    $region12: #{ournet_forward.1} parent=1 // pred_region
      _
    $region13: #{ournet_forward.1} parent=1 // pred_fallthru
      _
    // Predicated region
    $region14: #{ournet_forward.1} parent=1 // pred_check
      _
    $region15: #{ournet_forward.1} parent=1 // pred_check_branch
      %22 = sbr.rel (0) target = $region17
    $region16: #{ournet_forward.1} parent=1 // pred_region
      _
    $region17: #{ournet_forward.1} parent=1 // pred_fallthru
      _
    // Predicated region
    $region18: #{ournet_forward.1} parent=1 // pred_check
      _
    $region19: #{ournet_forward.1} parent=1 // pred_check_branch
      %24 = sbr.rel (0) target = $region21
    $region20: #{ournet_forward.1} parent=1 // pred_region
      _
    $region21: #{ournet_forward.1} parent=1 // pred_fallthru
      _
    // Predicated region
    $region22: #{ournet_forward.1} parent=1 // pred_check
      _
    $region23: #{ournet_forward.1} parent=1 // pred_check_branch
      %26 = sbr.rel (0) target = $region25
    $region24: #{ournet_forward.1} parent=1 // pred_region
      _
    $region25: #{ournet_forward.1} parent=1 // pred_fallthru
      _
    // Predicated region
    $region26: #{ournet_forward.1} parent=1 // pred_check
      _
    $region27: #{ournet_forward.1} parent=1 // pred_check_branch
      %28 = sbr.rel (0) target = $region29
    $region28: #{ournet_forward.1} parent=1 // pred_region
      _
    $region29: #{ournet_forward.1} parent=1 // pred_fallthru
      _
    // Predicated region
    $region30: #{ournet_forward.1} parent=1 // pred_check
      _
    $region31: #{ournet_forward.1} parent=1 // pred_check_branch
      %30 = sbr.rel (0) target = $region33
    $region32: #{ournet_forward.1} parent=1 // pred_region
      _
    $region33: #{ournet_forward.1} parent=1 // pred_fallthru
      _
    // Predicated region
    $region34: #{ournet_forward.1} parent=1 // pred_check
      _
    $region35: #{ournet_forward.1} parent=1 // pred_check_branch
      %32 = sbr.rel (0) target = $region37
    $region36: #{ournet_forward.1} parent=1 // pred_region
      _
    $region37: #{ournet_forward.1} parent=1 // pred_fallthru
      _
    %v34 = vld [vmem:[%s1] sm:$0xf]
    %v35 = vld [vmem:[%s2] sm:$0xf]
    %v36 = vld [vmem:[%s0] sm:$0xff]
    %38 = vset.pattern.permute.xlu0 0
    %39 = vperm.xlu0 %38, %v36
    %v40 = vpop.permute.xlu0 %39
    %v43 = vperm.slane %v34, 0
    %v44 = vperm.slane %v34, 1
    %v45 = vperm.slane %v34, 2
    %v46 = vperm.slane %v34, 3
    %v51 = vmul.f32 %v40, %v43
    %v52 = vmul.f32 %v40, %v44
    %v53 = vmul.f32 %v40, %v45
    %v54 = vmul.f32 %v40, %v46
    %v56 = vperm.slane %v35, 0
    %v57 = vperm.slane %v35, 1
    %v58 = vperm.slane %v35, 2
    %v59 = vperm.slane %v35, 3
    %v64 = vadd.f32 %v51, %v56
    %v65 = vadd.f32 %v52, %v57
    %v66 = vadd.f32 %v53, %v58
    %v67 = vadd.f32 %v54, %v59
    %v68 = vld [vmem:[%s3] sm:$0xff]
    %v69 = vld [vmem:[%s3 + $0x8] sm:$0xff]
    %v70 = vld [vmem:[%s3 + $0x10] sm:$0xff]
    %v71 = vld [vmem:[%s3 + $0x18] sm:$0xff]
    %v72 = vld [vmem:[%s3 + $0x20] sm:$0xff]
    %v73 = vld [vmem:[%s3 + $0x28] sm:$0xff]
    %v74 = vld [vmem:[%s3 + $0x30] sm:$0xff]
    %v75 = vld [vmem:[%s3 + $0x38] sm:$0xff]
    %v76 = vld [vmem:[%s3 + $0x40] sm:$0xff]
    %v77 = vld [vmem:[%s3 + $0x48] sm:$0xff]
    %v78 = vld [vmem:[%s3 + $0x50] sm:$0xff]
    %v79 = vld [vmem:[%s3 + $0x58] sm:$0xff]
    %v80 = vld [vmem:[%s3 + $0x60] sm:$0xff]
    %v81 = vld [vmem:[%s3 + $0x68] sm:$0xff]
    %v82 = vld [vmem:[%s3 + $0x70] sm:$0xff]
    %v83 = vld [vmem:[%s3 + $0x78] sm:$0xff]
    %v84 = vld [vmem:[%s3 + $0x80] sm:$0xff]
    %v85 = vld [vmem:[%s3 + $0x88] sm:$0xff]
    %v86 = vld [vmem:[%s3 + $0x90] sm:$0xff]
    %v87 = vld [vmem:[%s3 + $0x98] sm:$0xff]
    %v88 = vld [vmem:[%s3 + $0xa0] sm:$0xff]
    %v89 = vld [vmem:[%s3 + $0xa8] sm:$0xff]
    %v90 = vld [vmem:[%s3 + $0xb0] sm:$0xff]
    %v91 = vld [vmem:[%s3 + $0xb8] sm:$0xff]
    %v92 = vld [vmem:[%s3 + $0xc0] sm:$0xff]
    %v93 = vld [vmem:[%s3 + $0xc8] sm:$0xff]
    %v94 = vld [vmem:[%s3 + $0xd0] sm:$0xff]
    %v95 = vld [vmem:[%s3 + $0xd8] sm:$0xff]
    %v96 = vld [vmem:[%s3 + $0xe0] sm:$0xff]
    %v97 = vld [vmem:[%s3 + $0xe8] sm:$0xff]
    %v98 = vld [vmem:[%s3 + $0xf0] sm:$0xff]
    %v99 = vld [vmem:[%s3 + $0xf8] sm:$0xff]
    %v132 = vunpack.c.l.b16 %v68
    %v133 = vunpack.c.h.b16 %v68
    %v134 = vunpack.c.l.b16 %v69
    %v135 = vunpack.c.h.b16 %v69
    %v136 = vunpack.c.l.b16 %v70
    %v137 = vunpack.c.h.b16 %v70
    %v138 = vunpack.c.l.b16 %v71
    %v139 = vunpack.c.h.b16 %v71
    %v140 = vunpack.c.l.b16 %v72
    %v141 = vunpack.c.h.b16 %v72
    %v142 = vunpack.c.l.b16 %v73
    %v143 = vunpack.c.h.b16 %v73
    %v144 = vunpack.c.l.b16 %v74
    %v145 = vunpack.c.h.b16 %v74
    %v146 = vunpack.c.l.b16 %v75
    %v147 = vunpack.c.h.b16 %v75
    %v148 = vunpack.c.l.b16 %v76
    %v149 = vunpack.c.h.b16 %v76
    %v150 = vunpack.c.l.b16 %v77
    %v151 = vunpack.c.h.b16 %v77
    %v152 = vunpack.c.l.b16 %v78
    %v153 = vunpack.c.h.b16 %v78
    %v154 = vunpack.c.l.b16 %v79
    %v155 = vunpack.c.h.b16 %v79
    %v156 = vunpack.c.l.b16 %v80
    %v157 = vunpack.c.h.b16 %v80
    %v158 = vunpack.c.l.b16 %v81
    %v159 = vunpack.c.h.b16 %v81
    %v160 = vunpack.c.l.b16 %v82
    %v161 = vunpack.c.h.b16 %v82
    %v162 = vunpack.c.l.b16 %v83
    %v163 = vunpack.c.h.b16 %v83
    %v164 = vunpack.c.l.b16 %v84
    %v165 = vunpack.c.h.b16 %v84
    %v166 = vunpack.c.l.b16 %v85
    %v167 = vunpack.c.h.b16 %v85
    %v168 = vunpack.c.l.b16 %v86
    %v169 = vunpack.c.h.b16 %v86
    %v170 = vunpack.c.l.b16 %v87
    %v171 = vunpack.c.h.b16 %v87
    %v172 = vunpack.c.l.b16 %v88
    %v173 = vunpack.c.h.b16 %v88
    %v174 = vunpack.c.l.b16 %v89
    %v175 = vunpack.c.h.b16 %v89
    %v176 = vunpack.c.l.b16 %v90
    %v177 = vunpack.c.h.b16 %v90
    %v178 = vunpack.c.l.b16 %v91
    %v179 = vunpack.c.h.b16 %v91
    %v180 = vunpack.c.l.b16 %v92
    %v181 = vunpack.c.h.b16 %v92
    %v182 = vunpack.c.l.b16 %v93
    %v183 = vunpack.c.h.b16 %v93
    %v184 = vunpack.c.l.b16 %v94
    %v185 = vunpack.c.h.b16 %v94
    %v186 = vunpack.c.l.b16 %v95
    %v187 = vunpack.c.h.b16 %v95
    %v188 = vunpack.c.l.b16 %v96
    %v189 = vunpack.c.h.b16 %v96
    %v190 = vunpack.c.l.b16 %v97
    %v191 = vunpack.c.h.b16 %v97
    %v192 = vunpack.c.l.b16 %v98
    %v193 = vunpack.c.h.b16 %v98
    %v194 = vunpack.c.l.b16 %v99
    %v195 = vunpack.c.h.b16 %v99
    %v196 = vpack.c.b16 %v136, %v132
    %v197 = vpack.c.b16 %v137, %v133
    %v198 = vpack.c.b16 %v138, %v134
    %v199 = vpack.c.b16 %v139, %v135
    %v200 = vpack.c.b16 %v144, %v140
    %v201 = vpack.c.b16 %v145, %v141
    %v202 = vpack.c.b16 %v146, %v142
    %v203 = vpack.c.b16 %v147, %v143
    %v204 = vpack.c.b16 %v152, %v148
    %v205 = vpack.c.b16 %v153, %v149
    %v206 = vpack.c.b16 %v154, %v150
    %v207 = vpack.c.b16 %v155, %v151
    %v208 = vpack.c.b16 %v160, %v156
    %v209 = vpack.c.b16 %v161, %v157
    %v210 = vpack.c.b16 %v162, %v158
    %v211 = vpack.c.b16 %v163, %v159
    %v212 = vpack.c.b16 %v168, %v164
    %v213 = vpack.c.b16 %v169, %v165
    %v214 = vpack.c.b16 %v170, %v166
    %v215 = vpack.c.b16 %v171, %v167
    %v216 = vpack.c.b16 %v176, %v172
    %v217 = vpack.c.b16 %v177, %v173
    %v218 = vpack.c.b16 %v178, %v174
    %v219 = vpack.c.b16 %v179, %v175
    %v220 = vpack.c.b16 %v184, %v180
    %v221 = vpack.c.b16 %v185, %v181
    %v222 = vpack.c.b16 %v186, %v182
    %v223 = vpack.c.b16 %v187, %v183
    %v224 = vpack.c.b16 %v192, %v188
    %v225 = vpack.c.b16 %v193, %v189
    %v226 = vpack.c.b16 %v194, %v190
    %v227 = vpack.c.b16 %v195, %v191
    %260 = vmatpush.bf16.msra.mxu0 %v224
    %261 = vmatpush.bf16.msra.mxu0 %v220
    %262 = vmatpush.bf16.msra.mxu0 %v216
    %263 = vmatpush.bf16.msra.mxu0 %v212
    %264 = vmatpush.bf16.msra.mxu0 %v208
    %265 = vmatpush.bf16.msra.mxu0 %v204
    %266 = vmatpush.bf16.msra.mxu0 %v200
    %267 = vmatpush.bf16.msra.mxu0 %v196
    %268 = vmatmul.bf16.gmra.mxu0 0
    %v269 = vpop.f32.mrf.mxu0
    %v270 = vadd.f32 0.0, %v269
    %v271 = vpop.f32.mrf.mxu0
    %272 = vdwg.mxu0
    %273 = vmatpush.bf16.msra.mxu0 %v225
    %274 = vmatpush.bf16.msra.mxu0 %v221
    %275 = vmatpush.bf16.msra.mxu0 %v217
    %276 = vmatpush.bf16.msra.mxu0 %v213
    %277 = vmatpush.bf16.msra.mxu0 %v209
    %278 = vmatpush.bf16.msra.mxu0 %v205
    %279 = vmatpush.bf16.msra.mxu0 %v201
    %280 = vmatpush.bf16.msra.mxu0 %v197
    %281 = vmatmul.bf16.gmra.mxu0 0
    %v282 = vpop.f32.mrf.mxu0
    %v283 = vadd.f32 0.0, %v282
    %v284 = vpop.f32.mrf.mxu0
    %285 = vdwg.mxu0
    %286 = vmatpush.bf16.msra.mxu0 %v226
    %287 = vmatpush.bf16.msra.mxu0 %v222
    %288 = vmatpush.bf16.msra.mxu0 %v218
    %289 = vmatpush.bf16.msra.mxu0 %v214
    %290 = vmatpush.bf16.msra.mxu0 %v210
    %291 = vmatpush.bf16.msra.mxu0 %v206
    %292 = vmatpush.bf16.msra.mxu0 %v202
    %293 = vmatpush.bf16.msra.mxu0 %v198
    %294 = vmatmul.bf16.gmra.mxu0 0
    %v295 = vpop.f32.mrf.mxu0
    %v296 = vadd.f32 0.0, %v295
    %v297 = vpop.f32.mrf.mxu0
    %298 = vdwg.mxu0
    %299 = vmatpush.bf16.msra.mxu0 %v227
    %300 = vmatpush.bf16.msra.mxu0 %v223
    %301 = vmatpush.bf16.msra.mxu0 %v219
    %302 = vmatpush.bf16.msra.mxu0 %v215
    %303 = vmatpush.bf16.msra.mxu0 %v211
    %304 = vmatpush.bf16.msra.mxu0 %v207
    %305 = vmatpush.bf16.msra.mxu0 %v203
    %306 = vmatpush.bf16.msra.mxu0 %v199
    %307 = vmatmul.bf16.gmra.mxu0 0
    %v308 = vpop.f32.mrf.mxu0
    %v309 = vadd.f32 0.0, %v308
    %v310 = vpop.f32.mrf.mxu0
    %311 = vdwg.mxu0
    %v312 = vadd.f32 %v64, %v270
    %v313 = vadd.f32 %v65, %v283
    %v314 = vadd.f32 %v66, %v296
    %v315 = vadd.f32 %v67, %v309
    %v316 = vmul.f32 %v312, 0.5
    %v317 = vtanh.pop %v316
    %v318 = vmul.f32 %v317, 0.5
    %v319 = vadd.f32 %v318, 0.5
    %v320 = vmul.f32 %v313, 0.5
    %v321 = vtanh.pop %v320
    %v322 = vmul.f32 %v321, 0.5
    %v323 = vadd.f32 %v322, 0.5
    %v324 = vtanh.pop %v314
    %v325 = vmul.f32 %v315, 0.5
    %v326 = vtanh.pop %v325
    %v327 = vmul.f32 %v326, 0.5
    %v328 = vadd.f32 %v327, 0.5
    %v329 = vmul.f32 %v323, 0.0
    %v330 = vmul.f32 %v319, %v324
    %v331 = vadd.f32 %v329, %v330
    %v332 = vtanh.pop %v331
    %v333 = vmul.f32 %v328, %v332
    %s334 = scalar_lea.vmem %s0, 8
    %v335 = vld [vmem:[%s334] sm:$0xff]
    %337 = vset.pattern.permute.xlu0 0
    %338 = vperm.xlu0 %337, %v335
    %v339 = vpop.permute.xlu0 %338
    %v341 = vmul.f32 %v339, %v43
    %v342 = vmul.f32 %v339, %v44
    %v343 = vmul.f32 %v339, %v45
    %v344 = vmul.f32 %v339, %v46
    %v345 = vadd.f32 %v341, %v56
    %v346 = vadd.f32 %v342, %v57
    %v347 = vadd.f32 %v343, %v58
    %v348 = vadd.f32 %v344, %v59
    %v349 = vpack.c.bf16 %v333, %v333
    %350 = vmatpush.bf16.msra.mxu0 %v224
    %351 = vmatpush.bf16.msra.mxu0 %v220
    %352 = vmatpush.bf16.msra.mxu0 %v216
    %353 = vmatpush.bf16.msra.mxu0 %v212
    %354 = vmatpush.bf16.msra.mxu0 %v208
    %355 = vmatpush.bf16.msra.mxu0 %v204
    %356 = vmatpush.bf16.msra.mxu0 %v200
    %357 = vmatpush.bf16.msra.mxu0 %v196
    %358 = vmatmul.bf16.gmra.mxu0 %v349
    %v359 = vpop.f32.mrf.mxu0
    %v360 = vadd.f32 0.0, %v359
    %v361 = vpop.f32.mrf.mxu0
    %362 = vdwg.mxu0
    %363 = vmatpush.bf16.msra.mxu0 %v225
    %364 = vmatpush.bf16.msra.mxu0 %v221
    %365 = vmatpush.bf16.msra.mxu0 %v217
    %366 = vmatpush.bf16.msra.mxu0 %v213
    %367 = vmatpush.bf16.msra.mxu0 %v209
    %368 = vmatpush.bf16.msra.mxu0 %v205
    %369 = vmatpush.bf16.msra.mxu0 %v201
    %370 = vmatpush.bf16.msra.mxu0 %v197
    %371 = vmatmul.bf16.gmra.mxu0 %v349
    %v372 = vpop.f32.mrf.mxu0
    %v373 = vadd.f32 0.0, %v372
    %v374 = vpop.f32.mrf.mxu0
    %375 = vdwg.mxu0
    %376 = vmatpush.bf16.msra.mxu0 %v226
    %377 = vmatpush.bf16.msra.mxu0 %v222
    %378 = vmatpush.bf16.msra.mxu0 %v218
    %379 = vmatpush.bf16.msra.mxu0 %v214
    %380 = vmatpush.bf16.msra.mxu0 %v210
    %381 = vmatpush.bf16.msra.mxu0 %v206
    %382 = vmatpush.bf16.msra.mxu0 %v202
    %383 = vmatpush.bf16.msra.mxu0 %v198
    %384 = vmatmul.bf16.gmra.mxu0 %v349
    %v385 = vpop.f32.mrf.mxu0
    %v386 = vadd.f32 0.0, %v385
    %v387 = vpop.f32.mrf.mxu0
    %388 = vdwg.mxu0
    %389 = vmatpush.bf16.msra.mxu0 %v227
    %390 = vmatpush.bf16.msra.mxu0 %v223
    %391 = vmatpush.bf16.msra.mxu0 %v219
    %392 = vmatpush.bf16.msra.mxu0 %v215
    %393 = vmatpush.bf16.msra.mxu0 %v211
    %394 = vmatpush.bf16.msra.mxu0 %v207
    %395 = vmatpush.bf16.msra.mxu0 %v203
    %396 = vmatpush.bf16.msra.mxu0 %v199
    %397 = vmatmul.bf16.gmra.mxu0 %v349
    %v398 = vpop.f32.mrf.mxu0
    %v399 = vadd.f32 0.0, %v398
    %v400 = vpop.f32.mrf.mxu0
    %401 = vdwg.mxu0
    %v402 = vadd.f32 %v345, %v360
    %v403 = vadd.f32 %v346, %v373
    %v404 = vadd.f32 %v347, %v386
    %v405 = vadd.f32 %v348, %v399
    %v406 = vmul.f32 %v402, 0.5
    %v407 = vtanh.pop %v406
    %v408 = vmul.f32 %v407, 0.5
    %v409 = vadd.f32 %v408, 0.5
    %v410 = vmul.f32 %v403, 0.5
    %v411 = vtanh.pop %v410
    %v412 = vmul.f32 %v411, 0.5
    %v413 = vadd.f32 %v412, 0.5
    %v414 = vtanh.pop %v404
    %v415 = vmul.f32 %v405, 0.5
    %v416 = vtanh.pop %v415
    %v417 = vmul.f32 %v416, 0.5
    %v418 = vadd.f32 %v417, 0.5
    %v419 = vmul.f32 %v413, %v331
    %v420 = vmul.f32 %v409, %v414
    %v421 = vadd.f32 %v419, %v420
    %v422 = vtanh.pop %v421
    %v423 = vmul.f32 %v418, %v422
    %s424 = scalar_lea.vmem %s0, 16
    %v425 = vld [vmem:[%s424] sm:$0xff]
    %427 = vset.pattern.permute.xlu0 0
    %428 = vperm.xlu0 %427, %v425
    %v429 = vpop.permute.xlu0 %428
    %v431 = vmul.f32 %v429, %v43
    %v432 = vmul.f32 %v429, %v44
    %v433 = vmul.f32 %v429, %v45
    %v434 = vmul.f32 %v429, %v46
    %v435 = vadd.f32 %v431, %v56
    %v436 = vadd.f32 %v432, %v57
    %v437 = vadd.f32 %v433, %v58
    %v438 = vadd.f32 %v434, %v59
    %v439 = vpack.c.bf16 %v423, %v423
    %440 = vmatpush.bf16.msra.mxu0 %v224
    %441 = vmatpush.bf16.msra.mxu0 %v220
    %442 = vmatpush.bf16.msra.mxu0 %v216
    %443 = vmatpush.bf16.msra.mxu0 %v212
    %444 = vmatpush.bf16.msra.mxu0 %v208
    %445 = vmatpush.bf16.msra.mxu0 %v204
    %446 = vmatpush.bf16.msra.mxu0 %v200
    %447 = vmatpush.bf16.msra.mxu0 %v196
    %448 = vmatmul.bf16.gmra.mxu0 %v439
    %v449 = vpop.f32.mrf.mxu0
    %v450 = vadd.f32 0.0, %v449
    %v451 = vpop.f32.mrf.mxu0
    %452 = vdwg.mxu0
    %453 = vmatpush.bf16.msra.mxu0 %v225
    %454 = vmatpush.bf16.msra.mxu0 %v221
    %455 = vmatpush.bf16.msra.mxu0 %v217
    %456 = vmatpush.bf16.msra.mxu0 %v213
    %457 = vmatpush.bf16.msra.mxu0 %v209
    %458 = vmatpush.bf16.msra.mxu0 %v205
    %459 = vmatpush.bf16.msra.mxu0 %v201
    %460 = vmatpush.bf16.msra.mxu0 %v197
    %461 = vmatmul.bf16.gmra.mxu0 %v439
    %v462 = vpop.f32.mrf.mxu0
    %v463 = vadd.f32 0.0, %v462
    %v464 = vpop.f32.mrf.mxu0
    %465 = vdwg.mxu0
    %466 = vmatpush.bf16.msra.mxu0 %v226
    %467 = vmatpush.bf16.msra.mxu0 %v222
    %468 = vmatpush.bf16.msra.mxu0 %v218
    %469 = vmatpush.bf16.msra.mxu0 %v214
    %470 = vmatpush.bf16.msra.mxu0 %v210
    %471 = vmatpush.bf16.msra.mxu0 %v206
    %472 = vmatpush.bf16.msra.mxu0 %v202
    %473 = vmatpush.bf16.msra.mxu0 %v198
    %474 = vmatmul.bf16.gmra.mxu0 %v439
    %v475 = vpop.f32.mrf.mxu0
    %v476 = vadd.f32 0.0, %v475
    %v477 = vpop.f32.mrf.mxu0
    %478 = vdwg.mxu0
    %479 = vmatpush.bf16.msra.mxu0 %v227
    %480 = vmatpush.bf16.msra.mxu0 %v223
    %481 = vmatpush.bf16.msra.mxu0 %v219
    %482 = vmatpush.bf16.msra.mxu0 %v215
    %483 = vmatpush.bf16.msra.mxu0 %v211
    %484 = vmatpush.bf16.msra.mxu0 %v207
    %485 = vmatpush.bf16.msra.mxu0 %v203
    %486 = vmatpush.bf16.msra.mxu0 %v199
    %487 = vmatmul.bf16.gmra.mxu0 %v439
    %v488 = vpop.f32.mrf.mxu0
    %v489 = vadd.f32 0.0, %v488
    %v490 = vpop.f32.mrf.mxu0
    %491 = vdwg.mxu0
    %v492 = vadd.f32 %v435, %v450
    %v493 = vadd.f32 %v436, %v463
    %v494 = vadd.f32 %v437, %v476
    %v495 = vadd.f32 %v438, %v489
    %v496 = vmul.f32 %v492, 0.5
    %v497 = vtanh.pop %v496
    %v498 = vmul.f32 %v497, 0.5
    %v499 = vadd.f32 %v498, 0.5
    %v500 = vmul.f32 %v493, 0.5
    %v501 = vtanh.pop %v500
    %v502 = vmul.f32 %v501, 0.5
    %v503 = vadd.f32 %v502, 0.5
    %v504 = vtanh.pop %v494
    %v505 = vmul.f32 %v495, 0.5
    %v506 = vtanh.pop %v505
    %v507 = vmul.f32 %v506, 0.5
    %v508 = vadd.f32 %v507, 0.5
    %v509 = vmul.f32 %v503, %v421
    %v510 = vmul.f32 %v499, %v504
    %v511 = vadd.f32 %v509, %v510
    %v512 = vtanh.pop %v511
    %v513 = vmul.f32 %v508, %v512
    %s514 = scalar_lea.vmem %s0, 24
    %v515 = vld [vmem:[%s514] sm:$0xff]
    %517 = vset.pattern.permute.xlu0 0
    %518 = vperm.xlu0 %517, %v515
    %v519 = vpop.permute.xlu0 %518
    %v521 = vmul.f32 %v519, %v43
    %v522 = vmul.f32 %v519, %v44
    %v523 = vmul.f32 %v519, %v45
    %v524 = vmul.f32 %v519, %v46
    %v525 = vadd.f32 %v521, %v56
    %v526 = vadd.f32 %v522, %v57
    %v527 = vadd.f32 %v523, %v58
    %v528 = vadd.f32 %v524, %v59
    %v529 = vpack.c.bf16 %v513, %v513
    %530 = vmatpush.bf16.msra.mxu0 %v224
    %531 = vmatpush.bf16.msra.mxu0 %v220
    %532 = vmatpush.bf16.msra.mxu0 %v216
    %533 = vmatpush.bf16.msra.mxu0 %v212
    %534 = vmatpush.bf16.msra.mxu0 %v208
    %535 = vmatpush.bf16.msra.mxu0 %v204
    %536 = vmatpush.bf16.msra.mxu0 %v200
    %537 = vmatpush.bf16.msra.mxu0 %v196
    %538 = vmatmul.bf16.gmra.mxu0 %v529
    %v539 = vpop.f32.mrf.mxu0
    %v540 = vadd.f32 0.0, %v539
    %v541 = vpop.f32.mrf.mxu0
    %542 = vdwg.mxu0
    %543 = vmatpush.bf16.msra.mxu0 %v225
    %544 = vmatpush.bf16.msra.mxu0 %v221
    %545 = vmatpush.bf16.msra.mxu0 %v217
    %546 = vmatpush.bf16.msra.mxu0 %v213
    %547 = vmatpush.bf16.msra.mxu0 %v209
    %548 = vmatpush.bf16.msra.mxu0 %v205
    %549 = vmatpush.bf16.msra.mxu0 %v201
    %550 = vmatpush.bf16.msra.mxu0 %v197
    %551 = vmatmul.bf16.gmra.mxu0 %v529
    %v552 = vpop.f32.mrf.mxu0
    %v553 = vadd.f32 0.0, %v552
    %v554 = vpop.f32.mrf.mxu0
    %555 = vdwg.mxu0
    %556 = vmatpush.bf16.msra.mxu0 %v226
    %557 = vmatpush.bf16.msra.mxu0 %v222
    %558 = vmatpush.bf16.msra.mxu0 %v218
    %559 = vmatpush.bf16.msra.mxu0 %v214
    %560 = vmatpush.bf16.msra.mxu0 %v210
    %561 = vmatpush.bf16.msra.mxu0 %v206
    %562 = vmatpush.bf16.msra.mxu0 %v202
    %563 = vmatpush.bf16.msra.mxu0 %v198
    %564 = vmatmul.bf16.gmra.mxu0 %v529
    %v565 = vpop.f32.mrf.mxu0
    %v566 = vadd.f32 0.0, %v565
    %v567 = vpop.f32.mrf.mxu0
    %568 = vdwg.mxu0
    %569 = vmatpush.bf16.msra.mxu0 %v227
    %570 = vmatpush.bf16.msra.mxu0 %v223
    %571 = vmatpush.bf16.msra.mxu0 %v219
    %572 = vmatpush.bf16.msra.mxu0 %v215
    %573 = vmatpush.bf16.msra.mxu0 %v211
    %574 = vmatpush.bf16.msra.mxu0 %v207
    %575 = vmatpush.bf16.msra.mxu0 %v203
    %576 = vmatpush.bf16.msra.mxu0 %v199
    %577 = vmatmul.bf16.gmra.mxu0 %v529
    %v578 = vpop.f32.mrf.mxu0
    %v579 = vadd.f32 0.0, %v578
    %v580 = vpop.f32.mrf.mxu0
    %581 = vdwg.mxu0
    %v582 = vadd.f32 %v525, %v540
    %v583 = vadd.f32 %v526, %v553
    %v584 = vadd.f32 %v527, %v566
    %v585 = vadd.f32 %v528, %v579
    %v586 = vmul.f32 %v582, 0.5
    %v587 = vtanh.pop %v586
    %v588 = vmul.f32 %v587, 0.5
    %v589 = vadd.f32 %v588, 0.5
    %v590 = vmul.f32 %v583, 0.5
    %v591 = vtanh.pop %v590
    %v592 = vmul.f32 %v591, 0.5
    %v593 = vadd.f32 %v592, 0.5
    %v594 = vtanh.pop %v584
    %v595 = vmul.f32 %v585, 0.5
    %v596 = vtanh.pop %v595
    %v597 = vmul.f32 %v596, 0.5
    %v598 = vadd.f32 %v597, 0.5
    %v599 = vmul.f32 %v593, %v511
    %v600 = vmul.f32 %v589, %v594
    %v601 = vadd.f32 %v599, %v600
    %v602 = vtanh.pop %v601
    %v603 = vmul.f32 %v598, %v602
    %s604 = scalar_lea.vmem %s0, 32
    %v605 = vld [vmem:[%s604] sm:$0xff]
    %607 = vset.pattern.permute.xlu0 0
    %608 = vperm.xlu0 %607, %v605
    %v609 = vpop.permute.xlu0 %608
    %v611 = vmul.f32 %v609, %v43
    %v612 = vmul.f32 %v609, %v44
    %v613 = vmul.f32 %v609, %v45
    %v614 = vmul.f32 %v609, %v46
    %v615 = vadd.f32 %v611, %v56
    %v616 = vadd.f32 %v612, %v57
    %v617 = vadd.f32 %v613, %v58
    %v618 = vadd.f32 %v614, %v59
    %v619 = vpack.c.bf16 %v603, %v603
    %620 = vmatpush.bf16.msra.mxu0 %v224
    %621 = vmatpush.bf16.msra.mxu0 %v220
    %622 = vmatpush.bf16.msra.mxu0 %v216
    %623 = vmatpush.bf16.msra.mxu0 %v212
    %624 = vmatpush.bf16.msra.mxu0 %v208
    %625 = vmatpush.bf16.msra.mxu0 %v204
    %626 = vmatpush.bf16.msra.mxu0 %v200
    %627 = vmatpush.bf16.msra.mxu0 %v196
    %628 = vmatmul.bf16.gmra.mxu0 %v619
    %v629 = vpop.f32.mrf.mxu0
    %v630 = vadd.f32 0.0, %v629
    %v631 = vpop.f32.mrf.mxu0
    %632 = vdwg.mxu0
    %633 = vmatpush.bf16.msra.mxu0 %v225
    %634 = vmatpush.bf16.msra.mxu0 %v221
    %635 = vmatpush.bf16.msra.mxu0 %v217
    %636 = vmatpush.bf16.msra.mxu0 %v213
    %637 = vmatpush.bf16.msra.mxu0 %v209
    %638 = vmatpush.bf16.msra.mxu0 %v205
    %639 = vmatpush.bf16.msra.mxu0 %v201
    %640 = vmatpush.bf16.msra.mxu0 %v197
    %641 = vmatmul.bf16.gmra.mxu0 %v619
    %v642 = vpop.f32.mrf.mxu0
    %v643 = vadd.f32 0.0, %v642
    %v644 = vpop.f32.mrf.mxu0
    %645 = vdwg.mxu0
    %646 = vmatpush.bf16.msra.mxu0 %v226
    %647 = vmatpush.bf16.msra.mxu0 %v222
    %648 = vmatpush.bf16.msra.mxu0 %v218
    %649 = vmatpush.bf16.msra.mxu0 %v214
    %650 = vmatpush.bf16.msra.mxu0 %v210
    %651 = vmatpush.bf16.msra.mxu0 %v206
    %652 = vmatpush.bf16.msra.mxu0 %v202
    %653 = vmatpush.bf16.msra.mxu0 %v198
    %654 = vmatmul.bf16.gmra.mxu0 %v619
    %v655 = vpop.f32.mrf.mxu0
    %v656 = vadd.f32 0.0, %v655
    %v657 = vpop.f32.mrf.mxu0
    %658 = vdwg.mxu0
    %659 = vmatpush.bf16.msra.mxu0 %v227
    %660 = vmatpush.bf16.msra.mxu0 %v223
    %661 = vmatpush.bf16.msra.mxu0 %v219
    %662 = vmatpush.bf16.msra.mxu0 %v215
    %663 = vmatpush.bf16.msra.mxu0 %v211
    %664 = vmatpush.bf16.msra.mxu0 %v207
    %665 = vmatpush.bf16.msra.mxu0 %v203
    %666 = vmatpush.bf16.msra.mxu0 %v199
    %667 = vmatmul.bf16.gmra.mxu0 %v619
    %v668 = vpop.f32.mrf.mxu0
    %v669 = vadd.f32 0.0, %v668
    %v670 = vpop.f32.mrf.mxu0
    %671 = vdwg.mxu0
    %v672 = vadd.f32 %v615, %v630
    %v673 = vadd.f32 %v616, %v643
    %v674 = vadd.f32 %v617, %v656
    %v675 = vadd.f32 %v618, %v669
    %v676 = vmul.f32 %v672, 0.5
    %v677 = vtanh.pop %v676
    %v678 = vmul.f32 %v677, 0.5
    %v679 = vadd.f32 %v678, 0.5
    %v680 = vmul.f32 %v673, 0.5
    %v681 = vtanh.pop %v680
    %v682 = vmul.f32 %v681, 0.5
    %v683 = vadd.f32 %v682, 0.5
    %v684 = vtanh.pop %v674
    %v685 = vmul.f32 %v675, 0.5
    %v686 = vtanh.pop %v685
    %v687 = vmul.f32 %v686, 0.5
    %v688 = vadd.f32 %v687, 0.5
    %v689 = vmul.f32 %v683, %v601
    %v690 = vmul.f32 %v679, %v684
    %v691 = vadd.f32 %v689, %v690
    %v692 = vtanh.pop %v691
    %v693 = vmul.f32 %v688, %v692
    %s694 = scalar_lea.vmem %s0, 40
    %v695 = vld [vmem:[%s694] sm:$0xff]
    %697 = vset.pattern.permute.xlu0 0
    %698 = vperm.xlu0 %697, %v695
    %v699 = vpop.permute.xlu0 %698
    %v701 = vmul.f32 %v699, %v43
    %v702 = vmul.f32 %v699, %v44
    %v703 = vmul.f32 %v699, %v45
    %v704 = vmul.f32 %v699, %v46
    %v705 = vadd.f32 %v701, %v56
    %v706 = vadd.f32 %v702, %v57
    %v707 = vadd.f32 %v703, %v58
    %v708 = vadd.f32 %v704, %v59
    %v709 = vpack.c.bf16 %v693, %v693
    %710 = vmatpush.bf16.msra.mxu0 %v224
    %711 = vmatpush.bf16.msra.mxu0 %v220
    %712 = vmatpush.bf16.msra.mxu0 %v216
    %713 = vmatpush.bf16.msra.mxu0 %v212
    %714 = vmatpush.bf16.msra.mxu0 %v208
    %715 = vmatpush.bf16.msra.mxu0 %v204
    %716 = vmatpush.bf16.msra.mxu0 %v200
    %717 = vmatpush.bf16.msra.mxu0 %v196
    %718 = vmatmul.bf16.gmra.mxu0 %v709
    %v719 = vpop.f32.mrf.mxu0
    %v720 = vadd.f32 0.0, %v719
    %v721 = vpop.f32.mrf.mxu0
    %722 = vdwg.mxu0
    %723 = vmatpush.bf16.msra.mxu0 %v225
    %724 = vmatpush.bf16.msra.mxu0 %v221
    %725 = vmatpush.bf16.msra.mxu0 %v217
    %726 = vmatpush.bf16.msra.mxu0 %v213
    %727 = vmatpush.bf16.msra.mxu0 %v209
    %728 = vmatpush.bf16.msra.mxu0 %v205
    %729 = vmatpush.bf16.msra.mxu0 %v201
    %730 = vmatpush.bf16.msra.mxu0 %v197
    %731 = vmatmul.bf16.gmra.mxu0 %v709
    %v732 = vpop.f32.mrf.mxu0
    %v733 = vadd.f32 0.0, %v732
    %v734 = vpop.f32.mrf.mxu0
    %735 = vdwg.mxu0
    %736 = vmatpush.bf16.msra.mxu0 %v226
    %737 = vmatpush.bf16.msra.mxu0 %v222
    %738 = vmatpush.bf16.msra.mxu0 %v218
    %739 = vmatpush.bf16.msra.mxu0 %v214
    %740 = vmatpush.bf16.msra.mxu0 %v210
    %741 = vmatpush.bf16.msra.mxu0 %v206
    %742 = vmatpush.bf16.msra.mxu0 %v202
    %743 = vmatpush.bf16.msra.mxu0 %v198
    %744 = vmatmul.bf16.gmra.mxu0 %v709
    %v745 = vpop.f32.mrf.mxu0
    %v746 = vadd.f32 0.0, %v745
    %v747 = vpop.f32.mrf.mxu0
    %748 = vdwg.mxu0
    %749 = vmatpush.bf16.msra.mxu0 %v227
    %750 = vmatpush.bf16.msra.mxu0 %v223
    %751 = vmatpush.bf16.msra.mxu0 %v219
    %752 = vmatpush.bf16.msra.mxu0 %v215
    %753 = vmatpush.bf16.msra.mxu0 %v211
    %754 = vmatpush.bf16.msra.mxu0 %v207
    %755 = vmatpush.bf16.msra.mxu0 %v203
    %756 = vmatpush.bf16.msra.mxu0 %v199
    %757 = vmatmul.bf16.gmra.mxu0 %v709
    %v758 = vpop.f32.mrf.mxu0
    %v759 = vadd.f32 0.0, %v758
    %v760 = vpop.f32.mrf.mxu0
    %761 = vdwg.mxu0
    %v762 = vadd.f32 %v705, %v720
    %v763 = vadd.f32 %v706, %v733
    %v764 = vadd.f32 %v707, %v746
    %v765 = vadd.f32 %v708, %v759
    %v766 = vmul.f32 %v762, 0.5
    %v767 = vtanh.pop %v766
    %v768 = vmul.f32 %v767, 0.5
    %v769 = vadd.f32 %v768, 0.5
    %v770 = vmul.f32 %v763, 0.5
    %v771 = vtanh.pop %v770
    %v772 = vmul.f32 %v771, 0.5
    %v773 = vadd.f32 %v772, 0.5
    %v774 = vtanh.pop %v764
    %v775 = vmul.f32 %v765, 0.5
    %v776 = vtanh.pop %v775
    %v777 = vmul.f32 %v776, 0.5
    %v778 = vadd.f32 %v777, 0.5
    %v779 = vmul.f32 %v773, %v691
    %v780 = vmul.f32 %v769, %v774
    %v781 = vadd.f32 %v779, %v780
    %v782 = vtanh.pop %v781
    %v783 = vmul.f32 %v778, %v782
    %s784 = scalar_lea.vmem %s0, 48
    %v785 = vld [vmem:[%s784] sm:$0xff]
    %787 = vset.pattern.permute.xlu0 0
    %788 = vperm.xlu0 %787, %v785
    %v789 = vpop.permute.xlu0 %788
    %v791 = vmul.f32 %v789, %v43
    %v792 = vmul.f32 %v789, %v44
    %v793 = vmul.f32 %v789, %v45
    %v794 = vmul.f32 %v789, %v46
    %v795 = vadd.f32 %v791, %v56
    %v796 = vadd.f32 %v792, %v57
    %v797 = vadd.f32 %v793, %v58
    %v798 = vadd.f32 %v794, %v59
    %v799 = vpack.c.bf16 %v783, %v783
    %800 = vmatpush.bf16.msra.mxu0 %v224
    %801 = vmatpush.bf16.msra.mxu0 %v220
    %802 = vmatpush.bf16.msra.mxu0 %v216
    %803 = vmatpush.bf16.msra.mxu0 %v212
    %804 = vmatpush.bf16.msra.mxu0 %v208
    %805 = vmatpush.bf16.msra.mxu0 %v204
    %806 = vmatpush.bf16.msra.mxu0 %v200
    %807 = vmatpush.bf16.msra.mxu0 %v196
    %808 = vmatmul.bf16.gmra.mxu0 %v799
    %v809 = vpop.f32.mrf.mxu0
    %v810 = vadd.f32 0.0, %v809
    %v811 = vpop.f32.mrf.mxu0
    %812 = vdwg.mxu0
    %813 = vmatpush.bf16.msra.mxu0 %v225
    %814 = vmatpush.bf16.msra.mxu0 %v221
    %815 = vmatpush.bf16.msra.mxu0 %v217
    %816 = vmatpush.bf16.msra.mxu0 %v213
    %817 = vmatpush.bf16.msra.mxu0 %v209
    %818 = vmatpush.bf16.msra.mxu0 %v205
    %819 = vmatpush.bf16.msra.mxu0 %v201
    %820 = vmatpush.bf16.msra.mxu0 %v197
    %821 = vmatmul.bf16.gmra.mxu0 %v799
    %v822 = vpop.f32.mrf.mxu0
    %v823 = vadd.f32 0.0, %v822
    %v824 = vpop.f32.mrf.mxu0
    %825 = vdwg.mxu0
    %826 = vmatpush.bf16.msra.mxu0 %v226
    %827 = vmatpush.bf16.msra.mxu0 %v222
    %828 = vmatpush.bf16.msra.mxu0 %v218
    %829 = vmatpush.bf16.msra.mxu0 %v214
    %830 = vmatpush.bf16.msra.mxu0 %v210
    %831 = vmatpush.bf16.msra.mxu0 %v206
    %832 = vmatpush.bf16.msra.mxu0 %v202
    %833 = vmatpush.bf16.msra.mxu0 %v198
    %834 = vmatmul.bf16.gmra.mxu0 %v799
    %v835 = vpop.f32.mrf.mxu0
    %v836 = vadd.f32 0.0, %v835
    %v837 = vpop.f32.mrf.mxu0
    %838 = vdwg.mxu0
    %839 = vmatpush.bf16.msra.mxu0 %v227
    %840 = vmatpush.bf16.msra.mxu0 %v223
    %841 = vmatpush.bf16.msra.mxu0 %v219
    %842 = vmatpush.bf16.msra.mxu0 %v215
    %843 = vmatpush.bf16.msra.mxu0 %v211
    %844 = vmatpush.bf16.msra.mxu0 %v207
    %845 = vmatpush.bf16.msra.mxu0 %v203
    %846 = vmatpush.bf16.msra.mxu0 %v199
    %847 = vmatmul.bf16.gmra.mxu0 %v799
    %v848 = vpop.f32.mrf.mxu0
    %v849 = vadd.f32 0.0, %v848
    %v850 = vpop.f32.mrf.mxu0
    %851 = vdwg.mxu0
    %v852 = vadd.f32 %v795, %v810
    %v853 = vadd.f32 %v796, %v823
    %v854 = vadd.f32 %v797, %v836
    %v855 = vadd.f32 %v798, %v849
    %v856 = vmul.f32 %v852, 0.5
    %v857 = vtanh.pop %v856
    %v858 = vmul.f32 %v857, 0.5
    %v859 = vadd.f32 %v858, 0.5
    %v860 = vmul.f32 %v853, 0.5
    %v861 = vtanh.pop %v860
    %v862 = vmul.f32 %v861, 0.5
    %v863 = vadd.f32 %v862, 0.5
    %v864 = vtanh.pop %v854
    %v865 = vmul.f32 %v855, 0.5
    %v866 = vtanh.pop %v865
    %v867 = vmul.f32 %v866, 0.5
    %v868 = vadd.f32 %v867, 0.5
    %v869 = vmul.f32 %v863, %v781
    %v870 = vmul.f32 %v859, %v864
    %v871 = vadd.f32 %v869, %v870
    %v872 = vtanh.pop %v871
    %v873 = vmul.f32 %v868, %v872
    %s874 = scalar_lea.vmem %s0, 56
    %v875 = vld [vmem:[%s874] sm:$0xff]
    %877 = vset.pattern.permute.xlu0 0
    %878 = vperm.xlu0 %877, %v875
    %v879 = vpop.permute.xlu0 %878
    %v881 = vmul.f32 %v879, %v43
    %v882 = vmul.f32 %v879, %v44
    %v883 = vmul.f32 %v879, %v45
    %v884 = vmul.f32 %v879, %v46
    %v885 = vadd.f32 %v881, %v56
    %v886 = vadd.f32 %v882, %v57
    %v887 = vadd.f32 %v883, %v58
    %v888 = vadd.f32 %v884, %v59
    %v889 = vpack.c.bf16 %v873, %v873
    %890 = vmatpush.bf16.msra.mxu0 %v224
    %891 = vmatpush.bf16.msra.mxu0 %v220
    %892 = vmatpush.bf16.msra.mxu0 %v216
    %893 = vmatpush.bf16.msra.mxu0 %v212
    %894 = vmatpush.bf16.msra.mxu0 %v208
    %895 = vmatpush.bf16.msra.mxu0 %v204
    %896 = vmatpush.bf16.msra.mxu0 %v200
    %897 = vmatpush.bf16.msra.mxu0 %v196
    %898 = vmatmul.bf16.gmra.mxu0 %v889
    %v899 = vpop.f32.mrf.mxu0
    %v900 = vadd.f32 0.0, %v899
    %v901 = vpop.f32.mrf.mxu0
    %902 = vdwg.mxu0
    %903 = vmatpush.bf16.msra.mxu0 %v225
    %904 = vmatpush.bf16.msra.mxu0 %v221
    %905 = vmatpush.bf16.msra.mxu0 %v217
    %906 = vmatpush.bf16.msra.mxu0 %v213
    %907 = vmatpush.bf16.msra.mxu0 %v209
    %908 = vmatpush.bf16.msra.mxu0 %v205
    %909 = vmatpush.bf16.msra.mxu0 %v201
    %910 = vmatpush.bf16.msra.mxu0 %v197
    %911 = vmatmul.bf16.gmra.mxu0 %v889
    %v912 = vpop.f32.mrf.mxu0
    %v913 = vadd.f32 0.0, %v912
    %v914 = vpop.f32.mrf.mxu0
    %915 = vdwg.mxu0
    %916 = vmatpush.bf16.msra.mxu0 %v226
    %917 = vmatpush.bf16.msra.mxu0 %v222
    %918 = vmatpush.bf16.msra.mxu0 %v218
    %919 = vmatpush.bf16.msra.mxu0 %v214
    %920 = vmatpush.bf16.msra.mxu0 %v210
    %921 = vmatpush.bf16.msra.mxu0 %v206
    %922 = vmatpush.bf16.msra.mxu0 %v202
    %923 = vmatpush.bf16.msra.mxu0 %v198
    %924 = vmatmul.bf16.gmra.mxu0 %v889
    %v925 = vpop.f32.mrf.mxu0
    %v926 = vadd.f32 0.0, %v925
    %v927 = vpop.f32.mrf.mxu0
    %928 = vdwg.mxu0
    %929 = vmatpush.bf16.msra.mxu0 %v227
    %930 = vmatpush.bf16.msra.mxu0 %v223
    %931 = vmatpush.bf16.msra.mxu0 %v219
    %932 = vmatpush.bf16.msra.mxu0 %v215
    %933 = vmatpush.bf16.msra.mxu0 %v211
    %934 = vmatpush.bf16.msra.mxu0 %v207
    %935 = vmatpush.bf16.msra.mxu0 %v203
    %936 = vmatpush.bf16.msra.mxu0 %v199
    %937 = vmatmul.bf16.gmra.mxu0 %v889
    %v938 = vpop.f32.mrf.mxu0
    %v939 = vadd.f32 0.0, %v938
    %v940 = vpop.f32.mrf.mxu0
    %941 = vdwg.mxu0
    %v942 = vadd.f32 %v885, %v900
    %v943 = vadd.f32 %v886, %v913
    %v944 = vadd.f32 %v887, %v926
    %v945 = vadd.f32 %v888, %v939
    %v946 = vmul.f32 %v942, 0.5
    %v947 = vtanh.pop %v946
    %v948 = vmul.f32 %v947, 0.5
    %v949 = vadd.f32 %v948, 0.5
    %v950 = vmul.f32 %v943, 0.5
    %v951 = vtanh.pop %v950
    %v952 = vmul.f32 %v951, 0.5
    %v953 = vadd.f32 %v952, 0.5
    %v954 = vtanh.pop %v944
    %v955 = vmul.f32 %v945, 0.5
    %v956 = vtanh.pop %v955
    %v957 = vmul.f32 %v956, 0.5
    %v958 = vadd.f32 %v957, 0.5
    %v959 = vmul.f32 %v953, %v871
    %v960 = vmul.f32 %v949, %v954
    %v961 = vadd.f32 %v959, %v960
    %v962 = vtanh.pop %v961
    %v963 = vmul.f32 %v958, %v962
    %s964 = scalar_lea.vmem %s0, 64
    %v965 = vld [vmem:[%s964] sm:$0xff]
    %967 = vset.pattern.permute.xlu0 0
    %968 = vperm.xlu0 %967, %v965
    %v969 = vpop.permute.xlu0 %968
    %v971 = vmul.f32 %v969, %v43
    %v972 = vmul.f32 %v969, %v44
    %v973 = vmul.f32 %v969, %v45
    %v974 = vmul.f32 %v969, %v46
    %v975 = vadd.f32 %v971, %v56
    %v976 = vadd.f32 %v972, %v57
    %v977 = vadd.f32 %v973, %v58
    %v978 = vadd.f32 %v974, %v59
    %v979 = vpack.c.bf16 %v963, %v963
    %980 = vmatpush.bf16.msra.mxu0 %v224
    %981 = vmatpush.bf16.msra.mxu0 %v220
    %982 = vmatpush.bf16.msra.mxu0 %v216
    %983 = vmatpush.bf16.msra.mxu0 %v212
    %984 = vmatpush.bf16.msra.mxu0 %v208
    %985 = vmatpush.bf16.msra.mxu0 %v204
    %986 = vmatpush.bf16.msra.mxu0 %v200
    %987 = vmatpush.bf16.msra.mxu0 %v196
    %988 = vmatmul.bf16.gmra.mxu0 %v979
    %v989 = vpop.f32.mrf.mxu0
    %v990 = vadd.f32 0.0, %v989
    %v991 = vpop.f32.mrf.mxu0
    %992 = vdwg.mxu0
    %993 = vmatpush.bf16.msra.mxu0 %v225
    %994 = vmatpush.bf16.msra.mxu0 %v221
    %995 = vmatpush.bf16.msra.mxu0 %v217
    %996 = vmatpush.bf16.msra.mxu0 %v213
    %997 = vmatpush.bf16.msra.mxu0 %v209
    %998 = vmatpush.bf16.msra.mxu0 %v205
    %999 = vmatpush.bf16.msra.mxu0 %v201
    %1000 = vmatpush.bf16.msra.mxu0 %v197
    %1001 = vmatmul.bf16.gmra.mxu0 %v979
    %v1002 = vpop.f32.mrf.mxu0
    %v1003 = vadd.f32 0.0, %v1002
    %v1004 = vpop.f32.mrf.mxu0
    %1005 = vdwg.mxu0
    %1006 = vmatpush.bf16.msra.mxu0 %v226
    %1007 = vmatpush.bf16.msra.mxu0 %v222
    %1008 = vmatpush.bf16.msra.mxu0 %v218
    %1009 = vmatpush.bf16.msra.mxu0 %v214
    %1010 = vmatpush.bf16.msra.mxu0 %v210
    %1011 = vmatpush.bf16.msra.mxu0 %v206
    %1012 = vmatpush.bf16.msra.mxu0 %v202
    %1013 = vmatpush.bf16.msra.mxu0 %v198
    %1014 = vmatmul.bf16.gmra.mxu0 %v979
    %v1015 = vpop.f32.mrf.mxu0
    %v1016 = vadd.f32 0.0, %v1015
    %v1017 = vpop.f32.mrf.mxu0
    %1018 = vdwg.mxu0
    %1019 = vmatpush.bf16.msra.mxu0 %v227
    %1020 = vmatpush.bf16.msra.mxu0 %v223
    %1021 = vmatpush.bf16.msra.mxu0 %v219
    %1022 = vmatpush.bf16.msra.mxu0 %v215
    %1023 = vmatpush.bf16.msra.mxu0 %v211
    %1024 = vmatpush.bf16.msra.mxu0 %v207
    %1025 = vmatpush.bf16.msra.mxu0 %v203
    %1026 = vmatpush.bf16.msra.mxu0 %v199
    %1027 = vmatmul.bf16.gmra.mxu0 %v979
    %v1028 = vpop.f32.mrf.mxu0
    %v1029 = vadd.f32 0.0, %v1028
    %v1030 = vpop.f32.mrf.mxu0
    %1031 = vdwg.mxu0
    %v1032 = vadd.f32 %v975, %v990
    %v1033 = vadd.f32 %v976, %v1003
    %v1034 = vadd.f32 %v977, %v1016
    %v1035 = vadd.f32 %v978, %v1029
    %v1036 = vmul.f32 %v1032, 0.5
    %v1037 = vtanh.pop %v1036
    %v1038 = vmul.f32 %v1037, 0.5
    %v1039 = vadd.f32 %v1038, 0.5
    %v1040 = vmul.f32 %v1033, 0.5
    %v1041 = vtanh.pop %v1040
    %v1042 = vmul.f32 %v1041, 0.5
    %v1043 = vadd.f32 %v1042, 0.5
    %v1044 = vtanh.pop %v1034
    %v1045 = vmul.f32 %v1035, 0.5
    %v1046 = vtanh.pop %v1045
    %v1047 = vmul.f32 %v1046, 0.5
    %v1048 = vadd.f32 %v1047, 0.5
    %v1049 = vmul.f32 %v1043, %v961
    %v1050 = vmul.f32 %v1039, %v1044
    %v1051 = vadd.f32 %v1049, %v1050
    %v1052 = vtanh.pop %v1051
    %v1053 = vmul.f32 %v1048, %v1052
    %s1054 = scalar_lea.vmem %s0, 72
    %v1055 = vld [vmem:[%s1054] sm:$0xff]
    %1057 = vset.pattern.permute.xlu0 0
    %1058 = vperm.xlu0 %1057, %v1055
    %v1059 = vpop.permute.xlu0 %1058
    %v1061 = vmul.f32 %v1059, %v43
    %v1062 = vmul.f32 %v1059, %v44
    %v1063 = vmul.f32 %v1059, %v45
    %v1064 = vmul.f32 %v1059, %v46
    %v1065 = vadd.f32 %v1061, %v56
    %v1066 = vadd.f32 %v1062, %v57
    %v1067 = vadd.f32 %v1063, %v58
    %v1068 = vadd.f32 %v1064, %v59
    %v1069 = vpack.c.bf16 %v1053, %v1053
    %1070 = vmatpush.bf16.msra.mxu0 %v224
    %1071 = vmatpush.bf16.msra.mxu0 %v220
    %1072 = vmatpush.bf16.msra.mxu0 %v216
    %1073 = vmatpush.bf16.msra.mxu0 %v212
    %1074 = vmatpush.bf16.msra.mxu0 %v208
    %1075 = vmatpush.bf16.msra.mxu0 %v204
    %1076 = vmatpush.bf16.msra.mxu0 %v200
    %1077 = vmatpush.bf16.msra.mxu0 %v196
    %1078 = vmatmul.bf16.gmra.mxu0 %v1069
    %v1079 = vpop.f32.mrf.mxu0
    %v1080 = vadd.f32 0.0, %v1079
    %v1081 = vpop.f32.mrf.mxu0
    %1082 = vdwg.mxu0
    %1083 = vmatpush.bf16.msra.mxu0 %v225
    %1084 = vmatpush.bf16.msra.mxu0 %v221
    %1085 = vmatpush.bf16.msra.mxu0 %v217
    %1086 = vmatpush.bf16.msra.mxu0 %v213
    %1087 = vmatpush.bf16.msra.mxu0 %v209
    %1088 = vmatpush.bf16.msra.mxu0 %v205
    %1089 = vmatpush.bf16.msra.mxu0 %v201
    %1090 = vmatpush.bf16.msra.mxu0 %v197
    %1091 = vmatmul.bf16.gmra.mxu0 %v1069
    %v1092 = vpop.f32.mrf.mxu0
    %v1093 = vadd.f32 0.0, %v1092
    %v1094 = vpop.f32.mrf.mxu0
    %1095 = vdwg.mxu0
    %1096 = vmatpush.bf16.msra.mxu0 %v226
    %1097 = vmatpush.bf16.msra.mxu0 %v222
    %1098 = vmatpush.bf16.msra.mxu0 %v218
    %1099 = vmatpush.bf16.msra.mxu0 %v214
    %1100 = vmatpush.bf16.msra.mxu0 %v210
    %1101 = vmatpush.bf16.msra.mxu0 %v206
    %1102 = vmatpush.bf16.msra.mxu0 %v202
    %1103 = vmatpush.bf16.msra.mxu0 %v198
    %1104 = vmatmul.bf16.gmra.mxu0 %v1069
    %v1105 = vpop.f32.mrf.mxu0
    %v1106 = vadd.f32 0.0, %v1105
    %v1107 = vpop.f32.mrf.mxu0
    %1108 = vdwg.mxu0
    %1109 = vmatpush.bf16.msra.mxu0 %v227
    %1110 = vmatpush.bf16.msra.mxu0 %v223
    %1111 = vmatpush.bf16.msra.mxu0 %v219
    %1112 = vmatpush.bf16.msra.mxu0 %v215
    %1113 = vmatpush.bf16.msra.mxu0 %v211
    %1114 = vmatpush.bf16.msra.mxu0 %v207
    %1115 = vmatpush.bf16.msra.mxu0 %v203
    %1116 = vmatpush.bf16.msra.mxu0 %v199
    %1117 = vmatmul.bf16.gmra.mxu0 %v1069
    %v1118 = vpop.f32.mrf.mxu0
    %v1119 = vadd.f32 0.0, %v1118
    %v1120 = vpop.f32.mrf.mxu0
    %1121 = vdwg.mxu0
    %v1122 = vadd.f32 %v1065, %v1080
    %v1123 = vadd.f32 %v1066, %v1093
    %v1124 = vadd.f32 %v1067, %v1106
    %v1125 = vadd.f32 %v1068, %v1119
    %v1126 = vmul.f32 %v1122, 0.5
    %v1127 = vtanh.pop %v1126
    %v1128 = vmul.f32 %v1127, 0.5
    %v1129 = vadd.f32 %v1128, 0.5
    %v1130 = vmul.f32 %v1123, 0.5
    %v1131 = vtanh.pop %v1130
    %v1132 = vmul.f32 %v1131, 0.5
    %v1133 = vadd.f32 %v1132, 0.5
    %v1134 = vtanh.pop %v1124
    %v1135 = vmul.f32 %v1125, 0.5
    %v1136 = vtanh.pop %v1135
    %v1137 = vmul.f32 %v1136, 0.5
    %v1138 = vadd.f32 %v1137, 0.5
    %v1139 = vmul.f32 %v1133, %v1051
    %v1140 = vmul.f32 %v1129, %v1134
    %v1141 = vadd.f32 %v1139, %v1140
    %v1142 = vtanh.pop %v1141
    %v1143 = vmul.f32 %v1138, %v1142
    %s1144 = scalar_lea.vmem %s0, 80
    %v1145 = vld [vmem:[%s1144] sm:$0xff]
    %1147 = vset.pattern.permute.xlu0 0
    %1148 = vperm.xlu0 %1147, %v1145
    %v1149 = vpop.permute.xlu0 %1148
    %v1151 = vmul.f32 %v1149, %v43
    %v1152 = vmul.f32 %v1149, %v44
    %v1153 = vmul.f32 %v1149, %v45
    %v1154 = vmul.f32 %v1149, %v46
    %v1155 = vadd.f32 %v1151, %v56
    %v1156 = vadd.f32 %v1152, %v57
    %v1157 = vadd.f32 %v1153, %v58
    %v1158 = vadd.f32 %v1154, %v59
    %v1159 = vpack.c.bf16 %v1143, %v1143
    %1160 = vmatpush.bf16.msra.mxu0 %v224
    %1161 = vmatpush.bf16.msra.mxu0 %v220
    %1162 = vmatpush.bf16.msra.mxu0 %v216
    %1163 = vmatpush.bf16.msra.mxu0 %v212
    %1164 = vmatpush.bf16.msra.mxu0 %v208
    %1165 = vmatpush.bf16.msra.mxu0 %v204
    %1166 = vmatpush.bf16.msra.mxu0 %v200
    %1167 = vmatpush.bf16.msra.mxu0 %v196
    %1168 = vmatmul.bf16.gmra.mxu0 %v1159
    %v1169 = vpop.f32.mrf.mxu0
    %v1170 = vadd.f32 0.0, %v1169
    %v1171 = vpop.f32.mrf.mxu0
    %1172 = vdwg.mxu0
    %1173 = vmatpush.bf16.msra.mxu0 %v225
    %1174 = vmatpush.bf16.msra.mxu0 %v221
    %1175 = vmatpush.bf16.msra.mxu0 %v217
    %1176 = vmatpush.bf16.msra.mxu0 %v213
    %1177 = vmatpush.bf16.msra.mxu0 %v209
    %1178 = vmatpush.bf16.msra.mxu0 %v205
    %1179 = vmatpush.bf16.msra.mxu0 %v201
    %1180 = vmatpush.bf16.msra.mxu0 %v197
    %1181 = vmatmul.bf16.gmra.mxu0 %v1159
    %v1182 = vpop.f32.mrf.mxu0
    %v1183 = vadd.f32 0.0, %v1182
    %v1184 = vpop.f32.mrf.mxu0
    %1185 = vdwg.mxu0
    %1186 = vmatpush.bf16.msra.mxu0 %v226
    %1187 = vmatpush.bf16.msra.mxu0 %v222
    %1188 = vmatpush.bf16.msra.mxu0 %v218
    %1189 = vmatpush.bf16.msra.mxu0 %v214
    %1190 = vmatpush.bf16.msra.mxu0 %v210
    %1191 = vmatpush.bf16.msra.mxu0 %v206
    %1192 = vmatpush.bf16.msra.mxu0 %v202
    %1193 = vmatpush.bf16.msra.mxu0 %v198
    %1194 = vmatmul.bf16.gmra.mxu0 %v1159
    %v1195 = vpop.f32.mrf.mxu0
    %v1196 = vadd.f32 0.0, %v1195
    %v1197 = vpop.f32.mrf.mxu0
    %1198 = vdwg.mxu0
    %1199 = vmatpush.bf16.msra.mxu0 %v227
    %1200 = vmatpush.bf16.msra.mxu0 %v223
    %1201 = vmatpush.bf16.msra.mxu0 %v219
    %1202 = vmatpush.bf16.msra.mxu0 %v215
    %1203 = vmatpush.bf16.msra.mxu0 %v211
    %1204 = vmatpush.bf16.msra.mxu0 %v207
    %1205 = vmatpush.bf16.msra.mxu0 %v203
    %1206 = vmatpush.bf16.msra.mxu0 %v199
    %1207 = vmatmul.bf16.gmra.mxu0 %v1159
    %v1208 = vpop.f32.mrf.mxu0
    %v1209 = vadd.f32 0.0, %v1208
    %v1210 = vpop.f32.mrf.mxu0
    %1211 = vdwg.mxu0
    %v1212 = vadd.f32 %v1155, %v1170
    %v1213 = vadd.f32 %v1156, %v1183
    %v1214 = vadd.f32 %v1157, %v1196
    %v1215 = vadd.f32 %v1158, %v1209
    %v1216 = vmul.f32 %v1212, 0.5
    %v1217 = vtanh.pop %v1216
    %v1218 = vmul.f32 %v1217, 0.5
    %v1219 = vadd.f32 %v1218, 0.5
    %v1220 = vmul.f32 %v1213, 0.5
    %v1221 = vtanh.pop %v1220
    %v1222 = vmul.f32 %v1221, 0.5
    %v1223 = vadd.f32 %v1222, 0.5
    %v1224 = vtanh.pop %v1214
    %v1225 = vmul.f32 %v1215, 0.5
    %v1226 = vtanh.pop %v1225
    %v1227 = vmul.f32 %v1226, 0.5
    %v1228 = vadd.f32 %v1227, 0.5
    %v1229 = vmul.f32 %v1223, %v1141
    %v1230 = vmul.f32 %v1219, %v1224
    %v1231 = vadd.f32 %v1229, %v1230
    %v1232 = vtanh.pop %v1231
    %v1233 = vmul.f32 %v1228, %v1232
    %s1234 = scalar_lea.vmem %s0, 88
    %v1235 = vld [vmem:[%s1234] sm:$0xff]
    %1237 = vset.pattern.permute.xlu0 0
    %1238 = vperm.xlu0 %1237, %v1235
    %v1239 = vpop.permute.xlu0 %1238
    %v1241 = vmul.f32 %v1239, %v43
    %v1242 = vmul.f32 %v1239, %v44
    %v1243 = vmul.f32 %v1239, %v45
    %v1244 = vmul.f32 %v1239, %v46
    %v1245 = vadd.f32 %v1241, %v56
    %v1246 = vadd.f32 %v1242, %v57
    %v1247 = vadd.f32 %v1243, %v58
    %v1248 = vadd.f32 %v1244, %v59
    %v1249 = vpack.c.bf16 %v1233, %v1233
    %1250 = vmatpush.bf16.msra.mxu0 %v224
    %1251 = vmatpush.bf16.msra.mxu0 %v220
    %1252 = vmatpush.bf16.msra.mxu0 %v216
    %1253 = vmatpush.bf16.msra.mxu0 %v212
    %1254 = vmatpush.bf16.msra.mxu0 %v208
    %1255 = vmatpush.bf16.msra.mxu0 %v204
    %1256 = vmatpush.bf16.msra.mxu0 %v200
    %1257 = vmatpush.bf16.msra.mxu0 %v196
    %1258 = vmatmul.bf16.gmra.mxu0 %v1249
    %v1259 = vpop.f32.mrf.mxu0
    %v1260 = vadd.f32 0.0, %v1259
    %v1261 = vpop.f32.mrf.mxu0
    %1262 = vdwg.mxu0
    %1263 = vmatpush.bf16.msra.mxu0 %v225
    %1264 = vmatpush.bf16.msra.mxu0 %v221
    %1265 = vmatpush.bf16.msra.mxu0 %v217
    %1266 = vmatpush.bf16.msra.mxu0 %v213
    %1267 = vmatpush.bf16.msra.mxu0 %v209
    %1268 = vmatpush.bf16.msra.mxu0 %v205
    %1269 = vmatpush.bf16.msra.mxu0 %v201
    %1270 = vmatpush.bf16.msra.mxu0 %v197
    %1271 = vmatmul.bf16.gmra.mxu0 %v1249
    %v1272 = vpop.f32.mrf.mxu0
    %v1273 = vadd.f32 0.0, %v1272
    %v1274 = vpop.f32.mrf.mxu0
    %1275 = vdwg.mxu0
    %1276 = vmatpush.bf16.msra.mxu0 %v226
    %1277 = vmatpush.bf16.msra.mxu0 %v222
    %1278 = vmatpush.bf16.msra.mxu0 %v218
    %1279 = vmatpush.bf16.msra.mxu0 %v214
    %1280 = vmatpush.bf16.msra.mxu0 %v210
    %1281 = vmatpush.bf16.msra.mxu0 %v206
    %1282 = vmatpush.bf16.msra.mxu0 %v202
    %1283 = vmatpush.bf16.msra.mxu0 %v198
    %1284 = vmatmul.bf16.gmra.mxu0 %v1249
    %v1285 = vpop.f32.mrf.mxu0
    %v1286 = vadd.f32 0.0, %v1285
    %v1287 = vpop.f32.mrf.mxu0
    %1288 = vdwg.mxu0
    %1289 = vmatpush.bf16.msra.mxu0 %v227
    %1290 = vmatpush.bf16.msra.mxu0 %v223
    %1291 = vmatpush.bf16.msra.mxu0 %v219
    %1292 = vmatpush.bf16.msra.mxu0 %v215
    %1293 = vmatpush.bf16.msra.mxu0 %v211
    %1294 = vmatpush.bf16.msra.mxu0 %v207
    %1295 = vmatpush.bf16.msra.mxu0 %v203
    %1296 = vmatpush.bf16.msra.mxu0 %v199
    %1297 = vmatmul.bf16.gmra.mxu0 %v1249
    %v1298 = vpop.f32.mrf.mxu0
    %v1299 = vadd.f32 0.0, %v1298
    %v1300 = vpop.f32.mrf.mxu0
    %1301 = vdwg.mxu0
    %v1302 = vadd.f32 %v1245, %v1260
    %v1303 = vadd.f32 %v1246, %v1273
    %v1304 = vadd.f32 %v1247, %v1286
    %v1305 = vadd.f32 %v1248, %v1299
    %v1306 = vmul.f32 %v1302, 0.5
    %v1307 = vtanh.pop %v1306
    %v1308 = vmul.f32 %v1307, 0.5
    %v1309 = vadd.f32 %v1308, 0.5
    %v1310 = vmul.f32 %v1303, 0.5
    %v1311 = vtanh.pop %v1310
    %v1312 = vmul.f32 %v1311, 0.5
    %v1313 = vadd.f32 %v1312, 0.5
    %v1314 = vtanh.pop %v1304
    %v1315 = vmul.f32 %v1305, 0.5
    %v1316 = vtanh.pop %v1315
    %v1317 = vmul.f32 %v1316, 0.5
    %v1318 = vadd.f32 %v1317, 0.5
    %v1319 = vmul.f32 %v1313, %v1231
    %v1320 = vmul.f32 %v1309, %v1314
    %v1321 = vadd.f32 %v1319, %v1320
    %v1322 = vtanh.pop %v1321
    %v1323 = vmul.f32 %v1318, %v1322
    %s1324 = scalar_lea.vmem %s0, 96
    %v1325 = vld [vmem:[%s1324] sm:$0xff]
    %1327 = vset.pattern.permute.xlu0 0
    %1328 = vperm.xlu0 %1327, %v1325
    %v1329 = vpop.permute.xlu0 %1328
    %v1331 = vmul.f32 %v1329, %v43
    %v1332 = vmul.f32 %v1329, %v44
    %v1333 = vmul.f32 %v1329, %v45
    %v1334 = vmul.f32 %v1329, %v46
    %v1335 = vadd.f32 %v1331, %v56
    %v1336 = vadd.f32 %v1332, %v57
    %v1337 = vadd.f32 %v1333, %v58
    %v1338 = vadd.f32 %v1334, %v59
    %v1339 = vpack.c.bf16 %v1323, %v1323
    %1340 = vmatpush.bf16.msra.mxu0 %v224
    %1341 = vmatpush.bf16.msra.mxu0 %v220
    %1342 = vmatpush.bf16.msra.mxu0 %v216
    %1343 = vmatpush.bf16.msra.mxu0 %v212
    %1344 = vmatpush.bf16.msra.mxu0 %v208
    %1345 = vmatpush.bf16.msra.mxu0 %v204
    %1346 = vmatpush.bf16.msra.mxu0 %v200
    %1347 = vmatpush.bf16.msra.mxu0 %v196
    %1348 = vmatmul.bf16.gmra.mxu0 %v1339
    %v1349 = vpop.f32.mrf.mxu0
    %v1350 = vadd.f32 0.0, %v1349
    %v1351 = vpop.f32.mrf.mxu0
    %1352 = vdwg.mxu0
    %1353 = vmatpush.bf16.msra.mxu0 %v225
    %1354 = vmatpush.bf16.msra.mxu0 %v221
    %1355 = vmatpush.bf16.msra.mxu0 %v217
    %1356 = vmatpush.bf16.msra.mxu0 %v213
    %1357 = vmatpush.bf16.msra.mxu0 %v209
    %1358 = vmatpush.bf16.msra.mxu0 %v205
    %1359 = vmatpush.bf16.msra.mxu0 %v201
    %1360 = vmatpush.bf16.msra.mxu0 %v197
    %1361 = vmatmul.bf16.gmra.mxu0 %v1339
    %v1362 = vpop.f32.mrf.mxu0
    %v1363 = vadd.f32 0.0, %v1362
    %v1364 = vpop.f32.mrf.mxu0
    %1365 = vdwg.mxu0
    %1366 = vmatpush.bf16.msra.mxu0 %v226
    %1367 = vmatpush.bf16.msra.mxu0 %v222
    %1368 = vmatpush.bf16.msra.mxu0 %v218
    %1369 = vmatpush.bf16.msra.mxu0 %v214
    %1370 = vmatpush.bf16.msra.mxu0 %v210
    %1371 = vmatpush.bf16.msra.mxu0 %v206
    %1372 = vmatpush.bf16.msra.mxu0 %v202
    %1373 = vmatpush.bf16.msra.mxu0 %v198
    %1374 = vmatmul.bf16.gmra.mxu0 %v1339
    %v1375 = vpop.f32.mrf.mxu0
    %v1376 = vadd.f32 0.0, %v1375
    %v1377 = vpop.f32.mrf.mxu0
    %1378 = vdwg.mxu0
    %1379 = vmatpush.bf16.msra.mxu0 %v227
    %1380 = vmatpush.bf16.msra.mxu0 %v223
    %1381 = vmatpush.bf16.msra.mxu0 %v219
    %1382 = vmatpush.bf16.msra.mxu0 %v215
    %1383 = vmatpush.bf16.msra.mxu0 %v211
    %1384 = vmatpush.bf16.msra.mxu0 %v207
    %1385 = vmatpush.bf16.msra.mxu0 %v203
    %1386 = vmatpush.bf16.msra.mxu0 %v199
    %1387 = vmatmul.bf16.gmra.mxu0 %v1339
    %v1388 = vpop.f32.mrf.mxu0
    %v1389 = vadd.f32 0.0, %v1388
    %v1390 = vpop.f32.mrf.mxu0
    %1391 = vdwg.mxu0
    %v1392 = vadd.f32 %v1335, %v1350
    %v1393 = vadd.f32 %v1336, %v1363
    %v1394 = vadd.f32 %v1337, %v1376
    %v1395 = vadd.f32 %v1338, %v1389
    %v1396 = vmul.f32 %v1392, 0.5
    %v1397 = vtanh.pop %v1396
    %v1398 = vmul.f32 %v1397, 0.5
    %v1399 = vadd.f32 %v1398, 0.5
    %v1400 = vmul.f32 %v1393, 0.5
    %v1401 = vtanh.pop %v1400
    %v1402 = vmul.f32 %v1401, 0.5
    %v1403 = vadd.f32 %v1402, 0.5
    %v1404 = vtanh.pop %v1394
    %v1405 = vmul.f32 %v1395, 0.5
    %v1406 = vtanh.pop %v1405
    %v1407 = vmul.f32 %v1406, 0.5
    %v1408 = vadd.f32 %v1407, 0.5
    %v1409 = vmul.f32 %v1403, %v1321
    %v1410 = vmul.f32 %v1399, %v1404
    %v1411 = vadd.f32 %v1409, %v1410
    %v1412 = vtanh.pop %v1411
    %v1413 = vmul.f32 %v1408, %v1412
    %s1414 = scalar_lea.vmem %s0, 104
    %v1415 = vld [vmem:[%s1414] sm:$0xff]
    %1417 = vset.pattern.permute.xlu0 0
    %1418 = vperm.xlu0 %1417, %v1415
    %v1419 = vpop.permute.xlu0 %1418
    %v1421 = vmul.f32 %v1419, %v43
    %v1422 = vmul.f32 %v1419, %v44
    %v1423 = vmul.f32 %v1419, %v45
    %v1424 = vmul.f32 %v1419, %v46
    %v1425 = vadd.f32 %v1421, %v56
    %v1426 = vadd.f32 %v1422, %v57
    %v1427 = vadd.f32 %v1423, %v58
    %v1428 = vadd.f32 %v1424, %v59
    %v1429 = vpack.c.bf16 %v1413, %v1413
    %1430 = vmatpush.bf16.msra.mxu0 %v224
    %1431 = vmatpush.bf16.msra.mxu0 %v220
    %1432 = vmatpush.bf16.msra.mxu0 %v216
    %1433 = vmatpush.bf16.msra.mxu0 %v212
    %1434 = vmatpush.bf16.msra.mxu0 %v208
    %1435 = vmatpush.bf16.msra.mxu0 %v204
    %1436 = vmatpush.bf16.msra.mxu0 %v200
    %1437 = vmatpush.bf16.msra.mxu0 %v196
    %1438 = vmatmul.bf16.gmra.mxu0 %v1429
    %v1439 = vpop.f32.mrf.mxu0
    %v1440 = vadd.f32 0.0, %v1439
    %v1441 = vpop.f32.mrf.mxu0
    %1442 = vdwg.mxu0
    %1443 = vmatpush.bf16.msra.mxu0 %v225
    %1444 = vmatpush.bf16.msra.mxu0 %v221
    %1445 = vmatpush.bf16.msra.mxu0 %v217
    %1446 = vmatpush.bf16.msra.mxu0 %v213
    %1447 = vmatpush.bf16.msra.mxu0 %v209
    %1448 = vmatpush.bf16.msra.mxu0 %v205
    %1449 = vmatpush.bf16.msra.mxu0 %v201
    %1450 = vmatpush.bf16.msra.mxu0 %v197
    %1451 = vmatmul.bf16.gmra.mxu0 %v1429
    %v1452 = vpop.f32.mrf.mxu0
    %v1453 = vadd.f32 0.0, %v1452
    %v1454 = vpop.f32.mrf.mxu0
    %1455 = vdwg.mxu0
    %1456 = vmatpush.bf16.msra.mxu0 %v226
    %1457 = vmatpush.bf16.msra.mxu0 %v222
    %1458 = vmatpush.bf16.msra.mxu0 %v218
    %1459 = vmatpush.bf16.msra.mxu0 %v214
    %1460 = vmatpush.bf16.msra.mxu0 %v210
    %1461 = vmatpush.bf16.msra.mxu0 %v206
    %1462 = vmatpush.bf16.msra.mxu0 %v202
    %1463 = vmatpush.bf16.msra.mxu0 %v198
    %1464 = vmatmul.bf16.gmra.mxu0 %v1429
    %v1465 = vpop.f32.mrf.mxu0
    %v1466 = vadd.f32 0.0, %v1465
    %v1467 = vpop.f32.mrf.mxu0
    %1468 = vdwg.mxu0
    %1469 = vmatpush.bf16.msra.mxu0 %v227
    %1470 = vmatpush.bf16.msra.mxu0 %v223
    %1471 = vmatpush.bf16.msra.mxu0 %v219
    %1472 = vmatpush.bf16.msra.mxu0 %v215
    %1473 = vmatpush.bf16.msra.mxu0 %v211
    %1474 = vmatpush.bf16.msra.mxu0 %v207
    %1475 = vmatpush.bf16.msra.mxu0 %v203
    %1476 = vmatpush.bf16.msra.mxu0 %v199
    %1477 = vmatmul.bf16.gmra.mxu0 %v1429
    %v1478 = vpop.f32.mrf.mxu0
    %v1479 = vadd.f32 0.0, %v1478
    %v1480 = vpop.f32.mrf.mxu0
    %1481 = vdwg.mxu0
    %v1482 = vadd.f32 %v1425, %v1440
    %v1483 = vadd.f32 %v1426, %v1453
    %v1484 = vadd.f32 %v1427, %v1466
    %v1485 = vadd.f32 %v1428, %v1479
    %v1486 = vmul.f32 %v1482, 0.5
    %v1487 = vtanh.pop %v1486
    %v1488 = vmul.f32 %v1487, 0.5
    %v1489 = vadd.f32 %v1488, 0.5
    %v1490 = vmul.f32 %v1483, 0.5
    %v1491 = vtanh.pop %v1490
    %v1492 = vmul.f32 %v1491, 0.5
    %v1493 = vadd.f32 %v1492, 0.5
    %v1494 = vtanh.pop %v1484
    %v1495 = vmul.f32 %v1485, 0.5
    %v1496 = vtanh.pop %v1495
    %v1497 = vmul.f32 %v1496, 0.5
    %v1498 = vadd.f32 %v1497, 0.5
    %v1499 = vmul.f32 %v1493, %v1411
    %v1500 = vmul.f32 %v1489, %v1494
    %v1501 = vadd.f32 %v1499, %v1500
    %v1502 = vtanh.pop %v1501
    %v1503 = vmul.f32 %v1498, %v1502
    %s1504 = scalar_lea.vmem %s0, 112
    %v1505 = vld [vmem:[%s1504] sm:$0xff]
    %1507 = vset.pattern.permute.xlu0 0
    %1508 = vperm.xlu0 %1507, %v1505
    %v1509 = vpop.permute.xlu0 %1508
    %v1511 = vmul.f32 %v1509, %v43
    %v1512 = vmul.f32 %v1509, %v44
    %v1513 = vmul.f32 %v1509, %v45
    %v1514 = vmul.f32 %v1509, %v46
    %v1515 = vadd.f32 %v1511, %v56
    %v1516 = vadd.f32 %v1512, %v57
    %v1517 = vadd.f32 %v1513, %v58
    %v1518 = vadd.f32 %v1514, %v59
    %v1519 = vpack.c.bf16 %v1503, %v1503
    %1520 = vmatpush.bf16.msra.mxu0 %v224
    %1521 = vmatpush.bf16.msra.mxu0 %v220
    %1522 = vmatpush.bf16.msra.mxu0 %v216
    %1523 = vmatpush.bf16.msra.mxu0 %v212
    %1524 = vmatpush.bf16.msra.mxu0 %v208
    %1525 = vmatpush.bf16.msra.mxu0 %v204
    %1526 = vmatpush.bf16.msra.mxu0 %v200
    %1527 = vmatpush.bf16.msra.mxu0 %v196
    %1528 = vmatmul.bf16.gmra.mxu0 %v1519
    %v1529 = vpop.f32.mrf.mxu0
    %v1530 = vadd.f32 0.0, %v1529
    %v1531 = vpop.f32.mrf.mxu0
    %1532 = vdwg.mxu0
    %1533 = vmatpush.bf16.msra.mxu0 %v225
    %1534 = vmatpush.bf16.msra.mxu0 %v221
    %1535 = vmatpush.bf16.msra.mxu0 %v217
    %1536 = vmatpush.bf16.msra.mxu0 %v213
    %1537 = vmatpush.bf16.msra.mxu0 %v209
    %1538 = vmatpush.bf16.msra.mxu0 %v205
    %1539 = vmatpush.bf16.msra.mxu0 %v201
    %1540 = vmatpush.bf16.msra.mxu0 %v197
    %1541 = vmatmul.bf16.gmra.mxu0 %v1519
    %v1542 = vpop.f32.mrf.mxu0
    %v1543 = vadd.f32 0.0, %v1542
    %v1544 = vpop.f32.mrf.mxu0
    %1545 = vdwg.mxu0
    %1546 = vmatpush.bf16.msra.mxu0 %v226
    %1547 = vmatpush.bf16.msra.mxu0 %v222
    %1548 = vmatpush.bf16.msra.mxu0 %v218
    %1549 = vmatpush.bf16.msra.mxu0 %v214
    %1550 = vmatpush.bf16.msra.mxu0 %v210
    %1551 = vmatpush.bf16.msra.mxu0 %v206
    %1552 = vmatpush.bf16.msra.mxu0 %v202
    %1553 = vmatpush.bf16.msra.mxu0 %v198
    %1554 = vmatmul.bf16.gmra.mxu0 %v1519
    %v1555 = vpop.f32.mrf.mxu0
    %v1556 = vadd.f32 0.0, %v1555
    %v1557 = vpop.f32.mrf.mxu0
    %1558 = vdwg.mxu0
    %1559 = vmatpush.bf16.msra.mxu0 %v227
    %1560 = vmatpush.bf16.msra.mxu0 %v223
    %1561 = vmatpush.bf16.msra.mxu0 %v219
    %1562 = vmatpush.bf16.msra.mxu0 %v215
    %1563 = vmatpush.bf16.msra.mxu0 %v211
    %1564 = vmatpush.bf16.msra.mxu0 %v207
    %1565 = vmatpush.bf16.msra.mxu0 %v203
    %1566 = vmatpush.bf16.msra.mxu0 %v199
    %1567 = vmatmul.bf16.gmra.mxu0 %v1519
    %v1568 = vpop.f32.mrf.mxu0
    %v1569 = vadd.f32 0.0, %v1568
    %v1570 = vpop.f32.mrf.mxu0
    %1571 = vdwg.mxu0
    %v1572 = vadd.f32 %v1515, %v1530
    %v1573 = vadd.f32 %v1516, %v1543
    %v1574 = vadd.f32 %v1517, %v1556
    %v1575 = vadd.f32 %v1518, %v1569
    %v1576 = vmul.f32 %v1572, 0.5
    %v1577 = vtanh.pop %v1576
    %v1578 = vmul.f32 %v1577, 0.5
    %v1579 = vadd.f32 %v1578, 0.5
    %v1580 = vmul.f32 %v1573, 0.5
    %v1581 = vtanh.pop %v1580
    %v1582 = vmul.f32 %v1581, 0.5
    %v1583 = vadd.f32 %v1582, 0.5
    %v1584 = vtanh.pop %v1574
    %v1585 = vmul.f32 %v1575, 0.5
    %v1586 = vtanh.pop %v1585
    %v1587 = vmul.f32 %v1586, 0.5
    %v1588 = vadd.f32 %v1587, 0.5
    %v1589 = vmul.f32 %v1583, %v1501
    %v1590 = vmul.f32 %v1579, %v1584
    %v1591 = vadd.f32 %v1589, %v1590
    %v1592 = vtanh.pop %v1591
    %v1593 = vmul.f32 %v1588, %v1592
    %s1594 = scalar_lea.vmem %s0, 120
    %v1595 = vld [vmem:[%s1594] sm:$0xff]
    %1597 = vset.pattern.permute.xlu0 0
    %1598 = vperm.xlu0 %1597, %v1595
    %v1599 = vpop.permute.xlu0 %1598
    %v1601 = vmul.f32 %v1599, %v43
    %v1602 = vmul.f32 %v1599, %v44
    %v1603 = vmul.f32 %v1599, %v45
    %v1604 = vmul.f32 %v1599, %v46
    %v1605 = vadd.f32 %v1601, %v56
    %v1606 = vadd.f32 %v1602, %v57
    %v1607 = vadd.f32 %v1603, %v58
    %v1608 = vadd.f32 %v1604, %v59
    %v1609 = vpack.c.bf16 %v1593, %v1593
    %1610 = vmatpush.bf16.msra.mxu0 %v224
    %1611 = vmatpush.bf16.msra.mxu0 %v220
    %1612 = vmatpush.bf16.msra.mxu0 %v216
    %1613 = vmatpush.bf16.msra.mxu0 %v212
    %1614 = vmatpush.bf16.msra.mxu0 %v208
    %1615 = vmatpush.bf16.msra.mxu0 %v204
    %1616 = vmatpush.bf16.msra.mxu0 %v200
    %1617 = vmatpush.bf16.msra.mxu0 %v196
    %1618 = vmatmul.bf16.gmra.mxu0 %v1609
    %v1619 = vpop.f32.mrf.mxu0
    %v1620 = vadd.f32 0.0, %v1619
    %v1621 = vpop.f32.mrf.mxu0
    %1622 = vdwg.mxu0
    %1623 = vmatpush.bf16.msra.mxu0 %v225
    %1624 = vmatpush.bf16.msra.mxu0 %v221
    %1625 = vmatpush.bf16.msra.mxu0 %v217
    %1626 = vmatpush.bf16.msra.mxu0 %v213
    %1627 = vmatpush.bf16.msra.mxu0 %v209
    %1628 = vmatpush.bf16.msra.mxu0 %v205
    %1629 = vmatpush.bf16.msra.mxu0 %v201
    %1630 = vmatpush.bf16.msra.mxu0 %v197
    %1631 = vmatmul.bf16.gmra.mxu0 %v1609
    %v1632 = vpop.f32.mrf.mxu0
    %v1633 = vadd.f32 0.0, %v1632
    %v1634 = vpop.f32.mrf.mxu0
    %1635 = vdwg.mxu0
    %1636 = vmatpush.bf16.msra.mxu0 %v226
    %1637 = vmatpush.bf16.msra.mxu0 %v222
    %1638 = vmatpush.bf16.msra.mxu0 %v218
    %1639 = vmatpush.bf16.msra.mxu0 %v214
    %1640 = vmatpush.bf16.msra.mxu0 %v210
    %1641 = vmatpush.bf16.msra.mxu0 %v206
    %1642 = vmatpush.bf16.msra.mxu0 %v202
    %1643 = vmatpush.bf16.msra.mxu0 %v198
    %1644 = vmatmul.bf16.gmra.mxu0 %v1609
    %v1645 = vpop.f32.mrf.mxu0
    %v1646 = vadd.f32 0.0, %v1645
    %v1647 = vpop.f32.mrf.mxu0
    %1648 = vdwg.mxu0
    %1649 = vmatpush.bf16.msra.mxu0 %v227
    %1650 = vmatpush.bf16.msra.mxu0 %v223
    %1651 = vmatpush.bf16.msra.mxu0 %v219
    %1652 = vmatpush.bf16.msra.mxu0 %v215
    %1653 = vmatpush.bf16.msra.mxu0 %v211
    %1654 = vmatpush.bf16.msra.mxu0 %v207
    %1655 = vmatpush.bf16.msra.mxu0 %v203
    %1656 = vmatpush.bf16.msra.mxu0 %v199
    %1657 = vmatmul.bf16.gmra.mxu0 %v1609
    %v1658 = vpop.f32.mrf.mxu0
    %v1659 = vadd.f32 0.0, %v1658
    %v1660 = vpop.f32.mrf.mxu0
    %1661 = vdwg.mxu0
    %v1662 = vadd.f32 %v1605, %v1620
    %v1663 = vadd.f32 %v1606, %v1633
    %v1664 = vadd.f32 %v1607, %v1646
    %v1665 = vadd.f32 %v1608, %v1659
    %v1666 = vmul.f32 %v1662, 0.5
    %v1667 = vtanh.pop %v1666
    %v1668 = vmul.f32 %v1667, 0.5
    %v1669 = vadd.f32 %v1668, 0.5
    %v1670 = vmul.f32 %v1663, 0.5
    %v1671 = vtanh.pop %v1670
    %v1672 = vmul.f32 %v1671, 0.5
    %v1673 = vadd.f32 %v1672, 0.5
    %v1674 = vtanh.pop %v1664
    %v1675 = vmul.f32 %v1665, 0.5
    %v1676 = vtanh.pop %v1675
    %v1677 = vmul.f32 %v1676, 0.5
    %v1678 = vadd.f32 %v1677, 0.5
    %v1679 = vmul.f32 %v1673, %v1591
    %v1680 = vmul.f32 %v1669, %v1674
    %v1681 = vadd.f32 %v1679, %v1680
    %v1682 = vtanh.pop %v1681
    %v1683 = vmul.f32 %v1678, %v1682
    %s1684 = scalar_lea.vmem %s0, 128
    %v1685 = vld [vmem:[%s1684] sm:$0xff]
    %1687 = vset.pattern.permute.xlu0 0
    %1688 = vperm.xlu0 %1687, %v1685
    %v1689 = vpop.permute.xlu0 %1688
    %v1691 = vmul.f32 %v1689, %v43
    %v1692 = vmul.f32 %v1689, %v44
    %v1693 = vmul.f32 %v1689, %v45
    %v1694 = vmul.f32 %v1689, %v46
    %v1695 = vadd.f32 %v1691, %v56
    %v1696 = vadd.f32 %v1692, %v57
    %v1697 = vadd.f32 %v1693, %v58
    %v1698 = vadd.f32 %v1694, %v59
    %v1699 = vpack.c.bf16 %v1683, %v1683
    %1700 = vmatpush.bf16.msra.mxu0 %v224
    %1701 = vmatpush.bf16.msra.mxu0 %v220
    %1702 = vmatpush.bf16.msra.mxu0 %v216
    %1703 = vmatpush.bf16.msra.mxu0 %v212
    %1704 = vmatpush.bf16.msra.mxu0 %v208
    %1705 = vmatpush.bf16.msra.mxu0 %v204
    %1706 = vmatpush.bf16.msra.mxu0 %v200
    %1707 = vmatpush.bf16.msra.mxu0 %v196
    %1708 = vmatmul.bf16.gmra.mxu0 %v1699
    %v1709 = vpop.f32.mrf.mxu0
    %v1710 = vadd.f32 0.0, %v1709
    %v1711 = vpop.f32.mrf.mxu0
    %1712 = vdwg.mxu0
    %1713 = vmatpush.bf16.msra.mxu0 %v225
    %1714 = vmatpush.bf16.msra.mxu0 %v221
    %1715 = vmatpush.bf16.msra.mxu0 %v217
    %1716 = vmatpush.bf16.msra.mxu0 %v213
    %1717 = vmatpush.bf16.msra.mxu0 %v209
    %1718 = vmatpush.bf16.msra.mxu0 %v205
    %1719 = vmatpush.bf16.msra.mxu0 %v201
    %1720 = vmatpush.bf16.msra.mxu0 %v197
    %1721 = vmatmul.bf16.gmra.mxu0 %v1699
    %v1722 = vpop.f32.mrf.mxu0
    %v1723 = vadd.f32 0.0, %v1722
    %v1724 = vpop.f32.mrf.mxu0
    %1725 = vdwg.mxu0
    %1726 = vmatpush.bf16.msra.mxu0 %v226
    %1727 = vmatpush.bf16.msra.mxu0 %v222
    %1728 = vmatpush.bf16.msra.mxu0 %v218
    %1729 = vmatpush.bf16.msra.mxu0 %v214
    %1730 = vmatpush.bf16.msra.mxu0 %v210
    %1731 = vmatpush.bf16.msra.mxu0 %v206
    %1732 = vmatpush.bf16.msra.mxu0 %v202
    %1733 = vmatpush.bf16.msra.mxu0 %v198
    %1734 = vmatmul.bf16.gmra.mxu0 %v1699
    %v1735 = vpop.f32.mrf.mxu0
    %v1736 = vadd.f32 0.0, %v1735
    %v1737 = vpop.f32.mrf.mxu0
    %1738 = vdwg.mxu0
    %1739 = vmatpush.bf16.msra.mxu0 %v227
    %1740 = vmatpush.bf16.msra.mxu0 %v223
    %1741 = vmatpush.bf16.msra.mxu0 %v219
    %1742 = vmatpush.bf16.msra.mxu0 %v215
    %1743 = vmatpush.bf16.msra.mxu0 %v211
    %1744 = vmatpush.bf16.msra.mxu0 %v207
    %1745 = vmatpush.bf16.msra.mxu0 %v203
    %1746 = vmatpush.bf16.msra.mxu0 %v199
    %1747 = vmatmul.bf16.gmra.mxu0 %v1699
    %v1748 = vpop.f32.mrf.mxu0
    %v1749 = vadd.f32 0.0, %v1748
    %v1750 = vpop.f32.mrf.mxu0
    %1751 = vdwg.mxu0
    %v1752 = vadd.f32 %v1695, %v1710
    %v1753 = vadd.f32 %v1696, %v1723
    %v1754 = vadd.f32 %v1697, %v1736
    %v1755 = vadd.f32 %v1698, %v1749
    %v1756 = vmul.f32 %v1752, 0.5
    %v1757 = vtanh.pop %v1756
    %v1758 = vmul.f32 %v1757, 0.5
    %v1759 = vadd.f32 %v1758, 0.5
    %v1760 = vmul.f32 %v1753, 0.5
    %v1761 = vtanh.pop %v1760
    %v1762 = vmul.f32 %v1761, 0.5
    %v1763 = vadd.f32 %v1762, 0.5
    %v1764 = vtanh.pop %v1754
    %v1765 = vmul.f32 %v1755, 0.5
    %v1766 = vtanh.pop %v1765
    %v1767 = vmul.f32 %v1766, 0.5
    %v1768 = vadd.f32 %v1767, 0.5
    %v1769 = vmul.f32 %v1763, %v1681
    %v1770 = vmul.f32 %v1759, %v1764
    %v1771 = vadd.f32 %v1769, %v1770
    %v1772 = vtanh.pop %v1771
    %v1773 = vmul.f32 %v1768, %v1772
    %s1774 = scalar_lea.vmem %s0, 136
    %v1775 = vld [vmem:[%s1774] sm:$0xff]
    %1777 = vset.pattern.permute.xlu0 0
    %1778 = vperm.xlu0 %1777, %v1775
    %v1779 = vpop.permute.xlu0 %1778
    %v1781 = vmul.f32 %v1779, %v43
    %v1782 = vmul.f32 %v1779, %v44
    %v1783 = vmul.f32 %v1779, %v45
    %v1784 = vmul.f32 %v1779, %v46
    %v1785 = vadd.f32 %v1781, %v56
    %v1786 = vadd.f32 %v1782, %v57
    %v1787 = vadd.f32 %v1783, %v58
    %v1788 = vadd.f32 %v1784, %v59
    %v1789 = vpack.c.bf16 %v1773, %v1773
    %1790 = vmatpush.bf16.msra.mxu0 %v224
    %1791 = vmatpush.bf16.msra.mxu0 %v220
    %1792 = vmatpush.bf16.msra.mxu0 %v216
    %1793 = vmatpush.bf16.msra.mxu0 %v212
    %1794 = vmatpush.bf16.msra.mxu0 %v208
    %1795 = vmatpush.bf16.msra.mxu0 %v204
    %1796 = vmatpush.bf16.msra.mxu0 %v200
    %1797 = vmatpush.bf16.msra.mxu0 %v196
    %1798 = vmatmul.bf16.gmra.mxu0 %v1789
    %v1799 = vpop.f32.mrf.mxu0
    %v1800 = vadd.f32 0.0, %v1799
    %v1801 = vpop.f32.mrf.mxu0
    %1802 = vdwg.mxu0
    %1803 = vmatpush.bf16.msra.mxu0 %v225
    %1804 = vmatpush.bf16.msra.mxu0 %v221
    %1805 = vmatpush.bf16.msra.mxu0 %v217
    %1806 = vmatpush.bf16.msra.mxu0 %v213
    %1807 = vmatpush.bf16.msra.mxu0 %v209
    %1808 = vmatpush.bf16.msra.mxu0 %v205
    %1809 = vmatpush.bf16.msra.mxu0 %v201
    %1810 = vmatpush.bf16.msra.mxu0 %v197
    %1811 = vmatmul.bf16.gmra.mxu0 %v1789
    %v1812 = vpop.f32.mrf.mxu0
    %v1813 = vadd.f32 0.0, %v1812
    %v1814 = vpop.f32.mrf.mxu0
    %1815 = vdwg.mxu0
    %1816 = vmatpush.bf16.msra.mxu0 %v226
    %1817 = vmatpush.bf16.msra.mxu0 %v222
    %1818 = vmatpush.bf16.msra.mxu0 %v218
    %1819 = vmatpush.bf16.msra.mxu0 %v214
    %1820 = vmatpush.bf16.msra.mxu0 %v210
    %1821 = vmatpush.bf16.msra.mxu0 %v206
    %1822 = vmatpush.bf16.msra.mxu0 %v202
    %1823 = vmatpush.bf16.msra.mxu0 %v198
    %1824 = vmatmul.bf16.gmra.mxu0 %v1789
    %v1825 = vpop.f32.mrf.mxu0
    %v1826 = vadd.f32 0.0, %v1825
    %v1827 = vpop.f32.mrf.mxu0
    %1828 = vdwg.mxu0
    %1829 = vmatpush.bf16.msra.mxu0 %v227
    %1830 = vmatpush.bf16.msra.mxu0 %v223
    %1831 = vmatpush.bf16.msra.mxu0 %v219
    %1832 = vmatpush.bf16.msra.mxu0 %v215
    %1833 = vmatpush.bf16.msra.mxu0 %v211
    %1834 = vmatpush.bf16.msra.mxu0 %v207
    %1835 = vmatpush.bf16.msra.mxu0 %v203
    %1836 = vmatpush.bf16.msra.mxu0 %v199
    %1837 = vmatmul.bf16.gmra.mxu0 %v1789
    %v1838 = vpop.f32.mrf.mxu0
    %v1839 = vadd.f32 0.0, %v1838
    %v1840 = vpop.f32.mrf.mxu0
    %1841 = vdwg.mxu0
    %v1842 = vadd.f32 %v1785, %v1800
    %v1843 = vadd.f32 %v1786, %v1813
    %v1844 = vadd.f32 %v1787, %v1826
    %v1845 = vadd.f32 %v1788, %v1839
    %v1846 = vmul.f32 %v1842, 0.5
    %v1847 = vtanh.pop %v1846
    %v1848 = vmul.f32 %v1847, 0.5
    %v1849 = vadd.f32 %v1848, 0.5
    %v1850 = vmul.f32 %v1843, 0.5
    %v1851 = vtanh.pop %v1850
    %v1852 = vmul.f32 %v1851, 0.5
    %v1853 = vadd.f32 %v1852, 0.5
    %v1854 = vtanh.pop %v1844
    %v1855 = vmul.f32 %v1845, 0.5
    %v1856 = vtanh.pop %v1855
    %v1857 = vmul.f32 %v1856, 0.5
    %v1858 = vadd.f32 %v1857, 0.5
    %v1859 = vmul.f32 %v1853, %v1771
    %v1860 = vmul.f32 %v1849, %v1854
    %v1861 = vadd.f32 %v1859, %v1860
    %v1862 = vtanh.pop %v1861
    %v1863 = vmul.f32 %v1858, %v1862
    %s1864 = scalar_lea.vmem %s0, 144
    %v1865 = vld [vmem:[%s1864] sm:$0xff]
    %1867 = vset.pattern.permute.xlu0 0
    %1868 = vperm.xlu0 %1867, %v1865
    %v1869 = vpop.permute.xlu0 %1868
    %v1871 = vmul.f32 %v1869, %v43
    %v1872 = vmul.f32 %v1869, %v44
    %v1873 = vmul.f32 %v1869, %v45
    %v1874 = vmul.f32 %v1869, %v46
    %v1875 = vadd.f32 %v1871, %v56
    %v1876 = vadd.f32 %v1872, %v57
    %v1877 = vadd.f32 %v1873, %v58
    %v1878 = vadd.f32 %v1874, %v59
    %v1879 = vpack.c.bf16 %v1863, %v1863
    %1880 = vmatpush.bf16.msra.mxu0 %v224
    %1881 = vmatpush.bf16.msra.mxu0 %v220
    %1882 = vmatpush.bf16.msra.mxu0 %v216
    %1883 = vmatpush.bf16.msra.mxu0 %v212
    %1884 = vmatpush.bf16.msra.mxu0 %v208
    %1885 = vmatpush.bf16.msra.mxu0 %v204
    %1886 = vmatpush.bf16.msra.mxu0 %v200
    %1887 = vmatpush.bf16.msra.mxu0 %v196
    %1888 = vmatmul.bf16.gmra.mxu0 %v1879
    %v1889 = vpop.f32.mrf.mxu0
    %v1890 = vadd.f32 0.0, %v1889
    %v1891 = vpop.f32.mrf.mxu0
    %1892 = vdwg.mxu0
    %1893 = vmatpush.bf16.msra.mxu0 %v225
    %1894 = vmatpush.bf16.msra.mxu0 %v221
    %1895 = vmatpush.bf16.msra.mxu0 %v217
    %1896 = vmatpush.bf16.msra.mxu0 %v213
    %1897 = vmatpush.bf16.msra.mxu0 %v209
    %1898 = vmatpush.bf16.msra.mxu0 %v205
    %1899 = vmatpush.bf16.msra.mxu0 %v201
    %1900 = vmatpush.bf16.msra.mxu0 %v197
    %1901 = vmatmul.bf16.gmra.mxu0 %v1879
    %v1902 = vpop.f32.mrf.mxu0
    %v1903 = vadd.f32 0.0, %v1902
    %v1904 = vpop.f32.mrf.mxu0
    %1905 = vdwg.mxu0
    %1906 = vmatpush.bf16.msra.mxu0 %v226
    %1907 = vmatpush.bf16.msra.mxu0 %v222
    %1908 = vmatpush.bf16.msra.mxu0 %v218
    %1909 = vmatpush.bf16.msra.mxu0 %v214
    %1910 = vmatpush.bf16.msra.mxu0 %v210
    %1911 = vmatpush.bf16.msra.mxu0 %v206
    %1912 = vmatpush.bf16.msra.mxu0 %v202
    %1913 = vmatpush.bf16.msra.mxu0 %v198
    %1914 = vmatmul.bf16.gmra.mxu0 %v1879
    %v1915 = vpop.f32.mrf.mxu0
    %v1916 = vadd.f32 0.0, %v1915
    %v1917 = vpop.f32.mrf.mxu0
    %1918 = vdwg.mxu0
    %1919 = vmatpush.bf16.msra.mxu0 %v227
    %1920 = vmatpush.bf16.msra.mxu0 %v223
    %1921 = vmatpush.bf16.msra.mxu0 %v219
    %1922 = vmatpush.bf16.msra.mxu0 %v215
    %1923 = vmatpush.bf16.msra.mxu0 %v211
    %1924 = vmatpush.bf16.msra.mxu0 %v207
    %1925 = vmatpush.bf16.msra.mxu0 %v203
    %1926 = vmatpush.bf16.msra.mxu0 %v199
    %1927 = vmatmul.bf16.gmra.mxu0 %v1879
    %v1928 = vpop.f32.mrf.mxu0
    %v1929 = vadd.f32 0.0, %v1928
    %v1930 = vpop.f32.mrf.mxu0
    %1931 = vdwg.mxu0
    %v1932 = vadd.f32 %v1875, %v1890
    %v1933 = vadd.f32 %v1876, %v1903
    %v1934 = vadd.f32 %v1877, %v1916
    %v1935 = vadd.f32 %v1878, %v1929
    %v1936 = vmul.f32 %v1932, 0.5
    %v1937 = vtanh.pop %v1936
    %v1938 = vmul.f32 %v1937, 0.5
    %v1939 = vadd.f32 %v1938, 0.5
    %v1940 = vmul.f32 %v1933, 0.5
    %v1941 = vtanh.pop %v1940
    %v1942 = vmul.f32 %v1941, 0.5
    %v1943 = vadd.f32 %v1942, 0.5
    %v1944 = vtanh.pop %v1934
    %v1945 = vmul.f32 %v1935, 0.5
    %v1946 = vtanh.pop %v1945
    %v1947 = vmul.f32 %v1946, 0.5
    %v1948 = vadd.f32 %v1947, 0.5
    %v1949 = vmul.f32 %v1943, %v1861
    %v1950 = vmul.f32 %v1939, %v1944
    %v1951 = vadd.f32 %v1949, %v1950
    %v1952 = vtanh.pop %v1951
    %v1953 = vmul.f32 %v1948, %v1952
    %s1954 = scalar_lea.vmem %s0, 152
    %v1955 = vld [vmem:[%s1954] sm:$0xff]
    %1957 = vset.pattern.permute.xlu0 0
    %1958 = vperm.xlu0 %1957, %v1955
    %v1959 = vpop.permute.xlu0 %1958
    %v1961 = vmul.f32 %v1959, %v43
    %v1962 = vmul.f32 %v1959, %v44
    %v1963 = vmul.f32 %v1959, %v45
    %v1964 = vmul.f32 %v1959, %v46
    %v1965 = vadd.f32 %v1961, %v56
    %v1966 = vadd.f32 %v1962, %v57
    %v1967 = vadd.f32 %v1963, %v58
    %v1968 = vadd.f32 %v1964, %v59
    %v1969 = vpack.c.bf16 %v1953, %v1953
    %1970 = vmatpush.bf16.msra.mxu0 %v224
    %1971 = vmatpush.bf16.msra.mxu0 %v220
    %1972 = vmatpush.bf16.msra.mxu0 %v216
    %1973 = vmatpush.bf16.msra.mxu0 %v212
    %1974 = vmatpush.bf16.msra.mxu0 %v208
    %1975 = vmatpush.bf16.msra.mxu0 %v204
    %1976 = vmatpush.bf16.msra.mxu0 %v200
    %1977 = vmatpush.bf16.msra.mxu0 %v196
    %1978 = vmatmul.bf16.gmra.mxu0 %v1969
    %v1979 = vpop.f32.mrf.mxu0
    %v1980 = vadd.f32 0.0, %v1979
    %v1981 = vpop.f32.mrf.mxu0
    %1982 = vdwg.mxu0
    %1983 = vmatpush.bf16.msra.mxu0 %v225
    %1984 = vmatpush.bf16.msra.mxu0 %v221
    %1985 = vmatpush.bf16.msra.mxu0 %v217
    %1986 = vmatpush.bf16.msra.mxu0 %v213
    %1987 = vmatpush.bf16.msra.mxu0 %v209
    %1988 = vmatpush.bf16.msra.mxu0 %v205
    %1989 = vmatpush.bf16.msra.mxu0 %v201
    %1990 = vmatpush.bf16.msra.mxu0 %v197
    %1991 = vmatmul.bf16.gmra.mxu0 %v1969
    %v1992 = vpop.f32.mrf.mxu0
    %v1993 = vadd.f32 0.0, %v1992
    %v1994 = vpop.f32.mrf.mxu0
    %1995 = vdwg.mxu0
    %1996 = vmatpush.bf16.msra.mxu0 %v226
    %1997 = vmatpush.bf16.msra.mxu0 %v222
    %1998 = vmatpush.bf16.msra.mxu0 %v218
    %1999 = vmatpush.bf16.msra.mxu0 %v214
    %2000 = vmatpush.bf16.msra.mxu0 %v210
    %2001 = vmatpush.bf16.msra.mxu0 %v206
    %2002 = vmatpush.bf16.msra.mxu0 %v202
    %2003 = vmatpush.bf16.msra.mxu0 %v198
    %2004 = vmatmul.bf16.gmra.mxu0 %v1969
    %v2005 = vpop.f32.mrf.mxu0
    %v2006 = vadd.f32 0.0, %v2005
    %v2007 = vpop.f32.mrf.mxu0
    %2008 = vdwg.mxu0
    %2009 = vmatpush.bf16.msra.mxu0 %v227
    %2010 = vmatpush.bf16.msra.mxu0 %v223
    %2011 = vmatpush.bf16.msra.mxu0 %v219
    %2012 = vmatpush.bf16.msra.mxu0 %v215
    %2013 = vmatpush.bf16.msra.mxu0 %v211
    %2014 = vmatpush.bf16.msra.mxu0 %v207
    %2015 = vmatpush.bf16.msra.mxu0 %v203
    %2016 = vmatpush.bf16.msra.mxu0 %v199
    %2017 = vmatmul.bf16.gmra.mxu0 %v1969
    %v2018 = vpop.f32.mrf.mxu0
    %v2019 = vadd.f32 0.0, %v2018
    %v2020 = vpop.f32.mrf.mxu0
    %2021 = vdwg.mxu0
    %v2022 = vadd.f32 %v1965, %v1980
    %v2023 = vadd.f32 %v1966, %v1993
    %v2024 = vadd.f32 %v1967, %v2006
    %v2025 = vadd.f32 %v1968, %v2019
    %v2026 = vmul.f32 %v2022, 0.5
    %v2027 = vtanh.pop %v2026
    %v2028 = vmul.f32 %v2027, 0.5
    %v2029 = vadd.f32 %v2028, 0.5
    %v2030 = vmul.f32 %v2023, 0.5
    %v2031 = vtanh.pop %v2030
    %v2032 = vmul.f32 %v2031, 0.5
    %v2033 = vadd.f32 %v2032, 0.5
    %v2034 = vtanh.pop %v2024
    %v2035 = vmul.f32 %v2025, 0.5
    %v2036 = vtanh.pop %v2035
    %v2037 = vmul.f32 %v2036, 0.5
    %v2038 = vadd.f32 %v2037, 0.5
    %v2039 = vmul.f32 %v2033, %v1951
    %v2040 = vmul.f32 %v2029, %v2034
    %v2041 = vadd.f32 %v2039, %v2040
    %v2042 = vtanh.pop %v2041
    %v2043 = vmul.f32 %v2038, %v2042
    %s2044 = scalar_lea.vmem %s0, 160
    %v2045 = vld [vmem:[%s2044] sm:$0xff]
    %2047 = vset.pattern.permute.xlu0 0
    %2048 = vperm.xlu0 %2047, %v2045
    %v2049 = vpop.permute.xlu0 %2048
    %v2051 = vmul.f32 %v2049, %v43
    %v2052 = vmul.f32 %v2049, %v44
    %v2053 = vmul.f32 %v2049, %v45
    %v2054 = vmul.f32 %v2049, %v46
    %v2055 = vadd.f32 %v2051, %v56
    %v2056 = vadd.f32 %v2052, %v57
    %v2057 = vadd.f32 %v2053, %v58
    %v2058 = vadd.f32 %v2054, %v59
    %v2059 = vpack.c.bf16 %v2043, %v2043
    %2060 = vmatpush.bf16.msra.mxu0 %v224
    %2061 = vmatpush.bf16.msra.mxu0 %v220
    %2062 = vmatpush.bf16.msra.mxu0 %v216
    %2063 = vmatpush.bf16.msra.mxu0 %v212
    %2064 = vmatpush.bf16.msra.mxu0 %v208
    %2065 = vmatpush.bf16.msra.mxu0 %v204
    %2066 = vmatpush.bf16.msra.mxu0 %v200
    %2067 = vmatpush.bf16.msra.mxu0 %v196
    %2068 = vmatmul.bf16.gmra.mxu0 %v2059
    %v2069 = vpop.f32.mrf.mxu0
    %v2070 = vadd.f32 0.0, %v2069
    %v2071 = vpop.f32.mrf.mxu0
    %2072 = vdwg.mxu0
    %2073 = vmatpush.bf16.msra.mxu0 %v225
    %2074 = vmatpush.bf16.msra.mxu0 %v221
    %2075 = vmatpush.bf16.msra.mxu0 %v217
    %2076 = vmatpush.bf16.msra.mxu0 %v213
    %2077 = vmatpush.bf16.msra.mxu0 %v209
    %2078 = vmatpush.bf16.msra.mxu0 %v205
    %2079 = vmatpush.bf16.msra.mxu0 %v201
    %2080 = vmatpush.bf16.msra.mxu0 %v197
    %2081 = vmatmul.bf16.gmra.mxu0 %v2059
    %v2082 = vpop.f32.mrf.mxu0
    %v2083 = vadd.f32 0.0, %v2082
    %v2084 = vpop.f32.mrf.mxu0
    %2085 = vdwg.mxu0
    %2086 = vmatpush.bf16.msra.mxu0 %v226
    %2087 = vmatpush.bf16.msra.mxu0 %v222
    %2088 = vmatpush.bf16.msra.mxu0 %v218
    %2089 = vmatpush.bf16.msra.mxu0 %v214
    %2090 = vmatpush.bf16.msra.mxu0 %v210
    %2091 = vmatpush.bf16.msra.mxu0 %v206
    %2092 = vmatpush.bf16.msra.mxu0 %v202
    %2093 = vmatpush.bf16.msra.mxu0 %v198
    %2094 = vmatmul.bf16.gmra.mxu0 %v2059
    %v2095 = vpop.f32.mrf.mxu0
    %v2096 = vadd.f32 0.0, %v2095
    %v2097 = vpop.f32.mrf.mxu0
    %2098 = vdwg.mxu0
    %2099 = vmatpush.bf16.msra.mxu0 %v227
    %2100 = vmatpush.bf16.msra.mxu0 %v223
    %2101 = vmatpush.bf16.msra.mxu0 %v219
    %2102 = vmatpush.bf16.msra.mxu0 %v215
    %2103 = vmatpush.bf16.msra.mxu0 %v211
    %2104 = vmatpush.bf16.msra.mxu0 %v207
    %2105 = vmatpush.bf16.msra.mxu0 %v203
    %2106 = vmatpush.bf16.msra.mxu0 %v199
    %2107 = vmatmul.bf16.gmra.mxu0 %v2059
    %v2108 = vpop.f32.mrf.mxu0
    %v2109 = vadd.f32 0.0, %v2108
    %v2110 = vpop.f32.mrf.mxu0
    %2111 = vdwg.mxu0
    %v2112 = vadd.f32 %v2055, %v2070
    %v2113 = vadd.f32 %v2056, %v2083
    %v2114 = vadd.f32 %v2057, %v2096
    %v2115 = vadd.f32 %v2058, %v2109
    %v2116 = vmul.f32 %v2112, 0.5
    %v2117 = vtanh.pop %v2116
    %v2118 = vmul.f32 %v2117, 0.5
    %v2119 = vadd.f32 %v2118, 0.5
    %v2120 = vmul.f32 %v2113, 0.5
    %v2121 = vtanh.pop %v2120
    %v2122 = vmul.f32 %v2121, 0.5
    %v2123 = vadd.f32 %v2122, 0.5
    %v2124 = vtanh.pop %v2114
    %v2125 = vmul.f32 %v2115, 0.5
    %v2126 = vtanh.pop %v2125
    %v2127 = vmul.f32 %v2126, 0.5
    %v2128 = vadd.f32 %v2127, 0.5
    %v2129 = vmul.f32 %v2123, %v2041
    %v2130 = vmul.f32 %v2119, %v2124
    %v2131 = vadd.f32 %v2129, %v2130
    %v2132 = vtanh.pop %v2131
    %v2133 = vmul.f32 %v2128, %v2132
    %s2134 = scalar_lea.vmem %s0, 168
    %v2135 = vld [vmem:[%s2134] sm:$0xff]
    %2137 = vset.pattern.permute.xlu0 0
    %2138 = vperm.xlu0 %2137, %v2135
    %v2139 = vpop.permute.xlu0 %2138
    %v2141 = vmul.f32 %v2139, %v43
    %v2142 = vmul.f32 %v2139, %v44
    %v2143 = vmul.f32 %v2139, %v45
    %v2144 = vmul.f32 %v2139, %v46
    %v2145 = vadd.f32 %v2141, %v56
    %v2146 = vadd.f32 %v2142, %v57
    %v2147 = vadd.f32 %v2143, %v58
    %v2148 = vadd.f32 %v2144, %v59
    %v2149 = vpack.c.bf16 %v2133, %v2133
    %2150 = vmatpush.bf16.msra.mxu0 %v224
    %2151 = vmatpush.bf16.msra.mxu0 %v220
    %2152 = vmatpush.bf16.msra.mxu0 %v216
    %2153 = vmatpush.bf16.msra.mxu0 %v212
    %2154 = vmatpush.bf16.msra.mxu0 %v208
    %2155 = vmatpush.bf16.msra.mxu0 %v204
    %2156 = vmatpush.bf16.msra.mxu0 %v200
    %2157 = vmatpush.bf16.msra.mxu0 %v196
    %2158 = vmatmul.bf16.gmra.mxu0 %v2149
    %v2159 = vpop.f32.mrf.mxu0
    %v2160 = vadd.f32 0.0, %v2159
    %v2161 = vpop.f32.mrf.mxu0
    %2162 = vdwg.mxu0
    %2163 = vmatpush.bf16.msra.mxu0 %v225
    %2164 = vmatpush.bf16.msra.mxu0 %v221
    %2165 = vmatpush.bf16.msra.mxu0 %v217
    %2166 = vmatpush.bf16.msra.mxu0 %v213
    %2167 = vmatpush.bf16.msra.mxu0 %v209
    %2168 = vmatpush.bf16.msra.mxu0 %v205
    %2169 = vmatpush.bf16.msra.mxu0 %v201
    %2170 = vmatpush.bf16.msra.mxu0 %v197
    %2171 = vmatmul.bf16.gmra.mxu0 %v2149
    %v2172 = vpop.f32.mrf.mxu0
    %v2173 = vadd.f32 0.0, %v2172
    %v2174 = vpop.f32.mrf.mxu0
    %2175 = vdwg.mxu0
    %2176 = vmatpush.bf16.msra.mxu0 %v226
    %2177 = vmatpush.bf16.msra.mxu0 %v222
    %2178 = vmatpush.bf16.msra.mxu0 %v218
    %2179 = vmatpush.bf16.msra.mxu0 %v214
    %2180 = vmatpush.bf16.msra.mxu0 %v210
    %2181 = vmatpush.bf16.msra.mxu0 %v206
    %2182 = vmatpush.bf16.msra.mxu0 %v202
    %2183 = vmatpush.bf16.msra.mxu0 %v198
    %2184 = vmatmul.bf16.gmra.mxu0 %v2149
    %v2185 = vpop.f32.mrf.mxu0
    %v2186 = vadd.f32 0.0, %v2185
    %v2187 = vpop.f32.mrf.mxu0
    %2188 = vdwg.mxu0
    %2189 = vmatpush.bf16.msra.mxu0 %v227
    %2190 = vmatpush.bf16.msra.mxu0 %v223
    %2191 = vmatpush.bf16.msra.mxu0 %v219
    %2192 = vmatpush.bf16.msra.mxu0 %v215
    %2193 = vmatpush.bf16.msra.mxu0 %v211
    %2194 = vmatpush.bf16.msra.mxu0 %v207
    %2195 = vmatpush.bf16.msra.mxu0 %v203
    %2196 = vmatpush.bf16.msra.mxu0 %v199
    %2197 = vmatmul.bf16.gmra.mxu0 %v2149
    %v2198 = vpop.f32.mrf.mxu0
    %v2199 = vadd.f32 0.0, %v2198
    %v2200 = vpop.f32.mrf.mxu0
    %2201 = vdwg.mxu0
    %v2202 = vadd.f32 %v2145, %v2160
    %v2203 = vadd.f32 %v2146, %v2173
    %v2204 = vadd.f32 %v2147, %v2186
    %v2205 = vadd.f32 %v2148, %v2199
    %v2206 = vmul.f32 %v2202, 0.5
    %v2207 = vtanh.pop %v2206
    %v2208 = vmul.f32 %v2207, 0.5
    %v2209 = vadd.f32 %v2208, 0.5
    %v2210 = vmul.f32 %v2203, 0.5
    %v2211 = vtanh.pop %v2210
    %v2212 = vmul.f32 %v2211, 0.5
    %v2213 = vadd.f32 %v2212, 0.5
    %v2214 = vtanh.pop %v2204
    %v2215 = vmul.f32 %v2205, 0.5
    %v2216 = vtanh.pop %v2215
    %v2217 = vmul.f32 %v2216, 0.5
    %v2218 = vadd.f32 %v2217, 0.5
    %v2219 = vmul.f32 %v2213, %v2131
    %v2220 = vmul.f32 %v2209, %v2214
    %v2221 = vadd.f32 %v2219, %v2220
    %v2222 = vtanh.pop %v2221
    %v2223 = vmul.f32 %v2218, %v2222
    %s2224 = scalar_lea.vmem %s0, 176
    %v2225 = vld [vmem:[%s2224] sm:$0xff]
    %2227 = vset.pattern.permute.xlu0 0
    %2228 = vperm.xlu0 %2227, %v2225
    %v2229 = vpop.permute.xlu0 %2228
    %v2231 = vmul.f32 %v2229, %v43
    %v2232 = vmul.f32 %v2229, %v44
    %v2233 = vmul.f32 %v2229, %v45
    %v2234 = vmul.f32 %v2229, %v46
    %v2235 = vadd.f32 %v2231, %v56
    %v2236 = vadd.f32 %v2232, %v57
    %v2237 = vadd.f32 %v2233, %v58
    %v2238 = vadd.f32 %v2234, %v59
    %v2239 = vpack.c.bf16 %v2223, %v2223
    %2240 = vmatpush.bf16.msra.mxu0 %v224
    %2241 = vmatpush.bf16.msra.mxu0 %v220
    %2242 = vmatpush.bf16.msra.mxu0 %v216
    %2243 = vmatpush.bf16.msra.mxu0 %v212
    %2244 = vmatpush.bf16.msra.mxu0 %v208
    %2245 = vmatpush.bf16.msra.mxu0 %v204
    %2246 = vmatpush.bf16.msra.mxu0 %v200
    %2247 = vmatpush.bf16.msra.mxu0 %v196
    %2248 = vmatmul.bf16.gmra.mxu0 %v2239
    %v2249 = vpop.f32.mrf.mxu0
    %v2250 = vadd.f32 0.0, %v2249
    %v2251 = vpop.f32.mrf.mxu0
    %2252 = vdwg.mxu0
    %2253 = vmatpush.bf16.msra.mxu0 %v225
    %2254 = vmatpush.bf16.msra.mxu0 %v221
    %2255 = vmatpush.bf16.msra.mxu0 %v217
    %2256 = vmatpush.bf16.msra.mxu0 %v213
    %2257 = vmatpush.bf16.msra.mxu0 %v209
    %2258 = vmatpush.bf16.msra.mxu0 %v205
    %2259 = vmatpush.bf16.msra.mxu0 %v201
    %2260 = vmatpush.bf16.msra.mxu0 %v197
    %2261 = vmatmul.bf16.gmra.mxu0 %v2239
    %v2262 = vpop.f32.mrf.mxu0
    %v2263 = vadd.f32 0.0, %v2262
    %v2264 = vpop.f32.mrf.mxu0
    %2265 = vdwg.mxu0
    %2266 = vmatpush.bf16.msra.mxu0 %v226
    %2267 = vmatpush.bf16.msra.mxu0 %v222
    %2268 = vmatpush.bf16.msra.mxu0 %v218
    %2269 = vmatpush.bf16.msra.mxu0 %v214
    %2270 = vmatpush.bf16.msra.mxu0 %v210
    %2271 = vmatpush.bf16.msra.mxu0 %v206
    %2272 = vmatpush.bf16.msra.mxu0 %v202
    %2273 = vmatpush.bf16.msra.mxu0 %v198
    %2274 = vmatmul.bf16.gmra.mxu0 %v2239
    %v2275 = vpop.f32.mrf.mxu0
    %v2276 = vadd.f32 0.0, %v2275
    %v2277 = vpop.f32.mrf.mxu0
    %2278 = vdwg.mxu0
    %2279 = vmatpush.bf16.msra.mxu0 %v227
    %2280 = vmatpush.bf16.msra.mxu0 %v223
    %2281 = vmatpush.bf16.msra.mxu0 %v219
    %2282 = vmatpush.bf16.msra.mxu0 %v215
    %2283 = vmatpush.bf16.msra.mxu0 %v211
    %2284 = vmatpush.bf16.msra.mxu0 %v207
    %2285 = vmatpush.bf16.msra.mxu0 %v203
    %2286 = vmatpush.bf16.msra.mxu0 %v199
    %2287 = vmatmul.bf16.gmra.mxu0 %v2239
    %v2288 = vpop.f32.mrf.mxu0
    %v2289 = vadd.f32 0.0, %v2288
    %v2290 = vpop.f32.mrf.mxu0
    %2291 = vdwg.mxu0
    %v2292 = vadd.f32 %v2235, %v2250
    %v2293 = vadd.f32 %v2236, %v2263
    %v2294 = vadd.f32 %v2237, %v2276
    %v2295 = vadd.f32 %v2238, %v2289
    %v2296 = vmul.f32 %v2292, 0.5
    %v2297 = vtanh.pop %v2296
    %v2298 = vmul.f32 %v2297, 0.5
    %v2299 = vadd.f32 %v2298, 0.5
    %v2300 = vmul.f32 %v2293, 0.5
    %v2301 = vtanh.pop %v2300
    %v2302 = vmul.f32 %v2301, 0.5
    %v2303 = vadd.f32 %v2302, 0.5
    %v2304 = vtanh.pop %v2294
    %v2305 = vmul.f32 %v2295, 0.5
    %v2306 = vtanh.pop %v2305
    %v2307 = vmul.f32 %v2306, 0.5
    %v2308 = vadd.f32 %v2307, 0.5
    %v2309 = vmul.f32 %v2303, %v2221
    %v2310 = vmul.f32 %v2299, %v2304
    %v2311 = vadd.f32 %v2309, %v2310
    %v2312 = vtanh.pop %v2311
    %v2313 = vmul.f32 %v2308, %v2312
    %s2314 = scalar_lea.vmem %s0, 184
    %v2315 = vld [vmem:[%s2314] sm:$0xff]
    %2317 = vset.pattern.permute.xlu0 0
    %2318 = vperm.xlu0 %2317, %v2315
    %v2319 = vpop.permute.xlu0 %2318
    %v2321 = vmul.f32 %v2319, %v43
    %v2322 = vmul.f32 %v2319, %v44
    %v2323 = vmul.f32 %v2319, %v45
    %v2324 = vmul.f32 %v2319, %v46
    %v2325 = vadd.f32 %v2321, %v56
    %v2326 = vadd.f32 %v2322, %v57
    %v2327 = vadd.f32 %v2323, %v58
    %v2328 = vadd.f32 %v2324, %v59
    %v2329 = vpack.c.bf16 %v2313, %v2313
    %2330 = vmatpush.bf16.msra.mxu0 %v224
    %2331 = vmatpush.bf16.msra.mxu0 %v220
    %2332 = vmatpush.bf16.msra.mxu0 %v216
    %2333 = vmatpush.bf16.msra.mxu0 %v212
    %2334 = vmatpush.bf16.msra.mxu0 %v208
    %2335 = vmatpush.bf16.msra.mxu0 %v204
    %2336 = vmatpush.bf16.msra.mxu0 %v200
    %2337 = vmatpush.bf16.msra.mxu0 %v196
    %2338 = vmatmul.bf16.gmra.mxu0 %v2329
    %v2339 = vpop.f32.mrf.mxu0
    %v2340 = vadd.f32 0.0, %v2339
    %v2341 = vpop.f32.mrf.mxu0
    %2342 = vdwg.mxu0
    %2343 = vmatpush.bf16.msra.mxu0 %v225
    %2344 = vmatpush.bf16.msra.mxu0 %v221
    %2345 = vmatpush.bf16.msra.mxu0 %v217
    %2346 = vmatpush.bf16.msra.mxu0 %v213
    %2347 = vmatpush.bf16.msra.mxu0 %v209
    %2348 = vmatpush.bf16.msra.mxu0 %v205
    %2349 = vmatpush.bf16.msra.mxu0 %v201
    %2350 = vmatpush.bf16.msra.mxu0 %v197
    %2351 = vmatmul.bf16.gmra.mxu0 %v2329
    %v2352 = vpop.f32.mrf.mxu0
    %v2353 = vadd.f32 0.0, %v2352
    %v2354 = vpop.f32.mrf.mxu0
    %2355 = vdwg.mxu0
    %2356 = vmatpush.bf16.msra.mxu0 %v226
    %2357 = vmatpush.bf16.msra.mxu0 %v222
    %2358 = vmatpush.bf16.msra.mxu0 %v218
    %2359 = vmatpush.bf16.msra.mxu0 %v214
    %2360 = vmatpush.bf16.msra.mxu0 %v210
    %2361 = vmatpush.bf16.msra.mxu0 %v206
    %2362 = vmatpush.bf16.msra.mxu0 %v202
    %2363 = vmatpush.bf16.msra.mxu0 %v198
    %2364 = vmatmul.bf16.gmra.mxu0 %v2329
    %v2365 = vpop.f32.mrf.mxu0
    %v2366 = vadd.f32 0.0, %v2365
    %v2367 = vpop.f32.mrf.mxu0
    %2368 = vdwg.mxu0
    %2369 = vmatpush.bf16.msra.mxu0 %v227
    %2370 = vmatpush.bf16.msra.mxu0 %v223
    %2371 = vmatpush.bf16.msra.mxu0 %v219
    %2372 = vmatpush.bf16.msra.mxu0 %v215
    %2373 = vmatpush.bf16.msra.mxu0 %v211
    %2374 = vmatpush.bf16.msra.mxu0 %v207
    %2375 = vmatpush.bf16.msra.mxu0 %v203
    %2376 = vmatpush.bf16.msra.mxu0 %v199
    %2377 = vmatmul.bf16.gmra.mxu0 %v2329
    %v2378 = vpop.f32.mrf.mxu0
    %v2379 = vadd.f32 0.0, %v2378
    %v2380 = vpop.f32.mrf.mxu0
    %2381 = vdwg.mxu0
    %v2382 = vadd.f32 %v2325, %v2340
    %v2383 = vadd.f32 %v2326, %v2353
    %v2384 = vadd.f32 %v2327, %v2366
    %v2385 = vadd.f32 %v2328, %v2379
    %v2386 = vmul.f32 %v2382, 0.5
    %v2387 = vtanh.pop %v2386
    %v2388 = vmul.f32 %v2387, 0.5
    %v2389 = vadd.f32 %v2388, 0.5
    %v2390 = vmul.f32 %v2383, 0.5
    %v2391 = vtanh.pop %v2390
    %v2392 = vmul.f32 %v2391, 0.5
    %v2393 = vadd.f32 %v2392, 0.5
    %v2394 = vtanh.pop %v2384
    %v2395 = vmul.f32 %v2385, 0.5
    %v2396 = vtanh.pop %v2395
    %v2397 = vmul.f32 %v2396, 0.5
    %v2398 = vadd.f32 %v2397, 0.5
    %v2399 = vmul.f32 %v2393, %v2311
    %v2400 = vmul.f32 %v2389, %v2394
    %v2401 = vadd.f32 %v2399, %v2400
    %v2402 = vtanh.pop %v2401
    %v2403 = vmul.f32 %v2398, %v2402
    %s2404 = scalar_lea.vmem %s0, 192
    %v2405 = vld [vmem:[%s2404] sm:$0xff]
    %2407 = vset.pattern.permute.xlu0 0
    %2408 = vperm.xlu0 %2407, %v2405
    %v2409 = vpop.permute.xlu0 %2408
    %v2411 = vmul.f32 %v2409, %v43
    %v2412 = vmul.f32 %v2409, %v44
    %v2413 = vmul.f32 %v2409, %v45
    %v2414 = vmul.f32 %v2409, %v46
    %v2415 = vadd.f32 %v2411, %v56
    %v2416 = vadd.f32 %v2412, %v57
    %v2417 = vadd.f32 %v2413, %v58
    %v2418 = vadd.f32 %v2414, %v59
    %v2419 = vpack.c.bf16 %v2403, %v2403
    %2420 = vmatpush.bf16.msra.mxu0 %v224
    %2421 = vmatpush.bf16.msra.mxu0 %v220
    %2422 = vmatpush.bf16.msra.mxu0 %v216
    %2423 = vmatpush.bf16.msra.mxu0 %v212
    %2424 = vmatpush.bf16.msra.mxu0 %v208
    %2425 = vmatpush.bf16.msra.mxu0 %v204
    %2426 = vmatpush.bf16.msra.mxu0 %v200
    %2427 = vmatpush.bf16.msra.mxu0 %v196
    %2428 = vmatmul.bf16.gmra.mxu0 %v2419
    %v2429 = vpop.f32.mrf.mxu0
    %v2430 = vadd.f32 0.0, %v2429
    %v2431 = vpop.f32.mrf.mxu0
    %2432 = vdwg.mxu0
    %2433 = vmatpush.bf16.msra.mxu0 %v225
    %2434 = vmatpush.bf16.msra.mxu0 %v221
    %2435 = vmatpush.bf16.msra.mxu0 %v217
    %2436 = vmatpush.bf16.msra.mxu0 %v213
    %2437 = vmatpush.bf16.msra.mxu0 %v209
    %2438 = vmatpush.bf16.msra.mxu0 %v205
    %2439 = vmatpush.bf16.msra.mxu0 %v201
    %2440 = vmatpush.bf16.msra.mxu0 %v197
    %2441 = vmatmul.bf16.gmra.mxu0 %v2419
    %v2442 = vpop.f32.mrf.mxu0
    %v2443 = vadd.f32 0.0, %v2442
    %v2444 = vpop.f32.mrf.mxu0
    %2445 = vdwg.mxu0
    %2446 = vmatpush.bf16.msra.mxu0 %v226
    %2447 = vmatpush.bf16.msra.mxu0 %v222
    %2448 = vmatpush.bf16.msra.mxu0 %v218
    %2449 = vmatpush.bf16.msra.mxu0 %v214
    %2450 = vmatpush.bf16.msra.mxu0 %v210
    %2451 = vmatpush.bf16.msra.mxu0 %v206
    %2452 = vmatpush.bf16.msra.mxu0 %v202
    %2453 = vmatpush.bf16.msra.mxu0 %v198
    %2454 = vmatmul.bf16.gmra.mxu0 %v2419
    %v2455 = vpop.f32.mrf.mxu0
    %v2456 = vadd.f32 0.0, %v2455
    %v2457 = vpop.f32.mrf.mxu0
    %2458 = vdwg.mxu0
    %2459 = vmatpush.bf16.msra.mxu0 %v227
    %2460 = vmatpush.bf16.msra.mxu0 %v223
    %2461 = vmatpush.bf16.msra.mxu0 %v219
    %2462 = vmatpush.bf16.msra.mxu0 %v215
    %2463 = vmatpush.bf16.msra.mxu0 %v211
    %2464 = vmatpush.bf16.msra.mxu0 %v207
    %2465 = vmatpush.bf16.msra.mxu0 %v203
    %2466 = vmatpush.bf16.msra.mxu0 %v199
    %2467 = vmatmul.bf16.gmra.mxu0 %v2419
    %v2468 = vpop.f32.mrf.mxu0
    %v2469 = vadd.f32 0.0, %v2468
    %v2470 = vpop.f32.mrf.mxu0
    %2471 = vdwg.mxu0
    %v2472 = vadd.f32 %v2415, %v2430
    %v2473 = vadd.f32 %v2416, %v2443
    %v2474 = vadd.f32 %v2417, %v2456
    %v2475 = vadd.f32 %v2418, %v2469
    %v2476 = vmul.f32 %v2472, 0.5
    %v2477 = vtanh.pop %v2476
    %v2478 = vmul.f32 %v2477, 0.5
    %v2479 = vadd.f32 %v2478, 0.5
    %v2480 = vmul.f32 %v2473, 0.5
    %v2481 = vtanh.pop %v2480
    %v2482 = vmul.f32 %v2481, 0.5
    %v2483 = vadd.f32 %v2482, 0.5
    %v2484 = vtanh.pop %v2474
    %v2485 = vmul.f32 %v2475, 0.5
    %v2486 = vtanh.pop %v2485
    %v2487 = vmul.f32 %v2486, 0.5
    %v2488 = vadd.f32 %v2487, 0.5
    %v2489 = vmul.f32 %v2483, %v2401
    %v2490 = vmul.f32 %v2479, %v2484
    %v2491 = vadd.f32 %v2489, %v2490
    %v2492 = vtanh.pop %v2491
    %v2493 = vmul.f32 %v2488, %v2492
    %s2494 = scalar_lea.vmem %s0, 200
    %v2495 = vld [vmem:[%s2494] sm:$0xff]
    %2497 = vset.pattern.permute.xlu0 0
    %2498 = vperm.xlu0 %2497, %v2495
    %v2499 = vpop.permute.xlu0 %2498
    %v2501 = vmul.f32 %v2499, %v43
    %v2502 = vmul.f32 %v2499, %v44
    %v2503 = vmul.f32 %v2499, %v45
    %v2504 = vmul.f32 %v2499, %v46
    %v2505 = vadd.f32 %v2501, %v56
    %v2506 = vadd.f32 %v2502, %v57
    %v2507 = vadd.f32 %v2503, %v58
    %v2508 = vadd.f32 %v2504, %v59
    %v2509 = vpack.c.bf16 %v2493, %v2493
    %2510 = vmatpush.bf16.msra.mxu0 %v224
    %2511 = vmatpush.bf16.msra.mxu0 %v220
    %2512 = vmatpush.bf16.msra.mxu0 %v216
    %2513 = vmatpush.bf16.msra.mxu0 %v212
    %2514 = vmatpush.bf16.msra.mxu0 %v208
    %2515 = vmatpush.bf16.msra.mxu0 %v204
    %2516 = vmatpush.bf16.msra.mxu0 %v200
    %2517 = vmatpush.bf16.msra.mxu0 %v196
    %2518 = vmatmul.bf16.gmra.mxu0 %v2509
    %v2519 = vpop.f32.mrf.mxu0
    %v2520 = vadd.f32 0.0, %v2519
    %v2521 = vpop.f32.mrf.mxu0
    %2522 = vdwg.mxu0
    %2523 = vmatpush.bf16.msra.mxu0 %v225
    %2524 = vmatpush.bf16.msra.mxu0 %v221
    %2525 = vmatpush.bf16.msra.mxu0 %v217
    %2526 = vmatpush.bf16.msra.mxu0 %v213
    %2527 = vmatpush.bf16.msra.mxu0 %v209
    %2528 = vmatpush.bf16.msra.mxu0 %v205
    %2529 = vmatpush.bf16.msra.mxu0 %v201
    %2530 = vmatpush.bf16.msra.mxu0 %v197
    %2531 = vmatmul.bf16.gmra.mxu0 %v2509
    %v2532 = vpop.f32.mrf.mxu0
    %v2533 = vadd.f32 0.0, %v2532
    %v2534 = vpop.f32.mrf.mxu0
    %2535 = vdwg.mxu0
    %2536 = vmatpush.bf16.msra.mxu0 %v226
    %2537 = vmatpush.bf16.msra.mxu0 %v222
    %2538 = vmatpush.bf16.msra.mxu0 %v218
    %2539 = vmatpush.bf16.msra.mxu0 %v214
    %2540 = vmatpush.bf16.msra.mxu0 %v210
    %2541 = vmatpush.bf16.msra.mxu0 %v206
    %2542 = vmatpush.bf16.msra.mxu0 %v202
    %2543 = vmatpush.bf16.msra.mxu0 %v198
    %2544 = vmatmul.bf16.gmra.mxu0 %v2509
    %v2545 = vpop.f32.mrf.mxu0
    %v2546 = vadd.f32 0.0, %v2545
    %v2547 = vpop.f32.mrf.mxu0
    %2548 = vdwg.mxu0
    %2549 = vmatpush.bf16.msra.mxu0 %v227
    %2550 = vmatpush.bf16.msra.mxu0 %v223
    %2551 = vmatpush.bf16.msra.mxu0 %v219
    %2552 = vmatpush.bf16.msra.mxu0 %v215
    %2553 = vmatpush.bf16.msra.mxu0 %v211
    %2554 = vmatpush.bf16.msra.mxu0 %v207
    %2555 = vmatpush.bf16.msra.mxu0 %v203
    %2556 = vmatpush.bf16.msra.mxu0 %v199
    %2557 = vmatmul.bf16.gmra.mxu0 %v2509
    %v2558 = vpop.f32.mrf.mxu0
    %v2559 = vadd.f32 0.0, %v2558
    %v2560 = vpop.f32.mrf.mxu0
    %2561 = vdwg.mxu0
    %v2562 = vadd.f32 %v2505, %v2520
    %v2563 = vadd.f32 %v2506, %v2533
    %v2564 = vadd.f32 %v2507, %v2546
    %v2565 = vadd.f32 %v2508, %v2559
    %v2566 = vmul.f32 %v2562, 0.5
    %v2567 = vtanh.pop %v2566
    %v2568 = vmul.f32 %v2567, 0.5
    %v2569 = vadd.f32 %v2568, 0.5
    %v2570 = vmul.f32 %v2563, 0.5
    %v2571 = vtanh.pop %v2570
    %v2572 = vmul.f32 %v2571, 0.5
    %v2573 = vadd.f32 %v2572, 0.5
    %v2574 = vtanh.pop %v2564
    %v2575 = vmul.f32 %v2565, 0.5
    %v2576 = vtanh.pop %v2575
    %v2577 = vmul.f32 %v2576, 0.5
    %v2578 = vadd.f32 %v2577, 0.5
    %v2579 = vmul.f32 %v2573, %v2491
    %v2580 = vmul.f32 %v2569, %v2574
    %v2581 = vadd.f32 %v2579, %v2580
    %v2582 = vtanh.pop %v2581
    %v2583 = vmul.f32 %v2578, %v2582
    %s2584 = scalar_lea.vmem %s0, 208
    %v2585 = vld [vmem:[%s2584] sm:$0xff]
    %2587 = vset.pattern.permute.xlu0 0
    %2588 = vperm.xlu0 %2587, %v2585
    %v2589 = vpop.permute.xlu0 %2588
    %v2591 = vmul.f32 %v2589, %v43
    %v2592 = vmul.f32 %v2589, %v44
    %v2593 = vmul.f32 %v2589, %v45
    %v2594 = vmul.f32 %v2589, %v46
    %v2595 = vadd.f32 %v2591, %v56
    %v2596 = vadd.f32 %v2592, %v57
    %v2597 = vadd.f32 %v2593, %v58
    %v2598 = vadd.f32 %v2594, %v59
    %v2599 = vpack.c.bf16 %v2583, %v2583
    %2600 = vmatpush.bf16.msra.mxu0 %v224
    %2601 = vmatpush.bf16.msra.mxu0 %v220
    %2602 = vmatpush.bf16.msra.mxu0 %v216
    %2603 = vmatpush.bf16.msra.mxu0 %v212
    %2604 = vmatpush.bf16.msra.mxu0 %v208
    %2605 = vmatpush.bf16.msra.mxu0 %v204
    %2606 = vmatpush.bf16.msra.mxu0 %v200
    %2607 = vmatpush.bf16.msra.mxu0 %v196
    %2608 = vmatmul.bf16.gmra.mxu0 %v2599
    %v2609 = vpop.f32.mrf.mxu0
    %v2610 = vadd.f32 0.0, %v2609
    %v2611 = vpop.f32.mrf.mxu0
    %2612 = vdwg.mxu0
    %2613 = vmatpush.bf16.msra.mxu0 %v225
    %2614 = vmatpush.bf16.msra.mxu0 %v221
    %2615 = vmatpush.bf16.msra.mxu0 %v217
    %2616 = vmatpush.bf16.msra.mxu0 %v213
    %2617 = vmatpush.bf16.msra.mxu0 %v209
    %2618 = vmatpush.bf16.msra.mxu0 %v205
    %2619 = vmatpush.bf16.msra.mxu0 %v201
    %2620 = vmatpush.bf16.msra.mxu0 %v197
    %2621 = vmatmul.bf16.gmra.mxu0 %v2599
    %v2622 = vpop.f32.mrf.mxu0
    %v2623 = vadd.f32 0.0, %v2622
    %v2624 = vpop.f32.mrf.mxu0
    %2625 = vdwg.mxu0
    %2626 = vmatpush.bf16.msra.mxu0 %v226
    %2627 = vmatpush.bf16.msra.mxu0 %v222
    %2628 = vmatpush.bf16.msra.mxu0 %v218
    %2629 = vmatpush.bf16.msra.mxu0 %v214
    %2630 = vmatpush.bf16.msra.mxu0 %v210
    %2631 = vmatpush.bf16.msra.mxu0 %v206
    %2632 = vmatpush.bf16.msra.mxu0 %v202
    %2633 = vmatpush.bf16.msra.mxu0 %v198
    %2634 = vmatmul.bf16.gmra.mxu0 %v2599
    %v2635 = vpop.f32.mrf.mxu0
    %v2636 = vadd.f32 0.0, %v2635
    %v2637 = vpop.f32.mrf.mxu0
    %2638 = vdwg.mxu0
    %2639 = vmatpush.bf16.msra.mxu0 %v227
    %2640 = vmatpush.bf16.msra.mxu0 %v223
    %2641 = vmatpush.bf16.msra.mxu0 %v219
    %2642 = vmatpush.bf16.msra.mxu0 %v215
    %2643 = vmatpush.bf16.msra.mxu0 %v211
    %2644 = vmatpush.bf16.msra.mxu0 %v207
    %2645 = vmatpush.bf16.msra.mxu0 %v203
    %2646 = vmatpush.bf16.msra.mxu0 %v199
    %2647 = vmatmul.bf16.gmra.mxu0 %v2599
    %v2648 = vpop.f32.mrf.mxu0
    %v2649 = vadd.f32 0.0, %v2648
    %v2650 = vpop.f32.mrf.mxu0
    %2651 = vdwg.mxu0
    %v2652 = vadd.f32 %v2595, %v2610
    %v2653 = vadd.f32 %v2596, %v2623
    %v2654 = vadd.f32 %v2597, %v2636
    %v2655 = vadd.f32 %v2598, %v2649
    %v2656 = vmul.f32 %v2652, 0.5
    %v2657 = vtanh.pop %v2656
    %v2658 = vmul.f32 %v2657, 0.5
    %v2659 = vadd.f32 %v2658, 0.5
    %v2660 = vmul.f32 %v2653, 0.5
    %v2661 = vtanh.pop %v2660
    %v2662 = vmul.f32 %v2661, 0.5
    %v2663 = vadd.f32 %v2662, 0.5
    %v2664 = vtanh.pop %v2654
    %v2665 = vmul.f32 %v2655, 0.5
    %v2666 = vtanh.pop %v2665
    %v2667 = vmul.f32 %v2666, 0.5
    %v2668 = vadd.f32 %v2667, 0.5
    %v2669 = vmul.f32 %v2663, %v2581
    %v2670 = vmul.f32 %v2659, %v2664
    %v2671 = vadd.f32 %v2669, %v2670
    %v2672 = vtanh.pop %v2671
    %v2673 = vmul.f32 %v2668, %v2672
    %s2674 = scalar_lea.vmem %s0, 216
    %v2675 = vld [vmem:[%s2674] sm:$0xff]
    %2677 = vset.pattern.permute.xlu0 0
    %2678 = vperm.xlu0 %2677, %v2675
    %v2679 = vpop.permute.xlu0 %2678
    %v2681 = vmul.f32 %v2679, %v43
    %v2682 = vmul.f32 %v2679, %v44
    %v2683 = vmul.f32 %v2679, %v45
    %v2684 = vmul.f32 %v2679, %v46
    %v2685 = vadd.f32 %v2681, %v56
    %v2686 = vadd.f32 %v2682, %v57
    %v2687 = vadd.f32 %v2683, %v58
    %v2688 = vadd.f32 %v2684, %v59
    %v2689 = vpack.c.bf16 %v2673, %v2673
    %2690 = vmatpush.bf16.msra.mxu0 %v224
    %2691 = vmatpush.bf16.msra.mxu0 %v220
    %2692 = vmatpush.bf16.msra.mxu0 %v216
    %2693 = vmatpush.bf16.msra.mxu0 %v212
    %2694 = vmatpush.bf16.msra.mxu0 %v208
    %2695 = vmatpush.bf16.msra.mxu0 %v204
    %2696 = vmatpush.bf16.msra.mxu0 %v200
    %2697 = vmatpush.bf16.msra.mxu0 %v196
    %2698 = vmatmul.bf16.gmra.mxu0 %v2689
    %v2699 = vpop.f32.mrf.mxu0
    %v2700 = vadd.f32 0.0, %v2699
    %v2701 = vpop.f32.mrf.mxu0
    %2702 = vdwg.mxu0
    %2703 = vmatpush.bf16.msra.mxu0 %v225
    %2704 = vmatpush.bf16.msra.mxu0 %v221
    %2705 = vmatpush.bf16.msra.mxu0 %v217
    %2706 = vmatpush.bf16.msra.mxu0 %v213
    %2707 = vmatpush.bf16.msra.mxu0 %v209
    %2708 = vmatpush.bf16.msra.mxu0 %v205
    %2709 = vmatpush.bf16.msra.mxu0 %v201
    %2710 = vmatpush.bf16.msra.mxu0 %v197
    %2711 = vmatmul.bf16.gmra.mxu0 %v2689
    %v2712 = vpop.f32.mrf.mxu0
    %v2713 = vadd.f32 0.0, %v2712
    %v2714 = vpop.f32.mrf.mxu0
    %2715 = vdwg.mxu0
    %2716 = vmatpush.bf16.msra.mxu0 %v226
    %2717 = vmatpush.bf16.msra.mxu0 %v222
    %2718 = vmatpush.bf16.msra.mxu0 %v218
    %2719 = vmatpush.bf16.msra.mxu0 %v214
    %2720 = vmatpush.bf16.msra.mxu0 %v210
    %2721 = vmatpush.bf16.msra.mxu0 %v206
    %2722 = vmatpush.bf16.msra.mxu0 %v202
    %2723 = vmatpush.bf16.msra.mxu0 %v198
    %2724 = vmatmul.bf16.gmra.mxu0 %v2689
    %v2725 = vpop.f32.mrf.mxu0
    %v2726 = vadd.f32 0.0, %v2725
    %v2727 = vpop.f32.mrf.mxu0
    %2728 = vdwg.mxu0
    %2729 = vmatpush.bf16.msra.mxu0 %v227
    %2730 = vmatpush.bf16.msra.mxu0 %v223
    %2731 = vmatpush.bf16.msra.mxu0 %v219
    %2732 = vmatpush.bf16.msra.mxu0 %v215
    %2733 = vmatpush.bf16.msra.mxu0 %v211
    %2734 = vmatpush.bf16.msra.mxu0 %v207
    %2735 = vmatpush.bf16.msra.mxu0 %v203
    %2736 = vmatpush.bf16.msra.mxu0 %v199
    %2737 = vmatmul.bf16.gmra.mxu0 %v2689
    %v2738 = vpop.f32.mrf.mxu0
    %v2739 = vadd.f32 0.0, %v2738
    %v2740 = vpop.f32.mrf.mxu0
    %2741 = vdwg.mxu0
    %v2742 = vadd.f32 %v2685, %v2700
    %v2743 = vadd.f32 %v2686, %v2713
    %v2744 = vadd.f32 %v2687, %v2726
    %v2745 = vadd.f32 %v2688, %v2739
    %v2746 = vmul.f32 %v2742, 0.5
    %v2747 = vtanh.pop %v2746
    %v2748 = vmul.f32 %v2747, 0.5
    %v2749 = vadd.f32 %v2748, 0.5
    %v2750 = vmul.f32 %v2743, 0.5
    %v2751 = vtanh.pop %v2750
    %v2752 = vmul.f32 %v2751, 0.5
    %v2753 = vadd.f32 %v2752, 0.5
    %v2754 = vtanh.pop %v2744
    %v2755 = vmul.f32 %v2745, 0.5
    %v2756 = vtanh.pop %v2755
    %v2757 = vmul.f32 %v2756, 0.5
    %v2758 = vadd.f32 %v2757, 0.5
    %v2759 = vmul.f32 %v2753, %v2671
    %v2760 = vmul.f32 %v2749, %v2754
    %v2761 = vadd.f32 %v2759, %v2760
    %v2762 = vtanh.pop %v2761
    %v2763 = vmul.f32 %v2758, %v2762
    %s2764 = scalar_lea.vmem %s0, 224
    %v2765 = vld [vmem:[%s2764] sm:$0xff]
    %2767 = vset.pattern.permute.xlu0 0
    %2768 = vperm.xlu0 %2767, %v2765
    %v2769 = vpop.permute.xlu0 %2768
    %v2771 = vmul.f32 %v2769, %v43
    %v2772 = vmul.f32 %v2769, %v44
    %v2773 = vmul.f32 %v2769, %v45
    %v2774 = vmul.f32 %v2769, %v46
    %v2775 = vadd.f32 %v2771, %v56
    %v2776 = vadd.f32 %v2772, %v57
    %v2777 = vadd.f32 %v2773, %v58
    %v2778 = vadd.f32 %v2774, %v59
    %v2779 = vpack.c.bf16 %v2763, %v2763
    %2780 = vmatpush.bf16.msra.mxu0 %v224
    %2781 = vmatpush.bf16.msra.mxu0 %v220
    %2782 = vmatpush.bf16.msra.mxu0 %v216
    %2783 = vmatpush.bf16.msra.mxu0 %v212
    %2784 = vmatpush.bf16.msra.mxu0 %v208
    %2785 = vmatpush.bf16.msra.mxu0 %v204
    %2786 = vmatpush.bf16.msra.mxu0 %v200
    %2787 = vmatpush.bf16.msra.mxu0 %v196
    %2788 = vmatmul.bf16.gmra.mxu0 %v2779
    %v2789 = vpop.f32.mrf.mxu0
    %v2790 = vadd.f32 0.0, %v2789
    %v2791 = vpop.f32.mrf.mxu0
    %2792 = vdwg.mxu0
    %2793 = vmatpush.bf16.msra.mxu0 %v225
    %2794 = vmatpush.bf16.msra.mxu0 %v221
    %2795 = vmatpush.bf16.msra.mxu0 %v217
    %2796 = vmatpush.bf16.msra.mxu0 %v213
    %2797 = vmatpush.bf16.msra.mxu0 %v209
    %2798 = vmatpush.bf16.msra.mxu0 %v205
    %2799 = vmatpush.bf16.msra.mxu0 %v201
    %2800 = vmatpush.bf16.msra.mxu0 %v197
    %2801 = vmatmul.bf16.gmra.mxu0 %v2779
    %v2802 = vpop.f32.mrf.mxu0
    %v2803 = vadd.f32 0.0, %v2802
    %v2804 = vpop.f32.mrf.mxu0
    %2805 = vdwg.mxu0
    %2806 = vmatpush.bf16.msra.mxu0 %v226
    %2807 = vmatpush.bf16.msra.mxu0 %v222
    %2808 = vmatpush.bf16.msra.mxu0 %v218
    %2809 = vmatpush.bf16.msra.mxu0 %v214
    %2810 = vmatpush.bf16.msra.mxu0 %v210
    %2811 = vmatpush.bf16.msra.mxu0 %v206
    %2812 = vmatpush.bf16.msra.mxu0 %v202
    %2813 = vmatpush.bf16.msra.mxu0 %v198
    %2814 = vmatmul.bf16.gmra.mxu0 %v2779
    %v2815 = vpop.f32.mrf.mxu0
    %v2816 = vadd.f32 0.0, %v2815
    %v2817 = vpop.f32.mrf.mxu0
    %2818 = vdwg.mxu0
    %2819 = vmatpush.bf16.msra.mxu0 %v227
    %2820 = vmatpush.bf16.msra.mxu0 %v223
    %2821 = vmatpush.bf16.msra.mxu0 %v219
    %2822 = vmatpush.bf16.msra.mxu0 %v215
    %2823 = vmatpush.bf16.msra.mxu0 %v211
    %2824 = vmatpush.bf16.msra.mxu0 %v207
    %2825 = vmatpush.bf16.msra.mxu0 %v203
    %2826 = vmatpush.bf16.msra.mxu0 %v199
    %2827 = vmatmul.bf16.gmra.mxu0 %v2779
    %v2828 = vpop.f32.mrf.mxu0
    %v2829 = vadd.f32 0.0, %v2828
    %v2830 = vpop.f32.mrf.mxu0
    %2831 = vdwg.mxu0
    %v2832 = vadd.f32 %v2775, %v2790
    %v2833 = vadd.f32 %v2776, %v2803
    %v2834 = vadd.f32 %v2777, %v2816
    %v2835 = vadd.f32 %v2778, %v2829
    %v2836 = vmul.f32 %v2832, 0.5
    %v2837 = vtanh.pop %v2836
    %v2838 = vmul.f32 %v2837, 0.5
    %v2839 = vadd.f32 %v2838, 0.5
    %v2840 = vmul.f32 %v2833, 0.5
    %v2841 = vtanh.pop %v2840
    %v2842 = vmul.f32 %v2841, 0.5
    %v2843 = vadd.f32 %v2842, 0.5
    %v2844 = vtanh.pop %v2834
    %v2845 = vmul.f32 %v2835, 0.5
    %v2846 = vtanh.pop %v2845
    %v2847 = vmul.f32 %v2846, 0.5
    %v2848 = vadd.f32 %v2847, 0.5
    %v2849 = vmul.f32 %v2843, %v2761
    %v2850 = vmul.f32 %v2839, %v2844
    %v2851 = vadd.f32 %v2849, %v2850
    %v2852 = vtanh.pop %v2851
    %v2853 = vmul.f32 %v2848, %v2852
    %s2854 = scalar_lea.vmem %s0, 232
    %v2855 = vld [vmem:[%s2854] sm:$0xff]
    %2857 = vset.pattern.permute.xlu0 0
    %2858 = vperm.xlu0 %2857, %v2855
    %v2859 = vpop.permute.xlu0 %2858
    %v2861 = vmul.f32 %v2859, %v43
    %v2862 = vmul.f32 %v2859, %v44
    %v2863 = vmul.f32 %v2859, %v45
    %v2864 = vmul.f32 %v2859, %v46
    %v2865 = vadd.f32 %v2861, %v56
    %v2866 = vadd.f32 %v2862, %v57
    %v2867 = vadd.f32 %v2863, %v58
    %v2868 = vadd.f32 %v2864, %v59
    %v2869 = vpack.c.bf16 %v2853, %v2853
    %2870 = vmatpush.bf16.msra.mxu0 %v224
    %2871 = vmatpush.bf16.msra.mxu0 %v220
    %2872 = vmatpush.bf16.msra.mxu0 %v216
    %2873 = vmatpush.bf16.msra.mxu0 %v212
    %2874 = vmatpush.bf16.msra.mxu0 %v208
    %2875 = vmatpush.bf16.msra.mxu0 %v204
    %2876 = vmatpush.bf16.msra.mxu0 %v200
    %2877 = vmatpush.bf16.msra.mxu0 %v196
    %2878 = vmatmul.bf16.gmra.mxu0 %v2869
    %v2879 = vpop.f32.mrf.mxu0
    %v2880 = vadd.f32 0.0, %v2879
    %v2881 = vpop.f32.mrf.mxu0
    %2882 = vdwg.mxu0
    %2883 = vmatpush.bf16.msra.mxu0 %v225
    %2884 = vmatpush.bf16.msra.mxu0 %v221
    %2885 = vmatpush.bf16.msra.mxu0 %v217
    %2886 = vmatpush.bf16.msra.mxu0 %v213
    %2887 = vmatpush.bf16.msra.mxu0 %v209
    %2888 = vmatpush.bf16.msra.mxu0 %v205
    %2889 = vmatpush.bf16.msra.mxu0 %v201
    %2890 = vmatpush.bf16.msra.mxu0 %v197
    %2891 = vmatmul.bf16.gmra.mxu0 %v2869
    %v2892 = vpop.f32.mrf.mxu0
    %v2893 = vadd.f32 0.0, %v2892
    %v2894 = vpop.f32.mrf.mxu0
    %2895 = vdwg.mxu0
    %2896 = vmatpush.bf16.msra.mxu0 %v226
    %2897 = vmatpush.bf16.msra.mxu0 %v222
    %2898 = vmatpush.bf16.msra.mxu0 %v218
    %2899 = vmatpush.bf16.msra.mxu0 %v214
    %2900 = vmatpush.bf16.msra.mxu0 %v210
    %2901 = vmatpush.bf16.msra.mxu0 %v206
    %2902 = vmatpush.bf16.msra.mxu0 %v202
    %2903 = vmatpush.bf16.msra.mxu0 %v198
    %2904 = vmatmul.bf16.gmra.mxu0 %v2869
    %v2905 = vpop.f32.mrf.mxu0
    %v2906 = vadd.f32 0.0, %v2905
    %v2907 = vpop.f32.mrf.mxu0
    %2908 = vdwg.mxu0
    %2909 = vmatpush.bf16.msra.mxu0 %v227
    %2910 = vmatpush.bf16.msra.mxu0 %v223
    %2911 = vmatpush.bf16.msra.mxu0 %v219
    %2912 = vmatpush.bf16.msra.mxu0 %v215
    %2913 = vmatpush.bf16.msra.mxu0 %v211
    %2914 = vmatpush.bf16.msra.mxu0 %v207
    %2915 = vmatpush.bf16.msra.mxu0 %v203
    %2916 = vmatpush.bf16.msra.mxu0 %v199
    %2917 = vmatmul.bf16.gmra.mxu0 %v2869
    %v2918 = vpop.f32.mrf.mxu0
    %v2919 = vadd.f32 0.0, %v2918
    %v2920 = vpop.f32.mrf.mxu0
    %2921 = vdwg.mxu0
    %v2922 = vadd.f32 %v2865, %v2880
    %v2923 = vadd.f32 %v2866, %v2893
    %v2924 = vadd.f32 %v2867, %v2906
    %v2925 = vadd.f32 %v2868, %v2919
    %v2926 = vmul.f32 %v2922, 0.5
    %v2927 = vtanh.pop %v2926
    %v2928 = vmul.f32 %v2927, 0.5
    %v2929 = vadd.f32 %v2928, 0.5
    %v2930 = vmul.f32 %v2923, 0.5
    %v2931 = vtanh.pop %v2930
    %v2932 = vmul.f32 %v2931, 0.5
    %v2933 = vadd.f32 %v2932, 0.5
    %v2934 = vtanh.pop %v2924
    %v2935 = vmul.f32 %v2925, 0.5
    %v2936 = vtanh.pop %v2935
    %v2937 = vmul.f32 %v2936, 0.5
    %v2938 = vadd.f32 %v2937, 0.5
    %v2939 = vmul.f32 %v2933, %v2851
    %v2940 = vmul.f32 %v2929, %v2934
    %v2941 = vadd.f32 %v2939, %v2940
    %v2942 = vtanh.pop %v2941
    %v2943 = vmul.f32 %v2938, %v2942
    %v2944 = vpack.c.bf16 %v2943, %v2943
    %v2945 = vld [vmem:[%s4] sm:$0xff]
    %v2946 = vld [vmem:[%s4 + $0x8] sm:$0xff]
    %v2947 = vld [vmem:[%s4 + $0x10] sm:$0xff]
    %v2948 = vld [vmem:[%s4 + $0x18] sm:$0xff]
    %v2949 = vld [vmem:[%s4 + $0x20] sm:$0xff]
    %v2950 = vld [vmem:[%s4 + $0x28] sm:$0xff]
    %v2951 = vld [vmem:[%s4 + $0x30] sm:$0xff]
    %v2952 = vld [vmem:[%s4 + $0x38] sm:$0xff]
    %v2953 = vld [vmem:[%s4 + $0x40] sm:$0xff]
    %v2954 = vld [vmem:[%s4 + $0x48] sm:$0xff]
    %v2955 = vld [vmem:[%s4 + $0x50] sm:$0xff]
    %v2956 = vld [vmem:[%s4 + $0x58] sm:$0xff]
    %v2957 = vld [vmem:[%s4 + $0x60] sm:$0xff]
    %v2958 = vld [vmem:[%s4 + $0x68] sm:$0xff]
    %v2959 = vld [vmem:[%s4 + $0x70] sm:$0xff]
    %v2960 = vld [vmem:[%s4 + $0x78] sm:$0xff]
    %v2961 = vld [vmem:[%s4 + $0x80] sm:$0xff]
    %v2962 = vld [vmem:[%s4 + $0x88] sm:$0xff]
    %v2963 = vld [vmem:[%s4 + $0x90] sm:$0xff]
    %v2964 = vld [vmem:[%s4 + $0x98] sm:$0xff]
    %v2965 = vld [vmem:[%s4 + $0xa0] sm:$0xff]
    %v2966 = vld [vmem:[%s4 + $0xa8] sm:$0xff]
    %v2967 = vld [vmem:[%s4 + $0xb0] sm:$0xff]
    %v2968 = vld [vmem:[%s4 + $0xb8] sm:$0xff]
    %v2969 = vld [vmem:[%s4 + $0xc0] sm:$0xff]
    %v2970 = vld [vmem:[%s4 + $0xc8] sm:$0xff]
    %v2971 = vld [vmem:[%s4 + $0xd0] sm:$0xff]
    %v2972 = vld [vmem:[%s4 + $0xd8] sm:$0xff]
    %v2973 = vld [vmem:[%s4 + $0xe0] sm:$0xff]
    %v2974 = vld [vmem:[%s4 + $0xe8] sm:$0xff]
    %v2975 = vld [vmem:[%s4 + $0xf0] sm:$0xff]
    %v2976 = vld [vmem:[%s4 + $0xf8] sm:$0xff]
    %v2977 = vld [vmem:[%s6] sm:$0xf]
    %v2979 = vperm.slane %v2977, 0
    %v2980 = vperm.slane %v2977, 1
    %v2981 = vperm.slane %v2977, 2
    %v2982 = vperm.slane %v2977, 3
    %v3019 = vunpack.c.l.b16 %v2945
    %v3020 = vunpack.c.h.b16 %v2945
    %v3021 = vunpack.c.l.b16 %v2946
    %v3022 = vunpack.c.h.b16 %v2946
    %v3023 = vunpack.c.l.b16 %v2947
    %v3024 = vunpack.c.h.b16 %v2947
    %v3025 = vunpack.c.l.b16 %v2948
    %v3026 = vunpack.c.h.b16 %v2948
    %v3027 = vunpack.c.l.b16 %v2949
    %v3028 = vunpack.c.h.b16 %v2949
    %v3029 = vunpack.c.l.b16 %v2950
    %v3030 = vunpack.c.h.b16 %v2950
    %v3031 = vunpack.c.l.b16 %v2951
    %v3032 = vunpack.c.h.b16 %v2951
    %v3033 = vunpack.c.l.b16 %v2952
    %v3034 = vunpack.c.h.b16 %v2952
    %v3035 = vunpack.c.l.b16 %v2953
    %v3036 = vunpack.c.h.b16 %v2953
    %v3037 = vunpack.c.l.b16 %v2954
    %v3038 = vunpack.c.h.b16 %v2954
    %v3039 = vunpack.c.l.b16 %v2955
    %v3040 = vunpack.c.h.b16 %v2955
    %v3041 = vunpack.c.l.b16 %v2956
    %v3042 = vunpack.c.h.b16 %v2956
    %v3043 = vunpack.c.l.b16 %v2957
    %v3044 = vunpack.c.h.b16 %v2957
    %v3045 = vunpack.c.l.b16 %v2958
    %v3046 = vunpack.c.h.b16 %v2958
    %v3047 = vunpack.c.l.b16 %v2959
    %v3048 = vunpack.c.h.b16 %v2959
    %v3049 = vunpack.c.l.b16 %v2960
    %v3050 = vunpack.c.h.b16 %v2960
    %v3051 = vunpack.c.l.b16 %v2961
    %v3052 = vunpack.c.h.b16 %v2961
    %v3053 = vunpack.c.l.b16 %v2962
    %v3054 = vunpack.c.h.b16 %v2962
    %v3055 = vunpack.c.l.b16 %v2963
    %v3056 = vunpack.c.h.b16 %v2963
    %v3057 = vunpack.c.l.b16 %v2964
    %v3058 = vunpack.c.h.b16 %v2964
    %v3059 = vunpack.c.l.b16 %v2965
    %v3060 = vunpack.c.h.b16 %v2965
    %v3061 = vunpack.c.l.b16 %v2966
    %v3062 = vunpack.c.h.b16 %v2966
    %v3063 = vunpack.c.l.b16 %v2967
    %v3064 = vunpack.c.h.b16 %v2967
    %v3065 = vunpack.c.l.b16 %v2968
    %v3066 = vunpack.c.h.b16 %v2968
    %v3067 = vunpack.c.l.b16 %v2969
    %v3068 = vunpack.c.h.b16 %v2969
    %v3069 = vunpack.c.l.b16 %v2970
    %v3070 = vunpack.c.h.b16 %v2970
    %v3071 = vunpack.c.l.b16 %v2971
    %v3072 = vunpack.c.h.b16 %v2971
    %v3073 = vunpack.c.l.b16 %v2972
    %v3074 = vunpack.c.h.b16 %v2972
    %v3075 = vunpack.c.l.b16 %v2973
    %v3076 = vunpack.c.h.b16 %v2973
    %v3077 = vunpack.c.l.b16 %v2974
    %v3078 = vunpack.c.h.b16 %v2974
    %v3079 = vunpack.c.l.b16 %v2975
    %v3080 = vunpack.c.h.b16 %v2975
    %v3081 = vunpack.c.l.b16 %v2976
    %v3082 = vunpack.c.h.b16 %v2976
    %v3083 = vpack.c.b16 %v3023, %v3019
    %v3084 = vpack.c.b16 %v3024, %v3020
    %v3085 = vpack.c.b16 %v3025, %v3021
    %v3086 = vpack.c.b16 %v3026, %v3022
    %v3087 = vpack.c.b16 %v3031, %v3027
    %v3088 = vpack.c.b16 %v3032, %v3028
    %v3089 = vpack.c.b16 %v3033, %v3029
    %v3090 = vpack.c.b16 %v3034, %v3030
    %v3091 = vpack.c.b16 %v3039, %v3035
    %v3092 = vpack.c.b16 %v3040, %v3036
    %v3093 = vpack.c.b16 %v3041, %v3037
    %v3094 = vpack.c.b16 %v3042, %v3038
    %v3095 = vpack.c.b16 %v3047, %v3043
    %v3096 = vpack.c.b16 %v3048, %v3044
    %v3097 = vpack.c.b16 %v3049, %v3045
    %v3098 = vpack.c.b16 %v3050, %v3046
    %v3099 = vpack.c.b16 %v3055, %v3051
    %v3100 = vpack.c.b16 %v3056, %v3052
    %v3101 = vpack.c.b16 %v3057, %v3053
    %v3102 = vpack.c.b16 %v3058, %v3054
    %v3103 = vpack.c.b16 %v3063, %v3059
    %v3104 = vpack.c.b16 %v3064, %v3060
    %v3105 = vpack.c.b16 %v3065, %v3061
    %v3106 = vpack.c.b16 %v3066, %v3062
    %v3107 = vpack.c.b16 %v3071, %v3067
    %v3108 = vpack.c.b16 %v3072, %v3068
    %v3109 = vpack.c.b16 %v3073, %v3069
    %v3110 = vpack.c.b16 %v3074, %v3070
    %v3111 = vpack.c.b16 %v3079, %v3075
    %v3112 = vpack.c.b16 %v3080, %v3076
    %v3113 = vpack.c.b16 %v3081, %v3077
    %v3114 = vpack.c.b16 %v3082, %v3078
    %3147 = vmatpush.bf16.msra.mxu0 %v3111
    %3148 = vmatpush.bf16.msra.mxu0 %v3107
    %3149 = vmatpush.bf16.msra.mxu0 %v3103
    %3150 = vmatpush.bf16.msra.mxu0 %v3099
    %3151 = vmatpush.bf16.msra.mxu0 %v3095
    %3152 = vmatpush.bf16.msra.mxu0 %v3091
    %3153 = vmatpush.bf16.msra.mxu0 %v3087
    %3154 = vmatpush.bf16.msra.mxu0 %v3083
    %3155 = vmatmul.bf16.gmra.mxu0 %v2944
    %v3156 = vpop.f32.mrf.mxu0
    %v3157 = vadd.f32 %v2979, %v3156
    %v3158 = vpop.f32.mrf.mxu0
    %3159 = vdwg.mxu0
    %3160 = vmatpush.bf16.msra.mxu0 %v3112
    %3161 = vmatpush.bf16.msra.mxu0 %v3108
    %3162 = vmatpush.bf16.msra.mxu0 %v3104
    %3163 = vmatpush.bf16.msra.mxu0 %v3100
    %3164 = vmatpush.bf16.msra.mxu0 %v3096
    %3165 = vmatpush.bf16.msra.mxu0 %v3092
    %3166 = vmatpush.bf16.msra.mxu0 %v3088
    %3167 = vmatpush.bf16.msra.mxu0 %v3084
    %3168 = vmatmul.bf16.gmra.mxu0 %v2944
    %v3169 = vpop.f32.mrf.mxu0
    %v3170 = vadd.f32 %v2980, %v3169
    %v3171 = vpop.f32.mrf.mxu0
    %3172 = vdwg.mxu0
    %3173 = vmatpush.bf16.msra.mxu0 %v3113
    %3174 = vmatpush.bf16.msra.mxu0 %v3109
    %3175 = vmatpush.bf16.msra.mxu0 %v3105
    %3176 = vmatpush.bf16.msra.mxu0 %v3101
    %3177 = vmatpush.bf16.msra.mxu0 %v3097
    %3178 = vmatpush.bf16.msra.mxu0 %v3093
    %3179 = vmatpush.bf16.msra.mxu0 %v3089
    %3180 = vmatpush.bf16.msra.mxu0 %v3085
    %3181 = vmatmul.bf16.gmra.mxu0 %v2944
    %v3182 = vpop.f32.mrf.mxu0
    %v3183 = vadd.f32 %v2981, %v3182
    %v3184 = vpop.f32.mrf.mxu0
    %3185 = vdwg.mxu0
    %3186 = vmatpush.bf16.msra.mxu0 %v3114
    %3187 = vmatpush.bf16.msra.mxu0 %v3110
    %3188 = vmatpush.bf16.msra.mxu0 %v3106
    %3189 = vmatpush.bf16.msra.mxu0 %v3102
    %3190 = vmatpush.bf16.msra.mxu0 %v3098
    %3191 = vmatpush.bf16.msra.mxu0 %v3094
    %3192 = vmatpush.bf16.msra.mxu0 %v3090
    %3193 = vmatpush.bf16.msra.mxu0 %v3086
    %3194 = vmatmul.bf16.gmra.mxu0 %v2944
    %v3195 = vpop.f32.mrf.mxu0
    %v3196 = vadd.f32 %v2982, %v3195
    %v3197 = vpop.f32.mrf.mxu0
    %3198 = vdwg.mxu0
    %v3199 = vld [vmem:[%s5] sm:$0xff]
    %v3200 = vld [vmem:[%s5 + $0x8] sm:$0xff]
    %v3201 = vld [vmem:[%s5 + $0x10] sm:$0xff]
    %v3202 = vld [vmem:[%s5 + $0x18] sm:$0xff]
    %v3203 = vld [vmem:[%s5 + $0x20] sm:$0xff]
    %v3204 = vld [vmem:[%s5 + $0x28] sm:$0xff]
    %v3205 = vld [vmem:[%s5 + $0x30] sm:$0xff]
    %v3206 = vld [vmem:[%s5 + $0x38] sm:$0xff]
    %v3207 = vld [vmem:[%s5 + $0x40] sm:$0xff]
    %v3208 = vld [vmem:[%s5 + $0x48] sm:$0xff]
    %v3209 = vld [vmem:[%s5 + $0x50] sm:$0xff]
    %v3210 = vld [vmem:[%s5 + $0x58] sm:$0xff]
    %v3211 = vld [vmem:[%s5 + $0x60] sm:$0xff]
    %v3212 = vld [vmem:[%s5 + $0x68] sm:$0xff]
    %v3213 = vld [vmem:[%s5 + $0x70] sm:$0xff]
    %v3214 = vld [vmem:[%s5 + $0x78] sm:$0xff]
    %v3215 = vld [vmem:[%s5 + $0x80] sm:$0xff]
    %v3216 = vld [vmem:[%s5 + $0x88] sm:$0xff]
    %v3217 = vld [vmem:[%s5 + $0x90] sm:$0xff]
    %v3218 = vld [vmem:[%s5 + $0x98] sm:$0xff]
    %v3219 = vld [vmem:[%s5 + $0xa0] sm:$0xff]
    %v3220 = vld [vmem:[%s5 + $0xa8] sm:$0xff]
    %v3221 = vld [vmem:[%s5 + $0xb0] sm:$0xff]
    %v3222 = vld [vmem:[%s5 + $0xb8] sm:$0xff]
    %v3223 = vld [vmem:[%s5 + $0xc0] sm:$0xff]
    %v3224 = vld [vmem:[%s5 + $0xc8] sm:$0xff]
    %v3225 = vld [vmem:[%s5 + $0xd0] sm:$0xff]
    %v3226 = vld [vmem:[%s5 + $0xd8] sm:$0xff]
    %v3227 = vld [vmem:[%s5 + $0xe0] sm:$0xff]
    %v3228 = vld [vmem:[%s5 + $0xe8] sm:$0xff]
    %v3229 = vld [vmem:[%s5 + $0xf0] sm:$0xff]
    %v3230 = vld [vmem:[%s5 + $0xf8] sm:$0xff]
    %v3263 = vunpack.c.l.b16 %v3199
    %v3264 = vunpack.c.h.b16 %v3199
    %v3265 = vunpack.c.l.b16 %v3200
    %v3266 = vunpack.c.h.b16 %v3200
    %v3267 = vunpack.c.l.b16 %v3201
    %v3268 = vunpack.c.h.b16 %v3201
    %v3269 = vunpack.c.l.b16 %v3202
    %v3270 = vunpack.c.h.b16 %v3202
    %v3271 = vunpack.c.l.b16 %v3203
    %v3272 = vunpack.c.h.b16 %v3203
    %v3273 = vunpack.c.l.b16 %v3204
    %v3274 = vunpack.c.h.b16 %v3204
    %v3275 = vunpack.c.l.b16 %v3205
    %v3276 = vunpack.c.h.b16 %v3205
    %v3277 = vunpack.c.l.b16 %v3206
    %v3278 = vunpack.c.h.b16 %v3206
    %v3279 = vunpack.c.l.b16 %v3207
    %v3280 = vunpack.c.h.b16 %v3207
    %v3281 = vunpack.c.l.b16 %v3208
    %v3282 = vunpack.c.h.b16 %v3208
    %v3283 = vunpack.c.l.b16 %v3209
    %v3284 = vunpack.c.h.b16 %v3209
    %v3285 = vunpack.c.l.b16 %v3210
    %v3286 = vunpack.c.h.b16 %v3210
    %v3287 = vunpack.c.l.b16 %v3211
    %v3288 = vunpack.c.h.b16 %v3211
    %v3289 = vunpack.c.l.b16 %v3212
    %v3290 = vunpack.c.h.b16 %v3212
    %v3291 = vunpack.c.l.b16 %v3213
    %v3292 = vunpack.c.h.b16 %v3213
    %v3293 = vunpack.c.l.b16 %v3214
    %v3294 = vunpack.c.h.b16 %v3214
    %v3295 = vunpack.c.l.b16 %v3215
    %v3296 = vunpack.c.h.b16 %v3215
    %v3297 = vunpack.c.l.b16 %v3216
    %v3298 = vunpack.c.h.b16 %v3216
    %v3299 = vunpack.c.l.b16 %v3217
    %v3300 = vunpack.c.h.b16 %v3217
    %v3301 = vunpack.c.l.b16 %v3218
    %v3302 = vunpack.c.h.b16 %v3218
    %v3303 = vunpack.c.l.b16 %v3219
    %v3304 = vunpack.c.h.b16 %v3219
    %v3305 = vunpack.c.l.b16 %v3220
    %v3306 = vunpack.c.h.b16 %v3220
    %v3307 = vunpack.c.l.b16 %v3221
    %v3308 = vunpack.c.h.b16 %v3221
    %v3309 = vunpack.c.l.b16 %v3222
    %v3310 = vunpack.c.h.b16 %v3222
    %v3311 = vunpack.c.l.b16 %v3223
    %v3312 = vunpack.c.h.b16 %v3223
    %v3313 = vunpack.c.l.b16 %v3224
    %v3314 = vunpack.c.h.b16 %v3224
    %v3315 = vunpack.c.l.b16 %v3225
    %v3316 = vunpack.c.h.b16 %v3225
    %v3317 = vunpack.c.l.b16 %v3226
    %v3318 = vunpack.c.h.b16 %v3226
    %v3319 = vunpack.c.l.b16 %v3227
    %v3320 = vunpack.c.h.b16 %v3227
    %v3321 = vunpack.c.l.b16 %v3228
    %v3322 = vunpack.c.h.b16 %v3228
    %v3323 = vunpack.c.l.b16 %v3229
    %v3324 = vunpack.c.h.b16 %v3229
    %v3325 = vunpack.c.l.b16 %v3230
    %v3326 = vunpack.c.h.b16 %v3230
    %v3327 = vpack.c.b16 %v3267, %v3263
    %v3328 = vpack.c.b16 %v3268, %v3264
    %v3329 = vpack.c.b16 %v3269, %v3265
    %v3330 = vpack.c.b16 %v3270, %v3266
    %v3331 = vpack.c.b16 %v3275, %v3271
    %v3332 = vpack.c.b16 %v3276, %v3272
    %v3333 = vpack.c.b16 %v3277, %v3273
    %v3334 = vpack.c.b16 %v3278, %v3274
    %v3335 = vpack.c.b16 %v3283, %v3279
    %v3336 = vpack.c.b16 %v3284, %v3280
    %v3337 = vpack.c.b16 %v3285, %v3281
    %v3338 = vpack.c.b16 %v3286, %v3282
    %v3339 = vpack.c.b16 %v3291, %v3287
    %v3340 = vpack.c.b16 %v3292, %v3288
    %v3341 = vpack.c.b16 %v3293, %v3289
    %v3342 = vpack.c.b16 %v3294, %v3290
    %v3343 = vpack.c.b16 %v3299, %v3295
    %v3344 = vpack.c.b16 %v3300, %v3296
    %v3345 = vpack.c.b16 %v3301, %v3297
    %v3346 = vpack.c.b16 %v3302, %v3298
    %v3347 = vpack.c.b16 %v3307, %v3303
    %v3348 = vpack.c.b16 %v3308, %v3304
    %v3349 = vpack.c.b16 %v3309, %v3305
    %v3350 = vpack.c.b16 %v3310, %v3306
    %v3351 = vpack.c.b16 %v3315, %v3311
    %v3352 = vpack.c.b16 %v3316, %v3312
    %v3353 = vpack.c.b16 %v3317, %v3313
    %v3354 = vpack.c.b16 %v3318, %v3314
    %v3355 = vpack.c.b16 %v3323, %v3319
    %v3356 = vpack.c.b16 %v3324, %v3320
    %v3357 = vpack.c.b16 %v3325, %v3321
    %v3358 = vpack.c.b16 %v3326, %v3322
    %3391 = vmatpush.bf16.msra.mxu0 %v3355
    %3392 = vmatpush.bf16.msra.mxu0 %v3351
    %3393 = vmatpush.bf16.msra.mxu0 %v3347
    %3394 = vmatpush.bf16.msra.mxu0 %v3343
    %3395 = vmatpush.bf16.msra.mxu0 %v3339
    %3396 = vmatpush.bf16.msra.mxu0 %v3335
    %3397 = vmatpush.bf16.msra.mxu0 %v3331
    %3398 = vmatpush.bf16.msra.mxu0 %v3327
    %3399 = vmatmul.bf16.gmra.mxu0 %v2944
    %v3400 = vpop.f32.mrf.mxu0
    %v3401 = vadd.f32 0.0, %v3400
    %v3402 = vpop.f32.mrf.mxu0
    %3403 = vdwg.mxu0
    %3404 = vmatpush.bf16.msra.mxu0 %v3356
    %3405 = vmatpush.bf16.msra.mxu0 %v3352
    %3406 = vmatpush.bf16.msra.mxu0 %v3348
    %3407 = vmatpush.bf16.msra.mxu0 %v3344
    %3408 = vmatpush.bf16.msra.mxu0 %v3340
    %3409 = vmatpush.bf16.msra.mxu0 %v3336
    %3410 = vmatpush.bf16.msra.mxu0 %v3332
    %3411 = vmatpush.bf16.msra.mxu0 %v3328
    %3412 = vmatmul.bf16.gmra.mxu0 %v2944
    %v3413 = vpop.f32.mrf.mxu0
    %v3414 = vadd.f32 0.0, %v3413
    %v3415 = vpop.f32.mrf.mxu0
    %3416 = vdwg.mxu0
    %3417 = vmatpush.bf16.msra.mxu0 %v3357
    %3418 = vmatpush.bf16.msra.mxu0 %v3353
    %3419 = vmatpush.bf16.msra.mxu0 %v3349
    %3420 = vmatpush.bf16.msra.mxu0 %v3345
    %3421 = vmatpush.bf16.msra.mxu0 %v3341
    %3422 = vmatpush.bf16.msra.mxu0 %v3337
    %3423 = vmatpush.bf16.msra.mxu0 %v3333
    %3424 = vmatpush.bf16.msra.mxu0 %v3329
    %3425 = vmatmul.bf16.gmra.mxu0 %v2944
    %v3426 = vpop.f32.mrf.mxu0
    %v3427 = vadd.f32 0.0, %v3426
    %v3428 = vpop.f32.mrf.mxu0
    %3429 = vdwg.mxu0
    %3430 = vmatpush.bf16.msra.mxu0 %v3358
    %3431 = vmatpush.bf16.msra.mxu0 %v3354
    %3432 = vmatpush.bf16.msra.mxu0 %v3350
    %3433 = vmatpush.bf16.msra.mxu0 %v3346
    %3434 = vmatpush.bf16.msra.mxu0 %v3342
    %3435 = vmatpush.bf16.msra.mxu0 %v3338
    %3436 = vmatpush.bf16.msra.mxu0 %v3334
    %3437 = vmatpush.bf16.msra.mxu0 %v3330
    %3438 = vmatmul.bf16.gmra.mxu0 %v2944
    %v3439 = vpop.f32.mrf.mxu0
    %v3440 = vadd.f32 0.0, %v3439
    %v3441 = vpop.f32.mrf.mxu0
    %3442 = vdwg.mxu0
    %v3443 = vadd.f32 %v3157, %v3401
    %v3444 = vadd.f32 %v3170, %v3414
    %v3445 = vadd.f32 %v3183, %v3427
    %v3446 = vadd.f32 %v3196, %v3440
    %v3447 = vmul.f32 %v3443, 0.5
    %v3448 = vtanh.pop %v3447
    %v3449 = vmul.f32 %v3448, 0.5
    %v3450 = vadd.f32 %v3449, 0.5
    %v3451 = vmul.f32 %v3444, 0.5
    %v3452 = vtanh.pop %v3451
    %v3453 = vmul.f32 %v3452, 0.5
    %v3454 = vadd.f32 %v3453, 0.5
    %v3455 = vtanh.pop %v3445
    %v3456 = vmul.f32 %v3446, 0.5
    %v3457 = vtanh.pop %v3456
    %v3458 = vmul.f32 %v3457, 0.5
    %v3459 = vadd.f32 %v3458, 0.5
    %v3460 = vmul.f32 %v3454, %v2941
    %v3461 = vmul.f32 %v3450, %v3455
    %v3462 = vadd.f32 %v3460, %v3461
    %v3463 = vtanh.pop %v3462
    %v3464 = vmul.f32 %v3459, %v3463
    %3465 = vst [vmem:[#allocation2] sm:$0xff] %v3464
    %v3466 = vpack.c.bf16 %v3464, %v3464
    %v3467 = vld [vmem:[%s5] sm:$0xff]
    %v3468 = vld [vmem:[%s5 + $0x8] sm:$0xff]
    %v3469 = vld [vmem:[%s5 + $0x10] sm:$0xff]
    %v3470 = vld [vmem:[%s5 + $0x18] sm:$0xff]
    %v3471 = vld [vmem:[%s5 + $0x20] sm:$0xff]
    %v3472 = vld [vmem:[%s5 + $0x28] sm:$0xff]
    %v3473 = vld [vmem:[%s5 + $0x30] sm:$0xff]
    %v3474 = vld [vmem:[%s5 + $0x38] sm:$0xff]
    %v3475 = vld [vmem:[%s5 + $0x40] sm:$0xff]
    %v3476 = vld [vmem:[%s5 + $0x48] sm:$0xff]
    %v3477 = vld [vmem:[%s5 + $0x50] sm:$0xff]
    %v3478 = vld [vmem:[%s5 + $0x58] sm:$0xff]
    %v3479 = vld [vmem:[%s5 + $0x60] sm:$0xff]
    %v3480 = vld [vmem:[%s5 + $0x68] sm:$0xff]
    %v3481 = vld [vmem:[%s5 + $0x70] sm:$0xff]
    %v3482 = vld [vmem:[%s5 + $0x78] sm:$0xff]
    %v3483 = vld [vmem:[%s5 + $0x80] sm:$0xff]
    %v3484 = vld [vmem:[%s5 + $0x88] sm:$0xff]
    %v3485 = vld [vmem:[%s5 + $0x90] sm:$0xff]
    %v3486 = vld [vmem:[%s5 + $0x98] sm:$0xff]
    %v3487 = vld [vmem:[%s5 + $0xa0] sm:$0xff]
    %v3488 = vld [vmem:[%s5 + $0xa8] sm:$0xff]
    %v3489 = vld [vmem:[%s5 + $0xb0] sm:$0xff]
    %v3490 = vld [vmem:[%s5 + $0xb8] sm:$0xff]
    %v3491 = vld [vmem:[%s5 + $0xc0] sm:$0xff]
    %v3492 = vld [vmem:[%s5 + $0xc8] sm:$0xff]
    %v3493 = vld [vmem:[%s5 + $0xd0] sm:$0xff]
    %v3494 = vld [vmem:[%s5 + $0xd8] sm:$0xff]
    %v3495 = vld [vmem:[%s5 + $0xe0] sm:$0xff]
    %v3496 = vld [vmem:[%s5 + $0xe8] sm:$0xff]
    %v3497 = vld [vmem:[%s5 + $0xf0] sm:$0xff]
    %v3498 = vld [vmem:[%s5 + $0xf8] sm:$0xff]
    %v3531 = vunpack.c.l.b16 %v3467
    %v3532 = vunpack.c.h.b16 %v3467
    %v3533 = vunpack.c.l.b16 %v3468
    %v3534 = vunpack.c.h.b16 %v3468
    %v3535 = vunpack.c.l.b16 %v3469
    %v3536 = vunpack.c.h.b16 %v3469
    %v3537 = vunpack.c.l.b16 %v3470
    %v3538 = vunpack.c.h.b16 %v3470
    %v3539 = vunpack.c.l.b16 %v3471
    %v3540 = vunpack.c.h.b16 %v3471
    %v3541 = vunpack.c.l.b16 %v3472
    %v3542 = vunpack.c.h.b16 %v3472
    %v3543 = vunpack.c.l.b16 %v3473
    %v3544 = vunpack.c.h.b16 %v3473
    %v3545 = vunpack.c.l.b16 %v3474
    %v3546 = vunpack.c.h.b16 %v3474
    %v3547 = vunpack.c.l.b16 %v3475
    %v3548 = vunpack.c.h.b16 %v3475
    %v3549 = vunpack.c.l.b16 %v3476
    %v3550 = vunpack.c.h.b16 %v3476
    %v3551 = vunpack.c.l.b16 %v3477
    %v3552 = vunpack.c.h.b16 %v3477
    %v3553 = vunpack.c.l.b16 %v3478
    %v3554 = vunpack.c.h.b16 %v3478
    %v3555 = vunpack.c.l.b16 %v3479
    %v3556 = vunpack.c.h.b16 %v3479
    %v3557 = vunpack.c.l.b16 %v3480
    %v3558 = vunpack.c.h.b16 %v3480
    %v3559 = vunpack.c.l.b16 %v3481
    %v3560 = vunpack.c.h.b16 %v3481
    %v3561 = vunpack.c.l.b16 %v3482
    %v3562 = vunpack.c.h.b16 %v3482
    %v3563 = vunpack.c.l.b16 %v3483
    %v3564 = vunpack.c.h.b16 %v3483
    %v3565 = vunpack.c.l.b16 %v3484
    %v3566 = vunpack.c.h.b16 %v3484
    %v3567 = vunpack.c.l.b16 %v3485
    %v3568 = vunpack.c.h.b16 %v3485
    %v3569 = vunpack.c.l.b16 %v3486
    %v3570 = vunpack.c.h.b16 %v3486
    %v3571 = vunpack.c.l.b16 %v3487
    %v3572 = vunpack.c.h.b16 %v3487
    %v3573 = vunpack.c.l.b16 %v3488
    %v3574 = vunpack.c.h.b16 %v3488
    %v3575 = vunpack.c.l.b16 %v3489
    %v3576 = vunpack.c.h.b16 %v3489
    %v3577 = vunpack.c.l.b16 %v3490
    %v3578 = vunpack.c.h.b16 %v3490
    %v3579 = vunpack.c.l.b16 %v3491
    %v3580 = vunpack.c.h.b16 %v3491
    %v3581 = vunpack.c.l.b16 %v3492
    %v3582 = vunpack.c.h.b16 %v3492
    %v3583 = vunpack.c.l.b16 %v3493
    %v3584 = vunpack.c.h.b16 %v3493
    %v3585 = vunpack.c.l.b16 %v3494
    %v3586 = vunpack.c.h.b16 %v3494
    %v3587 = vunpack.c.l.b16 %v3495
    %v3588 = vunpack.c.h.b16 %v3495
    %v3589 = vunpack.c.l.b16 %v3496
    %v3590 = vunpack.c.h.b16 %v3496
    %v3591 = vunpack.c.l.b16 %v3497
    %v3592 = vunpack.c.h.b16 %v3497
    %v3593 = vunpack.c.l.b16 %v3498
    %v3594 = vunpack.c.h.b16 %v3498
    %v3595 = vpack.c.b16 %v3535, %v3531
    %v3596 = vpack.c.b16 %v3536, %v3532
    %v3597 = vpack.c.b16 %v3537, %v3533
    %v3598 = vpack.c.b16 %v3538, %v3534
    %v3599 = vpack.c.b16 %v3543, %v3539
    %v3600 = vpack.c.b16 %v3544, %v3540
    %v3601 = vpack.c.b16 %v3545, %v3541
    %v3602 = vpack.c.b16 %v3546, %v3542
    %v3603 = vpack.c.b16 %v3551, %v3547
    %v3604 = vpack.c.b16 %v3552, %v3548
    %v3605 = vpack.c.b16 %v3553, %v3549
    %v3606 = vpack.c.b16 %v3554, %v3550
    %v3607 = vpack.c.b16 %v3559, %v3555
    %v3608 = vpack.c.b16 %v3560, %v3556
    %v3609 = vpack.c.b16 %v3561, %v3557
    %v3610 = vpack.c.b16 %v3562, %v3558
    %v3611 = vpack.c.b16 %v3567, %v3563
    %v3612 = vpack.c.b16 %v3568, %v3564
    %v3613 = vpack.c.b16 %v3569, %v3565
    %v3614 = vpack.c.b16 %v3570, %v3566
    %v3615 = vpack.c.b16 %v3575, %v3571
    %v3616 = vpack.c.b16 %v3576, %v3572
    %v3617 = vpack.c.b16 %v3577, %v3573
    %v3618 = vpack.c.b16 %v3578, %v3574
    %v3619 = vpack.c.b16 %v3583, %v3579
    %v3620 = vpack.c.b16 %v3584, %v3580
    %v3621 = vpack.c.b16 %v3585, %v3581
    %v3622 = vpack.c.b16 %v3586, %v3582
    %v3623 = vpack.c.b16 %v3591, %v3587
    %v3624 = vpack.c.b16 %v3592, %v3588
    %v3625 = vpack.c.b16 %v3593, %v3589
    %v3626 = vpack.c.b16 %v3594, %v3590
    %3659 = vmatpush.bf16.msra.mxu0 %v3623
    %3660 = vmatpush.bf16.msra.mxu0 %v3619
    %3661 = vmatpush.bf16.msra.mxu0 %v3615
    %3662 = vmatpush.bf16.msra.mxu0 %v3611
    %3663 = vmatpush.bf16.msra.mxu0 %v3607
    %3664 = vmatpush.bf16.msra.mxu0 %v3603
    %3665 = vmatpush.bf16.msra.mxu0 %v3599
    %3666 = vmatpush.bf16.msra.mxu0 %v3595
    %3667 = vmatmul.bf16.gmra.mxu0 %v3466
    %v3668 = vpop.f32.mrf.mxu0
    %v3669 = vadd.f32 0.0, %v3668
    %v3670 = vpop.f32.mrf.mxu0
    %3671 = vdwg.mxu0
    %3672 = vmatpush.bf16.msra.mxu0 %v3624
    %3673 = vmatpush.bf16.msra.mxu0 %v3620
    %3674 = vmatpush.bf16.msra.mxu0 %v3616
    %3675 = vmatpush.bf16.msra.mxu0 %v3612
    %3676 = vmatpush.bf16.msra.mxu0 %v3608
    %3677 = vmatpush.bf16.msra.mxu0 %v3604
    %3678 = vmatpush.bf16.msra.mxu0 %v3600
    %3679 = vmatpush.bf16.msra.mxu0 %v3596
    %3680 = vmatmul.bf16.gmra.mxu0 %v3466
    %v3681 = vpop.f32.mrf.mxu0
    %v3682 = vadd.f32 0.0, %v3681
    %v3683 = vpop.f32.mrf.mxu0
    %3684 = vdwg.mxu0
    %3685 = vmatpush.bf16.msra.mxu0 %v3625
    %3686 = vmatpush.bf16.msra.mxu0 %v3621
    %3687 = vmatpush.bf16.msra.mxu0 %v3617
    %3688 = vmatpush.bf16.msra.mxu0 %v3613
    %3689 = vmatpush.bf16.msra.mxu0 %v3609
    %3690 = vmatpush.bf16.msra.mxu0 %v3605
    %3691 = vmatpush.bf16.msra.mxu0 %v3601
    %3692 = vmatpush.bf16.msra.mxu0 %v3597
    %3693 = vmatmul.bf16.gmra.mxu0 %v3466
    %v3694 = vpop.f32.mrf.mxu0
    %v3695 = vadd.f32 0.0, %v3694
    %v3696 = vpop.f32.mrf.mxu0
    %3697 = vdwg.mxu0
    %3698 = vmatpush.bf16.msra.mxu0 %v3626
    %3699 = vmatpush.bf16.msra.mxu0 %v3622
    %3700 = vmatpush.bf16.msra.mxu0 %v3618
    %3701 = vmatpush.bf16.msra.mxu0 %v3614
    %3702 = vmatpush.bf16.msra.mxu0 %v3610
    %3703 = vmatpush.bf16.msra.mxu0 %v3606
    %3704 = vmatpush.bf16.msra.mxu0 %v3602
    %3705 = vmatpush.bf16.msra.mxu0 %v3598
    %3706 = vmatmul.bf16.gmra.mxu0 %v3466
    %v3707 = vpop.f32.mrf.mxu0
    %v3708 = vadd.f32 0.0, %v3707
    %v3709 = vpop.f32.mrf.mxu0
    %3710 = vdwg.mxu0
    %v3711 = vadd.f32 %v3157, %v3669
    %v3712 = vadd.f32 %v3170, %v3682
    %v3713 = vadd.f32 %v3183, %v3695
    %v3714 = vadd.f32 %v3196, %v3708
    %v3715 = vmul.f32 %v3711, 0.5
    %v3716 = vtanh.pop %v3715
    %v3717 = vmul.f32 %v3716, 0.5
    %v3718 = vadd.f32 %v3717, 0.5
    %v3719 = vmul.f32 %v3712, 0.5
    %v3720 = vtanh.pop %v3719
    %v3721 = vmul.f32 %v3720, 0.5
    %v3722 = vadd.f32 %v3721, 0.5
    %v3723 = vtanh.pop %v3713
    %v3724 = vmul.f32 %v3714, 0.5
    %v3725 = vtanh.pop %v3724
    %v3726 = vmul.f32 %v3725, 0.5
    %v3727 = vadd.f32 %v3726, 0.5
    %v3728 = vmul.f32 %v3722, %v3462
    %v3729 = vmul.f32 %v3718, %v3723
    %v3730 = vadd.f32 %v3728, %v3729
    %v3731 = vtanh.pop %v3730
    %v3732 = vmul.f32 %v3727, %v3731
    %3733 = vst [vmem:[#allocation2 + $0x8] sm:$0xff] %v3732
    %v3734 = vpack.c.bf16 %v3732, %v3732
    %v3735 = vld [vmem:[%s5] sm:$0xff]
    %v3736 = vld [vmem:[%s5 + $0x8] sm:$0xff]
    %v3737 = vld [vmem:[%s5 + $0x10] sm:$0xff]
    %v3738 = vld [vmem:[%s5 + $0x18] sm:$0xff]
    %v3739 = vld [vmem:[%s5 + $0x20] sm:$0xff]
    %v3740 = vld [vmem:[%s5 + $0x28] sm:$0xff]
    %v3741 = vld [vmem:[%s5 + $0x30] sm:$0xff]
    %v3742 = vld [vmem:[%s5 + $0x38] sm:$0xff]
    %v3743 = vld [vmem:[%s5 + $0x40] sm:$0xff]
    %v3744 = vld [vmem:[%s5 + $0x48] sm:$0xff]
    %v3745 = vld [vmem:[%s5 + $0x50] sm:$0xff]
    %v3746 = vld [vmem:[%s5 + $0x58] sm:$0xff]
    %v3747 = vld [vmem:[%s5 + $0x60] sm:$0xff]
    %v3748 = vld [vmem:[%s5 + $0x68] sm:$0xff]
    %v3749 = vld [vmem:[%s5 + $0x70] sm:$0xff]
    %v3750 = vld [vmem:[%s5 + $0x78] sm:$0xff]
    %v3751 = vld [vmem:[%s5 + $0x80] sm:$0xff]
    %v3752 = vld [vmem:[%s5 + $0x88] sm:$0xff]
    %v3753 = vld [vmem:[%s5 + $0x90] sm:$0xff]
    %v3754 = vld [vmem:[%s5 + $0x98] sm:$0xff]
    %v3755 = vld [vmem:[%s5 + $0xa0] sm:$0xff]
    %v3756 = vld [vmem:[%s5 + $0xa8] sm:$0xff]
    %v3757 = vld [vmem:[%s5 + $0xb0] sm:$0xff]
    %v3758 = vld [vmem:[%s5 + $0xb8] sm:$0xff]
    %v3759 = vld [vmem:[%s5 + $0xc0] sm:$0xff]
    %v3760 = vld [vmem:[%s5 + $0xc8] sm:$0xff]
    %v3761 = vld [vmem:[%s5 + $0xd0] sm:$0xff]
    %v3762 = vld [vmem:[%s5 + $0xd8] sm:$0xff]
    %v3763 = vld [vmem:[%s5 + $0xe0] sm:$0xff]
    %v3764 = vld [vmem:[%s5 + $0xe8] sm:$0xff]
    %v3765 = vld [vmem:[%s5 + $0xf0] sm:$0xff]
    %v3766 = vld [vmem:[%s5 + $0xf8] sm:$0xff]
    %v3799 = vunpack.c.l.b16 %v3735
    %v3800 = vunpack.c.h.b16 %v3735
    %v3801 = vunpack.c.l.b16 %v3736
    %v3802 = vunpack.c.h.b16 %v3736
    %v3803 = vunpack.c.l.b16 %v3737
    %v3804 = vunpack.c.h.b16 %v3737
    %v3805 = vunpack.c.l.b16 %v3738
    %v3806 = vunpack.c.h.b16 %v3738
    %v3807 = vunpack.c.l.b16 %v3739
    %v3808 = vunpack.c.h.b16 %v3739
    %v3809 = vunpack.c.l.b16 %v3740
    %v3810 = vunpack.c.h.b16 %v3740
    %v3811 = vunpack.c.l.b16 %v3741
    %v3812 = vunpack.c.h.b16 %v3741
    %v3813 = vunpack.c.l.b16 %v3742
    %v3814 = vunpack.c.h.b16 %v3742
    %v3815 = vunpack.c.l.b16 %v3743
    %v3816 = vunpack.c.h.b16 %v3743
    %v3817 = vunpack.c.l.b16 %v3744
    %v3818 = vunpack.c.h.b16 %v3744
    %v3819 = vunpack.c.l.b16 %v3745
    %v3820 = vunpack.c.h.b16 %v3745
    %v3821 = vunpack.c.l.b16 %v3746
    %v3822 = vunpack.c.h.b16 %v3746
    %v3823 = vunpack.c.l.b16 %v3747
    %v3824 = vunpack.c.h.b16 %v3747
    %v3825 = vunpack.c.l.b16 %v3748
    %v3826 = vunpack.c.h.b16 %v3748
    %v3827 = vunpack.c.l.b16 %v3749
    %v3828 = vunpack.c.h.b16 %v3749
    %v3829 = vunpack.c.l.b16 %v3750
    %v3830 = vunpack.c.h.b16 %v3750
    %v3831 = vunpack.c.l.b16 %v3751
    %v3832 = vunpack.c.h.b16 %v3751
    %v3833 = vunpack.c.l.b16 %v3752
    %v3834 = vunpack.c.h.b16 %v3752
    %v3835 = vunpack.c.l.b16 %v3753
    %v3836 = vunpack.c.h.b16 %v3753
    %v3837 = vunpack.c.l.b16 %v3754
    %v3838 = vunpack.c.h.b16 %v3754
    %v3839 = vunpack.c.l.b16 %v3755
    %v3840 = vunpack.c.h.b16 %v3755
    %v3841 = vunpack.c.l.b16 %v3756
    %v3842 = vunpack.c.h.b16 %v3756
    %v3843 = vunpack.c.l.b16 %v3757
    %v3844 = vunpack.c.h.b16 %v3757
    %v3845 = vunpack.c.l.b16 %v3758
    %v3846 = vunpack.c.h.b16 %v3758
    %v3847 = vunpack.c.l.b16 %v3759
    %v3848 = vunpack.c.h.b16 %v3759
    %v3849 = vunpack.c.l.b16 %v3760
    %v3850 = vunpack.c.h.b16 %v3760
    %v3851 = vunpack.c.l.b16 %v3761
    %v3852 = vunpack.c.h.b16 %v3761
    %v3853 = vunpack.c.l.b16 %v3762
    %v3854 = vunpack.c.h.b16 %v3762
    %v3855 = vunpack.c.l.b16 %v3763
    %v3856 = vunpack.c.h.b16 %v3763
    %v3857 = vunpack.c.l.b16 %v3764
    %v3858 = vunpack.c.h.b16 %v3764
    %v3859 = vunpack.c.l.b16 %v3765
    %v3860 = vunpack.c.h.b16 %v3765
    %v3861 = vunpack.c.l.b16 %v3766
    %v3862 = vunpack.c.h.b16 %v3766
    %v3863 = vpack.c.b16 %v3803, %v3799
    %v3864 = vpack.c.b16 %v3804, %v3800
    %v3865 = vpack.c.b16 %v3805, %v3801
    %v3866 = vpack.c.b16 %v3806, %v3802
    %v3867 = vpack.c.b16 %v3811, %v3807
    %v3868 = vpack.c.b16 %v3812, %v3808
    %v3869 = vpack.c.b16 %v3813, %v3809
    %v3870 = vpack.c.b16 %v3814, %v3810
    %v3871 = vpack.c.b16 %v3819, %v3815
    %v3872 = vpack.c.b16 %v3820, %v3816
    %v3873 = vpack.c.b16 %v3821, %v3817
    %v3874 = vpack.c.b16 %v3822, %v3818
    %v3875 = vpack.c.b16 %v3827, %v3823
    %v3876 = vpack.c.b16 %v3828, %v3824
    %v3877 = vpack.c.b16 %v3829, %v3825
    %v3878 = vpack.c.b16 %v3830, %v3826
    %v3879 = vpack.c.b16 %v3835, %v3831
    %v3880 = vpack.c.b16 %v3836, %v3832
    %v3881 = vpack.c.b16 %v3837, %v3833
    %v3882 = vpack.c.b16 %v3838, %v3834
    %v3883 = vpack.c.b16 %v3843, %v3839
    %v3884 = vpack.c.b16 %v3844, %v3840
    %v3885 = vpack.c.b16 %v3845, %v3841
    %v3886 = vpack.c.b16 %v3846, %v3842
    %v3887 = vpack.c.b16 %v3851, %v3847
    %v3888 = vpack.c.b16 %v3852, %v3848
    %v3889 = vpack.c.b16 %v3853, %v3849
    %v3890 = vpack.c.b16 %v3854, %v3850
    %v3891 = vpack.c.b16 %v3859, %v3855
    %v3892 = vpack.c.b16 %v3860, %v3856
    %v3893 = vpack.c.b16 %v3861, %v3857
    %v3894 = vpack.c.b16 %v3862, %v3858
    %3927 = vmatpush.bf16.msra.mxu0 %v3891
    %3928 = vmatpush.bf16.msra.mxu0 %v3887
    %3929 = vmatpush.bf16.msra.mxu0 %v3883
    %3930 = vmatpush.bf16.msra.mxu0 %v3879
    %3931 = vmatpush.bf16.msra.mxu0 %v3875
    %3932 = vmatpush.bf16.msra.mxu0 %v3871
    %3933 = vmatpush.bf16.msra.mxu0 %v3867
    %3934 = vmatpush.bf16.msra.mxu0 %v3863
    %3935 = vmatmul.bf16.gmra.mxu0 %v3734
    %v3936 = vpop.f32.mrf.mxu0
    %v3937 = vadd.f32 0.0, %v3936
    %v3938 = vpop.f32.mrf.mxu0
    %3939 = vdwg.mxu0
    %3940 = vmatpush.bf16.msra.mxu0 %v3892
    %3941 = vmatpush.bf16.msra.mxu0 %v3888
    %3942 = vmatpush.bf16.msra.mxu0 %v3884
    %3943 = vmatpush.bf16.msra.mxu0 %v3880
    %3944 = vmatpush.bf16.msra.mxu0 %v3876
    %3945 = vmatpush.bf16.msra.mxu0 %v3872
    %3946 = vmatpush.bf16.msra.mxu0 %v3868
    %3947 = vmatpush.bf16.msra.mxu0 %v3864
    %3948 = vmatmul.bf16.gmra.mxu0 %v3734
    %v3949 = vpop.f32.mrf.mxu0
    %v3950 = vadd.f32 0.0, %v3949
    %v3951 = vpop.f32.mrf.mxu0
    %3952 = vdwg.mxu0
    %3953 = vmatpush.bf16.msra.mxu0 %v3893
    %3954 = vmatpush.bf16.msra.mxu0 %v3889
    %3955 = vmatpush.bf16.msra.mxu0 %v3885
    %3956 = vmatpush.bf16.msra.mxu0 %v3881
    %3957 = vmatpush.bf16.msra.mxu0 %v3877
    %3958 = vmatpush.bf16.msra.mxu0 %v3873
    %3959 = vmatpush.bf16.msra.mxu0 %v3869
    %3960 = vmatpush.bf16.msra.mxu0 %v3865
    %3961 = vmatmul.bf16.gmra.mxu0 %v3734
    %v3962 = vpop.f32.mrf.mxu0
    %v3963 = vadd.f32 0.0, %v3962
    %v3964 = vpop.f32.mrf.mxu0
    %3965 = vdwg.mxu0
    %3966 = vmatpush.bf16.msra.mxu0 %v3894
    %3967 = vmatpush.bf16.msra.mxu0 %v3890
    %3968 = vmatpush.bf16.msra.mxu0 %v3886
    %3969 = vmatpush.bf16.msra.mxu0 %v3882
    %3970 = vmatpush.bf16.msra.mxu0 %v3878
    %3971 = vmatpush.bf16.msra.mxu0 %v3874
    %3972 = vmatpush.bf16.msra.mxu0 %v3870
    %3973 = vmatpush.bf16.msra.mxu0 %v3866
    %3974 = vmatmul.bf16.gmra.mxu0 %v3734
    %v3975 = vpop.f32.mrf.mxu0
    %v3976 = vadd.f32 0.0, %v3975
    %v3977 = vpop.f32.mrf.mxu0
    %3978 = vdwg.mxu0
    %v3979 = vadd.f32 %v3157, %v3937
    %v3980 = vadd.f32 %v3170, %v3950
    %v3981 = vadd.f32 %v3183, %v3963
    %v3982 = vadd.f32 %v3196, %v3976
    %v3983 = vmul.f32 %v3979, 0.5
    %v3984 = vtanh.pop %v3983
    %v3985 = vmul.f32 %v3984, 0.5
    %v3986 = vadd.f32 %v3985, 0.5
    %v3987 = vmul.f32 %v3980, 0.5
    %v3988 = vtanh.pop %v3987
    %v3989 = vmul.f32 %v3988, 0.5
    %v3990 = vadd.f32 %v3989, 0.5
    %v3991 = vtanh.pop %v3981
    %v3992 = vmul.f32 %v3982, 0.5
    %v3993 = vtanh.pop %v3992
    %v3994 = vmul.f32 %v3993, 0.5
    %v3995 = vadd.f32 %v3994, 0.5
    %v3996 = vmul.f32 %v3990, %v3730
    %v3997 = vmul.f32 %v3986, %v3991
    %v3998 = vadd.f32 %v3996, %v3997
    %v3999 = vtanh.pop %v3998
    %v4000 = vmul.f32 %v3995, %v3999
    %4001 = vst [vmem:[#allocation2 + $0x10] sm:$0xff] %v4000
    %v4002 = vpack.c.bf16 %v4000, %v4000
    %v4003 = vld [vmem:[%s5] sm:$0xff]
    %v4004 = vld [vmem:[%s5 + $0x8] sm:$0xff]
    %v4005 = vld [vmem:[%s5 + $0x10] sm:$0xff]
    %v4006 = vld [vmem:[%s5 + $0x18] sm:$0xff]
    %v4007 = vld [vmem:[%s5 + $0x20] sm:$0xff]
    %v4008 = vld [vmem:[%s5 + $0x28] sm:$0xff]
    %v4009 = vld [vmem:[%s5 + $0x30] sm:$0xff]
    %v4010 = vld [vmem:[%s5 + $0x38] sm:$0xff]
    %v4011 = vld [vmem:[%s5 + $0x40] sm:$0xff]
    %v4012 = vld [vmem:[%s5 + $0x48] sm:$0xff]
    %v4013 = vld [vmem:[%s5 + $0x50] sm:$0xff]
    %v4014 = vld [vmem:[%s5 + $0x58] sm:$0xff]
    %v4015 = vld [vmem:[%s5 + $0x60] sm:$0xff]
    %v4016 = vld [vmem:[%s5 + $0x68] sm:$0xff]
    %v4017 = vld [vmem:[%s5 + $0x70] sm:$0xff]
    %v4018 = vld [vmem:[%s5 + $0x78] sm:$0xff]
    %v4019 = vld [vmem:[%s5 + $0x80] sm:$0xff]
    %v4020 = vld [vmem:[%s5 + $0x88] sm:$0xff]
    %v4021 = vld [vmem:[%s5 + $0x90] sm:$0xff]
    %v4022 = vld [vmem:[%s5 + $0x98] sm:$0xff]
    %v4023 = vld [vmem:[%s5 + $0xa0] sm:$0xff]
    %v4024 = vld [vmem:[%s5 + $0xa8] sm:$0xff]
    %v4025 = vld [vmem:[%s5 + $0xb0] sm:$0xff]
    %v4026 = vld [vmem:[%s5 + $0xb8] sm:$0xff]
    %v4027 = vld [vmem:[%s5 + $0xc0] sm:$0xff]
    %v4028 = vld [vmem:[%s5 + $0xc8] sm:$0xff]
    %v4029 = vld [vmem:[%s5 + $0xd0] sm:$0xff]
    %v4030 = vld [vmem:[%s5 + $0xd8] sm:$0xff]
    %v4031 = vld [vmem:[%s5 + $0xe0] sm:$0xff]
    %v4032 = vld [vmem:[%s5 + $0xe8] sm:$0xff]
    %v4033 = vld [vmem:[%s5 + $0xf0] sm:$0xff]
    %v4034 = vld [vmem:[%s5 + $0xf8] sm:$0xff]
    %v4067 = vunpack.c.l.b16 %v4003
    %v4068 = vunpack.c.h.b16 %v4003
    %v4069 = vunpack.c.l.b16 %v4004
    %v4070 = vunpack.c.h.b16 %v4004
    %v4071 = vunpack.c.l.b16 %v4005
    %v4072 = vunpack.c.h.b16 %v4005
    %v4073 = vunpack.c.l.b16 %v4006
    %v4074 = vunpack.c.h.b16 %v4006
    %v4075 = vunpack.c.l.b16 %v4007
    %v4076 = vunpack.c.h.b16 %v4007
    %v4077 = vunpack.c.l.b16 %v4008
    %v4078 = vunpack.c.h.b16 %v4008
    %v4079 = vunpack.c.l.b16 %v4009
    %v4080 = vunpack.c.h.b16 %v4009
    %v4081 = vunpack.c.l.b16 %v4010
    %v4082 = vunpack.c.h.b16 %v4010
    %v4083 = vunpack.c.l.b16 %v4011
    %v4084 = vunpack.c.h.b16 %v4011
    %v4085 = vunpack.c.l.b16 %v4012
    %v4086 = vunpack.c.h.b16 %v4012
    %v4087 = vunpack.c.l.b16 %v4013
    %v4088 = vunpack.c.h.b16 %v4013
    %v4089 = vunpack.c.l.b16 %v4014
    %v4090 = vunpack.c.h.b16 %v4014
    %v4091 = vunpack.c.l.b16 %v4015
    %v4092 = vunpack.c.h.b16 %v4015
    %v4093 = vunpack.c.l.b16 %v4016
    %v4094 = vunpack.c.h.b16 %v4016
    %v4095 = vunpack.c.l.b16 %v4017
    %v4096 = vunpack.c.h.b16 %v4017
    %v4097 = vunpack.c.l.b16 %v4018
    %v4098 = vunpack.c.h.b16 %v4018
    %v4099 = vunpack.c.l.b16 %v4019
    %v4100 = vunpack.c.h.b16 %v4019
    %v4101 = vunpack.c.l.b16 %v4020
    %v4102 = vunpack.c.h.b16 %v4020
    %v4103 = vunpack.c.l.b16 %v4021
    %v4104 = vunpack.c.h.b16 %v4021
    %v4105 = vunpack.c.l.b16 %v4022
    %v4106 = vunpack.c.h.b16 %v4022
    %v4107 = vunpack.c.l.b16 %v4023
    %v4108 = vunpack.c.h.b16 %v4023
    %v4109 = vunpack.c.l.b16 %v4024
    %v4110 = vunpack.c.h.b16 %v4024
    %v4111 = vunpack.c.l.b16 %v4025
    %v4112 = vunpack.c.h.b16 %v4025
    %v4113 = vunpack.c.l.b16 %v4026
    %v4114 = vunpack.c.h.b16 %v4026
    %v4115 = vunpack.c.l.b16 %v4027
    %v4116 = vunpack.c.h.b16 %v4027
    %v4117 = vunpack.c.l.b16 %v4028
    %v4118 = vunpack.c.h.b16 %v4028
    %v4119 = vunpack.c.l.b16 %v4029
    %v4120 = vunpack.c.h.b16 %v4029
    %v4121 = vunpack.c.l.b16 %v4030
    %v4122 = vunpack.c.h.b16 %v4030
    %v4123 = vunpack.c.l.b16 %v4031
    %v4124 = vunpack.c.h.b16 %v4031
    %v4125 = vunpack.c.l.b16 %v4032
    %v4126 = vunpack.c.h.b16 %v4032
    %v4127 = vunpack.c.l.b16 %v4033
    %v4128 = vunpack.c.h.b16 %v4033
    %v4129 = vunpack.c.l.b16 %v4034
    %v4130 = vunpack.c.h.b16 %v4034
    %v4131 = vpack.c.b16 %v4071, %v4067
    %v4132 = vpack.c.b16 %v4072, %v4068
    %v4133 = vpack.c.b16 %v4073, %v4069
    %v4134 = vpack.c.b16 %v4074, %v4070
    %v4135 = vpack.c.b16 %v4079, %v4075
    %v4136 = vpack.c.b16 %v4080, %v4076
    %v4137 = vpack.c.b16 %v4081, %v4077
    %v4138 = vpack.c.b16 %v4082, %v4078
    %v4139 = vpack.c.b16 %v4087, %v4083
    %v4140 = vpack.c.b16 %v4088, %v4084
    %v4141 = vpack.c.b16 %v4089, %v4085
    %v4142 = vpack.c.b16 %v4090, %v4086
    %v4143 = vpack.c.b16 %v4095, %v4091
    %v4144 = vpack.c.b16 %v4096, %v4092
    %v4145 = vpack.c.b16 %v4097, %v4093
    %v4146 = vpack.c.b16 %v4098, %v4094
    %v4147 = vpack.c.b16 %v4103, %v4099
    %v4148 = vpack.c.b16 %v4104, %v4100
    %v4149 = vpack.c.b16 %v4105, %v4101
    %v4150 = vpack.c.b16 %v4106, %v4102
    %v4151 = vpack.c.b16 %v4111, %v4107
    %v4152 = vpack.c.b16 %v4112, %v4108
    %v4153 = vpack.c.b16 %v4113, %v4109
    %v4154 = vpack.c.b16 %v4114, %v4110
    %v4155 = vpack.c.b16 %v4119, %v4115
    %v4156 = vpack.c.b16 %v4120, %v4116
    %v4157 = vpack.c.b16 %v4121, %v4117
    %v4158 = vpack.c.b16 %v4122, %v4118
    %v4159 = vpack.c.b16 %v4127, %v4123
    %v4160 = vpack.c.b16 %v4128, %v4124
    %v4161 = vpack.c.b16 %v4129, %v4125
    %v4162 = vpack.c.b16 %v4130, %v4126
    %4195 = vmatpush.bf16.msra.mxu0 %v4159
    %4196 = vmatpush.bf16.msra.mxu0 %v4155
    %4197 = vmatpush.bf16.msra.mxu0 %v4151
    %4198 = vmatpush.bf16.msra.mxu0 %v4147
    %4199 = vmatpush.bf16.msra.mxu0 %v4143
    %4200 = vmatpush.bf16.msra.mxu0 %v4139
    %4201 = vmatpush.bf16.msra.mxu0 %v4135
    %4202 = vmatpush.bf16.msra.mxu0 %v4131
    %4203 = vmatmul.bf16.gmra.mxu0 %v4002
    %v4204 = vpop.f32.mrf.mxu0
    %v4205 = vadd.f32 0.0, %v4204
    %v4206 = vpop.f32.mrf.mxu0
    %4207 = vdwg.mxu0
    %4208 = vmatpush.bf16.msra.mxu0 %v4160
    %4209 = vmatpush.bf16.msra.mxu0 %v4156
    %4210 = vmatpush.bf16.msra.mxu0 %v4152
    %4211 = vmatpush.bf16.msra.mxu0 %v4148
    %4212 = vmatpush.bf16.msra.mxu0 %v4144
    %4213 = vmatpush.bf16.msra.mxu0 %v4140
    %4214 = vmatpush.bf16.msra.mxu0 %v4136
    %4215 = vmatpush.bf16.msra.mxu0 %v4132
    %4216 = vmatmul.bf16.gmra.mxu0 %v4002
    %v4217 = vpop.f32.mrf.mxu0
    %v4218 = vadd.f32 0.0, %v4217
    %v4219 = vpop.f32.mrf.mxu0
    %4220 = vdwg.mxu0
    %4221 = vmatpush.bf16.msra.mxu0 %v4161
    %4222 = vmatpush.bf16.msra.mxu0 %v4157
    %4223 = vmatpush.bf16.msra.mxu0 %v4153
    %4224 = vmatpush.bf16.msra.mxu0 %v4149
    %4225 = vmatpush.bf16.msra.mxu0 %v4145
    %4226 = vmatpush.bf16.msra.mxu0 %v4141
    %4227 = vmatpush.bf16.msra.mxu0 %v4137
    %4228 = vmatpush.bf16.msra.mxu0 %v4133
    %4229 = vmatmul.bf16.gmra.mxu0 %v4002
    %v4230 = vpop.f32.mrf.mxu0
    %v4231 = vadd.f32 0.0, %v4230
    %v4232 = vpop.f32.mrf.mxu0
    %4233 = vdwg.mxu0
    %4234 = vmatpush.bf16.msra.mxu0 %v4162
    %4235 = vmatpush.bf16.msra.mxu0 %v4158
    %4236 = vmatpush.bf16.msra.mxu0 %v4154
    %4237 = vmatpush.bf16.msra.mxu0 %v4150
    %4238 = vmatpush.bf16.msra.mxu0 %v4146
    %4239 = vmatpush.bf16.msra.mxu0 %v4142
    %4240 = vmatpush.bf16.msra.mxu0 %v4138
    %4241 = vmatpush.bf16.msra.mxu0 %v4134
    %4242 = vmatmul.bf16.gmra.mxu0 %v4002
    %v4243 = vpop.f32.mrf.mxu0
    %v4244 = vadd.f32 0.0, %v4243
    %v4245 = vpop.f32.mrf.mxu0
    %4246 = vdwg.mxu0
    %v4247 = vadd.f32 %v3157, %v4205
    %v4248 = vadd.f32 %v3170, %v4218
    %v4249 = vadd.f32 %v3183, %v4231
    %v4250 = vadd.f32 %v3196, %v4244
    %v4251 = vmul.f32 %v4247, 0.5
    %v4252 = vtanh.pop %v4251
    %v4253 = vmul.f32 %v4252, 0.5
    %v4254 = vadd.f32 %v4253, 0.5
    %v4255 = vmul.f32 %v4248, 0.5
    %v4256 = vtanh.pop %v4255
    %v4257 = vmul.f32 %v4256, 0.5
    %v4258 = vadd.f32 %v4257, 0.5
    %v4259 = vtanh.pop %v4249
    %v4260 = vmul.f32 %v4250, 0.5
    %v4261 = vtanh.pop %v4260
    %v4262 = vmul.f32 %v4261, 0.5
    %v4263 = vadd.f32 %v4262, 0.5
    %v4264 = vmul.f32 %v4258, %v3998
    %v4265 = vmul.f32 %v4254, %v4259
    %v4266 = vadd.f32 %v4264, %v4265
    %v4267 = vtanh.pop %v4266
    %v4268 = vmul.f32 %v4263, %v4267
    %4269 = vst [vmem:[#allocation2 + $0x18] sm:$0xff] %v4268
    %v4270 = vpack.c.bf16 %v4268, %v4268
    %v4271 = vld [vmem:[%s5] sm:$0xff]
    %v4272 = vld [vmem:[%s5 + $0x8] sm:$0xff]
    %v4273 = vld [vmem:[%s5 + $0x10] sm:$0xff]
    %v4274 = vld [vmem:[%s5 + $0x18] sm:$0xff]
    %v4275 = vld [vmem:[%s5 + $0x20] sm:$0xff]
    %v4276 = vld [vmem:[%s5 + $0x28] sm:$0xff]
    %v4277 = vld [vmem:[%s5 + $0x30] sm:$0xff]
    %v4278 = vld [vmem:[%s5 + $0x38] sm:$0xff]
    %v4279 = vld [vmem:[%s5 + $0x40] sm:$0xff]
    %v4280 = vld [vmem:[%s5 + $0x48] sm:$0xff]
    %v4281 = vld [vmem:[%s5 + $0x50] sm:$0xff]
    %v4282 = vld [vmem:[%s5 + $0x58] sm:$0xff]
    %v4283 = vld [vmem:[%s5 + $0x60] sm:$0xff]
    %v4284 = vld [vmem:[%s5 + $0x68] sm:$0xff]
    %v4285 = vld [vmem:[%s5 + $0x70] sm:$0xff]
    %v4286 = vld [vmem:[%s5 + $0x78] sm:$0xff]
    %v4287 = vld [vmem:[%s5 + $0x80] sm:$0xff]
    %v4288 = vld [vmem:[%s5 + $0x88] sm:$0xff]
    %v4289 = vld [vmem:[%s5 + $0x90] sm:$0xff]
    %v4290 = vld [vmem:[%s5 + $0x98] sm:$0xff]
    %v4291 = vld [vmem:[%s5 + $0xa0] sm:$0xff]
    %v4292 = vld [vmem:[%s5 + $0xa8] sm:$0xff]
    %v4293 = vld [vmem:[%s5 + $0xb0] sm:$0xff]
    %v4294 = vld [vmem:[%s5 + $0xb8] sm:$0xff]
    %v4295 = vld [vmem:[%s5 + $0xc0] sm:$0xff]
    %v4296 = vld [vmem:[%s5 + $0xc8] sm:$0xff]
    %v4297 = vld [vmem:[%s5 + $0xd0] sm:$0xff]
    %v4298 = vld [vmem:[%s5 + $0xd8] sm:$0xff]
    %v4299 = vld [vmem:[%s5 + $0xe0] sm:$0xff]
    %v4300 = vld [vmem:[%s5 + $0xe8] sm:$0xff]
    %v4301 = vld [vmem:[%s5 + $0xf0] sm:$0xff]
    %v4302 = vld [vmem:[%s5 + $0xf8] sm:$0xff]
    %v4335 = vunpack.c.l.b16 %v4271
    %v4336 = vunpack.c.h.b16 %v4271
    %v4337 = vunpack.c.l.b16 %v4272
    %v4338 = vunpack.c.h.b16 %v4272
    %v4339 = vunpack.c.l.b16 %v4273
    %v4340 = vunpack.c.h.b16 %v4273
    %v4341 = vunpack.c.l.b16 %v4274
    %v4342 = vunpack.c.h.b16 %v4274
    %v4343 = vunpack.c.l.b16 %v4275
    %v4344 = vunpack.c.h.b16 %v4275
    %v4345 = vunpack.c.l.b16 %v4276
    %v4346 = vunpack.c.h.b16 %v4276
    %v4347 = vunpack.c.l.b16 %v4277
    %v4348 = vunpack.c.h.b16 %v4277
    %v4349 = vunpack.c.l.b16 %v4278
    %v4350 = vunpack.c.h.b16 %v4278
    %v4351 = vunpack.c.l.b16 %v4279
    %v4352 = vunpack.c.h.b16 %v4279
    %v4353 = vunpack.c.l.b16 %v4280
    %v4354 = vunpack.c.h.b16 %v4280
    %v4355 = vunpack.c.l.b16 %v4281
    %v4356 = vunpack.c.h.b16 %v4281
    %v4357 = vunpack.c.l.b16 %v4282
    %v4358 = vunpack.c.h.b16 %v4282
    %v4359 = vunpack.c.l.b16 %v4283
    %v4360 = vunpack.c.h.b16 %v4283
    %v4361 = vunpack.c.l.b16 %v4284
    %v4362 = vunpack.c.h.b16 %v4284
    %v4363 = vunpack.c.l.b16 %v4285
    %v4364 = vunpack.c.h.b16 %v4285
    %v4365 = vunpack.c.l.b16 %v4286
    %v4366 = vunpack.c.h.b16 %v4286
    %v4367 = vunpack.c.l.b16 %v4287
    %v4368 = vunpack.c.h.b16 %v4287
    %v4369 = vunpack.c.l.b16 %v4288
    %v4370 = vunpack.c.h.b16 %v4288
    %v4371 = vunpack.c.l.b16 %v4289
    %v4372 = vunpack.c.h.b16 %v4289
    %v4373 = vunpack.c.l.b16 %v4290
    %v4374 = vunpack.c.h.b16 %v4290
    %v4375 = vunpack.c.l.b16 %v4291
    %v4376 = vunpack.c.h.b16 %v4291
    %v4377 = vunpack.c.l.b16 %v4292
    %v4378 = vunpack.c.h.b16 %v4292
    %v4379 = vunpack.c.l.b16 %v4293
    %v4380 = vunpack.c.h.b16 %v4293
    %v4381 = vunpack.c.l.b16 %v4294
    %v4382 = vunpack.c.h.b16 %v4294
    %v4383 = vunpack.c.l.b16 %v4295
    %v4384 = vunpack.c.h.b16 %v4295
    %v4385 = vunpack.c.l.b16 %v4296
    %v4386 = vunpack.c.h.b16 %v4296
    %v4387 = vunpack.c.l.b16 %v4297
    %v4388 = vunpack.c.h.b16 %v4297
    %v4389 = vunpack.c.l.b16 %v4298
    %v4390 = vunpack.c.h.b16 %v4298
    %v4391 = vunpack.c.l.b16 %v4299
    %v4392 = vunpack.c.h.b16 %v4299
    %v4393 = vunpack.c.l.b16 %v4300
    %v4394 = vunpack.c.h.b16 %v4300
    %v4395 = vunpack.c.l.b16 %v4301
    %v4396 = vunpack.c.h.b16 %v4301
    %v4397 = vunpack.c.l.b16 %v4302
    %v4398 = vunpack.c.h.b16 %v4302
    %v4399 = vpack.c.b16 %v4339, %v4335
    %v4400 = vpack.c.b16 %v4340, %v4336
    %v4401 = vpack.c.b16 %v4341, %v4337
    %v4402 = vpack.c.b16 %v4342, %v4338
    %v4403 = vpack.c.b16 %v4347, %v4343
    %v4404 = vpack.c.b16 %v4348, %v4344
    %v4405 = vpack.c.b16 %v4349, %v4345
    %v4406 = vpack.c.b16 %v4350, %v4346
    %v4407 = vpack.c.b16 %v4355, %v4351
    %v4408 = vpack.c.b16 %v4356, %v4352
    %v4409 = vpack.c.b16 %v4357, %v4353
    %v4410 = vpack.c.b16 %v4358, %v4354
    %v4411 = vpack.c.b16 %v4363, %v4359
    %v4412 = vpack.c.b16 %v4364, %v4360
    %v4413 = vpack.c.b16 %v4365, %v4361
    %v4414 = vpack.c.b16 %v4366, %v4362
    %v4415 = vpack.c.b16 %v4371, %v4367
    %v4416 = vpack.c.b16 %v4372, %v4368
    %v4417 = vpack.c.b16 %v4373, %v4369
    %v4418 = vpack.c.b16 %v4374, %v4370
    %v4419 = vpack.c.b16 %v4379, %v4375
    %v4420 = vpack.c.b16 %v4380, %v4376
    %v4421 = vpack.c.b16 %v4381, %v4377
    %v4422 = vpack.c.b16 %v4382, %v4378
    %v4423 = vpack.c.b16 %v4387, %v4383
    %v4424 = vpack.c.b16 %v4388, %v4384
    %v4425 = vpack.c.b16 %v4389, %v4385
    %v4426 = vpack.c.b16 %v4390, %v4386
    %v4427 = vpack.c.b16 %v4395, %v4391
    %v4428 = vpack.c.b16 %v4396, %v4392
    %v4429 = vpack.c.b16 %v4397, %v4393
    %v4430 = vpack.c.b16 %v4398, %v4394
    %4463 = vmatpush.bf16.msra.mxu0 %v4427
    %4464 = vmatpush.bf16.msra.mxu0 %v4423
    %4465 = vmatpush.bf16.msra.mxu0 %v4419
    %4466 = vmatpush.bf16.msra.mxu0 %v4415
    %4467 = vmatpush.bf16.msra.mxu0 %v4411
    %4468 = vmatpush.bf16.msra.mxu0 %v4407
    %4469 = vmatpush.bf16.msra.mxu0 %v4403
    %4470 = vmatpush.bf16.msra.mxu0 %v4399
    %4471 = vmatmul.bf16.gmra.mxu0 %v4270
    %v4472 = vpop.f32.mrf.mxu0
    %v4473 = vadd.f32 0.0, %v4472
    %v4474 = vpop.f32.mrf.mxu0
    %4475 = vdwg.mxu0
    %4476 = vmatpush.bf16.msra.mxu0 %v4428
    %4477 = vmatpush.bf16.msra.mxu0 %v4424
    %4478 = vmatpush.bf16.msra.mxu0 %v4420
    %4479 = vmatpush.bf16.msra.mxu0 %v4416
    %4480 = vmatpush.bf16.msra.mxu0 %v4412
    %4481 = vmatpush.bf16.msra.mxu0 %v4408
    %4482 = vmatpush.bf16.msra.mxu0 %v4404
    %4483 = vmatpush.bf16.msra.mxu0 %v4400
    %4484 = vmatmul.bf16.gmra.mxu0 %v4270
    %v4485 = vpop.f32.mrf.mxu0
    %v4486 = vadd.f32 0.0, %v4485
    %v4487 = vpop.f32.mrf.mxu0
    %4488 = vdwg.mxu0
    %4489 = vmatpush.bf16.msra.mxu0 %v4429
    %4490 = vmatpush.bf16.msra.mxu0 %v4425
    %4491 = vmatpush.bf16.msra.mxu0 %v4421
    %4492 = vmatpush.bf16.msra.mxu0 %v4417
    %4493 = vmatpush.bf16.msra.mxu0 %v4413
    %4494 = vmatpush.bf16.msra.mxu0 %v4409
    %4495 = vmatpush.bf16.msra.mxu0 %v4405
    %4496 = vmatpush.bf16.msra.mxu0 %v4401
    %4497 = vmatmul.bf16.gmra.mxu0 %v4270
    %v4498 = vpop.f32.mrf.mxu0
    %v4499 = vadd.f32 0.0, %v4498
    %v4500 = vpop.f32.mrf.mxu0
    %4501 = vdwg.mxu0
    %4502 = vmatpush.bf16.msra.mxu0 %v4430
    %4503 = vmatpush.bf16.msra.mxu0 %v4426
    %4504 = vmatpush.bf16.msra.mxu0 %v4422
    %4505 = vmatpush.bf16.msra.mxu0 %v4418
    %4506 = vmatpush.bf16.msra.mxu0 %v4414
    %4507 = vmatpush.bf16.msra.mxu0 %v4410
    %4508 = vmatpush.bf16.msra.mxu0 %v4406
    %4509 = vmatpush.bf16.msra.mxu0 %v4402
    %4510 = vmatmul.bf16.gmra.mxu0 %v4270
    %v4511 = vpop.f32.mrf.mxu0
    %v4512 = vadd.f32 0.0, %v4511
    %v4513 = vpop.f32.mrf.mxu0
    %4514 = vdwg.mxu0
    %v4515 = vadd.f32 %v3157, %v4473
    %v4516 = vadd.f32 %v3170, %v4486
    %v4517 = vadd.f32 %v3183, %v4499
    %v4518 = vadd.f32 %v3196, %v4512
    %v4519 = vmul.f32 %v4515, 0.5
    %v4520 = vtanh.pop %v4519
    %v4521 = vmul.f32 %v4520, 0.5
    %v4522 = vadd.f32 %v4521, 0.5
    %v4523 = vmul.f32 %v4516, 0.5
    %v4524 = vtanh.pop %v4523
    %v4525 = vmul.f32 %v4524, 0.5
    %v4526 = vadd.f32 %v4525, 0.5
    %v4527 = vtanh.pop %v4517
    %v4528 = vmul.f32 %v4518, 0.5
    %v4529 = vtanh.pop %v4528
    %v4530 = vmul.f32 %v4529, 0.5
    %v4531 = vadd.f32 %v4530, 0.5
    %v4532 = vmul.f32 %v4526, %v4266
    %v4533 = vmul.f32 %v4522, %v4527
    %v4534 = vadd.f32 %v4532, %v4533
    %v4535 = vtanh.pop %v4534
    %v4536 = vmul.f32 %v4531, %v4535
    %4537 = vst [vmem:[#allocation2 + $0x20] sm:$0xff] %v4536
    %v4538 = vpack.c.bf16 %v4536, %v4536
    %v4539 = vld [vmem:[%s5] sm:$0xff]
    %v4540 = vld [vmem:[%s5 + $0x8] sm:$0xff]
    %v4541 = vld [vmem:[%s5 + $0x10] sm:$0xff]
    %v4542 = vld [vmem:[%s5 + $0x18] sm:$0xff]
    %v4543 = vld [vmem:[%s5 + $0x20] sm:$0xff]
    %v4544 = vld [vmem:[%s5 + $0x28] sm:$0xff]
    %v4545 = vld [vmem:[%s5 + $0x30] sm:$0xff]
    %v4546 = vld [vmem:[%s5 + $0x38] sm:$0xff]
    %v4547 = vld [vmem:[%s5 + $0x40] sm:$0xff]
    %v4548 = vld [vmem:[%s5 + $0x48] sm:$0xff]
    %v4549 = vld [vmem:[%s5 + $0x50] sm:$0xff]
    %v4550 = vld [vmem:[%s5 + $0x58] sm:$0xff]
    %v4551 = vld [vmem:[%s5 + $0x60] sm:$0xff]
    %v4552 = vld [vmem:[%s5 + $0x68] sm:$0xff]
    %v4553 = vld [vmem:[%s5 + $0x70] sm:$0xff]
    %v4554 = vld [vmem:[%s5 + $0x78] sm:$0xff]
    %v4555 = vld [vmem:[%s5 + $0x80] sm:$0xff]
    %v4556 = vld [vmem:[%s5 + $0x88] sm:$0xff]
    %v4557 = vld [vmem:[%s5 + $0x90] sm:$0xff]
    %v4558 = vld [vmem:[%s5 + $0x98] sm:$0xff]
    %v4559 = vld [vmem:[%s5 + $0xa0] sm:$0xff]
    %v4560 = vld [vmem:[%s5 + $0xa8] sm:$0xff]
    %v4561 = vld [vmem:[%s5 + $0xb0] sm:$0xff]
    %v4562 = vld [vmem:[%s5 + $0xb8] sm:$0xff]
    %v4563 = vld [vmem:[%s5 + $0xc0] sm:$0xff]
    %v4564 = vld [vmem:[%s5 + $0xc8] sm:$0xff]
    %v4565 = vld [vmem:[%s5 + $0xd0] sm:$0xff]
    %v4566 = vld [vmem:[%s5 + $0xd8] sm:$0xff]
    %v4567 = vld [vmem:[%s5 + $0xe0] sm:$0xff]
    %v4568 = vld [vmem:[%s5 + $0xe8] sm:$0xff]
    %v4569 = vld [vmem:[%s5 + $0xf0] sm:$0xff]
    %v4570 = vld [vmem:[%s5 + $0xf8] sm:$0xff]
    %v4603 = vunpack.c.l.b16 %v4539
    %v4604 = vunpack.c.h.b16 %v4539
    %v4605 = vunpack.c.l.b16 %v4540
    %v4606 = vunpack.c.h.b16 %v4540
    %v4607 = vunpack.c.l.b16 %v4541
    %v4608 = vunpack.c.h.b16 %v4541
    %v4609 = vunpack.c.l.b16 %v4542
    %v4610 = vunpack.c.h.b16 %v4542
    %v4611 = vunpack.c.l.b16 %v4543
    %v4612 = vunpack.c.h.b16 %v4543
    %v4613 = vunpack.c.l.b16 %v4544
    %v4614 = vunpack.c.h.b16 %v4544
    %v4615 = vunpack.c.l.b16 %v4545
    %v4616 = vunpack.c.h.b16 %v4545
    %v4617 = vunpack.c.l.b16 %v4546
    %v4618 = vunpack.c.h.b16 %v4546
    %v4619 = vunpack.c.l.b16 %v4547
    %v4620 = vunpack.c.h.b16 %v4547
    %v4621 = vunpack.c.l.b16 %v4548
    %v4622 = vunpack.c.h.b16 %v4548
    %v4623 = vunpack.c.l.b16 %v4549
    %v4624 = vunpack.c.h.b16 %v4549
    %v4625 = vunpack.c.l.b16 %v4550
    %v4626 = vunpack.c.h.b16 %v4550
    %v4627 = vunpack.c.l.b16 %v4551
    %v4628 = vunpack.c.h.b16 %v4551
    %v4629 = vunpack.c.l.b16 %v4552
    %v4630 = vunpack.c.h.b16 %v4552
    %v4631 = vunpack.c.l.b16 %v4553
    %v4632 = vunpack.c.h.b16 %v4553
    %v4633 = vunpack.c.l.b16 %v4554
    %v4634 = vunpack.c.h.b16 %v4554
    %v4635 = vunpack.c.l.b16 %v4555
    %v4636 = vunpack.c.h.b16 %v4555
    %v4637 = vunpack.c.l.b16 %v4556
    %v4638 = vunpack.c.h.b16 %v4556
    %v4639 = vunpack.c.l.b16 %v4557
    %v4640 = vunpack.c.h.b16 %v4557
    %v4641 = vunpack.c.l.b16 %v4558
    %v4642 = vunpack.c.h.b16 %v4558
    %v4643 = vunpack.c.l.b16 %v4559
    %v4644 = vunpack.c.h.b16 %v4559
    %v4645 = vunpack.c.l.b16 %v4560
    %v4646 = vunpack.c.h.b16 %v4560
    %v4647 = vunpack.c.l.b16 %v4561
    %v4648 = vunpack.c.h.b16 %v4561
    %v4649 = vunpack.c.l.b16 %v4562
    %v4650 = vunpack.c.h.b16 %v4562
    %v4651 = vunpack.c.l.b16 %v4563
    %v4652 = vunpack.c.h.b16 %v4563
    %v4653 = vunpack.c.l.b16 %v4564
    %v4654 = vunpack.c.h.b16 %v4564
    %v4655 = vunpack.c.l.b16 %v4565
    %v4656 = vunpack.c.h.b16 %v4565
    %v4657 = vunpack.c.l.b16 %v4566
    %v4658 = vunpack.c.h.b16 %v4566
    %v4659 = vunpack.c.l.b16 %v4567
    %v4660 = vunpack.c.h.b16 %v4567
    %v4661 = vunpack.c.l.b16 %v4568
    %v4662 = vunpack.c.h.b16 %v4568
    %v4663 = vunpack.c.l.b16 %v4569
    %v4664 = vunpack.c.h.b16 %v4569
    %v4665 = vunpack.c.l.b16 %v4570
    %v4666 = vunpack.c.h.b16 %v4570
    %v4667 = vpack.c.b16 %v4607, %v4603
    %v4668 = vpack.c.b16 %v4608, %v4604
    %v4669 = vpack.c.b16 %v4609, %v4605
    %v4670 = vpack.c.b16 %v4610, %v4606
    %v4671 = vpack.c.b16 %v4615, %v4611
    %v4672 = vpack.c.b16 %v4616, %v4612
    %v4673 = vpack.c.b16 %v4617, %v4613
    %v4674 = vpack.c.b16 %v4618, %v4614
    %v4675 = vpack.c.b16 %v4623, %v4619
    %v4676 = vpack.c.b16 %v4624, %v4620
    %v4677 = vpack.c.b16 %v4625, %v4621
    %v4678 = vpack.c.b16 %v4626, %v4622
    %v4679 = vpack.c.b16 %v4631, %v4627
    %v4680 = vpack.c.b16 %v4632, %v4628
    %v4681 = vpack.c.b16 %v4633, %v4629
    %v4682 = vpack.c.b16 %v4634, %v4630
    %v4683 = vpack.c.b16 %v4639, %v4635
    %v4684 = vpack.c.b16 %v4640, %v4636
    %v4685 = vpack.c.b16 %v4641, %v4637
    %v4686 = vpack.c.b16 %v4642, %v4638
    %v4687 = vpack.c.b16 %v4647, %v4643
    %v4688 = vpack.c.b16 %v4648, %v4644
    %v4689 = vpack.c.b16 %v4649, %v4645
    %v4690 = vpack.c.b16 %v4650, %v4646
    %v4691 = vpack.c.b16 %v4655, %v4651
    %v4692 = vpack.c.b16 %v4656, %v4652
    %v4693 = vpack.c.b16 %v4657, %v4653
    %v4694 = vpack.c.b16 %v4658, %v4654
    %v4695 = vpack.c.b16 %v4663, %v4659
    %v4696 = vpack.c.b16 %v4664, %v4660
    %v4697 = vpack.c.b16 %v4665, %v4661
    %v4698 = vpack.c.b16 %v4666, %v4662
    %4731 = vmatpush.bf16.msra.mxu0 %v4695
    %4732 = vmatpush.bf16.msra.mxu0 %v4691
    %4733 = vmatpush.bf16.msra.mxu0 %v4687
    %4734 = vmatpush.bf16.msra.mxu0 %v4683
    %4735 = vmatpush.bf16.msra.mxu0 %v4679
    %4736 = vmatpush.bf16.msra.mxu0 %v4675
    %4737 = vmatpush.bf16.msra.mxu0 %v4671
    %4738 = vmatpush.bf16.msra.mxu0 %v4667
    %4739 = vmatmul.bf16.gmra.mxu0 %v4538
    %v4740 = vpop.f32.mrf.mxu0
    %v4741 = vadd.f32 0.0, %v4740
    %v4742 = vpop.f32.mrf.mxu0
    %4743 = vdwg.mxu0
    %4744 = vmatpush.bf16.msra.mxu0 %v4696
    %4745 = vmatpush.bf16.msra.mxu0 %v4692
    %4746 = vmatpush.bf16.msra.mxu0 %v4688
    %4747 = vmatpush.bf16.msra.mxu0 %v4684
    %4748 = vmatpush.bf16.msra.mxu0 %v4680
    %4749 = vmatpush.bf16.msra.mxu0 %v4676
    %4750 = vmatpush.bf16.msra.mxu0 %v4672
    %4751 = vmatpush.bf16.msra.mxu0 %v4668
    %4752 = vmatmul.bf16.gmra.mxu0 %v4538
    %v4753 = vpop.f32.mrf.mxu0
    %v4754 = vadd.f32 0.0, %v4753
    %v4755 = vpop.f32.mrf.mxu0
    %4756 = vdwg.mxu0
    %4757 = vmatpush.bf16.msra.mxu0 %v4697
    %4758 = vmatpush.bf16.msra.mxu0 %v4693
    %4759 = vmatpush.bf16.msra.mxu0 %v4689
    %4760 = vmatpush.bf16.msra.mxu0 %v4685
    %4761 = vmatpush.bf16.msra.mxu0 %v4681
    %4762 = vmatpush.bf16.msra.mxu0 %v4677
    %4763 = vmatpush.bf16.msra.mxu0 %v4673
    %4764 = vmatpush.bf16.msra.mxu0 %v4669
    %4765 = vmatmul.bf16.gmra.mxu0 %v4538
    %v4766 = vpop.f32.mrf.mxu0
    %v4767 = vadd.f32 0.0, %v4766
    %v4768 = vpop.f32.mrf.mxu0
    %4769 = vdwg.mxu0
    %4770 = vmatpush.bf16.msra.mxu0 %v4698
    %4771 = vmatpush.bf16.msra.mxu0 %v4694
    %4772 = vmatpush.bf16.msra.mxu0 %v4690
    %4773 = vmatpush.bf16.msra.mxu0 %v4686
    %4774 = vmatpush.bf16.msra.mxu0 %v4682
    %4775 = vmatpush.bf16.msra.mxu0 %v4678
    %4776 = vmatpush.bf16.msra.mxu0 %v4674
    %4777 = vmatpush.bf16.msra.mxu0 %v4670
    %4778 = vmatmul.bf16.gmra.mxu0 %v4538
    %v4779 = vpop.f32.mrf.mxu0
    %v4780 = vadd.f32 0.0, %v4779
    %v4781 = vpop.f32.mrf.mxu0
    %4782 = vdwg.mxu0
    %v4783 = vadd.f32 %v3157, %v4741
    %v4784 = vadd.f32 %v3170, %v4754
    %v4785 = vadd.f32 %v3183, %v4767
    %v4786 = vadd.f32 %v3196, %v4780
    %v4787 = vmul.f32 %v4783, 0.5
    %v4788 = vtanh.pop %v4787
    %v4789 = vmul.f32 %v4788, 0.5
    %v4790 = vadd.f32 %v4789, 0.5
    %v4791 = vmul.f32 %v4784, 0.5
    %v4792 = vtanh.pop %v4791
    %v4793 = vmul.f32 %v4792, 0.5
    %v4794 = vadd.f32 %v4793, 0.5
    %v4795 = vtanh.pop %v4785
    %v4796 = vmul.f32 %v4786, 0.5
    %v4797 = vtanh.pop %v4796
    %v4798 = vmul.f32 %v4797, 0.5
    %v4799 = vadd.f32 %v4798, 0.5
    %v4800 = vmul.f32 %v4794, %v4534
    %v4801 = vmul.f32 %v4790, %v4795
    %v4802 = vadd.f32 %v4800, %v4801
    %v4803 = vtanh.pop %v4802
    %v4804 = vmul.f32 %v4799, %v4803
    %4805 = vst [vmem:[#allocation2 + $0x28] sm:$0xff] %v4804
    %v4806 = vpack.c.bf16 %v4804, %v4804
    %v4807 = vld [vmem:[%s5] sm:$0xff]
    %v4808 = vld [vmem:[%s5 + $0x8] sm:$0xff]
    %v4809 = vld [vmem:[%s5 + $0x10] sm:$0xff]
    %v4810 = vld [vmem:[%s5 + $0x18] sm:$0xff]
    %v4811 = vld [vmem:[%s5 + $0x20] sm:$0xff]
    %v4812 = vld [vmem:[%s5 + $0x28] sm:$0xff]
    %v4813 = vld [vmem:[%s5 + $0x30] sm:$0xff]
    %v4814 = vld [vmem:[%s5 + $0x38] sm:$0xff]
    %v4815 = vld [vmem:[%s5 + $0x40] sm:$0xff]
    %v4816 = vld [vmem:[%s5 + $0x48] sm:$0xff]
    %v4817 = vld [vmem:[%s5 + $0x50] sm:$0xff]
    %v4818 = vld [vmem:[%s5 + $0x58] sm:$0xff]
    %v4819 = vld [vmem:[%s5 + $0x60] sm:$0xff]
    %v4820 = vld [vmem:[%s5 + $0x68] sm:$0xff]
    %v4821 = vld [vmem:[%s5 + $0x70] sm:$0xff]
    %v4822 = vld [vmem:[%s5 + $0x78] sm:$0xff]
    %v4823 = vld [vmem:[%s5 + $0x80] sm:$0xff]
    %v4824 = vld [vmem:[%s5 + $0x88] sm:$0xff]
    %v4825 = vld [vmem:[%s5 + $0x90] sm:$0xff]
    %v4826 = vld [vmem:[%s5 + $0x98] sm:$0xff]
    %v4827 = vld [vmem:[%s5 + $0xa0] sm:$0xff]
    %v4828 = vld [vmem:[%s5 + $0xa8] sm:$0xff]
    %v4829 = vld [vmem:[%s5 + $0xb0] sm:$0xff]
    %v4830 = vld [vmem:[%s5 + $0xb8] sm:$0xff]
    %v4831 = vld [vmem:[%s5 + $0xc0] sm:$0xff]
    %v4832 = vld [vmem:[%s5 + $0xc8] sm:$0xff]
    %v4833 = vld [vmem:[%s5 + $0xd0] sm:$0xff]
    %v4834 = vld [vmem:[%s5 + $0xd8] sm:$0xff]
    %v4835 = vld [vmem:[%s5 + $0xe0] sm:$0xff]
    %v4836 = vld [vmem:[%s5 + $0xe8] sm:$0xff]
    %v4837 = vld [vmem:[%s5 + $0xf0] sm:$0xff]
    %v4838 = vld [vmem:[%s5 + $0xf8] sm:$0xff]
    %v4871 = vunpack.c.l.b16 %v4807
    %v4872 = vunpack.c.h.b16 %v4807
    %v4873 = vunpack.c.l.b16 %v4808
    %v4874 = vunpack.c.h.b16 %v4808
    %v4875 = vunpack.c.l.b16 %v4809
    %v4876 = vunpack.c.h.b16 %v4809
    %v4877 = vunpack.c.l.b16 %v4810
    %v4878 = vunpack.c.h.b16 %v4810
    %v4879 = vunpack.c.l.b16 %v4811
    %v4880 = vunpack.c.h.b16 %v4811
    %v4881 = vunpack.c.l.b16 %v4812
    %v4882 = vunpack.c.h.b16 %v4812
    %v4883 = vunpack.c.l.b16 %v4813
    %v4884 = vunpack.c.h.b16 %v4813
    %v4885 = vunpack.c.l.b16 %v4814
    %v4886 = vunpack.c.h.b16 %v4814
    %v4887 = vunpack.c.l.b16 %v4815
    %v4888 = vunpack.c.h.b16 %v4815
    %v4889 = vunpack.c.l.b16 %v4816
    %v4890 = vunpack.c.h.b16 %v4816
    %v4891 = vunpack.c.l.b16 %v4817
    %v4892 = vunpack.c.h.b16 %v4817
    %v4893 = vunpack.c.l.b16 %v4818
    %v4894 = vunpack.c.h.b16 %v4818
    %v4895 = vunpack.c.l.b16 %v4819
    %v4896 = vunpack.c.h.b16 %v4819
    %v4897 = vunpack.c.l.b16 %v4820
    %v4898 = vunpack.c.h.b16 %v4820
    %v4899 = vunpack.c.l.b16 %v4821
    %v4900 = vunpack.c.h.b16 %v4821
    %v4901 = vunpack.c.l.b16 %v4822
    %v4902 = vunpack.c.h.b16 %v4822
    %v4903 = vunpack.c.l.b16 %v4823
    %v4904 = vunpack.c.h.b16 %v4823
    %v4905 = vunpack.c.l.b16 %v4824
    %v4906 = vunpack.c.h.b16 %v4824
    %v4907 = vunpack.c.l.b16 %v4825
    %v4908 = vunpack.c.h.b16 %v4825
    %v4909 = vunpack.c.l.b16 %v4826
    %v4910 = vunpack.c.h.b16 %v4826
    %v4911 = vunpack.c.l.b16 %v4827
    %v4912 = vunpack.c.h.b16 %v4827
    %v4913 = vunpack.c.l.b16 %v4828
    %v4914 = vunpack.c.h.b16 %v4828
    %v4915 = vunpack.c.l.b16 %v4829
    %v4916 = vunpack.c.h.b16 %v4829
    %v4917 = vunpack.c.l.b16 %v4830
    %v4918 = vunpack.c.h.b16 %v4830
    %v4919 = vunpack.c.l.b16 %v4831
    %v4920 = vunpack.c.h.b16 %v4831
    %v4921 = vunpack.c.l.b16 %v4832
    %v4922 = vunpack.c.h.b16 %v4832
    %v4923 = vunpack.c.l.b16 %v4833
    %v4924 = vunpack.c.h.b16 %v4833
    %v4925 = vunpack.c.l.b16 %v4834
    %v4926 = vunpack.c.h.b16 %v4834
    %v4927 = vunpack.c.l.b16 %v4835
    %v4928 = vunpack.c.h.b16 %v4835
    %v4929 = vunpack.c.l.b16 %v4836
    %v4930 = vunpack.c.h.b16 %v4836
    %v4931 = vunpack.c.l.b16 %v4837
    %v4932 = vunpack.c.h.b16 %v4837
    %v4933 = vunpack.c.l.b16 %v4838
    %v4934 = vunpack.c.h.b16 %v4838
    %v4935 = vpack.c.b16 %v4875, %v4871
    %v4936 = vpack.c.b16 %v4876, %v4872
    %v4937 = vpack.c.b16 %v4877, %v4873
    %v4938 = vpack.c.b16 %v4878, %v4874
    %v4939 = vpack.c.b16 %v4883, %v4879
    %v4940 = vpack.c.b16 %v4884, %v4880
    %v4941 = vpack.c.b16 %v4885, %v4881
    %v4942 = vpack.c.b16 %v4886, %v4882
    %v4943 = vpack.c.b16 %v4891, %v4887
    %v4944 = vpack.c.b16 %v4892, %v4888
    %v4945 = vpack.c.b16 %v4893, %v4889
    %v4946 = vpack.c.b16 %v4894, %v4890
    %v4947 = vpack.c.b16 %v4899, %v4895
    %v4948 = vpack.c.b16 %v4900, %v4896
    %v4949 = vpack.c.b16 %v4901, %v4897
    %v4950 = vpack.c.b16 %v4902, %v4898
    %v4951 = vpack.c.b16 %v4907, %v4903
    %v4952 = vpack.c.b16 %v4908, %v4904
    %v4953 = vpack.c.b16 %v4909, %v4905
    %v4954 = vpack.c.b16 %v4910, %v4906
    %v4955 = vpack.c.b16 %v4915, %v4911
    %v4956 = vpack.c.b16 %v4916, %v4912
    %v4957 = vpack.c.b16 %v4917, %v4913
    %v4958 = vpack.c.b16 %v4918, %v4914
    %v4959 = vpack.c.b16 %v4923, %v4919
    %v4960 = vpack.c.b16 %v4924, %v4920
    %v4961 = vpack.c.b16 %v4925, %v4921
    %v4962 = vpack.c.b16 %v4926, %v4922
    %v4963 = vpack.c.b16 %v4931, %v4927
    %v4964 = vpack.c.b16 %v4932, %v4928
    %v4965 = vpack.c.b16 %v4933, %v4929
    %v4966 = vpack.c.b16 %v4934, %v4930
    %4999 = vmatpush.bf16.msra.mxu0 %v4963
    %5000 = vmatpush.bf16.msra.mxu0 %v4959
    %5001 = vmatpush.bf16.msra.mxu0 %v4955
    %5002 = vmatpush.bf16.msra.mxu0 %v4951
    %5003 = vmatpush.bf16.msra.mxu0 %v4947
    %5004 = vmatpush.bf16.msra.mxu0 %v4943
    %5005 = vmatpush.bf16.msra.mxu0 %v4939
    %5006 = vmatpush.bf16.msra.mxu0 %v4935
    %5007 = vmatmul.bf16.gmra.mxu0 %v4806
    %v5008 = vpop.f32.mrf.mxu0
    %v5009 = vadd.f32 0.0, %v5008
    %v5010 = vpop.f32.mrf.mxu0
    %5011 = vdwg.mxu0
    %5012 = vmatpush.bf16.msra.mxu0 %v4964
    %5013 = vmatpush.bf16.msra.mxu0 %v4960
    %5014 = vmatpush.bf16.msra.mxu0 %v4956
    %5015 = vmatpush.bf16.msra.mxu0 %v4952
    %5016 = vmatpush.bf16.msra.mxu0 %v4948
    %5017 = vmatpush.bf16.msra.mxu0 %v4944
    %5018 = vmatpush.bf16.msra.mxu0 %v4940
    %5019 = vmatpush.bf16.msra.mxu0 %v4936
    %5020 = vmatmul.bf16.gmra.mxu0 %v4806
    %v5021 = vpop.f32.mrf.mxu0
    %v5022 = vadd.f32 0.0, %v5021
    %v5023 = vpop.f32.mrf.mxu0
    %5024 = vdwg.mxu0
    %5025 = vmatpush.bf16.msra.mxu0 %v4965
    %5026 = vmatpush.bf16.msra.mxu0 %v4961
    %5027 = vmatpush.bf16.msra.mxu0 %v4957
    %5028 = vmatpush.bf16.msra.mxu0 %v4953
    %5029 = vmatpush.bf16.msra.mxu0 %v4949
    %5030 = vmatpush.bf16.msra.mxu0 %v4945
    %5031 = vmatpush.bf16.msra.mxu0 %v4941
    %5032 = vmatpush.bf16.msra.mxu0 %v4937
    %5033 = vmatmul.bf16.gmra.mxu0 %v4806
    %v5034 = vpop.f32.mrf.mxu0
    %v5035 = vadd.f32 0.0, %v5034
    %v5036 = vpop.f32.mrf.mxu0
    %5037 = vdwg.mxu0
    %5038 = vmatpush.bf16.msra.mxu0 %v4966
    %5039 = vmatpush.bf16.msra.mxu0 %v4962
    %5040 = vmatpush.bf16.msra.mxu0 %v4958
    %5041 = vmatpush.bf16.msra.mxu0 %v4954
    %5042 = vmatpush.bf16.msra.mxu0 %v4950
    %5043 = vmatpush.bf16.msra.mxu0 %v4946
    %5044 = vmatpush.bf16.msra.mxu0 %v4942
    %5045 = vmatpush.bf16.msra.mxu0 %v4938
    %5046 = vmatmul.bf16.gmra.mxu0 %v4806
    %v5047 = vpop.f32.mrf.mxu0
    %v5048 = vadd.f32 0.0, %v5047
    %v5049 = vpop.f32.mrf.mxu0
    %5050 = vdwg.mxu0
    %v5051 = vadd.f32 %v3157, %v5009
    %v5052 = vadd.f32 %v3170, %v5022
    %v5053 = vadd.f32 %v3183, %v5035
    %v5054 = vadd.f32 %v3196, %v5048
    %v5055 = vmul.f32 %v5051, 0.5
    %v5056 = vtanh.pop %v5055
    %v5057 = vmul.f32 %v5056, 0.5
    %v5058 = vadd.f32 %v5057, 0.5
    %v5059 = vmul.f32 %v5052, 0.5
    %v5060 = vtanh.pop %v5059
    %v5061 = vmul.f32 %v5060, 0.5
    %v5062 = vadd.f32 %v5061, 0.5
    %v5063 = vtanh.pop %v5053
    %v5064 = vmul.f32 %v5054, 0.5
    %v5065 = vtanh.pop %v5064
    %v5066 = vmul.f32 %v5065, 0.5
    %v5067 = vadd.f32 %v5066, 0.5
    %v5068 = vmul.f32 %v5062, %v4802
    %v5069 = vmul.f32 %v5058, %v5063
    %v5070 = vadd.f32 %v5068, %v5069
    %v5071 = vtanh.pop %v5070
    %v5072 = vmul.f32 %v5067, %v5071
    %5073 = vst [vmem:[#allocation2 + $0x30] sm:$0xff] %v5072
    %v5074 = vld [vmem:[#allocation2] sm:$0xff]
    %v5075 = vld [vmem:[#allocation2 + $0x8] sm:$0xff]
    %v5076 = vld [vmem:[#allocation2 + $0x10] sm:$0xff]
    %v5077 = vld [vmem:[#allocation2 + $0x18] sm:$0xff]
    %v5078 = vld [vmem:[#allocation2 + $0x20] sm:$0xff]
    %v5079 = vld [vmem:[#allocation2 + $0x28] sm:$0xff]
    %v5080 = vld [vmem:[#allocation2 + $0x30] sm:$0xff]
    %v5081 = vpack.c.bf16 %v5074, %v5074
    %v5082 = vpack.c.bf16 %v5075, %v5075
    %v5083 = vpack.c.bf16 %v5076, %v5076
    %v5084 = vpack.c.bf16 %v5077, %v5077
    %v5085 = vpack.c.bf16 %v5078, %v5078
    %v5086 = vpack.c.bf16 %v5079, %v5079
    %v5087 = vpack.c.bf16 %v5080, %v5080
    %v5088 = vld [vmem:[%s7] sm:$0xf]
    %v5089 = vld [vmem:[%s7 + $0x4] sm:$0xf]
    %v5090 = vld [vmem:[%s7 + $0x8] sm:$0xf]
    %v5091 = vld [vmem:[%s7 + $0xc] sm:$0xf]
    %v5092 = vld [vmem:[%s7 + $0x10] sm:$0xf]
    %v5093 = vld [vmem:[%s7 + $0x14] sm:$0xf]
    %v5094 = vld [vmem:[%s7 + $0x18] sm:$0xf]
    %v5095 = vld [vmem:[%s7 + $0x1c] sm:$0xf]
    %v5096 = vld [vmem:[%s7 + $0x20] sm:$0xf]
    %v5097 = vld [vmem:[%s7 + $0x24] sm:$0xf]
    %v5098 = vld [vmem:[%s7 + $0x28] sm:$0xf]
    %v5099 = vld [vmem:[%s7 + $0x2c] sm:$0xf]
    %v5100 = vld [vmem:[%s7 + $0x30] sm:$0xf]
    %v5101 = vld [vmem:[%s7 + $0x34] sm:$0xf]
    %v5102 = vld [vmem:[%s7 + $0x38] sm:$0xf]
    %v5103 = vld [vmem:[%s7 + $0x3c] sm:$0xf]
    %v5104 = vld [vmem:[%s7 + $0x40] sm:$0xf]
    %v5105 = vld [vmem:[%s7 + $0x44] sm:$0xf]
    %v5106 = vld [vmem:[%s7 + $0x48] sm:$0xf]
    %v5107 = vld [vmem:[%s7 + $0x4c] sm:$0xf]
    %v5108 = vld [vmem:[%s7 + $0x50] sm:$0xf]
    %v5109 = vld [vmem:[%s7 + $0x54] sm:$0xf]
    %v5110 = vld [vmem:[%s7 + $0x58] sm:$0xf]
    %v5111 = vld [vmem:[%s7 + $0x5c] sm:$0xf]
    %v5112 = vld [vmem:[%s7 + $0x60] sm:$0xf]
    %v5113 = vld [vmem:[%s7 + $0x64] sm:$0xf]
    %v5114 = vld [vmem:[%s7 + $0x68] sm:$0xf]
    %v5115 = vld [vmem:[%s7 + $0x6c] sm:$0xf]
    %v5116 = vld [vmem:[%s7 + $0x70] sm:$0xf]
    %v5117 = vld [vmem:[%s7 + $0x74] sm:$0xf]
    %v5118 = vld [vmem:[%s7 + $0x78] sm:$0xf]
    %v5119 = vld [vmem:[%s7 + $0x7c] sm:$0xf]
    %v5120 = vld [vmem:[%s7 + $0x80] sm:$0xf]
    %v5121 = vld [vmem:[%s7 + $0x84] sm:$0xf]
    %v5122 = vld [vmem:[%s7 + $0x88] sm:$0xf]
    %v5123 = vld [vmem:[%s7 + $0x8c] sm:$0xf]
    %v5124 = vld [vmem:[%s7 + $0x90] sm:$0xf]
    %v5125 = vld [vmem:[%s7 + $0x94] sm:$0xf]
    %v5126 = vld [vmem:[%s7 + $0x98] sm:$0xf]
    %v5127 = vld [vmem:[%s7 + $0x9c] sm:$0xf]
    %v5128 = vld [vmem:[%s7 + $0xa0] sm:$0xf]
    %v5129 = vld [vmem:[%s7 + $0xa4] sm:$0xf]
    %v5130 = vld [vmem:[%s7 + $0xa8] sm:$0xf]
    %v5131 = vld [vmem:[%s7 + $0xac] sm:$0xf]
    %v5132 = vld [vmem:[%s7 + $0xb0] sm:$0xf]
    %v5133 = vld [vmem:[%s7 + $0xb4] sm:$0xf]
    %v5134 = vld [vmem:[%s7 + $0xb8] sm:$0xf]
    %v5135 = vld [vmem:[%s7 + $0xbc] sm:$0xf]
    %v5136 = vld [vmem:[%s7 + $0xc0] sm:$0xf]
    %v5137 = vld [vmem:[%s7 + $0xc4] sm:$0xf]
    %v5138 = vld [vmem:[%s7 + $0xc8] sm:$0xf]
    %v5139 = vld [vmem:[%s7 + $0xcc] sm:$0xf]
    %v5140 = vld [vmem:[%s7 + $0xd0] sm:$0xf]
    %v5141 = vld [vmem:[%s7 + $0xd4] sm:$0xf]
    %v5142 = vld [vmem:[%s7 + $0xd8] sm:$0xf]
    %v5143 = vld [vmem:[%s7 + $0xdc] sm:$0xf]
    %v5144 = vld [vmem:[%s7 + $0xe0] sm:$0xf]
    %v5145 = vld [vmem:[%s7 + $0xe4] sm:$0xf]
    %v5146 = vld [vmem:[%s7 + $0xe8] sm:$0xf]
    %v5147 = vld [vmem:[%s7 + $0xec] sm:$0xf]
    %v5148 = vld [vmem:[%s7 + $0xf0] sm:$0xf]
    %v5149 = vld [vmem:[%s7 + $0xf4] sm:$0xf]
    %v5150 = vld [vmem:[%s7 + $0xf8] sm:$0xf]
    %v5151 = vld [vmem:[%s7 + $0xfc] sm:$0xf]
    %v5152 = vld [vmem:[%s7 + $0x100] sm:$0xf]
    %v5153 = vld [vmem:[%s7 + $0x104] sm:$0xf]
    %v5154 = vld [vmem:[%s7 + $0x108] sm:$0xf]
    %v5155 = vld [vmem:[%s7 + $0x10c] sm:$0xf]
    %v5156 = vld [vmem:[%s7 + $0x110] sm:$0xf]
    %v5157 = vld [vmem:[%s7 + $0x114] sm:$0xf]
    %v5158 = vld [vmem:[%s7 + $0x118] sm:$0xf]
    %v5159 = vld [vmem:[%s7 + $0x11c] sm:$0xf]
    %v5160 = vld [vmem:[%s7 + $0x120] sm:$0xf]
    %v5161 = vld [vmem:[%s7 + $0x124] sm:$0xf]
    %v5162 = vld [vmem:[%s7 + $0x128] sm:$0xf]
    %v5163 = vld [vmem:[%s7 + $0x12c] sm:$0xf]
    %v5164 = vld [vmem:[%s7 + $0x130] sm:$0xf]
    %v5165 = vld [vmem:[%s7 + $0x134] sm:$0xf]
    %v5166 = vld [vmem:[%s7 + $0x138] sm:$0xf]
    %v5167 = vld [vmem:[%s7 + $0x13c] sm:$0xf]
    %v5168 = vld [vmem:[%s7 + $0x140] sm:$0xf]
    %v5169 = vld [vmem:[%s7 + $0x144] sm:$0xf]
    %v5170 = vld [vmem:[%s7 + $0x148] sm:$0xf]
    %v5171 = vld [vmem:[%s7 + $0x14c] sm:$0xf]
    %v5172 = vld [vmem:[%s7 + $0x150] sm:$0xf]
    %v5173 = vld [vmem:[%s7 + $0x154] sm:$0xf]
    %v5174 = vld [vmem:[%s7 + $0x158] sm:$0xf]
    %v5175 = vld [vmem:[%s7 + $0x15c] sm:$0xf]
    %v5176 = vld [vmem:[%s7 + $0x160] sm:$0xf]
    %v5177 = vld [vmem:[%s7 + $0x164] sm:$0xf]
    %v5178 = vld [vmem:[%s7 + $0x168] sm:$0xf]
    %v5179 = vld [vmem:[%s7 + $0x16c] sm:$0xf]
    %v5180 = vld [vmem:[%s7 + $0x170] sm:$0xf]
    %v5181 = vld [vmem:[%s7 + $0x174] sm:$0xf]
    %v5182 = vld [vmem:[%s7 + $0x178] sm:$0xf]
    %v5183 = vld [vmem:[%s7 + $0x17c] sm:$0xf]
    %v5184 = vld [vmem:[%s7 + $0x180] sm:$0xf]
    %v5185 = vld [vmem:[%s7 + $0x184] sm:$0xf]
    %v5186 = vld [vmem:[%s7 + $0x188] sm:$0xf]
    %v5187 = vld [vmem:[%s7 + $0x18c] sm:$0xf]
    %v5188 = vld [vmem:[%s7 + $0x190] sm:$0xf]
    %v5189 = vld [vmem:[%s7 + $0x194] sm:$0xf]
    %v5190 = vld [vmem:[%s7 + $0x198] sm:$0xf]
    %v5191 = vld [vmem:[%s7 + $0x19c] sm:$0xf]
    %v5192 = vld [vmem:[%s7 + $0x1a0] sm:$0xf]
    %v5193 = vld [vmem:[%s7 + $0x1a4] sm:$0xf]
    %v5194 = vld [vmem:[%s7 + $0x1a8] sm:$0xf]
    %v5195 = vld [vmem:[%s7 + $0x1ac] sm:$0xf]
    %v5196 = vld [vmem:[%s7 + $0x1b0] sm:$0xf]
    %v5197 = vld [vmem:[%s7 + $0x1b4] sm:$0xf]
    %v5198 = vld [vmem:[%s7 + $0x1b8] sm:$0xf]
    %v5199 = vld [vmem:[%s7 + $0x1bc] sm:$0xf]
    %v5200 = vld [vmem:[%s8] sm:$0x1]
    %v5202 = vperm.slane %v5200, 0
    %v5316 = vunpack.c.l.b16 %v5088
    %v5317 = vunpack.c.l.b16 %v5089
    %v5318 = vunpack.c.l.b16 %v5090
    %v5319 = vunpack.c.l.b16 %v5091
    %v5320 = vunpack.c.l.b16 %v5092
    %v5321 = vunpack.c.l.b16 %v5093
    %v5322 = vunpack.c.l.b16 %v5094
    %v5323 = vunpack.c.l.b16 %v5095
    %v5324 = vunpack.c.l.b16 %v5096
    %v5325 = vunpack.c.l.b16 %v5097
    %v5326 = vunpack.c.l.b16 %v5098
    %v5327 = vunpack.c.l.b16 %v5099
    %v5328 = vunpack.c.l.b16 %v5100
    %v5329 = vunpack.c.l.b16 %v5101
    %v5330 = vunpack.c.l.b16 %v5102
    %v5331 = vunpack.c.l.b16 %v5103
    %v5332 = vunpack.c.l.b16 %v5104
    %v5333 = vunpack.c.l.b16 %v5105
    %v5334 = vunpack.c.l.b16 %v5106
    %v5335 = vunpack.c.l.b16 %v5107
    %v5336 = vunpack.c.l.b16 %v5108
    %v5337 = vunpack.c.l.b16 %v5109
    %v5338 = vunpack.c.l.b16 %v5110
    %v5339 = vunpack.c.l.b16 %v5111
    %v5340 = vunpack.c.l.b16 %v5112
    %v5341 = vunpack.c.l.b16 %v5113
    %v5342 = vunpack.c.l.b16 %v5114
    %v5343 = vunpack.c.l.b16 %v5115
    %v5344 = vunpack.c.l.b16 %v5116
    %v5345 = vunpack.c.l.b16 %v5117
    %v5346 = vunpack.c.l.b16 %v5118
    %v5347 = vunpack.c.l.b16 %v5119
    %v5348 = vunpack.c.l.b16 %v5120
    %v5349 = vunpack.c.l.b16 %v5121
    %v5350 = vunpack.c.l.b16 %v5122
    %v5351 = vunpack.c.l.b16 %v5123
    %v5352 = vunpack.c.l.b16 %v5124
    %v5353 = vunpack.c.l.b16 %v5125
    %v5354 = vunpack.c.l.b16 %v5126
    %v5355 = vunpack.c.l.b16 %v5127
    %v5356 = vunpack.c.l.b16 %v5128
    %v5357 = vunpack.c.l.b16 %v5129
    %v5358 = vunpack.c.l.b16 %v5130
    %v5359 = vunpack.c.l.b16 %v5131
    %v5360 = vunpack.c.l.b16 %v5132
    %v5361 = vunpack.c.l.b16 %v5133
    %v5362 = vunpack.c.l.b16 %v5134
    %v5363 = vunpack.c.l.b16 %v5135
    %v5364 = vunpack.c.l.b16 %v5136
    %v5365 = vunpack.c.l.b16 %v5137
    %v5366 = vunpack.c.l.b16 %v5138
    %v5367 = vunpack.c.l.b16 %v5139
    %v5368 = vunpack.c.l.b16 %v5140
    %v5369 = vunpack.c.l.b16 %v5141
    %v5370 = vunpack.c.l.b16 %v5142
    %v5371 = vunpack.c.l.b16 %v5143
    %v5372 = vunpack.c.l.b16 %v5144
    %v5373 = vunpack.c.l.b16 %v5145
    %v5374 = vunpack.c.l.b16 %v5146
    %v5375 = vunpack.c.l.b16 %v5147
    %v5376 = vunpack.c.l.b16 %v5148
    %v5377 = vunpack.c.l.b16 %v5149
    %v5378 = vunpack.c.l.b16 %v5150
    %v5379 = vunpack.c.l.b16 %v5151
    %v5380 = vunpack.c.l.b16 %v5152
    %v5381 = vunpack.c.l.b16 %v5153
    %v5382 = vunpack.c.l.b16 %v5154
    %v5383 = vunpack.c.l.b16 %v5155
    %v5384 = vunpack.c.l.b16 %v5156
    %v5385 = vunpack.c.l.b16 %v5157
    %v5386 = vunpack.c.l.b16 %v5158
    %v5387 = vunpack.c.l.b16 %v5159
    %v5388 = vunpack.c.l.b16 %v5160
    %v5389 = vunpack.c.l.b16 %v5161
    %v5390 = vunpack.c.l.b16 %v5162
    %v5391 = vunpack.c.l.b16 %v5163
    %v5392 = vunpack.c.l.b16 %v5164
    %v5393 = vunpack.c.l.b16 %v5165
    %v5394 = vunpack.c.l.b16 %v5166
    %v5395 = vunpack.c.l.b16 %v5167
    %v5396 = vunpack.c.l.b16 %v5168
    %v5397 = vunpack.c.l.b16 %v5169
    %v5398 = vunpack.c.l.b16 %v5170
    %v5399 = vunpack.c.l.b16 %v5171
    %v5400 = vunpack.c.l.b16 %v5172
    %v5401 = vunpack.c.l.b16 %v5173
    %v5402 = vunpack.c.l.b16 %v5174
    %v5403 = vunpack.c.l.b16 %v5175
    %v5404 = vunpack.c.l.b16 %v5176
    %v5405 = vunpack.c.l.b16 %v5177
    %v5406 = vunpack.c.l.b16 %v5178
    %v5407 = vunpack.c.l.b16 %v5179
    %v5408 = vunpack.c.l.b16 %v5180
    %v5409 = vunpack.c.l.b16 %v5181
    %v5410 = vunpack.c.l.b16 %v5182
    %v5411 = vunpack.c.l.b16 %v5183
    %v5412 = vunpack.c.l.b16 %v5184
    %v5413 = vunpack.c.l.b16 %v5185
    %v5414 = vunpack.c.l.b16 %v5186
    %v5415 = vunpack.c.l.b16 %v5187
    %v5416 = vunpack.c.l.b16 %v5188
    %v5417 = vunpack.c.l.b16 %v5189
    %v5418 = vunpack.c.l.b16 %v5190
    %v5419 = vunpack.c.l.b16 %v5191
    %v5420 = vunpack.c.l.b16 %v5192
    %v5421 = vunpack.c.l.b16 %v5193
    %v5422 = vunpack.c.l.b16 %v5194
    %v5423 = vunpack.c.l.b16 %v5195
    %v5424 = vunpack.c.l.b16 %v5196
    %v5425 = vunpack.c.l.b16 %v5197
    %v5426 = vunpack.c.l.b16 %v5198
    %v5427 = vunpack.c.l.b16 %v5199
    %v5428 = vpack.c.b16 %v5317, %v5316
    %v5429 = vpack.c.b16 %v5319, %v5318
    %v5430 = vpack.c.b16 %v5321, %v5320
    %v5431 = vpack.c.b16 %v5323, %v5322
    %v5432 = vpack.c.b16 %v5325, %v5324
    %v5433 = vpack.c.b16 %v5327, %v5326
    %v5434 = vpack.c.b16 %v5329, %v5328
    %v5435 = vpack.c.b16 %v5331, %v5330
    %v5436 = vpack.c.b16 %v5333, %v5332
    %v5437 = vpack.c.b16 %v5335, %v5334
    %v5438 = vpack.c.b16 %v5337, %v5336
    %v5439 = vpack.c.b16 %v5339, %v5338
    %v5440 = vpack.c.b16 %v5341, %v5340
    %v5441 = vpack.c.b16 %v5343, %v5342
    %v5442 = vpack.c.b16 %v5345, %v5344
    %v5443 = vpack.c.b16 %v5347, %v5346
    %v5444 = vpack.c.b16 %v5349, %v5348
    %v5445 = vpack.c.b16 %v5351, %v5350
    %v5446 = vpack.c.b16 %v5353, %v5352
    %v5447 = vpack.c.b16 %v5355, %v5354
    %v5448 = vpack.c.b16 %v5357, %v5356
    %v5449 = vpack.c.b16 %v5359, %v5358
    %v5450 = vpack.c.b16 %v5361, %v5360
    %v5451 = vpack.c.b16 %v5363, %v5362
    %v5452 = vpack.c.b16 %v5365, %v5364
    %v5453 = vpack.c.b16 %v5367, %v5366
    %v5454 = vpack.c.b16 %v5369, %v5368
    %v5455 = vpack.c.b16 %v5371, %v5370
    %v5456 = vpack.c.b16 %v5373, %v5372
    %v5457 = vpack.c.b16 %v5375, %v5374
    %v5458 = vpack.c.b16 %v5377, %v5376
    %v5459 = vpack.c.b16 %v5379, %v5378
    %v5460 = vpack.c.b16 %v5381, %v5380
    %v5461 = vpack.c.b16 %v5383, %v5382
    %v5462 = vpack.c.b16 %v5385, %v5384
    %v5463 = vpack.c.b16 %v5387, %v5386
    %v5464 = vpack.c.b16 %v5389, %v5388
    %v5465 = vpack.c.b16 %v5391, %v5390
    %v5466 = vpack.c.b16 %v5393, %v5392
    %v5467 = vpack.c.b16 %v5395, %v5394
    %v5468 = vpack.c.b16 %v5397, %v5396
    %v5469 = vpack.c.b16 %v5399, %v5398
    %v5470 = vpack.c.b16 %v5401, %v5400
    %v5471 = vpack.c.b16 %v5403, %v5402
    %v5472 = vpack.c.b16 %v5405, %v5404
    %v5473 = vpack.c.b16 %v5407, %v5406
    %v5474 = vpack.c.b16 %v5409, %v5408
    %v5475 = vpack.c.b16 %v5411, %v5410
    %v5476 = vpack.c.b16 %v5413, %v5412
    %v5477 = vpack.c.b16 %v5415, %v5414
    %v5478 = vpack.c.b16 %v5417, %v5416
    %v5479 = vpack.c.b16 %v5419, %v5418
    %v5480 = vpack.c.b16 %v5421, %v5420
    %v5481 = vpack.c.b16 %v5423, %v5422
    %v5482 = vpack.c.b16 %v5425, %v5424
    %v5483 = vpack.c.b16 %v5427, %v5426
    %5540 = vmatpush.bf16.msra.mxu0 %v5435
    %5541 = vmatpush.bf16.msra.mxu0 %v5434
    %5542 = vmatpush.bf16.msra.mxu0 %v5433
    %5543 = vmatpush.bf16.msra.mxu0 %v5432
    %5544 = vmatpush.bf16.msra.mxu0 %v5431
    %5545 = vmatpush.bf16.msra.mxu0 %v5430
    %5546 = vmatpush.bf16.msra.mxu0 %v5429
    %5547 = vmatpush.bf16.msra.mxu0 %v5428
    %5548 = vmatmul.bf16.gmra.mxu0 %v5081
    %v5549 = vpop.f32.mrf.mxu0
    %v5550 = vadd.f32 %v5202, %v5549
    %v5551 = vpop.f32.mrf.mxu0
    %5552 = vdwg.mxu0
    %5553 = vmatpush.bf16.msra.mxu0 %v5443
    %5554 = vmatpush.bf16.msra.mxu0 %v5442
    %5555 = vmatpush.bf16.msra.mxu0 %v5441
    %5556 = vmatpush.bf16.msra.mxu0 %v5440
    %5557 = vmatpush.bf16.msra.mxu0 %v5439
    %5558 = vmatpush.bf16.msra.mxu0 %v5438
    %5559 = vmatpush.bf16.msra.mxu0 %v5437
    %5560 = vmatpush.bf16.msra.mxu0 %v5436
    %5561 = vmatmul.bf16.gmra.mxu0 %v5082
    %v5562 = vpop.f32.mrf.mxu0
    %v5563 = vadd.f32 %v5550, %v5562
    %v5564 = vpop.f32.mrf.mxu0
    %5565 = vdwg.mxu0
    %5566 = vmatpush.bf16.msra.mxu0 %v5451
    %5567 = vmatpush.bf16.msra.mxu0 %v5450
    %5568 = vmatpush.bf16.msra.mxu0 %v5449
    %5569 = vmatpush.bf16.msra.mxu0 %v5448
    %5570 = vmatpush.bf16.msra.mxu0 %v5447
    %5571 = vmatpush.bf16.msra.mxu0 %v5446
    %5572 = vmatpush.bf16.msra.mxu0 %v5445
    %5573 = vmatpush.bf16.msra.mxu0 %v5444
    %5574 = vmatmul.bf16.gmra.mxu0 %v5083
    %v5575 = vpop.f32.mrf.mxu0
    %v5576 = vadd.f32 %v5563, %v5575
    %v5577 = vpop.f32.mrf.mxu0
    %5578 = vdwg.mxu0
    %5579 = vmatpush.bf16.msra.mxu0 %v5459
    %5580 = vmatpush.bf16.msra.mxu0 %v5458
    %5581 = vmatpush.bf16.msra.mxu0 %v5457
    %5582 = vmatpush.bf16.msra.mxu0 %v5456
    %5583 = vmatpush.bf16.msra.mxu0 %v5455
    %5584 = vmatpush.bf16.msra.mxu0 %v5454
    %5585 = vmatpush.bf16.msra.mxu0 %v5453
    %5586 = vmatpush.bf16.msra.mxu0 %v5452
    %5587 = vmatmul.bf16.gmra.mxu0 %v5084
    %v5588 = vpop.f32.mrf.mxu0
    %v5589 = vadd.f32 %v5576, %v5588
    %v5590 = vpop.f32.mrf.mxu0
    %5591 = vdwg.mxu0
    %5592 = vmatpush.bf16.msra.mxu0 %v5467
    %5593 = vmatpush.bf16.msra.mxu0 %v5466
    %5594 = vmatpush.bf16.msra.mxu0 %v5465
    %5595 = vmatpush.bf16.msra.mxu0 %v5464
    %5596 = vmatpush.bf16.msra.mxu0 %v5463
    %5597 = vmatpush.bf16.msra.mxu0 %v5462
    %5598 = vmatpush.bf16.msra.mxu0 %v5461
    %5599 = vmatpush.bf16.msra.mxu0 %v5460
    %5600 = vmatmul.bf16.gmra.mxu0 %v5085
    %v5601 = vpop.f32.mrf.mxu0
    %v5602 = vadd.f32 %v5589, %v5601
    %v5603 = vpop.f32.mrf.mxu0
    %5604 = vdwg.mxu0
    %5605 = vmatpush.bf16.msra.mxu0 %v5475
    %5606 = vmatpush.bf16.msra.mxu0 %v5474
    %5607 = vmatpush.bf16.msra.mxu0 %v5473
    %5608 = vmatpush.bf16.msra.mxu0 %v5472
    %5609 = vmatpush.bf16.msra.mxu0 %v5471
    %5610 = vmatpush.bf16.msra.mxu0 %v5470
    %5611 = vmatpush.bf16.msra.mxu0 %v5469
    %5612 = vmatpush.bf16.msra.mxu0 %v5468
    %5613 = vmatmul.bf16.gmra.mxu0 %v5086
    %v5614 = vpop.f32.mrf.mxu0
    %v5615 = vadd.f32 %v5602, %v5614
    %v5616 = vpop.f32.mrf.mxu0
    %5617 = vdwg.mxu0
    %5618 = vmatpush.bf16.msra.mxu0 %v5483
    %5619 = vmatpush.bf16.msra.mxu0 %v5482
    %5620 = vmatpush.bf16.msra.mxu0 %v5481
    %5621 = vmatpush.bf16.msra.mxu0 %v5480
    %5622 = vmatpush.bf16.msra.mxu0 %v5479
    %5623 = vmatpush.bf16.msra.mxu0 %v5478
    %5624 = vmatpush.bf16.msra.mxu0 %v5477
    %5625 = vmatpush.bf16.msra.mxu0 %v5476
    %5626 = vmatmul.bf16.gmra.mxu0 %v5087
    %v5627 = vpop.f32.mrf.mxu0
    %v5628 = vadd.f32 %v5615, %v5627
    %v5629 = vpop.f32.mrf.mxu0
    %5630 = vdwg.mxu0
    %v5631 = vmul.f32 %v5628, 0.5
    %v5632 = vtanh.pop %v5631
    %v5633 = vmul.f32 %v5632, 0.5
    %v5634 = vadd.f32 %v5633, 0.5
    %vm5635 = vcmask 56320
    %5636 = vst.msk [vmem:[#allocation3] sm:$0xff] %vm5635, %v5634
    // Predicated region
    $region38: #{ournet_forward.1} parent=1 // pred_check
      _
    $region39: #{ournet_forward.1} parent=1 // pred_check_branch
      %5638 = sbr.rel (0) target = $region41
    $region40: #{ournet_forward.1} parent=1 // pred_region
      %5640 = vsyncadd [#allocation4], 0
      %s5642 = sshll.u32 [#allocation3], 4
      %s5643 = int_to_ptr.vmem [resolvable:$true] %s5642
      %s5644 = sshll.u32 %s9, 4
      %s5645 = int_to_ptr.hbm [resolvable:$true] %s5644
      %5647 = dma.vmem_to_hbm [thread:$0]  %s5643, 128, %s5645, [#allocation4]
    $region41: #{ournet_forward.1} parent=1 // pred_fallthru
      _
    // Predicated region
    $region42: #{ournet_forward.1} parent=1 // pred_check
      _
    $region43: #{ournet_forward.1} parent=1 // pred_check_branch
      %5649 = sbr.rel (0) target = $region45
    $region44: #{ournet_forward.1} parent=1 // pred_region
      %5651 = dma.done [#allocation4], 128
    $region45: #{ournet_forward.1} parent=1 // pred_fallthru
      _
    %5652 = vsyncpa [#allocation4], 1

</llo_original>
